<compile_context>
chip_gen: v6e
topology: v6e:2x2x1
jax: 0.10.0
libtpu: 0.0.40
codegen_flags: <defaults>
</compile_context>

<pallas_src>
import numpy as np
import jax
import jax.numpy as jnp
from jax import lax
from jax.experimental import pallas as pl
from jax.experimental.pallas import tpu as pltpu

C_PAD = 128  # lane-dense channel padding


# ----------------------------- Pallas kernel ------------------------------ #

def _encoder_kernel(patches_ref, w1_ref, b_ref, s2_ref, w2_ref, s3_ref,
                    w3_ref, wr1a_ref, wr1b_ref, wr2a_ref, wr2b_ref, w4_ref,
                    o_ref):
    """Entire Encoder forward on VMEM-resident data (single grid step)."""

    def mm(a, b):
        return jnp.dot(a, b, preferred_element_type=jnp.float32)

    def relu(t):
        return jnp.maximum(t, 0.0)

    # conv1: 4x4 stride-2 (patches formed at the input boundary) + ReLU.
    h1 = relu(mm(patches_ref[...], w1_ref[...]) + b_ref[0:1, :])      # (M1,128)

    # conv2: 4x4 stride-2, in-kernel im2col via gather-as-matmul per tap.
    acc = mm(mm(s2_ref[0], h1), w2_ref[0])
    for t in range(1, s2_ref.shape[0]):
        acc = acc + mm(mm(s2_ref[t], h1), w2_ref[t])
    h2 = relu(acc + b_ref[1:2, :])                                    # (M2,128)

    def conv3x3(x, w_ref):
        a = mm(mm(s3_ref[0], x), w_ref[0])
        for t in range(1, s3_ref.shape[0]):
            a = a + mm(mm(s3_ref[t], x), w_ref[t])
        return a

    # conv3: 3x3 stride-1 (no ReLU).
    h3 = conv3x3(h2, w3_ref) + b_ref[2:3, :]

    # ResBlock 1: relu -> conv3x3 -> relu -> conv1x1 -> + identity.
    r = relu(conv3x3(relu(h3), wr1a_ref) + b_ref[3:4, :])
    h4 = mm(r, wr1b_ref[...]) + b_ref[4:5, :] + h3

    # ResBlock 2.
    r = relu(conv3x3(relu(h4), wr2a_ref) + b_ref[5:6, :])
    h5 = mm(r, wr2b_ref[...]) + b_ref[6:7, :] + h4

    # Sequential's trailing ReLU fused into the final 1x1 conv.
    o_ref[...] = (mm(relu(h5), w4_ref[...]) + b_ref[7:8, :]).astype(o_ref.dtype)


# ----------------------------- host-side glue ------------------------------ #

def _im2col(x, k, stride, pad):
    """x: (N,H,W,C) -> patches (N*Ho*Wo, k*k*C), columns ordered (ky, kx, cin).

    Used only for the first conv, whose input is the kernel boundary.
    """
    n, h, w, c = x.shape
    xp = jnp.pad(x, ((0, 0), (pad, pad), (pad, pad), (0, 0)))
    ho = (h + 2 * pad - k) // stride + 1
    wo = (w + 2 * pad - k) // stride + 1
    cols = []
    for ky in range(k):
        for kx in range(k):
            cols.append(
                xp[:, ky:ky + stride * ho:stride, kx:kx + stride * wo:stride, :])
    patches = jnp.concatenate(cols, axis=-1)
    return patches.reshape(n * ho * wo, k * k * c), ho, wo


def _conv_gather_matrices(n, hin, win, k, stride, pad):
    """Constant 0/1 operators S_t (t = ky*k+kx): row r_out of S_t @ x_flat is
    x[n, i*stride+ky-pad, j*stride+kx-pad, :] (zero row inside the pad ring)."""
    ho = (hin + 2 * pad - k) // stride + 1
    wo = (win + 2 * pad - k) // stride + 1
    s = np.zeros((k * k, n * ho * wo, n * hin * win), np.float32)
    for b in range(n):
        for i in range(ho):
            for j in range(wo):
                ro = (b * ho + i) * wo + j
                for ky in range(k):
                    for kx in range(k):
                        yy = i * stride + ky - pad
                        xx = j * stride + kx - pad
                        if 0 <= yy < hin and 0 <= xx < win:
                            s[ky * k + kx, ro, (b * hin + yy) * win + xx] = 1.0
    return s, ho, wo


def _pack_taps(w):
    """(k,k,cin,cout) -> (k*k, C_PAD, C_PAD), zero-padded channels."""
    k, _, cin, cout = w.shape
    wp = jnp.pad(w, ((0, 0), (0, 0), (0, C_PAD - cin), (0, C_PAD - cout)))
    return wp.reshape(k * k, C_PAD, C_PAD)


def _pack_1x1(w):
    _, _, cin, cout = w.shape
    return jnp.pad(w[0, 0], ((0, C_PAD - cin), (0, C_PAD - cout)))


def _pack_biases(bs):
    return jnp.stack([jnp.pad(b, (0, C_PAD - b.shape[0])) for b in bs], axis=0)


def _full_spec(shape):
    zeros = (0,) * len(shape)
    return pl.BlockSpec(shape, lambda i, _z=zeros: _z)


def encoder_forward(x_nchw, p):
    """Matches Encoder.forward: NCHW in -> NCHW out (embed_dim channels)."""
    n = x_nchw.shape[0]
    x = jnp.transpose(x_nchw, (0, 2, 3, 1))                      # NCHW -> NHWC

    # Boundary-only layout plumbing: im2col of the raw input for conv1.
    patches, h1s, w1s = _im2col(x, 4, 2, 1)
    m1, kd = patches.shape
    patches = jnp.pad(patches, ((0, 0), (0, C_PAD - kd)))

    w1, b1 = p['c1']; w2, b2 = p['c2']; w3, b3 = p['c3']
    wr1a, br1a = p['r1c1']; wr1b, br1b = p['r1c2']
    wr2a, br2a = p['r2c1']; wr2b, br2b = p['r2c2']
    w4, b4 = p['c4']
    embed_dim = w4.shape[3]

    w1m = jnp.pad(w1.reshape(kd, w1.shape[3]),
                  ((0, C_PAD - kd), (0, C_PAD - w1.shape[3])))
    biases = _pack_biases([b1, b2, b3, br1a, br1b, br2a, br2b, b4])
    w2t, w3t = _pack_taps(w2), _pack_taps(w3)
    wr1at, wr2at = _pack_taps(wr1a), _pack_taps(wr2a)
    wr1bm, wr2bm, w4m = _pack_1x1(wr1b), _pack_1x1(wr2b), _pack_1x1(w4)

    # Constant gather operators: stride-2 4x4 (conv2) and stride-1 3x3 convs.
    s2_np, h2s, w2s = _conv_gather_matrices(n, h1s, w1s, 4, 2, 1)
    s3_np, _, _ = _conv_gather_matrices(n, h2s, w2s, 3, 1, 1)
    s2, s3 = jnp.asarray(s2_np), jnp.asarray(s3_np)
    m2 = n * h2s * w2s

    operands = (patches, w1m, biases, s2, w2t, s3, w3t,
                wr1at, wr1bm, wr2at, wr2bm, w4m)

    flops = 2 * (m1 * C_PAD * C_PAD
                 + 16 * (m2 * m1 * C_PAD + m2 * C_PAD * C_PAD)
                 + 3 * 9 * (m2 * m2 * C_PAD + m2 * C_PAD * C_PAD)
                 + 3 * m2 * C_PAD * C_PAD)
    bytes_accessed = (sum(int(np.prod(a.shape)) * 4 for a in operands)
                      + m2 * C_PAD * 4)

    out_flat = pl.pallas_call(
        _encoder_kernel,
        out_shape=jax.ShapeDtypeStruct((m2, C_PAD), jnp.float32),
        grid=(1,),
        in_specs=[_full_spec(a.shape) for a in operands],
        out_specs=_full_spec((m2, C_PAD)),
        compiler_params=pltpu.CompilerParams(
            dimension_semantics=("arbitrary",)),
        cost_estimate=pl.CostEstimate(flops=flops, transcendentals=0,
                                      bytes_accessed=bytes_accessed),
    )(*operands)

    out = out_flat[:, :embed_dim].reshape(n, h2s, w2s, embed_dim)
    return jnp.transpose(out, (0, 3, 1, 2))                      # NHWC -> NCHW


# --------------------------- parameters / model ---------------------------- #

def _init_conv(key, k, cin, cout):
    """Deterministic PyTorch-Conv2d-default-style uniform init (HWIO)."""
    wk, bk = jax.random.split(key)
    fan_in = cin * k * k
    bound = 1.0 / (fan_in ** 0.5)
    w = jax.random.uniform(wk, (k, k, cin, cout), jnp.float32, -bound, bound)
    b = jax.random.uniform(bk, (cout,), jnp.float32, -bound, bound)
    return w, b


def init_encoder_params(key, embed_dim, n_hidden, res_hidden):
    keys = jax.random.split(key, 8)
    return {
        'c1': _init_conv(keys[0], 4, 3, n_hidden // 2),
        'c2': _init_conv(keys[1], 4, n_hidden // 2, n_hidden),
        'c3': _init_conv(keys[2], 3, n_hidden, n_hidden),
        'r1c1': _init_conv(keys[3], 3, n_hidden, res_hidden),
        'r1c2': _init_conv(keys[4], 1, res_hidden, n_hidden),
        'r2c1': _init_conv(keys[5], 3, n_hidden, res_hidden),
        'r2c2': _init_conv(keys[6], 1, res_hidden, n_hidden),
        'c4': _init_conv(keys[7], 1, n_hidden, embed_dim),
    }


# ------------------------- pure-JAX reference check ------------------------ #

def _conv_ref(x, w, b, stride, pad):
    y = lax.conv_general_dilated(
        x, w, (stride, stride), [(pad, pad), (pad, pad)],
        dimension_numbers=('NHWC', 'HWIO', 'NHWC'))
    return y + b


def encoder_ref(x_nchw, p):
    relu = lambda t: jnp.maximum(t, 0.0)
    x = jnp.transpose(x_nchw, (0, 2, 3, 1))
    h = relu(_conv_ref(x, *p['c1'], 2, 1))
    h = relu(_conv_ref(h, *p['c2'], 2, 1))
    h = _conv_ref(h, *p['c3'], 1, 1)
    r = relu(_conv_ref(relu(h), *p['r1c1'], 1, 1))
    h = _conv_ref(r, *p['r1c2'], 1, 0) + h
    r = relu(_conv_ref(relu(h), *p['r2c1'], 1, 1))
    h = _conv_ref(r, *p['r2c2'], 1, 0) + h
    h = _conv_ref(relu(h), *p['c4'], 1, 0)
    return jnp.transpose(h, (0, 3, 1, 2))


# ---------------------------------- main ----------------------------------- #

if __name__ == "__main__":
    embed_dim, n_hidden, res_hidden = 16, 32, 8  # loss_type unused in forward
    key = jax.random.PRNGKey(0)
    pkey, xkey = jax.random.split(key)

    params = init_encoder_params(pkey, embed_dim, n_hidden, res_hidden)
    x = jax.random.normal(xkey, (2, 3, 16, 16), dtype=jnp.float32)  # NCHW

    fwd = jax.jit(encoder_forward)
    out = jax.block_until_ready(fwd(x, params))
    assert out.shape == (2, embed_dim, 4, 4), out.shape

    ref = jax.block_until_ready(encoder_ref(x, params))
    assert jnp.allclose(out, ref, rtol=2e-4, atol=2e-4), \
        float(jnp.max(jnp.abs(out - ref)))

    print("KERNEL_OK")
</pallas_src>

<mosaic_0001>
module attributes {stable_mosaic.version = 11 : i64} {
  func.func @_encoder_kernel(%arg0: i32, %arg1: memref<128x128xf32, #tpu.memory_space<vmem>>, %arg2: memref<128x128xf32, #tpu.memory_space<vmem>>, %arg3: memref<8x128xf32, #tpu.memory_space<vmem>>, %arg4: memref<16x32x128xf32, #tpu.memory_space<vmem>>, %arg5: memref<16x128x128xf32, #tpu.memory_space<vmem>>, %arg6: memref<9x32x32xf32, #tpu.memory_space<vmem>>, %arg7: memref<9x128x128xf32, #tpu.memory_space<vmem>>, %arg8: memref<9x128x128xf32, #tpu.memory_space<vmem>>, %arg9: memref<128x128xf32, #tpu.memory_space<vmem>>, %arg10: memref<9x128x128xf32, #tpu.memory_space<vmem>>, %arg11: memref<128x128xf32, #tpu.memory_space<vmem>>, %arg12: memref<128x128xf32, #tpu.memory_space<vmem>>, %arg13: memref<32x128xf32, #tpu.memory_space<vmem>>) attributes {dimension_semantics = [#tpu.dimension_semantics<arbitrary>], iteration_bounds = array<i64: 1>, scalar_prefetch = 0 : i64, scratch_operands = 0 : i64, tpu.core_type = #tpu.core_type<tc>, window_params = [{pipeline_mode = #tpu.pipeline_mode<synchronous>, transform_indices = @transform_0, window_bounds = array<i64: 128, 128>}, {pipeline_mode = #tpu.pipeline_mode<synchronous>, transform_indices = @transform_1, window_bounds = array<i64: 128, 128>}, {pipeline_mode = #tpu.pipeline_mode<synchronous>, transform_indices = @transform_2, window_bounds = array<i64: 8, 128>}, {pipeline_mode = #tpu.pipeline_mode<synchronous>, transform_indices = @transform_3, window_bounds = array<i64: 16, 32, 128>}, {pipeline_mode = #tpu.pipeline_mode<synchronous>, transform_indices = @transform_4, window_bounds = array<i64: 16, 128, 128>}, {pipeline_mode = #tpu.pipeline_mode<synchronous>, transform_indices = @transform_5, window_bounds = array<i64: 9, 32, 32>}, {pipeline_mode = #tpu.pipeline_mode<synchronous>, transform_indices = @transform_6, window_bounds = array<i64: 9, 128, 128>}, {pipeline_mode = #tpu.pipeline_mode<synchronous>, transform_indices = @transform_7, window_bounds = array<i64: 9, 128, 128>}, {pipeline_mode = #tpu.pipeline_mode<synchronous>, transform_indices = @transform_8, window_bounds = array<i64: 128, 128>}, {pipeline_mode = #tpu.pipeline_mode<synchronous>, transform_indices = @transform_9, window_bounds = array<i64: 9, 128, 128>}, {pipeline_mode = #tpu.pipeline_mode<synchronous>, transform_indices = @transform_10, window_bounds = array<i64: 128, 128>}, {pipeline_mode = #tpu.pipeline_mode<synchronous>, transform_indices = @transform_11, window_bounds = array<i64: 128, 128>}, {pipeline_mode = #tpu.pipeline_mode<synchronous>, transform_indices = @transform_12, window_bounds = array<i64: 32, 128>}]} {
    %c0 = arith.constant 0 : index
    %c0_0 = arith.constant 0 : index
    %0 = vector.load %arg1[%c0, %c0_0] : memref<128x128xf32, #tpu.memory_space<vmem>>, vector<128x128xf32>
    %c0_1 = arith.constant 0 : index
    %c0_2 = arith.constant 0 : index
    %1 = vector.load %arg2[%c0_1, %c0_2] : memref<128x128xf32, #tpu.memory_space<vmem>>, vector<128x128xf32>
    %cst = arith.constant dense<0.000000e+00> : vector<128x128xf32>
    %2 = tpu.matmul %0, %1, %cst {dimension_numbers = #tpu.dot_dimension_numbers<[1], [0], [0], [1], [0, 0, 1, 1], [], []>} : vector<128x128xf32>, vector<128x128xf32>, vector<128x128xf32> -> vector<128x128xf32>
    %c0_3 = arith.constant 0 : index
    %c0_4 = arith.constant 0 : index
    %3 = vector.load %arg3[%c0_3, %c0_4] : memref<8x128xf32, #tpu.memory_space<vmem>>, vector<1x128xf32>
    %4 = vector.broadcast %3 : vector<1x128xf32> to vector<128x128xf32>
    %5 = arith.addf %2, %4 : vector<128x128xf32>
    %cst_5 = arith.constant 0.000000e+00 : f32
    %6 = vector.broadcast %cst_5 : f32 to vector<128x128xf32>
    %7 = arith.maximumf %5, %6 : vector<128x128xf32>
    %c0_6 = arith.constant 0 : index
    %c0_7 = arith.constant 0 : index
    %c0_8 = arith.constant 0 : index
    %8 = vector.load %arg4[%c0_6, %c0_7, %c0_8] : memref<16x32x128xf32, #tpu.memory_space<vmem>>, vector<1x32x128xf32>
    %9 = vector.shape_cast %8 : vector<1x32x128xf32> to vector<32x128xf32>
    %cst_9 = arith.constant dense<0.000000e+00> : vector<32x128xf32>
    %10 = tpu.matmul %9, %7, %cst_9 {dimension_numbers = #tpu.dot_dimension_numbers<[1], [0], [0], [1], [0, 0, 1, 1], [], []>} : vector<32x128xf32>, vector<128x128xf32>, vector<32x128xf32> -> vector<32x128xf32>
    %c0_10 = arith.constant 0 : index
    %c0_11 = arith.constant 0 : index
    %c0_12 = arith.constant 0 : index
    %11 = vector.load %arg5[%c0_10, %c0_11, %c0_12] : memref<16x128x128xf32, #tpu.memory_space<vmem>>, vector<1x128x128xf32>
    %12 = vector.shape_cast %11 : vector<1x128x128xf32> to vector<128x128xf32>
    %cst_13 = arith.constant dense<0.000000e+00> : vector<32x128xf32>
    %13 = tpu.matmul %10, %12, %cst_13 {dimension_numbers = #tpu.dot_dimension_numbers<[1], [0], [0], [1], [0, 0, 1, 1], [], []>} : vector<32x128xf32>, vector<128x128xf32>, vector<32x128xf32> -> vector<32x128xf32>
    %c1 = arith.constant 1 : index
    %c0_14 = arith.constant 0 : index
    %c0_15 = arith.constant 0 : index
    %14 = vector.load %arg4[%c1, %c0_14, %c0_15] : memref<16x32x128xf32, #tpu.memory_space<vmem>>, vector<1x32x128xf32>
    %15 = vector.shape_cast %14 : vector<1x32x128xf32> to vector<32x128xf32>
    %cst_16 = arith.constant dense<0.000000e+00> : vector<32x128xf32>
    %16 = tpu.matmul %15, %7, %cst_16 {dimension_numbers = #tpu.dot_dimension_numbers<[1], [0], [0], [1], [0, 0, 1, 1], [], []>} : vector<32x128xf32>, vector<128x128xf32>, vector<32x128xf32> -> vector<32x128xf32>
    %c1_17 = arith.constant 1 : index
    %c0_18 = arith.constant 0 : index
    %c0_19 = arith.constant 0 : index
    %17 = vector.load %arg5[%c1_17, %c0_18, %c0_19] : memref<16x128x128xf32, #tpu.memory_space<vmem>>, vector<1x128x128xf32>
    %18 = vector.shape_cast %17 : vector<1x128x128xf32> to vector<128x128xf32>
    %cst_20 = arith.constant dense<0.000000e+00> : vector<32x128xf32>
    %19 = tpu.matmul %16, %18, %cst_20 {dimension_numbers = #tpu.dot_dimension_numbers<[1], [0], [0], [1], [0, 0, 1, 1], [], []>} : vector<32x128xf32>, vector<128x128xf32>, vector<32x128xf32> -> vector<32x128xf32>
    %20 = arith.addf %13, %19 : vector<32x128xf32>
    %c2 = arith.constant 2 : index
    %c0_21 = arith.constant 0 : index
    %c0_22 = arith.constant 0 : index
    %21 = vector.load %arg4[%c2, %c0_21, %c0_22] : memref<16x32x128xf32, #tpu.memory_space<vmem>>, vector<1x32x128xf32>
    %22 = vector.shape_cast %21 : vector<1x32x128xf32> to vector<32x128xf32>
    %cst_23 = arith.constant dense<0.000000e+00> : vector<32x128xf32>
    %23 = tpu.matmul %22, %7, %cst_23 {dimension_numbers = #tpu.dot_dimension_numbers<[1], [0], [0], [1], [0, 0, 1, 1], [], []>} : vector<32x128xf32>, vector<128x128xf32>, vector<32x128xf32> -> vector<32x128xf32>
    %c2_24 = arith.constant 2 : index
    %c0_25 = arith.constant 0 : index
    %c0_26 = arith.constant 0 : index
    %24 = vector.load %arg5[%c2_24, %c0_25, %c0_26] : memref<16x128x128xf32, #tpu.memory_space<vmem>>, vector<1x128x128xf32>
    %25 = vector.shape_cast %24 : vector<1x128x128xf32> to vector<128x128xf32>
    %cst_27 = arith.constant dense<0.000000e+00> : vector<32x128xf32>
    %26 = tpu.matmul %23, %25, %cst_27 {dimension_numbers = #tpu.dot_dimension_numbers<[1], [0], [0], [1], [0, 0, 1, 1], [], []>} : vector<32x128xf32>, vector<128x128xf32>, vector<32x128xf32> -> vector<32x128xf32>
    %27 = arith.addf %20, %26 : vector<32x128xf32>
    %c3 = arith.constant 3 : index
    %c0_28 = arith.constant 0 : index
    %c0_29 = arith.constant 0 : index
    %28 = vector.load %arg4[%c3, %c0_28, %c0_29] : memref<16x32x128xf32, #tpu.memory_space<vmem>>, vector<1x32x128xf32>
    %29 = vector.shape_cast %28 : vector<1x32x128xf32> to vector<32x128xf32>
    %cst_30 = arith.constant dense<0.000000e+00> : vector<32x128xf32>
    %30 = tpu.matmul %29, %7, %cst_30 {dimension_numbers = #tpu.dot_dimension_numbers<[1], [0], [0], [1], [0, 0, 1, 1], [], []>} : vector<32x128xf32>, vector<128x128xf32>, vector<32x128xf32> -> vector<32x128xf32>
    %c3_31 = arith.constant 3 : index
    %c0_32 = arith.constant 0 : index
    %c0_33 = arith.constant 0 : index
    %31 = vector.load %arg5[%c3_31, %c0_32, %c0_33] : memref<16x128x128xf32, #tpu.memory_space<vmem>>, vector<1x128x128xf32>
    %32 = vector.shape_cast %31 : vector<1x128x128xf32> to vector<128x128xf32>
    %cst_34 = arith.constant dense<0.000000e+00> : vector<32x128xf32>
    %33 = tpu.matmul %30, %32, %cst_34 {dimension_numbers = #tpu.dot_dimension_numbers<[1], [0], [0], [1], [0, 0, 1, 1], [], []>} : vector<32x128xf32>, vector<128x128xf32>, vector<32x128xf32> -> vector<32x128xf32>
    %34 = arith.addf %27, %33 : vector<32x128xf32>
    %c4 = arith.constant 4 : index
    %c0_35 = arith.constant 0 : index
    %c0_36 = arith.constant 0 : index
    %35 = vector.load %arg4[%c4, %c0_35, %c0_36] : memref<16x32x128xf32, #tpu.memory_space<vmem>>, vector<1x32x128xf32>
    %36 = vector.shape_cast %35 : vector<1x32x128xf32> to vector<32x128xf32>
    %cst_37 = arith.constant dense<0.000000e+00> : vector<32x128xf32>
    %37 = tpu.matmul %36, %7, %cst_37 {dimension_numbers = #tpu.dot_dimension_numbers<[1], [0], [0], [1], [0, 0, 1, 1], [], []>} : vector<32x128xf32>, vector<128x128xf32>, vector<32x128xf32> -> vector<32x128xf32>
    %c4_38 = arith.constant 4 : index
    %c0_39 = arith.constant 0 : index
    %c0_40 = arith.constant 0 : index
    %38 = vector.load %arg5[%c4_38, %c0_39, %c0_40] : memref<16x128x128xf32, #tpu.memory_space<vmem>>, vector<1x128x128xf32>
    %39 = vector.shape_cast %38 : vector<1x128x128xf32> to vector<128x128xf32>
    %cst_41 = arith.constant dense<0.000000e+00> : vector<32x128xf32>
    %40 = tpu.matmul %37, %39, %cst_41 {dimension_numbers = #tpu.dot_dimension_numbers<[1], [0], [0], [1], [0, 0, 1, 1], [], []>} : vector<32x128xf32>, vector<128x128xf32>, vector<32x128xf32> -> vector<32x128xf32>
    %41 = arith.addf %34, %40 : vector<32x128xf32>
    %c5 = arith.constant 5 : index
    %c0_42 = arith.constant 0 : index
    %c0_43 = arith.constant 0 : index
    %42 = vector.load %arg4[%c5, %c0_42, %c0_43] : memref<16x32x128xf32, #tpu.memory_space<vmem>>, vector<1x32x128xf32>
    %43 = vector.shape_cast %42 : vector<1x32x128xf32> to vector<32x128xf32>
    %cst_44 = arith.constant dense<0.000000e+00> : vector<32x128xf32>
    %44 = tpu.matmul %43, %7, %cst_44 {dimension_numbers = #tpu.dot_dimension_numbers<[1], [0], [0], [1], [0, 0, 1, 1], [], []>} : vector<32x128xf32>, vector<128x128xf32>, vector<32x128xf32> -> vector<32x128xf32>
    %c5_45 = arith.constant 5 : index
    %c0_46 = arith.constant 0 : index
    %c0_47 = arith.constant 0 : index
    %45 = vector.load %arg5[%c5_45, %c0_46, %c0_47] : memref<16x128x128xf32, #tpu.memory_space<vmem>>, vector<1x128x128xf32>
    %46 = vector.shape_cast %45 : vector<1x128x128xf32> to vector<128x128xf32>
    %cst_48 = arith.constant dense<0.000000e+00> : vector<32x128xf32>
    %47 = tpu.matmul %44, %46, %cst_48 {dimension_numbers = #tpu.dot_dimension_numbers<[1], [0], [0], [1], [0, 0, 1, 1], [], []>} : vector<32x128xf32>, vector<128x128xf32>, vector<32x128xf32> -> vector<32x128xf32>
    %48 = arith.addf %41, %47 : vector<32x128xf32>
    %c6 = arith.constant 6 : index
    %c0_49 = arith.constant 0 : index
    %c0_50 = arith.constant 0 : index
    %49 = vector.load %arg4[%c6, %c0_49, %c0_50] : memref<16x32x128xf32, #tpu.memory_space<vmem>>, vector<1x32x128xf32>
    %50 = vector.shape_cast %49 : vector<1x32x128xf32> to vector<32x128xf32>
    %cst_51 = arith.constant dense<0.000000e+00> : vector<32x128xf32>
    %51 = tpu.matmul %50, %7, %cst_51 {dimension_numbers = #tpu.dot_dimension_numbers<[1], [0], [0], [1], [0, 0, 1, 1], [], []>} : vector<32x128xf32>, vector<128x128xf32>, vector<32x128xf32> -> vector<32x128xf32>
    %c6_52 = arith.constant 6 : index
    %c0_53 = arith.constant 0 : index
    %c0_54 = arith.constant 0 : index
    %52 = vector.load %arg5[%c6_52, %c0_53, %c0_54] : memref<16x128x128xf32, #tpu.memory_space<vmem>>, vector<1x128x128xf32>
    %53 = vector.shape_cast %52 : vector<1x128x128xf32> to vector<128x128xf32>
    %cst_55 = arith.constant dense<0.000000e+00> : vector<32x128xf32>
    %54 = tpu.matmul %51, %53, %cst_55 {dimension_numbers = #tpu.dot_dimension_numbers<[1], [0], [0], [1], [0, 0, 1, 1], [], []>} : vector<32x128xf32>, vector<128x128xf32>, vector<32x128xf32> -> vector<32x128xf32>
    %55 = arith.addf %48, %54 : vector<32x128xf32>
    %c7 = arith.constant 7 : index
    %c0_56 = arith.constant 0 : index
    %c0_57 = arith.constant 0 : index
    %56 = vector.load %arg4[%c7, %c0_56, %c0_57] : memref<16x32x128xf32, #tpu.memory_space<vmem>>, vector<1x32x128xf32>
    %57 = vector.shape_cast %56 : vector<1x32x128xf32> to vector<32x128xf32>
    %cst_58 = arith.constant dense<0.000000e+00> : vector<32x128xf32>
    %58 = tpu.matmul %57, %7, %cst_58 {dimension_numbers = #tpu.dot_dimension_numbers<[1], [0], [0], [1], [0, 0, 1, 1], [], []>} : vector<32x128xf32>, vector<128x128xf32>, vector<32x128xf32> -> vector<32x128xf32>
    %c7_59 = arith.constant 7 : index
    %c0_60 = arith.constant 0 : index
    %c0_61 = arith.constant 0 : index
    %59 = vector.load %arg5[%c7_59, %c0_60, %c0_61] : memref<16x128x128xf32, #tpu.memory_space<vmem>>, vector<1x128x128xf32>
    %60 = vector.shape_cast %59 : vector<1x128x128xf32> to vector<128x128xf32>
    %cst_62 = arith.constant dense<0.000000e+00> : vector<32x128xf32>
    %61 = tpu.matmul %58, %60, %cst_62 {dimension_numbers = #tpu.dot_dimension_numbers<[1], [0], [0], [1], [0, 0, 1, 1], [], []>} : vector<32x128xf32>, vector<128x128xf32>, vector<32x128xf32> -> vector<32x128xf32>
    %62 = arith.addf %55, %61 : vector<32x128xf32>
    %c8 = arith.constant 8 : index
    %c0_63 = arith.constant 0 : index
    %c0_64 = arith.constant 0 : index
    %63 = vector.load %arg4[%c8, %c0_63, %c0_64] : memref<16x32x128xf32, #tpu.memory_space<vmem>>, vector<1x32x128xf32>
    %64 = vector.shape_cast %63 : vector<1x32x128xf32> to vector<32x128xf32>
    %cst_65 = arith.constant dense<0.000000e+00> : vector<32x128xf32>
    %65 = tpu.matmul %64, %7, %cst_65 {dimension_numbers = #tpu.dot_dimension_numbers<[1], [0], [0], [1], [0, 0, 1, 1], [], []>} : vector<32x128xf32>, vector<128x128xf32>, vector<32x128xf32> -> vector<32x128xf32>
    %c8_66 = arith.constant 8 : index
    %c0_67 = arith.constant 0 : index
    %c0_68 = arith.constant 0 : index
    %66 = vector.load %arg5[%c8_66, %c0_67, %c0_68] : memref<16x128x128xf32, #tpu.memory_space<vmem>>, vector<1x128x128xf32>
    %67 = vector.shape_cast %66 : vector<1x128x128xf32> to vector<128x128xf32>
    %cst_69 = arith.constant dense<0.000000e+00> : vector<32x128xf32>
    %68 = tpu.matmul %65, %67, %cst_69 {dimension_numbers = #tpu.dot_dimension_numbers<[1], [0], [0], [1], [0, 0, 1, 1], [], []>} : vector<32x128xf32>, vector<128x128xf32>, vector<32x128xf32> -> vector<32x128xf32>
    %69 = arith.addf %62, %68 : vector<32x128xf32>
    %c9 = arith.constant 9 : index
    %c0_70 = arith.constant 0 : index
    %c0_71 = arith.constant 0 : index
    %70 = vector.load %arg4[%c9, %c0_70, %c0_71] : memref<16x32x128xf32, #tpu.memory_space<vmem>>, vector<1x32x128xf32>
    %71 = vector.shape_cast %70 : vector<1x32x128xf32> to vector<32x128xf32>
    %cst_72 = arith.constant dense<0.000000e+00> : vector<32x128xf32>
    %72 = tpu.matmul %71, %7, %cst_72 {dimension_numbers = #tpu.dot_dimension_numbers<[1], [0], [0], [1], [0, 0, 1, 1], [], []>} : vector<32x128xf32>, vector<128x128xf32>, vector<32x128xf32> -> vector<32x128xf32>
    %c9_73 = arith.constant 9 : index
    %c0_74 = arith.constant 0 : index
    %c0_75 = arith.constant 0 : index
    %73 = vector.load %arg5[%c9_73, %c0_74, %c0_75] : memref<16x128x128xf32, #tpu.memory_space<vmem>>, vector<1x128x128xf32>
    %74 = vector.shape_cast %73 : vector<1x128x128xf32> to vector<128x128xf32>
    %cst_76 = arith.constant dense<0.000000e+00> : vector<32x128xf32>
    %75 = tpu.matmul %72, %74, %cst_76 {dimension_numbers = #tpu.dot_dimension_numbers<[1], [0], [0], [1], [0, 0, 1, 1], [], []>} : vector<32x128xf32>, vector<128x128xf32>, vector<32x128xf32> -> vector<32x128xf32>
    %76 = arith.addf %69, %75 : vector<32x128xf32>
    %c10 = arith.constant 10 : index
    %c0_77 = arith.constant 0 : index
    %c0_78 = arith.constant 0 : index
    %77 = vector.load %arg4[%c10, %c0_77, %c0_78] : memref<16x32x128xf32, #tpu.memory_space<vmem>>, vector<1x32x128xf32>
    %78 = vector.shape_cast %77 : vector<1x32x128xf32> to vector<32x128xf32>
    %cst_79 = arith.constant dense<0.000000e+00> : vector<32x128xf32>
    %79 = tpu.matmul %78, %7, %cst_79 {dimension_numbers = #tpu.dot_dimension_numbers<[1], [0], [0], [1], [0, 0, 1, 1], [], []>} : vector<32x128xf32>, vector<128x128xf32>, vector<32x128xf32> -> vector<32x128xf32>
    %c10_80 = arith.constant 10 : index
    %c0_81 = arith.constant 0 : index
    %c0_82 = arith.constant 0 : index
    %80 = vector.load %arg5[%c10_80, %c0_81, %c0_82] : memref<16x128x128xf32, #tpu.memory_space<vmem>>, vector<1x128x128xf32>
    %81 = vector.shape_cast %80 : vector<1x128x128xf32> to vector<128x128xf32>
    %cst_83 = arith.constant dense<0.000000e+00> : vector<32x128xf32>
    %82 = tpu.matmul %79, %81, %cst_83 {dimension_numbers = #tpu.dot_dimension_numbers<[1], [0], [0], [1], [0, 0, 1, 1], [], []>} : vector<32x128xf32>, vector<128x128xf32>, vector<32x128xf32> -> vector<32x128xf32>
    %83 = arith.addf %76, %82 : vector<32x128xf32>
    %c11 = arith.constant 11 : index
    %c0_84 = arith.constant 0 : index
    %c0_85 = arith.constant 0 : index
    %84 = vector.load %arg4[%c11, %c0_84, %c0_85] : memref<16x32x128xf32, #tpu.memory_space<vmem>>, vector<1x32x128xf32>
    %85 = vector.shape_cast %84 : vector<1x32x128xf32> to vector<32x128xf32>
    %cst_86 = arith.constant dense<0.000000e+00> : vector<32x128xf32>
    %86 = tpu.matmul %85, %7, %cst_86 {dimension_numbers = #tpu.dot_dimension_numbers<[1], [0], [0], [1], [0, 0, 1, 1], [], []>} : vector<32x128xf32>, vector<128x128xf32>, vector<32x128xf32> -> vector<32x128xf32>
    %c11_87 = arith.constant 11 : index
    %c0_88 = arith.constant 0 : index
    %c0_89 = arith.constant 0 : index
    %87 = vector.load %arg5[%c11_87, %c0_88, %c0_89] : memref<16x128x128xf32, #tpu.memory_space<vmem>>, vector<1x128x128xf32>
    %88 = vector.shape_cast %87 : vector<1x128x128xf32> to vector<128x128xf32>
    %cst_90 = arith.constant dense<0.000000e+00> : vector<32x128xf32>
    %89 = tpu.matmul %86, %88, %cst_90 {dimension_numbers = #tpu.dot_dimension_numbers<[1], [0], [0], [1], [0, 0, 1, 1], [], []>} : vector<32x128xf32>, vector<128x128xf32>, vector<32x128xf32> -> vector<32x128xf32>
    %90 = arith.addf %83, %89 : vector<32x128xf32>
    %c12 = arith.constant 12 : index
    %c0_91 = arith.constant 0 : index
    %c0_92 = arith.constant 0 : index
    %91 = vector.load %arg4[%c12, %c0_91, %c0_92] : memref<16x32x128xf32, #tpu.memory_space<vmem>>, vector<1x32x128xf32>
    %92 = vector.shape_cast %91 : vector<1x32x128xf32> to vector<32x128xf32>
    %cst_93 = arith.constant dense<0.000000e+00> : vector<32x128xf32>
    %93 = tpu.matmul %92, %7, %cst_93 {dimension_numbers = #tpu.dot_dimension_numbers<[1], [0], [0], [1], [0, 0, 1, 1], [], []>} : vector<32x128xf32>, vector<128x128xf32>, vector<32x128xf32> -> vector<32x128xf32>
    %c12_94 = arith.constant 12 : index
    %c0_95 = arith.constant 0 : index
    %c0_96 = arith.constant 0 : index
    %94 = vector.load %arg5[%c12_94, %c0_95, %c0_96] : memref<16x128x128xf32, #tpu.memory_space<vmem>>, vector<1x128x128xf32>
    %95 = vector.shape_cast %94 : vector<1x128x128xf32> to vector<128x128xf32>
    %cst_97 = arith.constant dense<0.000000e+00> : vector<32x128xf32>
    %96 = tpu.matmul %93, %95, %cst_97 {dimension_numbers = #tpu.dot_dimension_numbers<[1], [0], [0], [1], [0, 0, 1, 1], [], []>} : vector<32x128xf32>, vector<128x128xf32>, vector<32x128xf32> -> vector<32x128xf32>
    %97 = arith.addf %90, %96 : vector<32x128xf32>
    %c13 = arith.constant 13 : index
    %c0_98 = arith.constant 0 : index
    %c0_99 = arith.constant 0 : index
    %98 = vector.load %arg4[%c13, %c0_98, %c0_99] : memref<16x32x128xf32, #tpu.memory_space<vmem>>, vector<1x32x128xf32>
    %99 = vector.shape_cast %98 : vector<1x32x128xf32> to vector<32x128xf32>
    %cst_100 = arith.constant dense<0.000000e+00> : vector<32x128xf32>
    %100 = tpu.matmul %99, %7, %cst_100 {dimension_numbers = #tpu.dot_dimension_numbers<[1], [0], [0], [1], [0, 0, 1, 1], [], []>} : vector<32x128xf32>, vector<128x128xf32>, vector<32x128xf32> -> vector<32x128xf32>
    %c13_101 = arith.constant 13 : index
    %c0_102 = arith.constant 0 : index
    %c0_103 = arith.constant 0 : index
    %101 = vector.load %arg5[%c13_101, %c0_102, %c0_103] : memref<16x128x128xf32, #tpu.memory_space<vmem>>, vector<1x128x128xf32>
    %102 = vector.shape_cast %101 : vector<1x128x128xf32> to vector<128x128xf32>
    %cst_104 = arith.constant dense<0.000000e+00> : vector<32x128xf32>
    %103 = tpu.matmul %100, %102, %cst_104 {dimension_numbers = #tpu.dot_dimension_numbers<[1], [0], [0], [1], [0, 0, 1, 1], [], []>} : vector<32x128xf32>, vector<128x128xf32>, vector<32x128xf32> -> vector<32x128xf32>
    %104 = arith.addf %97, %103 : vector<32x128xf32>
    %c14 = arith.constant 14 : index
    %c0_105 = arith.constant 0 : index
    %c0_106 = arith.constant 0 : index
    %105 = vector.load %arg4[%c14, %c0_105, %c0_106] : memref<16x32x128xf32, #tpu.memory_space<vmem>>, vector<1x32x128xf32>
    %106 = vector.shape_cast %105 : vector<1x32x128xf32> to vector<32x128xf32>
    %cst_107 = arith.constant dense<0.000000e+00> : vector<32x128xf32>
    %107 = tpu.matmul %106, %7, %cst_107 {dimension_numbers = #tpu.dot_dimension_numbers<[1], [0], [0], [1], [0, 0, 1, 1], [], []>} : vector<32x128xf32>, vector<128x128xf32>, vector<32x128xf32> -> vector<32x128xf32>
    %c14_108 = arith.constant 14 : index
    %c0_109 = arith.constant 0 : index
    %c0_110 = arith.constant 0 : index
    %108 = vector.load %arg5[%c14_108, %c0_109, %c0_110] : memref<16x128x128xf32, #tpu.memory_space<vmem>>, vector<1x128x128xf32>
    %109 = vector.shape_cast %108 : vector<1x128x128xf32> to vector<128x128xf32>
    %cst_111 = arith.constant dense<0.000000e+00> : vector<32x128xf32>
    %110 = tpu.matmul %107, %109, %cst_111 {dimension_numbers = #tpu.dot_dimension_numbers<[1], [0], [0], [1], [0, 0, 1, 1], [], []>} : vector<32x128xf32>, vector<128x128xf32>, vector<32x128xf32> -> vector<32x128xf32>
    %111 = arith.addf %104, %110 : vector<32x128xf32>
    %c15 = arith.constant 15 : index
    %c0_112 = arith.constant 0 : index
    %c0_113 = arith.constant 0 : index
    %112 = vector.load %arg4[%c15, %c0_112, %c0_113] : memref<16x32x128xf32, #tpu.memory_space<vmem>>, vector<1x32x128xf32>
    %113 = vector.shape_cast %112 : vector<1x32x128xf32> to vector<32x128xf32>
    %cst_114 = arith.constant dense<0.000000e+00> : vector<32x128xf32>
    %114 = tpu.matmul %113, %7, %cst_114 {dimension_numbers = #tpu.dot_dimension_numbers<[1], [0], [0], [1], [0, 0, 1, 1], [], []>} : vector<32x128xf32>, vector<128x128xf32>, vector<32x128xf32> -> vector<32x128xf32>
    %c15_115 = arith.constant 15 : index
    %c0_116 = arith.constant 0 : index
    %c0_117 = arith.constant 0 : index
    %115 = vector.load %arg5[%c15_115, %c0_116, %c0_117] : memref<16x128x128xf32, #tpu.memory_space<vmem>>, vector<1x128x128xf32>
    %116 = vector.shape_cast %115 : vector<1x128x128xf32> to vector<128x128xf32>
    %cst_118 = arith.constant dense<0.000000e+00> : vector<32x128xf32>
    %117 = tpu.matmul %114, %116, %cst_118 {dimension_numbers = #tpu.dot_dimension_numbers<[1], [0], [0], [1], [0, 0, 1, 1], [], []>} : vector<32x128xf32>, vector<128x128xf32>, vector<32x128xf32> -> vector<32x128xf32>
    %118 = arith.addf %111, %117 : vector<32x128xf32>
    %c1_119 = arith.constant 1 : index
    %c0_120 = arith.constant 0 : index
    %119 = vector.load %arg3[%c1_119, %c0_120] : memref<8x128xf32, #tpu.memory_space<vmem>>, vector<1x128xf32>
    %120 = vector.broadcast %119 : vector<1x128xf32> to vector<32x128xf32>
    %121 = arith.addf %118, %120 : vector<32x128xf32>
    %cst_121 = arith.constant 0.000000e+00 : f32
    %122 = vector.broadcast %cst_121 : f32 to vector<32x128xf32>
    %123 = arith.maximumf %121, %122 : vector<32x128xf32>
    %c0_122 = arith.constant 0 : index
    %c0_123 = arith.constant 0 : index
    %c0_124 = arith.constant 0 : index
    %124 = vector.load %arg6[%c0_122, %c0_123, %c0_124] : memref<9x32x32xf32, #tpu.memory_space<vmem>>, vector<1x32x32xf32>
    %125 = vector.shape_cast %124 : vector<1x32x32xf32> to vector<32x32xf32>
    %cst_125 = arith.constant dense<0.000000e+00> : vector<32x128xf32>
    %126 = tpu.matmul %125, %123, %cst_125 {dimension_numbers = #tpu.dot_dimension_numbers<[1], [0], [0], [1], [0, 0, 1, 1], [], []>} : vector<32x32xf32>, vector<32x128xf32>, vector<32x128xf32> -> vector<32x128xf32>
    %c0_126 = arith.constant 0 : index
    %c0_127 = arith.constant 0 : index
    %c0_128 = arith.constant 0 : index
    %127 = vector.load %arg7[%c0_126, %c0_127, %c0_128] : memref<9x128x128xf32, #tpu.memory_space<vmem>>, vector<1x128x128xf32>
    %128 = vector.shape_cast %127 : vector<1x128x128xf32> to vector<128x128xf32>
    %cst_129 = arith.constant dense<0.000000e+00> : vector<32x128xf32>
    %129 = tpu.matmul %126, %128, %cst_129 {dimension_numbers = #tpu.dot_dimension_numbers<[1], [0], [0], [1], [0, 0, 1, 1], [], []>} : vector<32x128xf32>, vector<128x128xf32>, vector<32x128xf32> -> vector<32x128xf32>
    %c1_130 = arith.constant 1 : index
    %c0_131 = arith.constant 0 : index
    %c0_132 = arith.constant 0 : index
    %130 = vector.load %arg6[%c1_130, %c0_131, %c0_132] : memref<9x32x32xf32, #tpu.memory_space<vmem>>, vector<1x32x32xf32>
    %131 = vector.shape_cast %130 : vector<1x32x32xf32> to vector<32x32xf32>
    %cst_133 = arith.constant dense<0.000000e+00> : vector<32x128xf32>
    %132 = tpu.matmul %131, %123, %cst_133 {dimension_numbers = #tpu.dot_dimension_numbers<[1], [0], [0], [1], [0, 0, 1, 1], [], []>} : vector<32x32xf32>, vector<32x128xf32>, vector<32x128xf32> -> vector<32x128xf32>
    %c1_134 = arith.constant 1 : index
    %c0_135 = arith.constant 0 : index
    %c0_136 = arith.constant 0 : index
    %133 = vector.load %arg7[%c1_134, %c0_135, %c0_136] : memref<9x128x128xf32, #tpu.memory_space<vmem>>, vector<1x128x128xf32>
    %134 = vector.shape_cast %133 : vector<1x128x128xf32> to vector<128x128xf32>
    %cst_137 = arith.constant dense<0.000000e+00> : vector<32x128xf32>
    %135 = tpu.matmul %132, %134, %cst_137 {dimension_numbers = #tpu.dot_dimension_numbers<[1], [0], [0], [1], [0, 0, 1, 1], [], []>} : vector<32x128xf32>, vector<128x128xf32>, vector<32x128xf32> -> vector<32x128xf32>
    %136 = arith.addf %129, %135 : vector<32x128xf32>
    %c2_138 = arith.constant 2 : index
    %c0_139 = arith.constant 0 : index
    %c0_140 = arith.constant 0 : index
    %137 = vector.load %arg6[%c2_138, %c0_139, %c0_140] : memref<9x32x32xf32, #tpu.memory_space<vmem>>, vector<1x32x32xf32>
    %138 = vector.shape_cast %137 : vector<1x32x32xf32> to vector<32x32xf32>
    %cst_141 = arith.constant dense<0.000000e+00> : vector<32x128xf32>
    %139 = tpu.matmul %138, %123, %cst_141 {dimension_numbers = #tpu.dot_dimension_numbers<[1], [0], [0], [1], [0, 0, 1, 1], [], []>} : vector<32x32xf32>, vector<32x128xf32>, vector<32x128xf32> -> vector<32x128xf32>
    %c2_142 = arith.constant 2 : index
    %c0_143 = arith.constant 0 : index
    %c0_144 = arith.constant 0 : index
    %140 = vector.load %arg7[%c2_142, %c0_143, %c0_144] : memref<9x128x128xf32, #tpu.memory_space<vmem>>, vector<1x128x128xf32>
    %141 = vector.shape_cast %140 : vector<1x128x128xf32> to vector<128x128xf32>
    %cst_145 = arith.constant dense<0.000000e+00> : vector<32x128xf32>
    %142 = tpu.matmul %139, %141, %cst_145 {dimension_numbers = #tpu.dot_dimension_numbers<[1], [0], [0], [1], [0, 0, 1, 1], [], []>} : vector<32x128xf32>, vector<128x128xf32>, vector<32x128xf32> -> vector<32x128xf32>
    %143 = arith.addf %136, %142 : vector<32x128xf32>
    %c3_146 = arith.constant 3 : index
    %c0_147 = arith.constant 0 : index
    %c0_148 = arith.constant 0 : index
    %144 = vector.load %arg6[%c3_146, %c0_147, %c0_148] : memref<9x32x32xf32, #tpu.memory_space<vmem>>, vector<1x32x32xf32>
    %145 = vector.shape_cast %144 : vector<1x32x32xf32> to vector<32x32xf32>
    %cst_149 = arith.constant dense<0.000000e+00> : vector<32x128xf32>
    %146 = tpu.matmul %145, %123, %cst_149 {dimension_numbers = #tpu.dot_dimension_numbers<[1], [0], [0], [1], [0, 0, 1, 1], [], []>} : vector<32x32xf32>, vector<32x128xf32>, vector<32x128xf32> -> vector<32x128xf32>
    %c3_150 = arith.constant 3 : index
    %c0_151 = arith.constant 0 : index
    %c0_152 = arith.constant 0 : index
    %147 = vector.load %arg7[%c3_150, %c0_151, %c0_152] : memref<9x128x128xf32, #tpu.memory_space<vmem>>, vector<1x128x128xf32>
    %148 = vector.shape_cast %147 : vector<1x128x128xf32> to vector<128x128xf32>
    %cst_153 = arith.constant dense<0.000000e+00> : vector<32x128xf32>
    %149 = tpu.matmul %146, %148, %cst_153 {dimension_numbers = #tpu.dot_dimension_numbers<[1], [0], [0], [1], [0, 0, 1, 1], [], []>} : vector<32x128xf32>, vector<128x128xf32>, vector<32x128xf32> -> vector<32x128xf32>
    %150 = arith.addf %143, %149 : vector<32x128xf32>
    %c4_154 = arith.constant 4 : index
    %c0_155 = arith.constant 0 : index
    %c0_156 = arith.constant 0 : index
    %151 = vector.load %arg6[%c4_154, %c0_155, %c0_156] : memref<9x32x32xf32, #tpu.memory_space<vmem>>, vector<1x32x32xf32>
    %152 = vector.shape_cast %151 : vector<1x32x32xf32> to vector<32x32xf32>
    %cst_157 = arith.constant dense<0.000000e+00> : vector<32x128xf32>
    %153 = tpu.matmul %152, %123, %cst_157 {dimension_numbers = #tpu.dot_dimension_numbers<[1], [0], [0], [1], [0, 0, 1, 1], [], []>} : vector<32x32xf32>, vector<32x128xf32>, vector<32x128xf32> -> vector<32x128xf32>
    %c4_158 = arith.constant 4 : index
    %c0_159 = arith.constant 0 : index
    %c0_160 = arith.constant 0 : index
    %154 = vector.load %arg7[%c4_158, %c0_159, %c0_160] : memref<9x128x128xf32, #tpu.memory_space<vmem>>, vector<1x128x128xf32>
    %155 = vector.shape_cast %154 : vector<1x128x128xf32> to vector<128x128xf32>
    %cst_161 = arith.constant dense<0.000000e+00> : vector<32x128xf32>
    %156 = tpu.matmul %153, %155, %cst_161 {dimension_numbers = #tpu.dot_dimension_numbers<[1], [0], [0], [1], [0, 0, 1, 1], [], []>} : vector<32x128xf32>, vector<128x128xf32>, vector<32x128xf32> -> vector<32x128xf32>
    %157 = arith.addf %150, %156 : vector<32x128xf32>
    %c5_162 = arith.constant 5 : index
    %c0_163 = arith.constant 0 : index
    %c0_164 = arith.constant 0 : index
    %158 = vector.load %arg6[%c5_162, %c0_163, %c0_164] : memref<9x32x32xf32, #tpu.memory_space<vmem>>, vector<1x32x32xf32>
    %159 = vector.shape_cast %158 : vector<1x32x32xf32> to vector<32x32xf32>
    %cst_165 = arith.constant dense<0.000000e+00> : vector<32x128xf32>
    %160 = tpu.matmul %159, %123, %cst_165 {dimension_numbers = #tpu.dot_dimension_numbers<[1], [0], [0], [1], [0, 0, 1, 1], [], []>} : vector<32x32xf32>, vector<32x128xf32>, vector<32x128xf32> -> vector<32x128xf32>
    %c5_166 = arith.constant 5 : index
    %c0_167 = arith.constant 0 : index
    %c0_168 = arith.constant 0 : index
    %161 = vector.load %arg7[%c5_166, %c0_167, %c0_168] : memref<9x128x128xf32, #tpu.memory_space<vmem>>, vector<1x128x128xf32>
    %162 = vector.shape_cast %161 : vector<1x128x128xf32> to vector<128x128xf32>
    %cst_169 = arith.constant dense<0.000000e+00> : vector<32x128xf32>
    %163 = tpu.matmul %160, %162, %cst_169 {dimension_numbers = #tpu.dot_dimension_numbers<[1], [0], [0], [1], [0, 0, 1, 1], [], []>} : vector<32x128xf32>, vector<128x128xf32>, vector<32x128xf32> -> vector<32x128xf32>
    %164 = arith.addf %157, %163 : vector<32x128xf32>
    %c6_170 = arith.constant 6 : index
    %c0_171 = arith.constant 0 : index
    %c0_172 = arith.constant 0 : index
    %165 = vector.load %arg6[%c6_170, %c0_171, %c0_172] : memref<9x32x32xf32, #tpu.memory_space<vmem>>, vector<1x32x32xf32>
    %166 = vector.shape_cast %165 : vector<1x32x32xf32> to vector<32x32xf32>
    %cst_173 = arith.constant dense<0.000000e+00> : vector<32x128xf32>
    %167 = tpu.matmul %166, %123, %cst_173 {dimension_numbers = #tpu.dot_dimension_numbers<[1], [0], [0], [1], [0, 0, 1, 1], [], []>} : vector<32x32xf32>, vector<32x128xf32>, vector<32x128xf32> -> vector<32x128xf32>
    %c6_174 = arith.constant 6 : index
    %c0_175 = arith.constant 0 : index
    %c0_176 = arith.constant 0 : index
    %168 = vector.load %arg7[%c6_174, %c0_175, %c0_176] : memref<9x128x128xf32, #tpu.memory_space<vmem>>, vector<1x128x128xf32>
    %169 = vector.shape_cast %168 : vector<1x128x128xf32> to vector<128x128xf32>
    %cst_177 = arith.constant dense<0.000000e+00> : vector<32x128xf32>
    %170 = tpu.matmul %167, %169, %cst_177 {dimension_numbers = #tpu.dot_dimension_numbers<[1], [0], [0], [1], [0, 0, 1, 1], [], []>} : vector<32x128xf32>, vector<128x128xf32>, vector<32x128xf32> -> vector<32x128xf32>
    %171 = arith.addf %164, %170 : vector<32x128xf32>
    %c7_178 = arith.constant 7 : index
    %c0_179 = arith.constant 0 : index
    %c0_180 = arith.constant 0 : index
    %172 = vector.load %arg6[%c7_178, %c0_179, %c0_180] : memref<9x32x32xf32, #tpu.memory_space<vmem>>, vector<1x32x32xf32>
    %173 = vector.shape_cast %172 : vector<1x32x32xf32> to vector<32x32xf32>
    %cst_181 = arith.constant dense<0.000000e+00> : vector<32x128xf32>
    %174 = tpu.matmul %173, %123, %cst_181 {dimension_numbers = #tpu.dot_dimension_numbers<[1], [0], [0], [1], [0, 0, 1, 1], [], []>} : vector<32x32xf32>, vector<32x128xf32>, vector<32x128xf32> -> vector<32x128xf32>
    %c7_182 = arith.constant 7 : index
    %c0_183 = arith.constant 0 : index
    %c0_184 = arith.constant 0 : index
    %175 = vector.load %arg7[%c7_182, %c0_183, %c0_184] : memref<9x128x128xf32, #tpu.memory_space<vmem>>, vector<1x128x128xf32>
    %176 = vector.shape_cast %175 : vector<1x128x128xf32> to vector<128x128xf32>
    %cst_185 = arith.constant dense<0.000000e+00> : vector<32x128xf32>
    %177 = tpu.matmul %174, %176, %cst_185 {dimension_numbers = #tpu.dot_dimension_numbers<[1], [0], [0], [1], [0, 0, 1, 1], [], []>} : vector<32x128xf32>, vector<128x128xf32>, vector<32x128xf32> -> vector<32x128xf32>
    %178 = arith.addf %171, %177 : vector<32x128xf32>
    %c8_186 = arith.constant 8 : index
    %c0_187 = arith.constant 0 : index
    %c0_188 = arith.constant 0 : index
    %179 = vector.load %arg6[%c8_186, %c0_187, %c0_188] : memref<9x32x32xf32, #tpu.memory_space<vmem>>, vector<1x32x32xf32>
    %180 = vector.shape_cast %179 : vector<1x32x32xf32> to vector<32x32xf32>
    %cst_189 = arith.constant dense<0.000000e+00> : vector<32x128xf32>
    %181 = tpu.matmul %180, %123, %cst_189 {dimension_numbers = #tpu.dot_dimension_numbers<[1], [0], [0], [1], [0, 0, 1, 1], [], []>} : vector<32x32xf32>, vector<32x128xf32>, vector<32x128xf32> -> vector<32x128xf32>
    %c8_190 = arith.constant 8 : index
    %c0_191 = arith.constant 0 : index
    %c0_192 = arith.constant 0 : index
    %182 = vector.load %arg7[%c8_190, %c0_191, %c0_192] : memref<9x128x128xf32, #tpu.memory_space<vmem>>, vector<1x128x128xf32>
    %183 = vector.shape_cast %182 : vector<1x128x128xf32> to vector<128x128xf32>
    %cst_193 = arith.constant dense<0.000000e+00> : vector<32x128xf32>
    %184 = tpu.matmul %181, %183, %cst_193 {dimension_numbers = #tpu.dot_dimension_numbers<[1], [0], [0], [1], [0, 0, 1, 1], [], []>} : vector<32x128xf32>, vector<128x128xf32>, vector<32x128xf32> -> vector<32x128xf32>
    %185 = arith.addf %178, %184 : vector<32x128xf32>
    %c2_194 = arith.constant 2 : index
    %c0_195 = arith.constant 0 : index
    %186 = vector.load %arg3[%c2_194, %c0_195] : memref<8x128xf32, #tpu.memory_space<vmem>>, vector<1x128xf32>
    %187 = vector.broadcast %186 : vector<1x128xf32> to vector<32x128xf32>
    %188 = arith.addf %185, %187 : vector<32x128xf32>
    %cst_196 = arith.constant 0.000000e+00 : f32
    %189 = vector.broadcast %cst_196 : f32 to vector<32x128xf32>
    %190 = arith.maximumf %188, %189 : vector<32x128xf32>
    %c0_197 = arith.constant 0 : index
    %c0_198 = arith.constant 0 : index
    %c0_199 = arith.constant 0 : index
    %191 = vector.load %arg6[%c0_197, %c0_198, %c0_199] : memref<9x32x32xf32, #tpu.memory_space<vmem>>, vector<1x32x32xf32>
    %192 = vector.shape_cast %191 : vector<1x32x32xf32> to vector<32x32xf32>
    %cst_200 = arith.constant dense<0.000000e+00> : vector<32x128xf32>
    %193 = tpu.matmul %192, %190, %cst_200 {dimension_numbers = #tpu.dot_dimension_numbers<[1], [0], [0], [1], [0, 0, 1, 1], [], []>} : vector<32x32xf32>, vector<32x128xf32>, vector<32x128xf32> -> vector<32x128xf32>
    %c0_201 = arith.constant 0 : index
    %c0_202 = arith.constant 0 : index
    %c0_203 = arith.constant 0 : index
    %194 = vector.load %arg8[%c0_201, %c0_202, %c0_203] : memref<9x128x128xf32, #tpu.memory_space<vmem>>, vector<1x128x128xf32>
    %195 = vector.shape_cast %194 : vector<1x128x128xf32> to vector<128x128xf32>
    %cst_204 = arith.constant dense<0.000000e+00> : vector<32x128xf32>
    %196 = tpu.matmul %193, %195, %cst_204 {dimension_numbers = #tpu.dot_dimension_numbers<[1], [0], [0], [1], [0, 0, 1, 1], [], []>} : vector<32x128xf32>, vector<128x128xf32>, vector<32x128xf32> -> vector<32x128xf32>
    %c1_205 = arith.constant 1 : index
    %c0_206 = arith.constant 0 : index
    %c0_207 = arith.constant 0 : index
    %197 = vector.load %arg6[%c1_205, %c0_206, %c0_207] : memref<9x32x32xf32, #tpu.memory_space<vmem>>, vector<1x32x32xf32>
    %198 = vector.shape_cast %197 : vector<1x32x32xf32> to vector<32x32xf32>
    %cst_208 = arith.constant dense<0.000000e+00> : vector<32x128xf32>
    %199 = tpu.matmul %198, %190, %cst_208 {dimension_numbers = #tpu.dot_dimension_numbers<[1], [0], [0], [1], [0, 0, 1, 1], [], []>} : vector<32x32xf32>, vector<32x128xf32>, vector<32x128xf32> -> vector<32x128xf32>
    %c1_209 = arith.constant 1 : index
    %c0_210 = arith.constant 0 : index
    %c0_211 = arith.constant 0 : index
    %200 = vector.load %arg8[%c1_209, %c0_210, %c0_211] : memref<9x128x128xf32, #tpu.memory_space<vmem>>, vector<1x128x128xf32>
    %201 = vector.shape_cast %200 : vector<1x128x128xf32> to vector<128x128xf32>
    %cst_212 = arith.constant dense<0.000000e+00> : vector<32x128xf32>
    %202 = tpu.matmul %199, %201, %cst_212 {dimension_numbers = #tpu.dot_dimension_numbers<[1], [0], [0], [1], [0, 0, 1, 1], [], []>} : vector<32x128xf32>, vector<128x128xf32>, vector<32x128xf32> -> vector<32x128xf32>
    %203 = arith.addf %196, %202 : vector<32x128xf32>
    %c2_213 = arith.constant 2 : index
    %c0_214 = arith.constant 0 : index
    %c0_215 = arith.constant 0 : index
    %204 = vector.load %arg6[%c2_213, %c0_214, %c0_215] : memref<9x32x32xf32, #tpu.memory_space<vmem>>, vector<1x32x32xf32>
    %205 = vector.shape_cast %204 : vector<1x32x32xf32> to vector<32x32xf32>
    %cst_216 = arith.constant dense<0.000000e+00> : vector<32x128xf32>
    %206 = tpu.matmul %205, %190, %cst_216 {dimension_numbers = #tpu.dot_dimension_numbers<[1], [0], [0], [1], [0, 0, 1, 1], [], []>} : vector<32x32xf32>, vector<32x128xf32>, vector<32x128xf32> -> vector<32x128xf32>
    %c2_217 = arith.constant 2 : index
    %c0_218 = arith.constant 0 : index
    %c0_219 = arith.constant 0 : index
    %207 = vector.load %arg8[%c2_217, %c0_218, %c0_219] : memref<9x128x128xf32, #tpu.memory_space<vmem>>, vector<1x128x128xf32>
    %208 = vector.shape_cast %207 : vector<1x128x128xf32> to vector<128x128xf32>
    %cst_220 = arith.constant dense<0.000000e+00> : vector<32x128xf32>
    %209 = tpu.matmul %206, %208, %cst_220 {dimension_numbers = #tpu.dot_dimension_numbers<[1], [0], [0], [1], [0, 0, 1, 1], [], []>} : vector<32x128xf32>, vector<128x128xf32>, vector<32x128xf32> -> vector<32x128xf32>
    %210 = arith.addf %203, %209 : vector<32x128xf32>
    %c3_221 = arith.constant 3 : index
    %c0_222 = arith.constant 0 : index
    %c0_223 = arith.constant 0 : index
    %211 = vector.load %arg6[%c3_221, %c0_222, %c0_223] : memref<9x32x32xf32, #tpu.memory_space<vmem>>, vector<1x32x32xf32>
    %212 = vector.shape_cast %211 : vector<1x32x32xf32> to vector<32x32xf32>
    %cst_224 = arith.constant dense<0.000000e+00> : vector<32x128xf32>
    %213 = tpu.matmul %212, %190, %cst_224 {dimension_numbers = #tpu.dot_dimension_numbers<[1], [0], [0], [1], [0, 0, 1, 1], [], []>} : vector<32x32xf32>, vector<32x128xf32>, vector<32x128xf32> -> vector<32x128xf32>
    %c3_225 = arith.constant 3 : index
    %c0_226 = arith.constant 0 : index
    %c0_227 = arith.constant 0 : index
    %214 = vector.load %arg8[%c3_225, %c0_226, %c0_227] : memref<9x128x128xf32, #tpu.memory_space<vmem>>, vector<1x128x128xf32>
    %215 = vector.shape_cast %214 : vector<1x128x128xf32> to vector<128x128xf32>
    %cst_228 = arith.constant dense<0.000000e+00> : vector<32x128xf32>
    %216 = tpu.matmul %213, %215, %cst_228 {dimension_numbers = #tpu.dot_dimension_numbers<[1], [0], [0], [1], [0, 0, 1, 1], [], []>} : vector<32x128xf32>, vector<128x128xf32>, vector<32x128xf32> -> vector<32x128xf32>
    %217 = arith.addf %210, %216 : vector<32x128xf32>
    %c4_229 = arith.constant 4 : index
    %c0_230 = arith.constant 0 : index
    %c0_231 = arith.constant 0 : index
    %218 = vector.load %arg6[%c4_229, %c0_230, %c0_231] : memref<9x32x32xf32, #tpu.memory_space<vmem>>, vector<1x32x32xf32>
    %219 = vector.shape_cast %218 : vector<1x32x32xf32> to vector<32x32xf32>
    %cst_232 = arith.constant dense<0.000000e+00> : vector<32x128xf32>
    %220 = tpu.matmul %219, %190, %cst_232 {dimension_numbers = #tpu.dot_dimension_numbers<[1], [0], [0], [1], [0, 0, 1, 1], [], []>} : vector<32x32xf32>, vector<32x128xf32>, vector<32x128xf32> -> vector<32x128xf32>
    %c4_233 = arith.constant 4 : index
    %c0_234 = arith.constant 0 : index
    %c0_235 = arith.constant 0 : index
    %221 = vector.load %arg8[%c4_233, %c0_234, %c0_235] : memref<9x128x128xf32, #tpu.memory_space<vmem>>, vector<1x128x128xf32>
    %222 = vector.shape_cast %221 : vector<1x128x128xf32> to vector<128x128xf32>
    %cst_236 = arith.constant dense<0.000000e+00> : vector<32x128xf32>
    %223 = tpu.matmul %220, %222, %cst_236 {dimension_numbers = #tpu.dot_dimension_numbers<[1], [0], [0], [1], [0, 0, 1, 1], [], []>} : vector<32x128xf32>, vector<128x128xf32>, vector<32x128xf32> -> vector<32x128xf32>
    %224 = arith.addf %217, %223 : vector<32x128xf32>
    %c5_237 = arith.constant 5 : index
    %c0_238 = arith.constant 0 : index
    %c0_239 = arith.constant 0 : index
    %225 = vector.load %arg6[%c5_237, %c0_238, %c0_239] : memref<9x32x32xf32, #tpu.memory_space<vmem>>, vector<1x32x32xf32>
    %226 = vector.shape_cast %225 : vector<1x32x32xf32> to vector<32x32xf32>
    %cst_240 = arith.constant dense<0.000000e+00> : vector<32x128xf32>
    %227 = tpu.matmul %226, %190, %cst_240 {dimension_numbers = #tpu.dot_dimension_numbers<[1], [0], [0], [1], [0, 0, 1, 1], [], []>} : vector<32x32xf32>, vector<32x128xf32>, vector<32x128xf32> -> vector<32x128xf32>
    %c5_241 = arith.constant 5 : index
    %c0_242 = arith.constant 0 : index
    %c0_243 = arith.constant 0 : index
    %228 = vector.load %arg8[%c5_241, %c0_242, %c0_243] : memref<9x128x128xf32, #tpu.memory_space<vmem>>, vector<1x128x128xf32>
    %229 = vector.shape_cast %228 : vector<1x128x128xf32> to vector<128x128xf32>
    %cst_244 = arith.constant dense<0.000000e+00> : vector<32x128xf32>
    %230 = tpu.matmul %227, %229, %cst_244 {dimension_numbers = #tpu.dot_dimension_numbers<[1], [0], [0], [1], [0, 0, 1, 1], [], []>} : vector<32x128xf32>, vector<128x128xf32>, vector<32x128xf32> -> vector<32x128xf32>
    %231 = arith.addf %224, %230 : vector<32x128xf32>
    %c6_245 = arith.constant 6 : index
    %c0_246 = arith.constant 0 : index
    %c0_247 = arith.constant 0 : index
    %232 = vector.load %arg6[%c6_245, %c0_246, %c0_247] : memref<9x32x32xf32, #tpu.memory_space<vmem>>, vector<1x32x32xf32>
    %233 = vector.shape_cast %232 : vector<1x32x32xf32> to vector<32x32xf32>
    %cst_248 = arith.constant dense<0.000000e+00> : vector<32x128xf32>
    %234 = tpu.matmul %233, %190, %cst_248 {dimension_numbers = #tpu.dot_dimension_numbers<[1], [0], [0], [1], [0, 0, 1, 1], [], []>} : vector<32x32xf32>, vector<32x128xf32>, vector<32x128xf32> -> vector<32x128xf32>
    %c6_249 = arith.constant 6 : index
    %c0_250 = arith.constant 0 : index
    %c0_251 = arith.constant 0 : index
    %235 = vector.load %arg8[%c6_249, %c0_250, %c0_251] : memref<9x128x128xf32, #tpu.memory_space<vmem>>, vector<1x128x128xf32>
    %236 = vector.shape_cast %235 : vector<1x128x128xf32> to vector<128x128xf32>
    %cst_252 = arith.constant dense<0.000000e+00> : vector<32x128xf32>
    %237 = tpu.matmul %234, %236, %cst_252 {dimension_numbers = #tpu.dot_dimension_numbers<[1], [0], [0], [1], [0, 0, 1, 1], [], []>} : vector<32x128xf32>, vector<128x128xf32>, vector<32x128xf32> -> vector<32x128xf32>
    %238 = arith.addf %231, %237 : vector<32x128xf32>
    %c7_253 = arith.constant 7 : index
    %c0_254 = arith.constant 0 : index
    %c0_255 = arith.constant 0 : index
    %239 = vector.load %arg6[%c7_253, %c0_254, %c0_255] : memref<9x32x32xf32, #tpu.memory_space<vmem>>, vector<1x32x32xf32>
    %240 = vector.shape_cast %239 : vector<1x32x32xf32> to vector<32x32xf32>
    %cst_256 = arith.constant dense<0.000000e+00> : vector<32x128xf32>
    %241 = tpu.matmul %240, %190, %cst_256 {dimension_numbers = #tpu.dot_dimension_numbers<[1], [0], [0], [1], [0, 0, 1, 1], [], []>} : vector<32x32xf32>, vector<32x128xf32>, vector<32x128xf32> -> vector<32x128xf32>
    %c7_257 = arith.constant 7 : index
    %c0_258 = arith.constant 0 : index
    %c0_259 = arith.constant 0 : index
    %242 = vector.load %arg8[%c7_257, %c0_258, %c0_259] : memref<9x128x128xf32, #tpu.memory_space<vmem>>, vector<1x128x128xf32>
    %243 = vector.shape_cast %242 : vector<1x128x128xf32> to vector<128x128xf32>
    %cst_260 = arith.constant dense<0.000000e+00> : vector<32x128xf32>
    %244 = tpu.matmul %241, %243, %cst_260 {dimension_numbers = #tpu.dot_dimension_numbers<[1], [0], [0], [1], [0, 0, 1, 1], [], []>} : vector<32x128xf32>, vector<128x128xf32>, vector<32x128xf32> -> vector<32x128xf32>
    %245 = arith.addf %238, %244 : vector<32x128xf32>
    %c8_261 = arith.constant 8 : index
    %c0_262 = arith.constant 0 : index
    %c0_263 = arith.constant 0 : index
    %246 = vector.load %arg6[%c8_261, %c0_262, %c0_263] : memref<9x32x32xf32, #tpu.memory_space<vmem>>, vector<1x32x32xf32>
    %247 = vector.shape_cast %246 : vector<1x32x32xf32> to vector<32x32xf32>
    %cst_264 = arith.constant dense<0.000000e+00> : vector<32x128xf32>
    %248 = tpu.matmul %247, %190, %cst_264 {dimension_numbers = #tpu.dot_dimension_numbers<[1], [0], [0], [1], [0, 0, 1, 1], [], []>} : vector<32x32xf32>, vector<32x128xf32>, vector<32x128xf32> -> vector<32x128xf32>
    %c8_265 = arith.constant 8 : index
    %c0_266 = arith.constant 0 : index
    %c0_267 = arith.constant 0 : index
    %249 = vector.load %arg8[%c8_265, %c0_266, %c0_267] : memref<9x128x128xf32, #tpu.memory_space<vmem>>, vector<1x128x128xf32>
    %250 = vector.shape_cast %249 : vector<1x128x128xf32> to vector<128x128xf32>
    %cst_268 = arith.constant dense<0.000000e+00> : vector<32x128xf32>
    %251 = tpu.matmul %248, %250, %cst_268 {dimension_numbers = #tpu.dot_dimension_numbers<[1], [0], [0], [1], [0, 0, 1, 1], [], []>} : vector<32x128xf32>, vector<128x128xf32>, vector<32x128xf32> -> vector<32x128xf32>
    %252 = arith.addf %245, %251 : vector<32x128xf32>
    %c3_269 = arith.constant 3 : index
    %c0_270 = arith.constant 0 : index
    %253 = vector.load %arg3[%c3_269, %c0_270] : memref<8x128xf32, #tpu.memory_space<vmem>>, vector<1x128xf32>
    %254 = vector.broadcast %253 : vector<1x128xf32> to vector<32x128xf32>
    %255 = arith.addf %252, %254 : vector<32x128xf32>
    %cst_271 = arith.constant 0.000000e+00 : f32
    %256 = vector.broadcast %cst_271 : f32 to vector<32x128xf32>
    %257 = arith.maximumf %255, %256 : vector<32x128xf32>
    %c0_272 = arith.constant 0 : index
    %c0_273 = arith.constant 0 : index
    %258 = vector.load %arg9[%c0_272, %c0_273] : memref<128x128xf32, #tpu.memory_space<vmem>>, vector<128x128xf32>
    %cst_274 = arith.constant dense<0.000000e+00> : vector<32x128xf32>
    %259 = tpu.matmul %257, %258, %cst_274 {dimension_numbers = #tpu.dot_dimension_numbers<[1], [0], [0], [1], [0, 0, 1, 1], [], []>} : vector<32x128xf32>, vector<128x128xf32>, vector<32x128xf32> -> vector<32x128xf32>
    %c4_275 = arith.constant 4 : index
    %c0_276 = arith.constant 0 : index
    %260 = vector.load %arg3[%c4_275, %c0_276] : memref<8x128xf32, #tpu.memory_space<vmem>>, vector<1x128xf32>
    %261 = vector.broadcast %260 : vector<1x128xf32> to vector<32x128xf32>
    %262 = arith.addf %259, %261 : vector<32x128xf32>
    %263 = arith.addf %262, %188 : vector<32x128xf32>
    %cst_277 = arith.constant 0.000000e+00 : f32
    %264 = vector.broadcast %cst_277 : f32 to vector<32x128xf32>
    %265 = arith.maximumf %263, %264 : vector<32x128xf32>
    %c0_278 = arith.constant 0 : index
    %c0_279 = arith.constant 0 : index
    %c0_280 = arith.constant 0 : index
    %266 = vector.load %arg6[%c0_278, %c0_279, %c0_280] : memref<9x32x32xf32, #tpu.memory_space<vmem>>, vector<1x32x32xf32>
    %267 = vector.shape_cast %266 : vector<1x32x32xf32> to vector<32x32xf32>
    %cst_281 = arith.constant dense<0.000000e+00> : vector<32x128xf32>
    %268 = tpu.matmul %267, %265, %cst_281 {dimension_numbers = #tpu.dot_dimension_numbers<[1], [0], [0], [1], [0, 0, 1, 1], [], []>} : vector<32x32xf32>, vector<32x128xf32>, vector<32x128xf32> -> vector<32x128xf32>
    %c0_282 = arith.constant 0 : index
    %c0_283 = arith.constant 0 : index
    %c0_284 = arith.constant 0 : index
    %269 = vector.load %arg10[%c0_282, %c0_283, %c0_284] : memref<9x128x128xf32, #tpu.memory_space<vmem>>, vector<1x128x128xf32>
    %270 = vector.shape_cast %269 : vector<1x128x128xf32> to vector<128x128xf32>
    %cst_285 = arith.constant dense<0.000000e+00> : vector<32x128xf32>
    %271 = tpu.matmul %268, %270, %cst_285 {dimension_numbers = #tpu.dot_dimension_numbers<[1], [0], [0], [1], [0, 0, 1, 1], [], []>} : vector<32x128xf32>, vector<128x128xf32>, vector<32x128xf32> -> vector<32x128xf32>
    %c1_286 = arith.constant 1 : index
    %c0_287 = arith.constant 0 : index
    %c0_288 = arith.constant 0 : index
    %272 = vector.load %arg6[%c1_286, %c0_287, %c0_288] : memref<9x32x32xf32, #tpu.memory_space<vmem>>, vector<1x32x32xf32>
    %273 = vector.shape_cast %272 : vector<1x32x32xf32> to vector<32x32xf32>
    %cst_289 = arith.constant dense<0.000000e+00> : vector<32x128xf32>
    %274 = tpu.matmul %273, %265, %cst_289 {dimension_numbers = #tpu.dot_dimension_numbers<[1], [0], [0], [1], [0, 0, 1, 1], [], []>} : vector<32x32xf32>, vector<32x128xf32>, vector<32x128xf32> -> vector<32x128xf32>
    %c1_290 = arith.constant 1 : index
    %c0_291 = arith.constant 0 : index
    %c0_292 = arith.constant 0 : index
    %275 = vector.load %arg10[%c1_290, %c0_291, %c0_292] : memref<9x128x128xf32, #tpu.memory_space<vmem>>, vector<1x128x128xf32>
    %276 = vector.shape_cast %275 : vector<1x128x128xf32> to vector<128x128xf32>
    %cst_293 = arith.constant dense<0.000000e+00> : vector<32x128xf32>
    %277 = tpu.matmul %274, %276, %cst_293 {dimension_numbers = #tpu.dot_dimension_numbers<[1], [0], [0], [1], [0, 0, 1, 1], [], []>} : vector<32x128xf32>, vector<128x128xf32>, vector<32x128xf32> -> vector<32x128xf32>
    %278 = arith.addf %271, %277 : vector<32x128xf32>
    %c2_294 = arith.constant 2 : index
    %c0_295 = arith.constant 0 : index
    %c0_296 = arith.constant 0 : index
    %279 = vector.load %arg6[%c2_294, %c0_295, %c0_296] : memref<9x32x32xf32, #tpu.memory_space<vmem>>, vector<1x32x32xf32>
    %280 = vector.shape_cast %279 : vector<1x32x32xf32> to vector<32x32xf32>
    %cst_297 = arith.constant dense<0.000000e+00> : vector<32x128xf32>
    %281 = tpu.matmul %280, %265, %cst_297 {dimension_numbers = #tpu.dot_dimension_numbers<[1], [0], [0], [1], [0, 0, 1, 1], [], []>} : vector<32x32xf32>, vector<32x128xf32>, vector<32x128xf32> -> vector<32x128xf32>
    %c2_298 = arith.constant 2 : index
    %c0_299 = arith.constant 0 : index
    %c0_300 = arith.constant 0 : index
    %282 = vector.load %arg10[%c2_298, %c0_299, %c0_300] : memref<9x128x128xf32, #tpu.memory_space<vmem>>, vector<1x128x128xf32>
    %283 = vector.shape_cast %282 : vector<1x128x128xf32> to vector<128x128xf32>
    %cst_301 = arith.constant dense<0.000000e+00> : vector<32x128xf32>
    %284 = tpu.matmul %281, %283, %cst_301 {dimension_numbers = #tpu.dot_dimension_numbers<[1], [0], [0], [1], [0, 0, 1, 1], [], []>} : vector<32x128xf32>, vector<128x128xf32>, vector<32x128xf32> -> vector<32x128xf32>
    %285 = arith.addf %278, %284 : vector<32x128xf32>
    %c3_302 = arith.constant 3 : index
    %c0_303 = arith.constant 0 : index
    %c0_304 = arith.constant 0 : index
    %286 = vector.load %arg6[%c3_302, %c0_303, %c0_304] : memref<9x32x32xf32, #tpu.memory_space<vmem>>, vector<1x32x32xf32>
    %287 = vector.shape_cast %286 : vector<1x32x32xf32> to vector<32x32xf32>
    %cst_305 = arith.constant dense<0.000000e+00> : vector<32x128xf32>
    %288 = tpu.matmul %287, %265, %cst_305 {dimension_numbers = #tpu.dot_dimension_numbers<[1], [0], [0], [1], [0, 0, 1, 1], [], []>} : vector<32x32xf32>, vector<32x128xf32>, vector<32x128xf32> -> vector<32x128xf32>
    %c3_306 = arith.constant 3 : index
    %c0_307 = arith.constant 0 : index
    %c0_308 = arith.constant 0 : index
    %289 = vector.load %arg10[%c3_306, %c0_307, %c0_308] : memref<9x128x128xf32, #tpu.memory_space<vmem>>, vector<1x128x128xf32>
    %290 = vector.shape_cast %289 : vector<1x128x128xf32> to vector<128x128xf32>
    %cst_309 = arith.constant dense<0.000000e+00> : vector<32x128xf32>
    %291 = tpu.matmul %288, %290, %cst_309 {dimension_numbers = #tpu.dot_dimension_numbers<[1], [0], [0], [1], [0, 0, 1, 1], [], []>} : vector<32x128xf32>, vector<128x128xf32>, vector<32x128xf32> -> vector<32x128xf32>
    %292 = arith.addf %285, %291 : vector<32x128xf32>
    %c4_310 = arith.constant 4 : index
    %c0_311 = arith.constant 0 : index
    %c0_312 = arith.constant 0 : index
    %293 = vector.load %arg6[%c4_310, %c0_311, %c0_312] : memref<9x32x32xf32, #tpu.memory_space<vmem>>, vector<1x32x32xf32>
    %294 = vector.shape_cast %293 : vector<1x32x32xf32> to vector<32x32xf32>
    %cst_313 = arith.constant dense<0.000000e+00> : vector<32x128xf32>
    %295 = tpu.matmul %294, %265, %cst_313 {dimension_numbers = #tpu.dot_dimension_numbers<[1], [0], [0], [1], [0, 0, 1, 1], [], []>} : vector<32x32xf32>, vector<32x128xf32>, vector<32x128xf32> -> vector<32x128xf32>
    %c4_314 = arith.constant 4 : index
    %c0_315 = arith.constant 0 : index
    %c0_316 = arith.constant 0 : index
    %296 = vector.load %arg10[%c4_314, %c0_315, %c0_316] : memref<9x128x128xf32, #tpu.memory_space<vmem>>, vector<1x128x128xf32>
    %297 = vector.shape_cast %296 : vector<1x128x128xf32> to vector<128x128xf32>
    %cst_317 = arith.constant dense<0.000000e+00> : vector<32x128xf32>
    %298 = tpu.matmul %295, %297, %cst_317 {dimension_numbers = #tpu.dot_dimension_numbers<[1], [0], [0], [1], [0, 0, 1, 1], [], []>} : vector<32x128xf32>, vector<128x128xf32>, vector<32x128xf32> -> vector<32x128xf32>
    %299 = arith.addf %292, %298 : vector<32x128xf32>
    %c5_318 = arith.constant 5 : index
    %c0_319 = arith.constant 0 : index
    %c0_320 = arith.constant 0 : index
    %300 = vector.load %arg6[%c5_318, %c0_319, %c0_320] : memref<9x32x32xf32, #tpu.memory_space<vmem>>, vector<1x32x32xf32>
    %301 = vector.shape_cast %300 : vector<1x32x32xf32> to vector<32x32xf32>
    %cst_321 = arith.constant dense<0.000000e+00> : vector<32x128xf32>
    %302 = tpu.matmul %301, %265, %cst_321 {dimension_numbers = #tpu.dot_dimension_numbers<[1], [0], [0], [1], [0, 0, 1, 1], [], []>} : vector<32x32xf32>, vector<32x128xf32>, vector<32x128xf32> -> vector<32x128xf32>
    %c5_322 = arith.constant 5 : index
    %c0_323 = arith.constant 0 : index
    %c0_324 = arith.constant 0 : index
    %303 = vector.load %arg10[%c5_322, %c0_323, %c0_324] : memref<9x128x128xf32, #tpu.memory_space<vmem>>, vector<1x128x128xf32>
    %304 = vector.shape_cast %303 : vector<1x128x128xf32> to vector<128x128xf32>
    %cst_325 = arith.constant dense<0.000000e+00> : vector<32x128xf32>
    %305 = tpu.matmul %302, %304, %cst_325 {dimension_numbers = #tpu.dot_dimension_numbers<[1], [0], [0], [1], [0, 0, 1, 1], [], []>} : vector<32x128xf32>, vector<128x128xf32>, vector<32x128xf32> -> vector<32x128xf32>
    %306 = arith.addf %299, %305 : vector<32x128xf32>
    %c6_326 = arith.constant 6 : index
    %c0_327 = arith.constant 0 : index
    %c0_328 = arith.constant 0 : index
    %307 = vector.load %arg6[%c6_326, %c0_327, %c0_328] : memref<9x32x32xf32, #tpu.memory_space<vmem>>, vector<1x32x32xf32>
    %308 = vector.shape_cast %307 : vector<1x32x32xf32> to vector<32x32xf32>
    %cst_329 = arith.constant dense<0.000000e+00> : vector<32x128xf32>
    %309 = tpu.matmul %308, %265, %cst_329 {dimension_numbers = #tpu.dot_dimension_numbers<[1], [0], [0], [1], [0, 0, 1, 1], [], []>} : vector<32x32xf32>, vector<32x128xf32>, vector<32x128xf32> -> vector<32x128xf32>
    %c6_330 = arith.constant 6 : index
    %c0_331 = arith.constant 0 : index
    %c0_332 = arith.constant 0 : index
    %310 = vector.load %arg10[%c6_330, %c0_331, %c0_332] : memref<9x128x128xf32, #tpu.memory_space<vmem>>, vector<1x128x128xf32>
    %311 = vector.shape_cast %310 : vector<1x128x128xf32> to vector<128x128xf32>
    %cst_333 = arith.constant dense<0.000000e+00> : vector<32x128xf32>
    %312 = tpu.matmul %309, %311, %cst_333 {dimension_numbers = #tpu.dot_dimension_numbers<[1], [0], [0], [1], [0, 0, 1, 1], [], []>} : vector<32x128xf32>, vector<128x128xf32>, vector<32x128xf32> -> vector<32x128xf32>
    %313 = arith.addf %306, %312 : vector<32x128xf32>
    %c7_334 = arith.constant 7 : index
    %c0_335 = arith.constant 0 : index
    %c0_336 = arith.constant 0 : index
    %314 = vector.load %arg6[%c7_334, %c0_335, %c0_336] : memref<9x32x32xf32, #tpu.memory_space<vmem>>, vector<1x32x32xf32>
    %315 = vector.shape_cast %314 : vector<1x32x32xf32> to vector<32x32xf32>
    %cst_337 = arith.constant dense<0.000000e+00> : vector<32x128xf32>
    %316 = tpu.matmul %315, %265, %cst_337 {dimension_numbers = #tpu.dot_dimension_numbers<[1], [0], [0], [1], [0, 0, 1, 1], [], []>} : vector<32x32xf32>, vector<32x128xf32>, vector<32x128xf32> -> vector<32x128xf32>
    %c7_338 = arith.constant 7 : index
    %c0_339 = arith.constant 0 : index
    %c0_340 = arith.constant 0 : index
    %317 = vector.load %arg10[%c7_338, %c0_339, %c0_340] : memref<9x128x128xf32, #tpu.memory_space<vmem>>, vector<1x128x128xf32>
    %318 = vector.shape_cast %317 : vector<1x128x128xf32> to vector<128x128xf32>
    %cst_341 = arith.constant dense<0.000000e+00> : vector<32x128xf32>
    %319 = tpu.matmul %316, %318, %cst_341 {dimension_numbers = #tpu.dot_dimension_numbers<[1], [0], [0], [1], [0, 0, 1, 1], [], []>} : vector<32x128xf32>, vector<128x128xf32>, vector<32x128xf32> -> vector<32x128xf32>
    %320 = arith.addf %313, %319 : vector<32x128xf32>
    %c8_342 = arith.constant 8 : index
    %c0_343 = arith.constant 0 : index
    %c0_344 = arith.constant 0 : index
    %321 = vector.load %arg6[%c8_342, %c0_343, %c0_344] : memref<9x32x32xf32, #tpu.memory_space<vmem>>, vector<1x32x32xf32>
    %322 = vector.shape_cast %321 : vector<1x32x32xf32> to vector<32x32xf32>
    %cst_345 = arith.constant dense<0.000000e+00> : vector<32x128xf32>
    %323 = tpu.matmul %322, %265, %cst_345 {dimension_numbers = #tpu.dot_dimension_numbers<[1], [0], [0], [1], [0, 0, 1, 1], [], []>} : vector<32x32xf32>, vector<32x128xf32>, vector<32x128xf32> -> vector<32x128xf32>
    %c8_346 = arith.constant 8 : index
    %c0_347 = arith.constant 0 : index
    %c0_348 = arith.constant 0 : index
    %324 = vector.load %arg10[%c8_346, %c0_347, %c0_348] : memref<9x128x128xf32, #tpu.memory_space<vmem>>, vector<1x128x128xf32>
    %325 = vector.shape_cast %324 : vector<1x128x128xf32> to vector<128x128xf32>
    %cst_349 = arith.constant dense<0.000000e+00> : vector<32x128xf32>
    %326 = tpu.matmul %323, %325, %cst_349 {dimension_numbers = #tpu.dot_dimension_numbers<[1], [0], [0], [1], [0, 0, 1, 1], [], []>} : vector<32x128xf32>, vector<128x128xf32>, vector<32x128xf32> -> vector<32x128xf32>
    %327 = arith.addf %320, %326 : vector<32x128xf32>
    %c5_350 = arith.constant 5 : index
    %c0_351 = arith.constant 0 : index
    %328 = vector.load %arg3[%c5_350, %c0_351] : memref<8x128xf32, #tpu.memory_space<vmem>>, vector<1x128xf32>
    %329 = vector.broadcast %328 : vector<1x128xf32> to vector<32x128xf32>
    %330 = arith.addf %327, %329 : vector<32x128xf32>
    %cst_352 = arith.constant 0.000000e+00 : f32
    %331 = vector.broadcast %cst_352 : f32 to vector<32x128xf32>
    %332 = arith.maximumf %330, %331 : vector<32x128xf32>
    %c0_353 = arith.constant 0 : index
    %c0_354 = arith.constant 0 : index
    %333 = vector.load %arg11[%c0_353, %c0_354] : memref<128x128xf32, #tpu.memory_space<vmem>>, vector<128x128xf32>
    %cst_355 = arith.constant dense<0.000000e+00> : vector<32x128xf32>
    %334 = tpu.matmul %332, %333, %cst_355 {dimension_numbers = #tpu.dot_dimension_numbers<[1], [0], [0], [1], [0, 0, 1, 1], [], []>} : vector<32x128xf32>, vector<128x128xf32>, vector<32x128xf32> -> vector<32x128xf32>
    %c6_356 = arith.constant 6 : index
    %c0_357 = arith.constant 0 : index
    %335 = vector.load %arg3[%c6_356, %c0_357] : memref<8x128xf32, #tpu.memory_space<vmem>>, vector<1x128xf32>
    %336 = vector.broadcast %335 : vector<1x128xf32> to vector<32x128xf32>
    %337 = arith.addf %334, %336 : vector<32x128xf32>
    %338 = arith.addf %337, %263 : vector<32x128xf32>
    %cst_358 = arith.constant 0.000000e+00 : f32
    %339 = vector.broadcast %cst_358 : f32 to vector<32x128xf32>
    %340 = arith.maximumf %338, %339 : vector<32x128xf32>
    %c0_359 = arith.constant 0 : index
    %c0_360 = arith.constant 0 : index
    %341 = vector.load %arg12[%c0_359, %c0_360] : memref<128x128xf32, #tpu.memory_space<vmem>>, vector<128x128xf32>
    %cst_361 = arith.constant dense<0.000000e+00> : vector<32x128xf32>
    %342 = tpu.matmul %340, %341, %cst_361 {dimension_numbers = #tpu.dot_dimension_numbers<[1], [0], [0], [1], [0, 0, 1, 1], [], []>} : vector<32x128xf32>, vector<128x128xf32>, vector<32x128xf32> -> vector<32x128xf32>
    %c7_362 = arith.constant 7 : index
    %c0_363 = arith.constant 0 : index
    %343 = vector.load %arg3[%c7_362, %c0_363] : memref<8x128xf32, #tpu.memory_space<vmem>>, vector<1x128xf32>
    %344 = vector.broadcast %343 : vector<1x128xf32> to vector<32x128xf32>
    %345 = arith.addf %342, %344 : vector<32x128xf32>
    %c0_364 = arith.constant 0 : index
    %c0_365 = arith.constant 0 : index
    %346 = vector.load %arg13[%c0_364, %c0_365] : memref<32x128xf32, #tpu.memory_space<vmem>>, vector<32x128xf32>
    tpu.vector_store %arg13[%c0_364, %c0_365], %345 {strides = array<i32>} : memref<32x128xf32, #tpu.memory_space<vmem>>, vector<32x128xf32>,
    return
  }
  func.func @transform_0(%arg0: i32) -> (i32, i32) {
    %c0_i32 = arith.constant 0 : i32
    %c0_i32_0 = arith.constant 0 : i32
    %c0_i32_1 = arith.constant 0 : i32
    return %c0_i32, %c0_i32_0 : i32, i32
  }
  func.func @transform_1(%arg0: i32) -> (i32, i32) {
    %c0_i32 = arith.constant 0 : i32
    %c0_i32_0 = arith.constant 0 : i32
    %c0_i32_1 = arith.constant 0 : i32
    return %c0_i32, %c0_i32_0 : i32, i32
  }
  func.func @transform_2(%arg0: i32) -> (i32, i32) {
    %c0_i32 = arith.constant 0 : i32
    %c0_i32_0 = arith.constant 0 : i32
    %c0_i32_1 = arith.constant 0 : i32
    return %c0_i32, %c0_i32_0 : i32, i32
  }
  func.func @transform_3(%arg0: i32) -> (i32, i32, i32) {
    %c0_i32 = arith.constant 0 : i32
    %c0_i32_0 = arith.constant 0 : i32
    %c0_i32_1 = arith.constant 0 : i32
    %c0_i32_2 = arith.constant 0 : i32
    return %c0_i32, %c0_i32_0, %c0_i32_1 : i32, i32, i32
  }
  func.func @transform_4(%arg0: i32) -> (i32, i32, i32) {
    %c0_i32 = arith.constant 0 : i32
    %c0_i32_0 = arith.constant 0 : i32
    %c0_i32_1 = arith.constant 0 : i32
    %c0_i32_2 = arith.constant 0 : i32
    return %c0_i32, %c0_i32_0, %c0_i32_1 : i32, i32, i32
  }
  func.func @transform_5(%arg0: i32) -> (i32, i32, i32) {
    %c0_i32 = arith.constant 0 : i32
    %c0_i32_0 = arith.constant 0 : i32
    %c0_i32_1 = arith.constant 0 : i32
    %c0_i32_2 = arith.constant 0 : i32
    return %c0_i32, %c0_i32_0, %c0_i32_1 : i32, i32, i32
  }
  func.func @transform_6(%arg0: i32) -> (i32, i32, i32) {
    %c0_i32 = arith.constant 0 : i32
    %c0_i32_0 = arith.constant 0 : i32
    %c0_i32_1 = arith.constant 0 : i32
    %c0_i32_2 = arith.constant 0 : i32
    return %c0_i32, %c0_i32_0, %c0_i32_1 : i32, i32, i32
  }
  func.func @transform_7(%arg0: i32) -> (i32, i32, i32) {
    %c0_i32 = arith.constant 0 : i32
    %c0_i32_0 = arith.constant 0 : i32
    %c0_i32_1 = arith.constant 0 : i32
    %c0_i32_2 = arith.constant 0 : i32
    return %c0_i32, %c0_i32_0, %c0_i32_1 : i32, i32, i32
  }
  func.func @transform_8(%arg0: i32) -> (i32, i32) {
    %c0_i32 = arith.constant 0 : i32
    %c0_i32_0 = arith.constant 0 : i32
    %c0_i32_1 = arith.constant 0 : i32
    return %c0_i32, %c0_i32_0 : i32, i32
  }
  func.func @transform_9(%arg0: i32) -> (i32, i32, i32) {
    %c0_i32 = arith.constant 0 : i32
    %c0_i32_0 = arith.constant 0 : i32
    %c0_i32_1 = arith.constant 0 : i32
    %c0_i32_2 = arith.constant 0 : i32
    return %c0_i32, %c0_i32_0, %c0_i32_1 : i32, i32, i32
  }
  func.func @transform_10(%arg0: i32) -> (i32, i32) {
    %c0_i32 = arith.constant 0 : i32
    %c0_i32_0 = arith.constant 0 : i32
    %c0_i32_1 = arith.constant 0 : i32
    return %c0_i32, %c0_i32_0 : i32, i32
  }
  func.func @transform_11(%arg0: i32) -> (i32, i32) {
    %c0_i32 = arith.constant 0 : i32
    %c0_i32_0 = arith.constant 0 : i32
    %c0_i32_1 = arith.constant 0 : i32
    return %c0_i32, %c0_i32_0 : i32, i32
  }
  func.func @transform_12(%arg0: i32) -> (i32, i32) {
    %c0_i32 = arith.constant 0 : i32
    %c0_i32_0 = arith.constant 0 : i32
    %c0_i32_1 = arith.constant 0 : i32
    return %c0_i32, %c0_i32_0 : i32, i32
  }
}

</mosaic_0001>

<llo_original>
// kernel: encoder_forward.1
$region0: #{encoder_forward.1}
  #allocation0 [shape = 'u32[]', space=smem, size = 0x4, offset = 0x4, fixed_abs, tag = 'smem constant byte address 0x4 - core index']
  #allocation1 [shape = 'u32[144,128]{1,0:T(1,128)}', space=vmem, size = 0x12000, scoped, tag = 'internal scratch']
  %s0 = inlined_call_operand.vmem [shape: f32[128,128], index: 0, kind: input, shape index: {}]
  %s1 = inlined_call_operand.vmem [shape: f32[128,128], index: 1, kind: input, shape index: {}]
  %s2 = inlined_call_operand.vmem [shape: f32[8,128], index: 2, kind: input, shape index: {}]
  %s3 = inlined_call_operand.vmem [shape: f32[16,32,128], index: 3, kind: input, shape index: {}]
  %s4 = inlined_call_operand.vmem [shape: f32[16,128,128], index: 4, kind: input, shape index: {}]
  %s5 = inlined_call_operand.vmem [shape: f32[9,32,32], index: 5, kind: input, shape index: {}]
  %s6 = inlined_call_operand.vmem [shape: f32[9,128,128], index: 6, kind: input, shape index: {}]
  %s7 = inlined_call_operand.vmem [shape: f32[9,128,128], index: 7, kind: input, shape index: {}]
  %s8 = inlined_call_operand.vmem [shape: f32[128,128], index: 8, kind: input, shape index: {}]
  %s9 = inlined_call_operand.vmem [shape: f32[9,128,128], index: 9, kind: input, shape index: {}]
  %s10 = inlined_call_operand.vmem [shape: f32[128,128], index: 10, kind: input, shape index: {}]
  %s11 = inlined_call_operand.vmem [shape: f32[128,128], index: 11, kind: input, shape index: {}]
  %s12 = inlined_call_operand.hbm [shape: f32[32,128], index: 12, kind: output, shape index: {}]
  %s13 = sld [smem:[#allocation0]]
  $region58: #{encoder_forward.1} parent=0
    _
  %s15 = ssub.s32 1, %s13
  %s16 = scalar_select 0, %s15, %s13
  $region1: #{encoder_forward.1} parent=0
    #allocation2 [shape = 'u8[16384]{0}', space=vmem, size = 0x4000, scoped, tag = 'output window, operand 0, single buffered']
    #allocation3 [shape = 's32[1]{0}', space=sflag, size = 0x4, scoped, tag = 'scoped memory for encoder_forward.1']
    %17 = vsyncpa [#allocation3], 0
    // Predicated region
    $region2: #{encoder_forward.1} parent=1 // pred_check
      _
    $region3: #{encoder_forward.1} parent=1 // pred_check_branch
      %19 = sbr.rel (0) target = $region5
    $region4: #{encoder_forward.1} parent=1 // pred_region
      _
    $region5: #{encoder_forward.1} parent=1 // pred_fallthru
      _
    // Predicated region
    $region6: #{encoder_forward.1} parent=1 // pred_check
      _
    $region7: #{encoder_forward.1} parent=1 // pred_check_branch
      %21 = sbr.rel (0) target = $region9
    $region8: #{encoder_forward.1} parent=1 // pred_region
      _
    $region9: #{encoder_forward.1} parent=1 // pred_fallthru
      _
    // Predicated region
    $region10: #{encoder_forward.1} parent=1 // pred_check
      _
    $region11: #{encoder_forward.1} parent=1 // pred_check_branch
      %23 = sbr.rel (0) target = $region13
    $region12: #{encoder_forward.1} parent=1 // pred_region
      _
    $region13: #{encoder_forward.1} parent=1 // pred_fallthru
      _
    // Predicated region
    $region14: #{encoder_forward.1} parent=1 // pred_check
      _
    $region15: #{encoder_forward.1} parent=1 // pred_check_branch
      %25 = sbr.rel (0) target = $region17
    $region16: #{encoder_forward.1} parent=1 // pred_region
      _
    $region17: #{encoder_forward.1} parent=1 // pred_fallthru
      _
    // Predicated region
    $region18: #{encoder_forward.1} parent=1 // pred_check
      _
    $region19: #{encoder_forward.1} parent=1 // pred_check_branch
      %27 = sbr.rel (0) target = $region21
    $region20: #{encoder_forward.1} parent=1 // pred_region
      _
    $region21: #{encoder_forward.1} parent=1 // pred_fallthru
      _
    // Predicated region
    $region22: #{encoder_forward.1} parent=1 // pred_check
      _
    $region23: #{encoder_forward.1} parent=1 // pred_check_branch
      %29 = sbr.rel (0) target = $region25
    $region24: #{encoder_forward.1} parent=1 // pred_region
      _
    $region25: #{encoder_forward.1} parent=1 // pred_fallthru
      _
    // Predicated region
    $region26: #{encoder_forward.1} parent=1 // pred_check
      _
    $region27: #{encoder_forward.1} parent=1 // pred_check_branch
      %31 = sbr.rel (0) target = $region29
    $region28: #{encoder_forward.1} parent=1 // pred_region
      _
    $region29: #{encoder_forward.1} parent=1 // pred_fallthru
      _
    // Predicated region
    $region30: #{encoder_forward.1} parent=1 // pred_check
      _
    $region31: #{encoder_forward.1} parent=1 // pred_check_branch
      %33 = sbr.rel (0) target = $region33
    $region32: #{encoder_forward.1} parent=1 // pred_region
      _
    $region33: #{encoder_forward.1} parent=1 // pred_fallthru
      _
    // Predicated region
    $region34: #{encoder_forward.1} parent=1 // pred_check
      _
    $region35: #{encoder_forward.1} parent=1 // pred_check_branch
      %35 = sbr.rel (0) target = $region37
    $region36: #{encoder_forward.1} parent=1 // pred_region
      _
    $region37: #{encoder_forward.1} parent=1 // pred_fallthru
      _
    // Predicated region
    $region38: #{encoder_forward.1} parent=1 // pred_check
      _
    $region39: #{encoder_forward.1} parent=1 // pred_check_branch
      %37 = sbr.rel (0) target = $region41
    $region40: #{encoder_forward.1} parent=1 // pred_region
      _
    $region41: #{encoder_forward.1} parent=1 // pred_fallthru
      _
    // Predicated region
    $region42: #{encoder_forward.1} parent=1 // pred_check
      _
    $region43: #{encoder_forward.1} parent=1 // pred_check_branch
      %39 = sbr.rel (0) target = $region45
    $region44: #{encoder_forward.1} parent=1 // pred_region
      _
    $region45: #{encoder_forward.1} parent=1 // pred_fallthru
      _
    // Predicated region
    $region46: #{encoder_forward.1} parent=1 // pred_check
      _
    $region47: #{encoder_forward.1} parent=1 // pred_check_branch
      %41 = sbr.rel (0) target = $region49
    $region48: #{encoder_forward.1} parent=1 // pred_region
      _
    $region49: #{encoder_forward.1} parent=1 // pred_fallthru
      _
    %v42 = vld [vmem:[%s0] sm:$0xff]
    %v43 = vld [vmem:[%s0 + $0x8] sm:$0xff]
    %v44 = vld [vmem:[%s0 + $0x10] sm:$0xff]
    %v45 = vld [vmem:[%s0 + $0x18] sm:$0xff]
    %v46 = vld [vmem:[%s0 + $0x20] sm:$0xff]
    %v47 = vld [vmem:[%s0 + $0x28] sm:$0xff]
    %v48 = vld [vmem:[%s0 + $0x30] sm:$0xff]
    %v49 = vld [vmem:[%s0 + $0x38] sm:$0xff]
    %v50 = vld [vmem:[%s0 + $0x40] sm:$0xff]
    %v51 = vld [vmem:[%s0 + $0x48] sm:$0xff]
    %v52 = vld [vmem:[%s0 + $0x50] sm:$0xff]
    %v53 = vld [vmem:[%s0 + $0x58] sm:$0xff]
    %v54 = vld [vmem:[%s0 + $0x60] sm:$0xff]
    %v55 = vld [vmem:[%s0 + $0x68] sm:$0xff]
    %v56 = vld [vmem:[%s0 + $0x70] sm:$0xff]
    %v57 = vld [vmem:[%s0 + $0x78] sm:$0xff]
    %v58 = vld [vmem:[%s1] sm:$0xff]
    %v59 = vld [vmem:[%s1 + $0x8] sm:$0xff]
    %v60 = vld [vmem:[%s1 + $0x10] sm:$0xff]
    %v61 = vld [vmem:[%s1 + $0x18] sm:$0xff]
    %v62 = vld [vmem:[%s1 + $0x20] sm:$0xff]
    %v63 = vld [vmem:[%s1 + $0x28] sm:$0xff]
    %v64 = vld [vmem:[%s1 + $0x30] sm:$0xff]
    %v65 = vld [vmem:[%s1 + $0x38] sm:$0xff]
    %v66 = vld [vmem:[%s1 + $0x40] sm:$0xff]
    %v67 = vld [vmem:[%s1 + $0x48] sm:$0xff]
    %v68 = vld [vmem:[%s1 + $0x50] sm:$0xff]
    %v69 = vld [vmem:[%s1 + $0x58] sm:$0xff]
    %v70 = vld [vmem:[%s1 + $0x60] sm:$0xff]
    %v71 = vld [vmem:[%s1 + $0x68] sm:$0xff]
    %v72 = vld [vmem:[%s1 + $0x70] sm:$0xff]
    %v73 = vld [vmem:[%s1 + $0x78] sm:$0xff]
    %v74 = vld [vmem:[%s2] sm:$0x1]
    %v75 = vlaneseq
    %v76 = vshrl.u32 %v75, 7
    %v77 = vsub.s32 0, %v76
    %v78 = vrot.slane %v74, %v77
    %79 = vmatprep.subr.mxu0 0.0
    %80 = vmatpush1.msra.mxu0 %v73
    %81 = vmatprep.subr.mxu0 0.0
    %82 = vmatpush1.msra.mxu0 %v72
    %83 = vmatprep.subr.mxu0 0.0
    %84 = vmatpush1.msra.mxu0 %v71
    %85 = vmatprep.subr.mxu0 0.0
    %86 = vmatpush1.msra.mxu0 %v70
    %87 = vmatprep.subr.mxu0 0.0
    %88 = vmatpush1.msra.mxu0 %v69
    %89 = vmatprep.subr.mxu0 0.0
    %90 = vmatpush1.msra.mxu0 %v68
    %91 = vmatprep.subr.mxu0 0.0
    %92 = vmatpush1.msra.mxu0 %v67
    %93 = vmatprep.subr.mxu0 0.0
    %94 = vmatpush1.msra.mxu0 %v66
    %95 = vmatprep.subr.mxu0 0.0
    %96 = vmatpush1.msra.mxu0 %v65
    %97 = vmatprep.subr.mxu0 0.0
    %98 = vmatpush1.msra.mxu0 %v64
    %99 = vmatprep.subr.mxu0 0.0
    %100 = vmatpush1.msra.mxu0 %v63
    %101 = vmatprep.subr.mxu0 0.0
    %102 = vmatpush1.msra.mxu0 %v62
    %103 = vmatprep.subr.mxu0 0.0
    %104 = vmatpush1.msra.mxu0 %v61
    %105 = vmatprep.subr.mxu0 0.0
    %106 = vmatpush1.msra.mxu0 %v60
    %107 = vmatprep.subr.mxu0 0.0
    %108 = vmatpush1.msra.mxu0 %v59
    %109 = vmatprep.subr.mxu0 0.0
    %110 = vmatpush1.msra.mxu0 %v58
    %111 = vmatprep.subr.mxu0 0.0
    %112 = vmatpush2.msra.mxu0 0.0
    %113 = vmatprep.subr.mxu0 0.0
    %114 = vmatpush2.msra.mxu0 0.0
    %115 = vmatprep.subr.mxu0 0.0
    %116 = vmatpush2.msra.mxu0 0.0
    %117 = vmatprep.subr.mxu0 0.0
    %118 = vmatpush2.msra.mxu0 0.0
    %119 = vmatprep.subr.mxu0 0.0
    %120 = vmatpush2.msra.mxu0 0.0
    %121 = vmatprep.subr.mxu0 0.0
    %122 = vmatpush2.msra.mxu0 0.0
    %123 = vmatprep.subr.mxu0 0.0
    %124 = vmatpush2.msra.mxu0 0.0
    %125 = vmatprep.subr.mxu0 0.0
    %126 = vmatpush2.msra.mxu0 0.0
    %127 = vmatprep.subr.mxu0 0.0
    %128 = vmatpush2.msra.mxu0 0.0
    %129 = vmatprep.subr.mxu0 0.0
    %130 = vmatpush2.msra.mxu0 0.0
    %131 = vmatprep.subr.mxu0 0.0
    %132 = vmatpush2.msra.mxu0 0.0
    %133 = vmatprep.subr.mxu0 0.0
    %134 = vmatpush2.msra.mxu0 0.0
    %135 = vmatprep.subr.mxu0 0.0
    %136 = vmatpush2.msra.mxu0 0.0
    %137 = vmatprep.subr.mxu0 0.0
    %138 = vmatpush2.msra.mxu0 0.0
    %139 = vmatprep.subr.mxu0 0.0
    %140 = vmatpush2.msra.mxu0 0.0
    %141 = vmatprep.subr.mxu0 0.0
    %142 = vmatpush2.msra.mxu0 0.0
    %143 = vmatprep.mubr.f32.mxu0 0.0
    %144 = vmatmul.mubr.f32.gmra.mxu0 %v42
    %v145 = vpop.f32.mrf.mxu0
    %v146 = vadd.f32 %v78, %v145
    %v147 = vpop.f32.mrf.mxu0
    %148 = vmatprep.mubr.f32.mxu0 0.0
    %149 = vmatmul.mubr.f32.gmra.mxu0 %v43
    %v150 = vpop.f32.mrf.mxu0
    %v151 = vadd.f32 %v78, %v150
    %v152 = vpop.f32.mrf.mxu0
    %153 = vmatprep.mubr.f32.mxu0 0.0
    %154 = vmatmul.mubr.f32.gmra.mxu0 %v44
    %v155 = vpop.f32.mrf.mxu0
    %v156 = vadd.f32 %v78, %v155
    %v157 = vpop.f32.mrf.mxu0
    %158 = vmatprep.mubr.f32.mxu0 0.0
    %159 = vmatmul.mubr.f32.gmra.mxu0 %v45
    %v160 = vpop.f32.mrf.mxu0
    %v161 = vadd.f32 %v78, %v160
    %v162 = vpop.f32.mrf.mxu0
    %163 = vmatprep.mubr.f32.mxu0 0.0
    %164 = vmatmul.mubr.f32.gmra.mxu0 %v46
    %v165 = vpop.f32.mrf.mxu0
    %v166 = vadd.f32 %v78, %v165
    %v167 = vpop.f32.mrf.mxu0
    %168 = vmatprep.mubr.f32.mxu0 0.0
    %169 = vmatmul.mubr.f32.gmra.mxu0 %v47
    %v170 = vpop.f32.mrf.mxu0
    %v171 = vadd.f32 %v78, %v170
    %v172 = vpop.f32.mrf.mxu0
    %173 = vmatprep.mubr.f32.mxu0 0.0
    %174 = vmatmul.mubr.f32.gmra.mxu0 %v48
    %v175 = vpop.f32.mrf.mxu0
    %v176 = vadd.f32 %v78, %v175
    %v177 = vpop.f32.mrf.mxu0
    %178 = vmatprep.mubr.f32.mxu0 0.0
    %179 = vmatmul.mubr.f32.gmra.mxu0 %v49
    %v180 = vpop.f32.mrf.mxu0
    %v181 = vadd.f32 %v78, %v180
    %v182 = vpop.f32.mrf.mxu0
    %183 = vmatprep.mubr.f32.mxu0 0.0
    %184 = vmatmul.mubr.f32.gmra.mxu0 %v50
    %v185 = vpop.f32.mrf.mxu0
    %v186 = vadd.f32 %v78, %v185
    %v187 = vpop.f32.mrf.mxu0
    %188 = vmatprep.mubr.f32.mxu0 0.0
    %189 = vmatmul.mubr.f32.gmra.mxu0 %v51
    %v190 = vpop.f32.mrf.mxu0
    %v191 = vadd.f32 %v78, %v190
    %v192 = vpop.f32.mrf.mxu0
    %193 = vmatprep.mubr.f32.mxu0 0.0
    %194 = vmatmul.mubr.f32.gmra.mxu0 %v52
    %v195 = vpop.f32.mrf.mxu0
    %v196 = vadd.f32 %v78, %v195
    %v197 = vpop.f32.mrf.mxu0
    %198 = vmatprep.mubr.f32.mxu0 0.0
    %199 = vmatmul.mubr.f32.gmra.mxu0 %v53
    %v200 = vpop.f32.mrf.mxu0
    %v201 = vadd.f32 %v78, %v200
    %v202 = vpop.f32.mrf.mxu0
    %203 = vmatprep.mubr.f32.mxu0 0.0
    %204 = vmatmul.mubr.f32.gmra.mxu0 %v54
    %v205 = vpop.f32.mrf.mxu0
    %v206 = vadd.f32 %v78, %v205
    %v207 = vpop.f32.mrf.mxu0
    %208 = vmatprep.mubr.f32.mxu0 0.0
    %209 = vmatmul.mubr.f32.gmra.mxu0 %v55
    %v210 = vpop.f32.mrf.mxu0
    %v211 = vadd.f32 %v78, %v210
    %v212 = vpop.f32.mrf.mxu0
    %213 = vmatprep.mubr.f32.mxu0 0.0
    %214 = vmatmul.mubr.f32.gmra.mxu0 %v56
    %v215 = vpop.f32.mrf.mxu0
    %v216 = vadd.f32 %v78, %v215
    %v217 = vpop.f32.mrf.mxu0
    %218 = vmatprep.mubr.f32.mxu0 0.0
    %219 = vmatmul.mubr.f32.gmra.mxu0 %v57
    %v220 = vpop.f32.mrf.mxu0
    %v221 = vadd.f32 %v78, %v220
    %v222 = vpop.f32.mrf.mxu0
    %223 = vdwg.mxu0
    %v224 = vmax.f32 %v146, 0.0
    %v225 = vmax.f32 %v151, 0.0
    %v226 = vmax.f32 %v156, 0.0
    %v227 = vmax.f32 %v161, 0.0
    %v228 = vmax.f32 %v166, 0.0
    %v229 = vmax.f32 %v171, 0.0
    %v230 = vmax.f32 %v176, 0.0
    %v231 = vmax.f32 %v181, 0.0
    %v232 = vmax.f32 %v186, 0.0
    %v233 = vmax.f32 %v191, 0.0
    %v234 = vmax.f32 %v196, 0.0
    %v235 = vmax.f32 %v201, 0.0
    %v236 = vmax.f32 %v206, 0.0
    %v237 = vmax.f32 %v211, 0.0
    %v238 = vmax.f32 %v216, 0.0
    %v239 = vmax.f32 %v221, 0.0
    %v240 = vld [vmem:[%s3] sm:$0xff]
    %v241 = vld [vmem:[%s3 + $0x8] sm:$0xff]
    %v242 = vld [vmem:[%s3 + $0x10] sm:$0xff]
    %v243 = vld [vmem:[%s3 + $0x18] sm:$0xff]
    %244 = vmatprep.subr.mxu0 0.0
    %245 = vmatpush1.msra.mxu0 %v239
    %246 = vmatprep.subr.mxu0 0.0
    %247 = vmatpush1.msra.mxu0 %v238
    %248 = vmatprep.subr.mxu0 0.0
    %249 = vmatpush1.msra.mxu0 %v237
    %250 = vmatprep.subr.mxu0 0.0
    %251 = vmatpush1.msra.mxu0 %v236
    %252 = vmatprep.subr.mxu0 0.0
    %253 = vmatpush1.msra.mxu0 %v235
    %254 = vmatprep.subr.mxu0 0.0
    %255 = vmatpush1.msra.mxu0 %v234
    %256 = vmatprep.subr.mxu0 0.0
    %257 = vmatpush1.msra.mxu0 %v233
    %258 = vmatprep.subr.mxu0 0.0
    %259 = vmatpush1.msra.mxu0 %v232
    %260 = vmatprep.subr.mxu0 0.0
    %261 = vmatpush1.msra.mxu0 %v231
    %262 = vmatprep.subr.mxu0 0.0
    %263 = vmatpush1.msra.mxu0 %v230
    %264 = vmatprep.subr.mxu0 0.0
    %265 = vmatpush1.msra.mxu0 %v229
    %266 = vmatprep.subr.mxu0 0.0
    %267 = vmatpush1.msra.mxu0 %v228
    %268 = vmatprep.subr.mxu0 0.0
    %269 = vmatpush1.msra.mxu0 %v227
    %270 = vmatprep.subr.mxu0 0.0
    %271 = vmatpush1.msra.mxu0 %v226
    %272 = vmatprep.subr.mxu0 0.0
    %273 = vmatpush1.msra.mxu0 %v225
    %274 = vmatprep.subr.mxu0 0.0
    %275 = vmatpush1.msra.mxu0 %v224
    %276 = vmatprep.subr.mxu0 0.0
    %277 = vmatpush2.msra.mxu0 0.0
    %278 = vmatprep.subr.mxu0 0.0
    %279 = vmatpush2.msra.mxu0 0.0
    %280 = vmatprep.subr.mxu0 0.0
    %281 = vmatpush2.msra.mxu0 0.0
    %282 = vmatprep.subr.mxu0 0.0
    %283 = vmatpush2.msra.mxu0 0.0
    %284 = vmatprep.subr.mxu0 0.0
    %285 = vmatpush2.msra.mxu0 0.0
    %286 = vmatprep.subr.mxu0 0.0
    %287 = vmatpush2.msra.mxu0 0.0
    %288 = vmatprep.subr.mxu0 0.0
    %289 = vmatpush2.msra.mxu0 0.0
    %290 = vmatprep.subr.mxu0 0.0
    %291 = vmatpush2.msra.mxu0 0.0
    %292 = vmatprep.subr.mxu0 0.0
    %293 = vmatpush2.msra.mxu0 0.0
    %294 = vmatprep.subr.mxu0 0.0
    %295 = vmatpush2.msra.mxu0 0.0
    %296 = vmatprep.subr.mxu0 0.0
    %297 = vmatpush2.msra.mxu0 0.0
    %298 = vmatprep.subr.mxu0 0.0
    %299 = vmatpush2.msra.mxu0 0.0
    %300 = vmatprep.subr.mxu0 0.0
    %301 = vmatpush2.msra.mxu0 0.0
    %302 = vmatprep.subr.mxu0 0.0
    %303 = vmatpush2.msra.mxu0 0.0
    %304 = vmatprep.subr.mxu0 0.0
    %305 = vmatpush2.msra.mxu0 0.0
    %306 = vmatprep.subr.mxu0 0.0
    %307 = vmatpush2.msra.mxu0 0.0
    %308 = vmatprep.mubr.f32.mxu0 0.0
    %309 = vmatmul.mubr.f32.gmra.mxu0 %v240
    %v310 = vpop.f32.mrf.mxu0
    %v311 = vadd.f32 0.0, %v310
    %v312 = vpop.f32.mrf.mxu0
    %313 = vmatprep.mubr.f32.mxu0 0.0
    %314 = vmatmul.mubr.f32.gmra.mxu0 %v241
    %v315 = vpop.f32.mrf.mxu0
    %v316 = vadd.f32 0.0, %v315
    %v317 = vpop.f32.mrf.mxu0
    %318 = vmatprep.mubr.f32.mxu0 0.0
    %319 = vmatmul.mubr.f32.gmra.mxu0 %v242
    %v320 = vpop.f32.mrf.mxu0
    %v321 = vadd.f32 0.0, %v320
    %v322 = vpop.f32.mrf.mxu0
    %323 = vmatprep.mubr.f32.mxu0 0.0
    %324 = vmatmul.mubr.f32.gmra.mxu0 %v243
    %v325 = vpop.f32.mrf.mxu0
    %v326 = vadd.f32 0.0, %v325
    %v327 = vpop.f32.mrf.mxu0
    %328 = vdwg.mxu0
    %v329 = vld [vmem:[%s4] sm:$0xff]
    %v330 = vld [vmem:[%s4 + $0x8] sm:$0xff]
    %v331 = vld [vmem:[%s4 + $0x10] sm:$0xff]
    %v332 = vld [vmem:[%s4 + $0x18] sm:$0xff]
    %v333 = vld [vmem:[%s4 + $0x20] sm:$0xff]
    %v334 = vld [vmem:[%s4 + $0x28] sm:$0xff]
    %v335 = vld [vmem:[%s4 + $0x30] sm:$0xff]
    %v336 = vld [vmem:[%s4 + $0x38] sm:$0xff]
    %v337 = vld [vmem:[%s4 + $0x40] sm:$0xff]
    %v338 = vld [vmem:[%s4 + $0x48] sm:$0xff]
    %v339 = vld [vmem:[%s4 + $0x50] sm:$0xff]
    %v340 = vld [vmem:[%s4 + $0x58] sm:$0xff]
    %v341 = vld [vmem:[%s4 + $0x60] sm:$0xff]
    %v342 = vld [vmem:[%s4 + $0x68] sm:$0xff]
    %v343 = vld [vmem:[%s4 + $0x70] sm:$0xff]
    %v344 = vld [vmem:[%s4 + $0x78] sm:$0xff]
    %s345 = scalar_lea.vmem %s3, 32
    %v346 = vld [vmem:[%s345] sm:$0xff]
    %v347 = vld [vmem:[%s345 + $0x8] sm:$0xff]
    %v348 = vld [vmem:[%s345 + $0x10] sm:$0xff]
    %v349 = vld [vmem:[%s345 + $0x18] sm:$0xff]
    %350 = vmatprep.subr.mxu0 0.0
    %351 = vmatpush1.msra.mxu0 %v239
    %352 = vmatprep.subr.mxu0 0.0
    %353 = vmatpush1.msra.mxu0 %v238
    %354 = vmatprep.subr.mxu0 0.0
    %355 = vmatpush1.msra.mxu0 %v237
    %356 = vmatprep.subr.mxu0 0.0
    %357 = vmatpush1.msra.mxu0 %v236
    %358 = vmatprep.subr.mxu0 0.0
    %359 = vmatpush1.msra.mxu0 %v235
    %360 = vmatprep.subr.mxu0 0.0
    %361 = vmatpush1.msra.mxu0 %v234
    %362 = vmatprep.subr.mxu0 0.0
    %363 = vmatpush1.msra.mxu0 %v233
    %364 = vmatprep.subr.mxu0 0.0
    %365 = vmatpush1.msra.mxu0 %v232
    %366 = vmatprep.subr.mxu0 0.0
    %367 = vmatpush1.msra.mxu0 %v231
    %368 = vmatprep.subr.mxu0 0.0
    %369 = vmatpush1.msra.mxu0 %v230
    %370 = vmatprep.subr.mxu0 0.0
    %371 = vmatpush1.msra.mxu0 %v229
    %372 = vmatprep.subr.mxu0 0.0
    %373 = vmatpush1.msra.mxu0 %v228
    %374 = vmatprep.subr.mxu0 0.0
    %375 = vmatpush1.msra.mxu0 %v227
    %376 = vmatprep.subr.mxu0 0.0
    %377 = vmatpush1.msra.mxu0 %v226
    %378 = vmatprep.subr.mxu0 0.0
    %379 = vmatpush1.msra.mxu0 %v225
    %380 = vmatprep.subr.mxu0 0.0
    %381 = vmatpush1.msra.mxu0 %v224
    %382 = vmatprep.subr.mxu0 0.0
    %383 = vmatpush2.msra.mxu0 0.0
    %384 = vmatprep.subr.mxu0 0.0
    %385 = vmatpush2.msra.mxu0 0.0
    %386 = vmatprep.subr.mxu0 0.0
    %387 = vmatpush2.msra.mxu0 0.0
    %388 = vmatprep.subr.mxu0 0.0
    %389 = vmatpush2.msra.mxu0 0.0
    %390 = vmatprep.subr.mxu0 0.0
    %391 = vmatpush2.msra.mxu0 0.0
    %392 = vmatprep.subr.mxu0 0.0
    %393 = vmatpush2.msra.mxu0 0.0
    %394 = vmatprep.subr.mxu0 0.0
    %395 = vmatpush2.msra.mxu0 0.0
    %396 = vmatprep.subr.mxu0 0.0
    %397 = vmatpush2.msra.mxu0 0.0
    %398 = vmatprep.subr.mxu0 0.0
    %399 = vmatpush2.msra.mxu0 0.0
    %400 = vmatprep.subr.mxu0 0.0
    %401 = vmatpush2.msra.mxu0 0.0
    %402 = vmatprep.subr.mxu0 0.0
    %403 = vmatpush2.msra.mxu0 0.0
    %404 = vmatprep.subr.mxu0 0.0
    %405 = vmatpush2.msra.mxu0 0.0
    %406 = vmatprep.subr.mxu0 0.0
    %407 = vmatpush2.msra.mxu0 0.0
    %408 = vmatprep.subr.mxu0 0.0
    %409 = vmatpush2.msra.mxu0 0.0
    %410 = vmatprep.subr.mxu0 0.0
    %411 = vmatpush2.msra.mxu0 0.0
    %412 = vmatprep.subr.mxu0 0.0
    %413 = vmatpush2.msra.mxu0 0.0
    %414 = vmatprep.mubr.f32.mxu0 0.0
    %415 = vmatmul.mubr.f32.gmra.mxu0 %v346
    %v416 = vpop.f32.mrf.mxu0
    %v417 = vadd.f32 0.0, %v416
    %v418 = vpop.f32.mrf.mxu0
    %419 = vmatprep.mubr.f32.mxu0 0.0
    %420 = vmatmul.mubr.f32.gmra.mxu0 %v347
    %v421 = vpop.f32.mrf.mxu0
    %v422 = vadd.f32 0.0, %v421
    %v423 = vpop.f32.mrf.mxu0
    %424 = vmatprep.mubr.f32.mxu0 0.0
    %425 = vmatmul.mubr.f32.gmra.mxu0 %v348
    %v426 = vpop.f32.mrf.mxu0
    %v427 = vadd.f32 0.0, %v426
    %v428 = vpop.f32.mrf.mxu0
    %429 = vmatprep.mubr.f32.mxu0 0.0
    %430 = vmatmul.mubr.f32.gmra.mxu0 %v349
    %v431 = vpop.f32.mrf.mxu0
    %v432 = vadd.f32 0.0, %v431
    %v433 = vpop.f32.mrf.mxu0
    %434 = vdwg.mxu0
    %s435 = scalar_lea.vmem %s4, 128
    %v436 = vld [vmem:[%s435] sm:$0xff]
    %v437 = vld [vmem:[%s435 + $0x8] sm:$0xff]
    %v438 = vld [vmem:[%s435 + $0x10] sm:$0xff]
    %v439 = vld [vmem:[%s435 + $0x18] sm:$0xff]
    %v440 = vld [vmem:[%s435 + $0x20] sm:$0xff]
    %v441 = vld [vmem:[%s435 + $0x28] sm:$0xff]
    %v442 = vld [vmem:[%s435 + $0x30] sm:$0xff]
    %v443 = vld [vmem:[%s435 + $0x38] sm:$0xff]
    %v444 = vld [vmem:[%s435 + $0x40] sm:$0xff]
    %v445 = vld [vmem:[%s435 + $0x48] sm:$0xff]
    %v446 = vld [vmem:[%s435 + $0x50] sm:$0xff]
    %v447 = vld [vmem:[%s435 + $0x58] sm:$0xff]
    %v448 = vld [vmem:[%s435 + $0x60] sm:$0xff]
    %v449 = vld [vmem:[%s435 + $0x68] sm:$0xff]
    %v450 = vld [vmem:[%s435 + $0x70] sm:$0xff]
    %v451 = vld [vmem:[%s435 + $0x78] sm:$0xff]
    %452 = vmatprep.subr.mxu0 0.0
    %453 = vmatpush1.msra.mxu0 %v451
    %454 = vmatprep.subr.mxu0 0.0
    %455 = vmatpush1.msra.mxu0 %v450
    %456 = vmatprep.subr.mxu0 0.0
    %457 = vmatpush1.msra.mxu0 %v449
    %458 = vmatprep.subr.mxu0 0.0
    %459 = vmatpush1.msra.mxu0 %v448
    %460 = vmatprep.subr.mxu0 0.0
    %461 = vmatpush1.msra.mxu0 %v447
    %462 = vmatprep.subr.mxu0 0.0
    %463 = vmatpush1.msra.mxu0 %v446
    %464 = vmatprep.subr.mxu0 0.0
    %465 = vmatpush1.msra.mxu0 %v445
    %466 = vmatprep.subr.mxu0 0.0
    %467 = vmatpush1.msra.mxu0 %v444
    %468 = vmatprep.subr.mxu0 0.0
    %469 = vmatpush1.msra.mxu0 %v443
    %470 = vmatprep.subr.mxu0 0.0
    %471 = vmatpush1.msra.mxu0 %v442
    %472 = vmatprep.subr.mxu0 0.0
    %473 = vmatpush1.msra.mxu0 %v441
    %474 = vmatprep.subr.mxu0 0.0
    %475 = vmatpush1.msra.mxu0 %v440
    %476 = vmatprep.subr.mxu0 0.0
    %477 = vmatpush1.msra.mxu0 %v439
    %478 = vmatprep.subr.mxu0 0.0
    %479 = vmatpush1.msra.mxu0 %v438
    %480 = vmatprep.subr.mxu0 0.0
    %481 = vmatpush1.msra.mxu0 %v437
    %482 = vmatprep.subr.mxu0 0.0
    %483 = vmatpush1.msra.mxu0 %v436
    %484 = vmatprep.subr.mxu0 0.0
    %485 = vmatpush2.msra.mxu0 0.0
    %486 = vmatprep.subr.mxu0 0.0
    %487 = vmatpush2.msra.mxu0 0.0
    %488 = vmatprep.subr.mxu0 0.0
    %489 = vmatpush2.msra.mxu0 0.0
    %490 = vmatprep.subr.mxu0 0.0
    %491 = vmatpush2.msra.mxu0 0.0
    %492 = vmatprep.subr.mxu0 0.0
    %493 = vmatpush2.msra.mxu0 0.0
    %494 = vmatprep.subr.mxu0 0.0
    %495 = vmatpush2.msra.mxu0 0.0
    %496 = vmatprep.subr.mxu0 0.0
    %497 = vmatpush2.msra.mxu0 0.0
    %498 = vmatprep.subr.mxu0 0.0
    %499 = vmatpush2.msra.mxu0 0.0
    %500 = vmatprep.subr.mxu0 0.0
    %501 = vmatpush2.msra.mxu0 0.0
    %502 = vmatprep.subr.mxu0 0.0
    %503 = vmatpush2.msra.mxu0 0.0
    %504 = vmatprep.subr.mxu0 0.0
    %505 = vmatpush2.msra.mxu0 0.0
    %506 = vmatprep.subr.mxu0 0.0
    %507 = vmatpush2.msra.mxu0 0.0
    %508 = vmatprep.subr.mxu0 0.0
    %509 = vmatpush2.msra.mxu0 0.0
    %510 = vmatprep.subr.mxu0 0.0
    %511 = vmatpush2.msra.mxu0 0.0
    %512 = vmatprep.subr.mxu0 0.0
    %513 = vmatpush2.msra.mxu0 0.0
    %514 = vmatprep.subr.mxu0 0.0
    %515 = vmatpush2.msra.mxu0 0.0
    %516 = vmatprep.mubr.f32.mxu0 0.0
    %517 = vmatmul.mubr.f32.gmra.mxu0 %v417
    %v518 = vpop.f32.mrf.mxu0
    %v519 = vadd.f32 0.0, %v518
    %v520 = vpop.f32.mrf.mxu0
    %521 = vmatprep.mubr.f32.mxu0 0.0
    %522 = vmatmul.mubr.f32.gmra.mxu0 %v422
    %v523 = vpop.f32.mrf.mxu0
    %v524 = vadd.f32 0.0, %v523
    %v525 = vpop.f32.mrf.mxu0
    %526 = vmatprep.mubr.f32.mxu0 0.0
    %527 = vmatmul.mubr.f32.gmra.mxu0 %v427
    %v528 = vpop.f32.mrf.mxu0
    %v529 = vadd.f32 0.0, %v528
    %v530 = vpop.f32.mrf.mxu0
    %531 = vmatprep.mubr.f32.mxu0 0.0
    %532 = vmatmul.mubr.f32.gmra.mxu0 %v432
    %v533 = vpop.f32.mrf.mxu0
    %v534 = vadd.f32 0.0, %v533
    %v535 = vpop.f32.mrf.mxu0
    %536 = vdwg.mxu0
    %537 = vmatprep.subr.mxu0 0.0
    %538 = vmatpush1.msra.mxu0 %v344
    %539 = vmatprep.subr.mxu0 0.0
    %540 = vmatpush1.msra.mxu0 %v343
    %541 = vmatprep.subr.mxu0 0.0
    %542 = vmatpush1.msra.mxu0 %v342
    %543 = vmatprep.subr.mxu0 0.0
    %544 = vmatpush1.msra.mxu0 %v341
    %545 = vmatprep.subr.mxu0 0.0
    %546 = vmatpush1.msra.mxu0 %v340
    %547 = vmatprep.subr.mxu0 0.0
    %548 = vmatpush1.msra.mxu0 %v339
    %549 = vmatprep.subr.mxu0 0.0
    %550 = vmatpush1.msra.mxu0 %v338
    %551 = vmatprep.subr.mxu0 0.0
    %552 = vmatpush1.msra.mxu0 %v337
    %553 = vmatprep.subr.mxu0 0.0
    %554 = vmatpush1.msra.mxu0 %v336
    %555 = vmatprep.subr.mxu0 0.0
    %556 = vmatpush1.msra.mxu0 %v335
    %557 = vmatprep.subr.mxu0 0.0
    %558 = vmatpush1.msra.mxu0 %v334
    %559 = vmatprep.subr.mxu0 0.0
    %560 = vmatpush1.msra.mxu0 %v333
    %561 = vmatprep.subr.mxu0 0.0
    %562 = vmatpush1.msra.mxu0 %v332
    %563 = vmatprep.subr.mxu0 0.0
    %564 = vmatpush1.msra.mxu0 %v331
    %565 = vmatprep.subr.mxu0 0.0
    %566 = vmatpush1.msra.mxu0 %v330
    %567 = vmatprep.subr.mxu0 0.0
    %568 = vmatpush1.msra.mxu0 %v329
    %569 = vmatprep.subr.mxu0 0.0
    %570 = vmatpush2.msra.mxu0 0.0
    %571 = vmatprep.subr.mxu0 0.0
    %572 = vmatpush2.msra.mxu0 0.0
    %573 = vmatprep.subr.mxu0 0.0
    %574 = vmatpush2.msra.mxu0 0.0
    %575 = vmatprep.subr.mxu0 0.0
    %576 = vmatpush2.msra.mxu0 0.0
    %577 = vmatprep.subr.mxu0 0.0
    %578 = vmatpush2.msra.mxu0 0.0
    %579 = vmatprep.subr.mxu0 0.0
    %580 = vmatpush2.msra.mxu0 0.0
    %581 = vmatprep.subr.mxu0 0.0
    %582 = vmatpush2.msra.mxu0 0.0
    %583 = vmatprep.subr.mxu0 0.0
    %584 = vmatpush2.msra.mxu0 0.0
    %585 = vmatprep.subr.mxu0 0.0
    %586 = vmatpush2.msra.mxu0 0.0
    %587 = vmatprep.subr.mxu0 0.0
    %588 = vmatpush2.msra.mxu0 0.0
    %589 = vmatprep.subr.mxu0 0.0
    %590 = vmatpush2.msra.mxu0 0.0
    %591 = vmatprep.subr.mxu0 0.0
    %592 = vmatpush2.msra.mxu0 0.0
    %593 = vmatprep.subr.mxu0 0.0
    %594 = vmatpush2.msra.mxu0 0.0
    %595 = vmatprep.subr.mxu0 0.0
    %596 = vmatpush2.msra.mxu0 0.0
    %597 = vmatprep.subr.mxu0 0.0
    %598 = vmatpush2.msra.mxu0 0.0
    %599 = vmatprep.subr.mxu0 0.0
    %600 = vmatpush2.msra.mxu0 0.0
    %601 = vmatprep.mubr.f32.mxu0 0.0
    %602 = vmatmul.mubr.f32.gmra.mxu0 %v311
    %v603 = vpop.f32.mrf.mxu0
    %v604 = vadd.f32 %v519, %v603
    %v605 = vpop.f32.mrf.mxu0
    %606 = vmatprep.mubr.f32.mxu0 0.0
    %607 = vmatmul.mubr.f32.gmra.mxu0 %v316
    %v608 = vpop.f32.mrf.mxu0
    %v609 = vadd.f32 %v524, %v608
    %v610 = vpop.f32.mrf.mxu0
    %611 = vmatprep.mubr.f32.mxu0 0.0
    %612 = vmatmul.mubr.f32.gmra.mxu0 %v321
    %v613 = vpop.f32.mrf.mxu0
    %v614 = vadd.f32 %v529, %v613
    %v615 = vpop.f32.mrf.mxu0
    %616 = vmatprep.mubr.f32.mxu0 0.0
    %617 = vmatmul.mubr.f32.gmra.mxu0 %v326
    %v618 = vpop.f32.mrf.mxu0
    %v619 = vadd.f32 %v534, %v618
    %v620 = vpop.f32.mrf.mxu0
    %621 = vdwg.mxu0
    %s622 = scalar_lea.vmem %s3, 64
    %v623 = vld [vmem:[%s622] sm:$0xff]
    %v624 = vld [vmem:[%s622 + $0x8] sm:$0xff]
    %v625 = vld [vmem:[%s622 + $0x10] sm:$0xff]
    %v626 = vld [vmem:[%s622 + $0x18] sm:$0xff]
    %627 = vmatprep.subr.mxu0 0.0
    %628 = vmatpush1.msra.mxu0 %v239
    %629 = vmatprep.subr.mxu0 0.0
    %630 = vmatpush1.msra.mxu0 %v238
    %631 = vmatprep.subr.mxu0 0.0
    %632 = vmatpush1.msra.mxu0 %v237
    %633 = vmatprep.subr.mxu0 0.0
    %634 = vmatpush1.msra.mxu0 %v236
    %635 = vmatprep.subr.mxu0 0.0
    %636 = vmatpush1.msra.mxu0 %v235
    %637 = vmatprep.subr.mxu0 0.0
    %638 = vmatpush1.msra.mxu0 %v234
    %639 = vmatprep.subr.mxu0 0.0
    %640 = vmatpush1.msra.mxu0 %v233
    %641 = vmatprep.subr.mxu0 0.0
    %642 = vmatpush1.msra.mxu0 %v232
    %643 = vmatprep.subr.mxu0 0.0
    %644 = vmatpush1.msra.mxu0 %v231
    %645 = vmatprep.subr.mxu0 0.0
    %646 = vmatpush1.msra.mxu0 %v230
    %647 = vmatprep.subr.mxu0 0.0
    %648 = vmatpush1.msra.mxu0 %v229
    %649 = vmatprep.subr.mxu0 0.0
    %650 = vmatpush1.msra.mxu0 %v228
    %651 = vmatprep.subr.mxu0 0.0
    %652 = vmatpush1.msra.mxu0 %v227
    %653 = vmatprep.subr.mxu0 0.0
    %654 = vmatpush1.msra.mxu0 %v226
    %655 = vmatprep.subr.mxu0 0.0
    %656 = vmatpush1.msra.mxu0 %v225
    %657 = vmatprep.subr.mxu0 0.0
    %658 = vmatpush1.msra.mxu0 %v224
    %659 = vmatprep.subr.mxu0 0.0
    %660 = vmatpush2.msra.mxu0 0.0
    %661 = vmatprep.subr.mxu0 0.0
    %662 = vmatpush2.msra.mxu0 0.0
    %663 = vmatprep.subr.mxu0 0.0
    %664 = vmatpush2.msra.mxu0 0.0
    %665 = vmatprep.subr.mxu0 0.0
    %666 = vmatpush2.msra.mxu0 0.0
    %667 = vmatprep.subr.mxu0 0.0
    %668 = vmatpush2.msra.mxu0 0.0
    %669 = vmatprep.subr.mxu0 0.0
    %670 = vmatpush2.msra.mxu0 0.0
    %671 = vmatprep.subr.mxu0 0.0
    %672 = vmatpush2.msra.mxu0 0.0
    %673 = vmatprep.subr.mxu0 0.0
    %674 = vmatpush2.msra.mxu0 0.0
    %675 = vmatprep.subr.mxu0 0.0
    %676 = vmatpush2.msra.mxu0 0.0
    %677 = vmatprep.subr.mxu0 0.0
    %678 = vmatpush2.msra.mxu0 0.0
    %679 = vmatprep.subr.mxu0 0.0
    %680 = vmatpush2.msra.mxu0 0.0
    %681 = vmatprep.subr.mxu0 0.0
    %682 = vmatpush2.msra.mxu0 0.0
    %683 = vmatprep.subr.mxu0 0.0
    %684 = vmatpush2.msra.mxu0 0.0
    %685 = vmatprep.subr.mxu0 0.0
    %686 = vmatpush2.msra.mxu0 0.0
    %687 = vmatprep.subr.mxu0 0.0
    %688 = vmatpush2.msra.mxu0 0.0
    %689 = vmatprep.subr.mxu0 0.0
    %690 = vmatpush2.msra.mxu0 0.0
    %691 = vmatprep.mubr.f32.mxu0 0.0
    %692 = vmatmul.mubr.f32.gmra.mxu0 %v623
    %v693 = vpop.f32.mrf.mxu0
    %v694 = vadd.f32 0.0, %v693
    %v695 = vpop.f32.mrf.mxu0
    %696 = vmatprep.mubr.f32.mxu0 0.0
    %697 = vmatmul.mubr.f32.gmra.mxu0 %v624
    %v698 = vpop.f32.mrf.mxu0
    %v699 = vadd.f32 0.0, %v698
    %v700 = vpop.f32.mrf.mxu0
    %701 = vmatprep.mubr.f32.mxu0 0.0
    %702 = vmatmul.mubr.f32.gmra.mxu0 %v625
    %v703 = vpop.f32.mrf.mxu0
    %v704 = vadd.f32 0.0, %v703
    %v705 = vpop.f32.mrf.mxu0
    %706 = vmatprep.mubr.f32.mxu0 0.0
    %707 = vmatmul.mubr.f32.gmra.mxu0 %v626
    %v708 = vpop.f32.mrf.mxu0
    %v709 = vadd.f32 0.0, %v708
    %v710 = vpop.f32.mrf.mxu0
    %711 = vdwg.mxu0
    %s712 = scalar_lea.vmem %s4, 256
    %v713 = vld [vmem:[%s712] sm:$0xff]
    %v714 = vld [vmem:[%s712 + $0x8] sm:$0xff]
    %v715 = vld [vmem:[%s712 + $0x10] sm:$0xff]
    %v716 = vld [vmem:[%s712 + $0x18] sm:$0xff]
    %v717 = vld [vmem:[%s712 + $0x20] sm:$0xff]
    %v718 = vld [vmem:[%s712 + $0x28] sm:$0xff]
    %v719 = vld [vmem:[%s712 + $0x30] sm:$0xff]
    %v720 = vld [vmem:[%s712 + $0x38] sm:$0xff]
    %v721 = vld [vmem:[%s712 + $0x40] sm:$0xff]
    %v722 = vld [vmem:[%s712 + $0x48] sm:$0xff]
    %v723 = vld [vmem:[%s712 + $0x50] sm:$0xff]
    %v724 = vld [vmem:[%s712 + $0x58] sm:$0xff]
    %v725 = vld [vmem:[%s712 + $0x60] sm:$0xff]
    %v726 = vld [vmem:[%s712 + $0x68] sm:$0xff]
    %v727 = vld [vmem:[%s712 + $0x70] sm:$0xff]
    %v728 = vld [vmem:[%s712 + $0x78] sm:$0xff]
    %729 = vmatprep.subr.mxu0 0.0
    %730 = vmatpush1.msra.mxu0 %v728
    %731 = vmatprep.subr.mxu0 0.0
    %732 = vmatpush1.msra.mxu0 %v727
    %733 = vmatprep.subr.mxu0 0.0
    %734 = vmatpush1.msra.mxu0 %v726
    %735 = vmatprep.subr.mxu0 0.0
    %736 = vmatpush1.msra.mxu0 %v725
    %737 = vmatprep.subr.mxu0 0.0
    %738 = vmatpush1.msra.mxu0 %v724
    %739 = vmatprep.subr.mxu0 0.0
    %740 = vmatpush1.msra.mxu0 %v723
    %741 = vmatprep.subr.mxu0 0.0
    %742 = vmatpush1.msra.mxu0 %v722
    %743 = vmatprep.subr.mxu0 0.0
    %744 = vmatpush1.msra.mxu0 %v721
    %745 = vmatprep.subr.mxu0 0.0
    %746 = vmatpush1.msra.mxu0 %v720
    %747 = vmatprep.subr.mxu0 0.0
    %748 = vmatpush1.msra.mxu0 %v719
    %749 = vmatprep.subr.mxu0 0.0
    %750 = vmatpush1.msra.mxu0 %v718
    %751 = vmatprep.subr.mxu0 0.0
    %752 = vmatpush1.msra.mxu0 %v717
    %753 = vmatprep.subr.mxu0 0.0
    %754 = vmatpush1.msra.mxu0 %v716
    %755 = vmatprep.subr.mxu0 0.0
    %756 = vmatpush1.msra.mxu0 %v715
    %757 = vmatprep.subr.mxu0 0.0
    %758 = vmatpush1.msra.mxu0 %v714
    %759 = vmatprep.subr.mxu0 0.0
    %760 = vmatpush1.msra.mxu0 %v713
    %761 = vmatprep.subr.mxu0 0.0
    %762 = vmatpush2.msra.mxu0 0.0
    %763 = vmatprep.subr.mxu0 0.0
    %764 = vmatpush2.msra.mxu0 0.0
    %765 = vmatprep.subr.mxu0 0.0
    %766 = vmatpush2.msra.mxu0 0.0
    %767 = vmatprep.subr.mxu0 0.0
    %768 = vmatpush2.msra.mxu0 0.0
    %769 = vmatprep.subr.mxu0 0.0
    %770 = vmatpush2.msra.mxu0 0.0
    %771 = vmatprep.subr.mxu0 0.0
    %772 = vmatpush2.msra.mxu0 0.0
    %773 = vmatprep.subr.mxu0 0.0
    %774 = vmatpush2.msra.mxu0 0.0
    %775 = vmatprep.subr.mxu0 0.0
    %776 = vmatpush2.msra.mxu0 0.0
    %777 = vmatprep.subr.mxu0 0.0
    %778 = vmatpush2.msra.mxu0 0.0
    %779 = vmatprep.subr.mxu0 0.0
    %780 = vmatpush2.msra.mxu0 0.0
    %781 = vmatprep.subr.mxu0 0.0
    %782 = vmatpush2.msra.mxu0 0.0
    %783 = vmatprep.subr.mxu0 0.0
    %784 = vmatpush2.msra.mxu0 0.0
    %785 = vmatprep.subr.mxu0 0.0
    %786 = vmatpush2.msra.mxu0 0.0
    %787 = vmatprep.subr.mxu0 0.0
    %788 = vmatpush2.msra.mxu0 0.0
    %789 = vmatprep.subr.mxu0 0.0
    %790 = vmatpush2.msra.mxu0 0.0
    %791 = vmatprep.subr.mxu0 0.0
    %792 = vmatpush2.msra.mxu0 0.0
    %793 = vmatprep.mubr.f32.mxu0 0.0
    %794 = vmatmul.mubr.f32.gmra.mxu0 %v694
    %v795 = vpop.f32.mrf.mxu0
    %v796 = vadd.f32 0.0, %v795
    %v797 = vpop.f32.mrf.mxu0
    %798 = vmatprep.mubr.f32.mxu0 0.0
    %799 = vmatmul.mubr.f32.gmra.mxu0 %v699
    %v800 = vpop.f32.mrf.mxu0
    %v801 = vadd.f32 0.0, %v800
    %v802 = vpop.f32.mrf.mxu0
    %803 = vmatprep.mubr.f32.mxu0 0.0
    %804 = vmatmul.mubr.f32.gmra.mxu0 %v704
    %v805 = vpop.f32.mrf.mxu0
    %v806 = vadd.f32 0.0, %v805
    %v807 = vpop.f32.mrf.mxu0
    %808 = vmatprep.mubr.f32.mxu0 0.0
    %809 = vmatmul.mubr.f32.gmra.mxu0 %v709
    %v810 = vpop.f32.mrf.mxu0
    %v811 = vadd.f32 0.0, %v810
    %v812 = vpop.f32.mrf.mxu0
    %813 = vdwg.mxu0
    %v814 = vadd.f32 %v604, %v796
    %v815 = vadd.f32 %v609, %v801
    %v816 = vadd.f32 %v614, %v806
    %v817 = vadd.f32 %v619, %v811
    %s818 = scalar_lea.vmem %s3, 96
    %v819 = vld [vmem:[%s818] sm:$0xff]
    %v820 = vld [vmem:[%s818 + $0x8] sm:$0xff]
    %v821 = vld [vmem:[%s818 + $0x10] sm:$0xff]
    %v822 = vld [vmem:[%s818 + $0x18] sm:$0xff]
    %823 = vmatprep.subr.mxu0 0.0
    %824 = vmatpush1.msra.mxu0 %v239
    %825 = vmatprep.subr.mxu0 0.0
    %826 = vmatpush1.msra.mxu0 %v238
    %827 = vmatprep.subr.mxu0 0.0
    %828 = vmatpush1.msra.mxu0 %v237
    %829 = vmatprep.subr.mxu0 0.0
    %830 = vmatpush1.msra.mxu0 %v236
    %831 = vmatprep.subr.mxu0 0.0
    %832 = vmatpush1.msra.mxu0 %v235
    %833 = vmatprep.subr.mxu0 0.0
    %834 = vmatpush1.msra.mxu0 %v234
    %835 = vmatprep.subr.mxu0 0.0
    %836 = vmatpush1.msra.mxu0 %v233
    %837 = vmatprep.subr.mxu0 0.0
    %838 = vmatpush1.msra.mxu0 %v232
    %839 = vmatprep.subr.mxu0 0.0
    %840 = vmatpush1.msra.mxu0 %v231
    %841 = vmatprep.subr.mxu0 0.0
    %842 = vmatpush1.msra.mxu0 %v230
    %843 = vmatprep.subr.mxu0 0.0
    %844 = vmatpush1.msra.mxu0 %v229
    %845 = vmatprep.subr.mxu0 0.0
    %846 = vmatpush1.msra.mxu0 %v228
    %847 = vmatprep.subr.mxu0 0.0
    %848 = vmatpush1.msra.mxu0 %v227
    %849 = vmatprep.subr.mxu0 0.0
    %850 = vmatpush1.msra.mxu0 %v226
    %851 = vmatprep.subr.mxu0 0.0
    %852 = vmatpush1.msra.mxu0 %v225
    %853 = vmatprep.subr.mxu0 0.0
    %854 = vmatpush1.msra.mxu0 %v224
    %855 = vmatprep.subr.mxu0 0.0
    %856 = vmatpush2.msra.mxu0 0.0
    %857 = vmatprep.subr.mxu0 0.0
    %858 = vmatpush2.msra.mxu0 0.0
    %859 = vmatprep.subr.mxu0 0.0
    %860 = vmatpush2.msra.mxu0 0.0
    %861 = vmatprep.subr.mxu0 0.0
    %862 = vmatpush2.msra.mxu0 0.0
    %863 = vmatprep.subr.mxu0 0.0
    %864 = vmatpush2.msra.mxu0 0.0
    %865 = vmatprep.subr.mxu0 0.0
    %866 = vmatpush2.msra.mxu0 0.0
    %867 = vmatprep.subr.mxu0 0.0
    %868 = vmatpush2.msra.mxu0 0.0
    %869 = vmatprep.subr.mxu0 0.0
    %870 = vmatpush2.msra.mxu0 0.0
    %871 = vmatprep.subr.mxu0 0.0
    %872 = vmatpush2.msra.mxu0 0.0
    %873 = vmatprep.subr.mxu0 0.0
    %874 = vmatpush2.msra.mxu0 0.0
    %875 = vmatprep.subr.mxu0 0.0
    %876 = vmatpush2.msra.mxu0 0.0
    %877 = vmatprep.subr.mxu0 0.0
    %878 = vmatpush2.msra.mxu0 0.0
    %879 = vmatprep.subr.mxu0 0.0
    %880 = vmatpush2.msra.mxu0 0.0
    %881 = vmatprep.subr.mxu0 0.0
    %882 = vmatpush2.msra.mxu0 0.0
    %883 = vmatprep.subr.mxu0 0.0
    %884 = vmatpush2.msra.mxu0 0.0
    %885 = vmatprep.subr.mxu0 0.0
    %886 = vmatpush2.msra.mxu0 0.0
    %887 = vmatprep.mubr.f32.mxu0 0.0
    %888 = vmatmul.mubr.f32.gmra.mxu0 %v819
    %v889 = vpop.f32.mrf.mxu0
    %v890 = vadd.f32 0.0, %v889
    %v891 = vpop.f32.mrf.mxu0
    %892 = vmatprep.mubr.f32.mxu0 0.0
    %893 = vmatmul.mubr.f32.gmra.mxu0 %v820
    %v894 = vpop.f32.mrf.mxu0
    %v895 = vadd.f32 0.0, %v894
    %v896 = vpop.f32.mrf.mxu0
    %897 = vmatprep.mubr.f32.mxu0 0.0
    %898 = vmatmul.mubr.f32.gmra.mxu0 %v821
    %v899 = vpop.f32.mrf.mxu0
    %v900 = vadd.f32 0.0, %v899
    %v901 = vpop.f32.mrf.mxu0
    %902 = vmatprep.mubr.f32.mxu0 0.0
    %903 = vmatmul.mubr.f32.gmra.mxu0 %v822
    %v904 = vpop.f32.mrf.mxu0
    %v905 = vadd.f32 0.0, %v904
    %v906 = vpop.f32.mrf.mxu0
    %907 = vdwg.mxu0
    %s908 = scalar_lea.vmem %s4, 384
    %v909 = vld [vmem:[%s908] sm:$0xff]
    %v910 = vld [vmem:[%s908 + $0x8] sm:$0xff]
    %v911 = vld [vmem:[%s908 + $0x10] sm:$0xff]
    %v912 = vld [vmem:[%s908 + $0x18] sm:$0xff]
    %v913 = vld [vmem:[%s908 + $0x20] sm:$0xff]
    %v914 = vld [vmem:[%s908 + $0x28] sm:$0xff]
    %v915 = vld [vmem:[%s908 + $0x30] sm:$0xff]
    %v916 = vld [vmem:[%s908 + $0x38] sm:$0xff]
    %v917 = vld [vmem:[%s908 + $0x40] sm:$0xff]
    %v918 = vld [vmem:[%s908 + $0x48] sm:$0xff]
    %v919 = vld [vmem:[%s908 + $0x50] sm:$0xff]
    %v920 = vld [vmem:[%s908 + $0x58] sm:$0xff]
    %v921 = vld [vmem:[%s908 + $0x60] sm:$0xff]
    %v922 = vld [vmem:[%s908 + $0x68] sm:$0xff]
    %v923 = vld [vmem:[%s908 + $0x70] sm:$0xff]
    %v924 = vld [vmem:[%s908 + $0x78] sm:$0xff]
    %925 = vmatprep.subr.mxu0 0.0
    %926 = vmatpush1.msra.mxu0 %v924
    %927 = vmatprep.subr.mxu0 0.0
    %928 = vmatpush1.msra.mxu0 %v923
    %929 = vmatprep.subr.mxu0 0.0
    %930 = vmatpush1.msra.mxu0 %v922
    %931 = vmatprep.subr.mxu0 0.0
    %932 = vmatpush1.msra.mxu0 %v921
    %933 = vmatprep.subr.mxu0 0.0
    %934 = vmatpush1.msra.mxu0 %v920
    %935 = vmatprep.subr.mxu0 0.0
    %936 = vmatpush1.msra.mxu0 %v919
    %937 = vmatprep.subr.mxu0 0.0
    %938 = vmatpush1.msra.mxu0 %v918
    %939 = vmatprep.subr.mxu0 0.0
    %940 = vmatpush1.msra.mxu0 %v917
    %941 = vmatprep.subr.mxu0 0.0
    %942 = vmatpush1.msra.mxu0 %v916
    %943 = vmatprep.subr.mxu0 0.0
    %944 = vmatpush1.msra.mxu0 %v915
    %945 = vmatprep.subr.mxu0 0.0
    %946 = vmatpush1.msra.mxu0 %v914
    %947 = vmatprep.subr.mxu0 0.0
    %948 = vmatpush1.msra.mxu0 %v913
    %949 = vmatprep.subr.mxu0 0.0
    %950 = vmatpush1.msra.mxu0 %v912
    %951 = vmatprep.subr.mxu0 0.0
    %952 = vmatpush1.msra.mxu0 %v911
    %953 = vmatprep.subr.mxu0 0.0
    %954 = vmatpush1.msra.mxu0 %v910
    %955 = vmatprep.subr.mxu0 0.0
    %956 = vmatpush1.msra.mxu0 %v909
    %957 = vmatprep.subr.mxu0 0.0
    %958 = vmatpush2.msra.mxu0 0.0
    %959 = vmatprep.subr.mxu0 0.0
    %960 = vmatpush2.msra.mxu0 0.0
    %961 = vmatprep.subr.mxu0 0.0
    %962 = vmatpush2.msra.mxu0 0.0
    %963 = vmatprep.subr.mxu0 0.0
    %964 = vmatpush2.msra.mxu0 0.0
    %965 = vmatprep.subr.mxu0 0.0
    %966 = vmatpush2.msra.mxu0 0.0
    %967 = vmatprep.subr.mxu0 0.0
    %968 = vmatpush2.msra.mxu0 0.0
    %969 = vmatprep.subr.mxu0 0.0
    %970 = vmatpush2.msra.mxu0 0.0
    %971 = vmatprep.subr.mxu0 0.0
    %972 = vmatpush2.msra.mxu0 0.0
    %973 = vmatprep.subr.mxu0 0.0
    %974 = vmatpush2.msra.mxu0 0.0
    %975 = vmatprep.subr.mxu0 0.0
    %976 = vmatpush2.msra.mxu0 0.0
    %977 = vmatprep.subr.mxu0 0.0
    %978 = vmatpush2.msra.mxu0 0.0
    %979 = vmatprep.subr.mxu0 0.0
    %980 = vmatpush2.msra.mxu0 0.0
    %981 = vmatprep.subr.mxu0 0.0
    %982 = vmatpush2.msra.mxu0 0.0
    %983 = vmatprep.subr.mxu0 0.0
    %984 = vmatpush2.msra.mxu0 0.0
    %985 = vmatprep.subr.mxu0 0.0
    %986 = vmatpush2.msra.mxu0 0.0
    %987 = vmatprep.subr.mxu0 0.0
    %988 = vmatpush2.msra.mxu0 0.0
    %989 = vmatprep.mubr.f32.mxu0 0.0
    %990 = vmatmul.mubr.f32.gmra.mxu0 %v890
    %v991 = vpop.f32.mrf.mxu0
    %v992 = vadd.f32 0.0, %v991
    %v993 = vpop.f32.mrf.mxu0
    %994 = vmatprep.mubr.f32.mxu0 0.0
    %995 = vmatmul.mubr.f32.gmra.mxu0 %v895
    %v996 = vpop.f32.mrf.mxu0
    %v997 = vadd.f32 0.0, %v996
    %v998 = vpop.f32.mrf.mxu0
    %999 = vmatprep.mubr.f32.mxu0 0.0
    %1000 = vmatmul.mubr.f32.gmra.mxu0 %v900
    %v1001 = vpop.f32.mrf.mxu0
    %v1002 = vadd.f32 0.0, %v1001
    %v1003 = vpop.f32.mrf.mxu0
    %1004 = vmatprep.mubr.f32.mxu0 0.0
    %1005 = vmatmul.mubr.f32.gmra.mxu0 %v905
    %v1006 = vpop.f32.mrf.mxu0
    %v1007 = vadd.f32 0.0, %v1006
    %v1008 = vpop.f32.mrf.mxu0
    %1009 = vdwg.mxu0
    %v1010 = vadd.f32 %v814, %v992
    %v1011 = vadd.f32 %v815, %v997
    %v1012 = vadd.f32 %v816, %v1002
    %v1013 = vadd.f32 %v817, %v1007
    %s1014 = scalar_lea.vmem %s3, 128
    %v1015 = vld [vmem:[%s1014] sm:$0xff]
    %v1016 = vld [vmem:[%s1014 + $0x8] sm:$0xff]
    %v1017 = vld [vmem:[%s1014 + $0x10] sm:$0xff]
    %v1018 = vld [vmem:[%s1014 + $0x18] sm:$0xff]
    %1019 = vmatprep.subr.mxu0 0.0
    %1020 = vmatpush1.msra.mxu0 %v239
    %1021 = vmatprep.subr.mxu0 0.0
    %1022 = vmatpush1.msra.mxu0 %v238
    %1023 = vmatprep.subr.mxu0 0.0
    %1024 = vmatpush1.msra.mxu0 %v237
    %1025 = vmatprep.subr.mxu0 0.0
    %1026 = vmatpush1.msra.mxu0 %v236
    %1027 = vmatprep.subr.mxu0 0.0
    %1028 = vmatpush1.msra.mxu0 %v235
    %1029 = vmatprep.subr.mxu0 0.0
    %1030 = vmatpush1.msra.mxu0 %v234
    %1031 = vmatprep.subr.mxu0 0.0
    %1032 = vmatpush1.msra.mxu0 %v233
    %1033 = vmatprep.subr.mxu0 0.0
    %1034 = vmatpush1.msra.mxu0 %v232
    %1035 = vmatprep.subr.mxu0 0.0
    %1036 = vmatpush1.msra.mxu0 %v231
    %1037 = vmatprep.subr.mxu0 0.0
    %1038 = vmatpush1.msra.mxu0 %v230
    %1039 = vmatprep.subr.mxu0 0.0
    %1040 = vmatpush1.msra.mxu0 %v229
    %1041 = vmatprep.subr.mxu0 0.0
    %1042 = vmatpush1.msra.mxu0 %v228
    %1043 = vmatprep.subr.mxu0 0.0
    %1044 = vmatpush1.msra.mxu0 %v227
    %1045 = vmatprep.subr.mxu0 0.0
    %1046 = vmatpush1.msra.mxu0 %v226
    %1047 = vmatprep.subr.mxu0 0.0
    %1048 = vmatpush1.msra.mxu0 %v225
    %1049 = vmatprep.subr.mxu0 0.0
    %1050 = vmatpush1.msra.mxu0 %v224
    %1051 = vmatprep.subr.mxu0 0.0
    %1052 = vmatpush2.msra.mxu0 0.0
    %1053 = vmatprep.subr.mxu0 0.0
    %1054 = vmatpush2.msra.mxu0 0.0
    %1055 = vmatprep.subr.mxu0 0.0
    %1056 = vmatpush2.msra.mxu0 0.0
    %1057 = vmatprep.subr.mxu0 0.0
    %1058 = vmatpush2.msra.mxu0 0.0
    %1059 = vmatprep.subr.mxu0 0.0
    %1060 = vmatpush2.msra.mxu0 0.0
    %1061 = vmatprep.subr.mxu0 0.0
    %1062 = vmatpush2.msra.mxu0 0.0
    %1063 = vmatprep.subr.mxu0 0.0
    %1064 = vmatpush2.msra.mxu0 0.0
    %1065 = vmatprep.subr.mxu0 0.0
    %1066 = vmatpush2.msra.mxu0 0.0
    %1067 = vmatprep.subr.mxu0 0.0
    %1068 = vmatpush2.msra.mxu0 0.0
    %1069 = vmatprep.subr.mxu0 0.0
    %1070 = vmatpush2.msra.mxu0 0.0
    %1071 = vmatprep.subr.mxu0 0.0
    %1072 = vmatpush2.msra.mxu0 0.0
    %1073 = vmatprep.subr.mxu0 0.0
    %1074 = vmatpush2.msra.mxu0 0.0
    %1075 = vmatprep.subr.mxu0 0.0
    %1076 = vmatpush2.msra.mxu0 0.0
    %1077 = vmatprep.subr.mxu0 0.0
    %1078 = vmatpush2.msra.mxu0 0.0
    %1079 = vmatprep.subr.mxu0 0.0
    %1080 = vmatpush2.msra.mxu0 0.0
    %1081 = vmatprep.subr.mxu0 0.0
    %1082 = vmatpush2.msra.mxu0 0.0
    %1083 = vmatprep.mubr.f32.mxu0 0.0
    %1084 = vmatmul.mubr.f32.gmra.mxu0 %v1015
    %v1085 = vpop.f32.mrf.mxu0
    %v1086 = vadd.f32 0.0, %v1085
    %v1087 = vpop.f32.mrf.mxu0
    %1088 = vmatprep.mubr.f32.mxu0 0.0
    %1089 = vmatmul.mubr.f32.gmra.mxu0 %v1016
    %v1090 = vpop.f32.mrf.mxu0
    %v1091 = vadd.f32 0.0, %v1090
    %v1092 = vpop.f32.mrf.mxu0
    %1093 = vmatprep.mubr.f32.mxu0 0.0
    %1094 = vmatmul.mubr.f32.gmra.mxu0 %v1017
    %v1095 = vpop.f32.mrf.mxu0
    %v1096 = vadd.f32 0.0, %v1095
    %v1097 = vpop.f32.mrf.mxu0
    %1098 = vmatprep.mubr.f32.mxu0 0.0
    %1099 = vmatmul.mubr.f32.gmra.mxu0 %v1018
    %v1100 = vpop.f32.mrf.mxu0
    %v1101 = vadd.f32 0.0, %v1100
    %v1102 = vpop.f32.mrf.mxu0
    %1103 = vdwg.mxu0
    %s1104 = scalar_lea.vmem %s4, 512
    %v1105 = vld [vmem:[%s1104] sm:$0xff]
    %v1106 = vld [vmem:[%s1104 + $0x8] sm:$0xff]
    %v1107 = vld [vmem:[%s1104 + $0x10] sm:$0xff]
    %v1108 = vld [vmem:[%s1104 + $0x18] sm:$0xff]
    %v1109 = vld [vmem:[%s1104 + $0x20] sm:$0xff]
    %v1110 = vld [vmem:[%s1104 + $0x28] sm:$0xff]
    %v1111 = vld [vmem:[%s1104 + $0x30] sm:$0xff]
    %v1112 = vld [vmem:[%s1104 + $0x38] sm:$0xff]
    %v1113 = vld [vmem:[%s1104 + $0x40] sm:$0xff]
    %v1114 = vld [vmem:[%s1104 + $0x48] sm:$0xff]
    %v1115 = vld [vmem:[%s1104 + $0x50] sm:$0xff]
    %v1116 = vld [vmem:[%s1104 + $0x58] sm:$0xff]
    %v1117 = vld [vmem:[%s1104 + $0x60] sm:$0xff]
    %v1118 = vld [vmem:[%s1104 + $0x68] sm:$0xff]
    %v1119 = vld [vmem:[%s1104 + $0x70] sm:$0xff]
    %v1120 = vld [vmem:[%s1104 + $0x78] sm:$0xff]
    %1121 = vmatprep.subr.mxu0 0.0
    %1122 = vmatpush1.msra.mxu0 %v1120
    %1123 = vmatprep.subr.mxu0 0.0
    %1124 = vmatpush1.msra.mxu0 %v1119
    %1125 = vmatprep.subr.mxu0 0.0
    %1126 = vmatpush1.msra.mxu0 %v1118
    %1127 = vmatprep.subr.mxu0 0.0
    %1128 = vmatpush1.msra.mxu0 %v1117
    %1129 = vmatprep.subr.mxu0 0.0
    %1130 = vmatpush1.msra.mxu0 %v1116
    %1131 = vmatprep.subr.mxu0 0.0
    %1132 = vmatpush1.msra.mxu0 %v1115
    %1133 = vmatprep.subr.mxu0 0.0
    %1134 = vmatpush1.msra.mxu0 %v1114
    %1135 = vmatprep.subr.mxu0 0.0
    %1136 = vmatpush1.msra.mxu0 %v1113
    %1137 = vmatprep.subr.mxu0 0.0
    %1138 = vmatpush1.msra.mxu0 %v1112
    %1139 = vmatprep.subr.mxu0 0.0
    %1140 = vmatpush1.msra.mxu0 %v1111
    %1141 = vmatprep.subr.mxu0 0.0
    %1142 = vmatpush1.msra.mxu0 %v1110
    %1143 = vmatprep.subr.mxu0 0.0
    %1144 = vmatpush1.msra.mxu0 %v1109
    %1145 = vmatprep.subr.mxu0 0.0
    %1146 = vmatpush1.msra.mxu0 %v1108
    %1147 = vmatprep.subr.mxu0 0.0
    %1148 = vmatpush1.msra.mxu0 %v1107
    %1149 = vmatprep.subr.mxu0 0.0
    %1150 = vmatpush1.msra.mxu0 %v1106
    %1151 = vmatprep.subr.mxu0 0.0
    %1152 = vmatpush1.msra.mxu0 %v1105
    %1153 = vmatprep.subr.mxu0 0.0
    %1154 = vmatpush2.msra.mxu0 0.0
    %1155 = vmatprep.subr.mxu0 0.0
    %1156 = vmatpush2.msra.mxu0 0.0
    %1157 = vmatprep.subr.mxu0 0.0
    %1158 = vmatpush2.msra.mxu0 0.0
    %1159 = vmatprep.subr.mxu0 0.0
    %1160 = vmatpush2.msra.mxu0 0.0
    %1161 = vmatprep.subr.mxu0 0.0
    %1162 = vmatpush2.msra.mxu0 0.0
    %1163 = vmatprep.subr.mxu0 0.0
    %1164 = vmatpush2.msra.mxu0 0.0
    %1165 = vmatprep.subr.mxu0 0.0
    %1166 = vmatpush2.msra.mxu0 0.0
    %1167 = vmatprep.subr.mxu0 0.0
    %1168 = vmatpush2.msra.mxu0 0.0
    %1169 = vmatprep.subr.mxu0 0.0
    %1170 = vmatpush2.msra.mxu0 0.0
    %1171 = vmatprep.subr.mxu0 0.0
    %1172 = vmatpush2.msra.mxu0 0.0
    %1173 = vmatprep.subr.mxu0 0.0
    %1174 = vmatpush2.msra.mxu0 0.0
    %1175 = vmatprep.subr.mxu0 0.0
    %1176 = vmatpush2.msra.mxu0 0.0
    %1177 = vmatprep.subr.mxu0 0.0
    %1178 = vmatpush2.msra.mxu0 0.0
    %1179 = vmatprep.subr.mxu0 0.0
    %1180 = vmatpush2.msra.mxu0 0.0
    %1181 = vmatprep.subr.mxu0 0.0
    %1182 = vmatpush2.msra.mxu0 0.0
    %1183 = vmatprep.subr.mxu0 0.0
    %1184 = vmatpush2.msra.mxu0 0.0
    %1185 = vmatprep.mubr.f32.mxu0 0.0
    %1186 = vmatmul.mubr.f32.gmra.mxu0 %v1086
    %v1187 = vpop.f32.mrf.mxu0
    %v1188 = vadd.f32 0.0, %v1187
    %v1189 = vpop.f32.mrf.mxu0
    %1190 = vmatprep.mubr.f32.mxu0 0.0
    %1191 = vmatmul.mubr.f32.gmra.mxu0 %v1091
    %v1192 = vpop.f32.mrf.mxu0
    %v1193 = vadd.f32 0.0, %v1192
    %v1194 = vpop.f32.mrf.mxu0
    %1195 = vmatprep.mubr.f32.mxu0 0.0
    %1196 = vmatmul.mubr.f32.gmra.mxu0 %v1096
    %v1197 = vpop.f32.mrf.mxu0
    %v1198 = vadd.f32 0.0, %v1197
    %v1199 = vpop.f32.mrf.mxu0
    %1200 = vmatprep.mubr.f32.mxu0 0.0
    %1201 = vmatmul.mubr.f32.gmra.mxu0 %v1101
    %v1202 = vpop.f32.mrf.mxu0
    %v1203 = vadd.f32 0.0, %v1202
    %v1204 = vpop.f32.mrf.mxu0
    %1205 = vdwg.mxu0
    %v1206 = vadd.f32 %v1010, %v1188
    %v1207 = vadd.f32 %v1011, %v1193
    %v1208 = vadd.f32 %v1012, %v1198
    %v1209 = vadd.f32 %v1013, %v1203
    %s1210 = scalar_lea.vmem %s3, 160
    %v1211 = vld [vmem:[%s1210] sm:$0xff]
    %v1212 = vld [vmem:[%s1210 + $0x8] sm:$0xff]
    %v1213 = vld [vmem:[%s1210 + $0x10] sm:$0xff]
    %v1214 = vld [vmem:[%s1210 + $0x18] sm:$0xff]
    %1215 = vmatprep.subr.mxu0 0.0
    %1216 = vmatpush1.msra.mxu0 %v239
    %1217 = vmatprep.subr.mxu0 0.0
    %1218 = vmatpush1.msra.mxu0 %v238
    %1219 = vmatprep.subr.mxu0 0.0
    %1220 = vmatpush1.msra.mxu0 %v237
    %1221 = vmatprep.subr.mxu0 0.0
    %1222 = vmatpush1.msra.mxu0 %v236
    %1223 = vmatprep.subr.mxu0 0.0
    %1224 = vmatpush1.msra.mxu0 %v235
    %1225 = vmatprep.subr.mxu0 0.0
    %1226 = vmatpush1.msra.mxu0 %v234
    %1227 = vmatprep.subr.mxu0 0.0
    %1228 = vmatpush1.msra.mxu0 %v233
    %1229 = vmatprep.subr.mxu0 0.0
    %1230 = vmatpush1.msra.mxu0 %v232
    %1231 = vmatprep.subr.mxu0 0.0
    %1232 = vmatpush1.msra.mxu0 %v231
    %1233 = vmatprep.subr.mxu0 0.0
    %1234 = vmatpush1.msra.mxu0 %v230
    %1235 = vmatprep.subr.mxu0 0.0
    %1236 = vmatpush1.msra.mxu0 %v229
    %1237 = vmatprep.subr.mxu0 0.0
    %1238 = vmatpush1.msra.mxu0 %v228
    %1239 = vmatprep.subr.mxu0 0.0
    %1240 = vmatpush1.msra.mxu0 %v227
    %1241 = vmatprep.subr.mxu0 0.0
    %1242 = vmatpush1.msra.mxu0 %v226
    %1243 = vmatprep.subr.mxu0 0.0
    %1244 = vmatpush1.msra.mxu0 %v225
    %1245 = vmatprep.subr.mxu0 0.0
    %1246 = vmatpush1.msra.mxu0 %v224
    %1247 = vmatprep.subr.mxu0 0.0
    %1248 = vmatpush2.msra.mxu0 0.0
    %1249 = vmatprep.subr.mxu0 0.0
    %1250 = vmatpush2.msra.mxu0 0.0
    %1251 = vmatprep.subr.mxu0 0.0
    %1252 = vmatpush2.msra.mxu0 0.0
    %1253 = vmatprep.subr.mxu0 0.0
    %1254 = vmatpush2.msra.mxu0 0.0
    %1255 = vmatprep.subr.mxu0 0.0
    %1256 = vmatpush2.msra.mxu0 0.0
    %1257 = vmatprep.subr.mxu0 0.0
    %1258 = vmatpush2.msra.mxu0 0.0
    %1259 = vmatprep.subr.mxu0 0.0
    %1260 = vmatpush2.msra.mxu0 0.0
    %1261 = vmatprep.subr.mxu0 0.0
    %1262 = vmatpush2.msra.mxu0 0.0
    %1263 = vmatprep.subr.mxu0 0.0
    %1264 = vmatpush2.msra.mxu0 0.0
    %1265 = vmatprep.subr.mxu0 0.0
    %1266 = vmatpush2.msra.mxu0 0.0
    %1267 = vmatprep.subr.mxu0 0.0
    %1268 = vmatpush2.msra.mxu0 0.0
    %1269 = vmatprep.subr.mxu0 0.0
    %1270 = vmatpush2.msra.mxu0 0.0
    %1271 = vmatprep.subr.mxu0 0.0
    %1272 = vmatpush2.msra.mxu0 0.0
    %1273 = vmatprep.subr.mxu0 0.0
    %1274 = vmatpush2.msra.mxu0 0.0
    %1275 = vmatprep.subr.mxu0 0.0
    %1276 = vmatpush2.msra.mxu0 0.0
    %1277 = vmatprep.subr.mxu0 0.0
    %1278 = vmatpush2.msra.mxu0 0.0
    %1279 = vmatprep.mubr.f32.mxu0 0.0
    %1280 = vmatmul.mubr.f32.gmra.mxu0 %v1211
    %v1281 = vpop.f32.mrf.mxu0
    %v1282 = vadd.f32 0.0, %v1281
    %v1283 = vpop.f32.mrf.mxu0
    %1284 = vmatprep.mubr.f32.mxu0 0.0
    %1285 = vmatmul.mubr.f32.gmra.mxu0 %v1212
    %v1286 = vpop.f32.mrf.mxu0
    %v1287 = vadd.f32 0.0, %v1286
    %v1288 = vpop.f32.mrf.mxu0
    %1289 = vmatprep.mubr.f32.mxu0 0.0
    %1290 = vmatmul.mubr.f32.gmra.mxu0 %v1213
    %v1291 = vpop.f32.mrf.mxu0
    %v1292 = vadd.f32 0.0, %v1291
    %v1293 = vpop.f32.mrf.mxu0
    %1294 = vmatprep.mubr.f32.mxu0 0.0
    %1295 = vmatmul.mubr.f32.gmra.mxu0 %v1214
    %v1296 = vpop.f32.mrf.mxu0
    %v1297 = vadd.f32 0.0, %v1296
    %v1298 = vpop.f32.mrf.mxu0
    %1299 = vdwg.mxu0
    %s1300 = scalar_lea.vmem %s4, 640
    %v1301 = vld [vmem:[%s1300] sm:$0xff]
    %v1302 = vld [vmem:[%s1300 + $0x8] sm:$0xff]
    %v1303 = vld [vmem:[%s1300 + $0x10] sm:$0xff]
    %v1304 = vld [vmem:[%s1300 + $0x18] sm:$0xff]
    %v1305 = vld [vmem:[%s1300 + $0x20] sm:$0xff]
    %v1306 = vld [vmem:[%s1300 + $0x28] sm:$0xff]
    %v1307 = vld [vmem:[%s1300 + $0x30] sm:$0xff]
    %v1308 = vld [vmem:[%s1300 + $0x38] sm:$0xff]
    %v1309 = vld [vmem:[%s1300 + $0x40] sm:$0xff]
    %v1310 = vld [vmem:[%s1300 + $0x48] sm:$0xff]
    %v1311 = vld [vmem:[%s1300 + $0x50] sm:$0xff]
    %v1312 = vld [vmem:[%s1300 + $0x58] sm:$0xff]
    %v1313 = vld [vmem:[%s1300 + $0x60] sm:$0xff]
    %v1314 = vld [vmem:[%s1300 + $0x68] sm:$0xff]
    %v1315 = vld [vmem:[%s1300 + $0x70] sm:$0xff]
    %v1316 = vld [vmem:[%s1300 + $0x78] sm:$0xff]
    %1317 = vmatprep.subr.mxu0 0.0
    %1318 = vmatpush1.msra.mxu0 %v1316
    %1319 = vmatprep.subr.mxu0 0.0
    %1320 = vmatpush1.msra.mxu0 %v1315
    %1321 = vmatprep.subr.mxu0 0.0
    %1322 = vmatpush1.msra.mxu0 %v1314
    %1323 = vmatprep.subr.mxu0 0.0
    %1324 = vmatpush1.msra.mxu0 %v1313
    %1325 = vmatprep.subr.mxu0 0.0
    %1326 = vmatpush1.msra.mxu0 %v1312
    %1327 = vmatprep.subr.mxu0 0.0
    %1328 = vmatpush1.msra.mxu0 %v1311
    %1329 = vmatprep.subr.mxu0 0.0
    %1330 = vmatpush1.msra.mxu0 %v1310
    %1331 = vmatprep.subr.mxu0 0.0
    %1332 = vmatpush1.msra.mxu0 %v1309
    %1333 = vmatprep.subr.mxu0 0.0
    %1334 = vmatpush1.msra.mxu0 %v1308
    %1335 = vmatprep.subr.mxu0 0.0
    %1336 = vmatpush1.msra.mxu0 %v1307
    %1337 = vmatprep.subr.mxu0 0.0
    %1338 = vmatpush1.msra.mxu0 %v1306
    %1339 = vmatprep.subr.mxu0 0.0
    %1340 = vmatpush1.msra.mxu0 %v1305
    %1341 = vmatprep.subr.mxu0 0.0
    %1342 = vmatpush1.msra.mxu0 %v1304
    %1343 = vmatprep.subr.mxu0 0.0
    %1344 = vmatpush1.msra.mxu0 %v1303
    %1345 = vmatprep.subr.mxu0 0.0
    %1346 = vmatpush1.msra.mxu0 %v1302
    %1347 = vmatprep.subr.mxu0 0.0
    %1348 = vmatpush1.msra.mxu0 %v1301
    %1349 = vmatprep.subr.mxu0 0.0
    %1350 = vmatpush2.msra.mxu0 0.0
    %1351 = vmatprep.subr.mxu0 0.0
    %1352 = vmatpush2.msra.mxu0 0.0
    %1353 = vmatprep.subr.mxu0 0.0
    %1354 = vmatpush2.msra.mxu0 0.0
    %1355 = vmatprep.subr.mxu0 0.0
    %1356 = vmatpush2.msra.mxu0 0.0
    %1357 = vmatprep.subr.mxu0 0.0
    %1358 = vmatpush2.msra.mxu0 0.0
    %1359 = vmatprep.subr.mxu0 0.0
    %1360 = vmatpush2.msra.mxu0 0.0
    %1361 = vmatprep.subr.mxu0 0.0
    %1362 = vmatpush2.msra.mxu0 0.0
    %1363 = vmatprep.subr.mxu0 0.0
    %1364 = vmatpush2.msra.mxu0 0.0
    %1365 = vmatprep.subr.mxu0 0.0
    %1366 = vmatpush2.msra.mxu0 0.0
    %1367 = vmatprep.subr.mxu0 0.0
    %1368 = vmatpush2.msra.mxu0 0.0
    %1369 = vmatprep.subr.mxu0 0.0
    %1370 = vmatpush2.msra.mxu0 0.0
    %1371 = vmatprep.subr.mxu0 0.0
    %1372 = vmatpush2.msra.mxu0 0.0
    %1373 = vmatprep.subr.mxu0 0.0
    %1374 = vmatpush2.msra.mxu0 0.0
    %1375 = vmatprep.subr.mxu0 0.0
    %1376 = vmatpush2.msra.mxu0 0.0
    %1377 = vmatprep.subr.mxu0 0.0
    %1378 = vmatpush2.msra.mxu0 0.0
    %1379 = vmatprep.subr.mxu0 0.0
    %1380 = vmatpush2.msra.mxu0 0.0
    %1381 = vmatprep.mubr.f32.mxu0 0.0
    %1382 = vmatmul.mubr.f32.gmra.mxu0 %v1282
    %v1383 = vpop.f32.mrf.mxu0
    %v1384 = vadd.f32 0.0, %v1383
    %v1385 = vpop.f32.mrf.mxu0
    %1386 = vmatprep.mubr.f32.mxu0 0.0
    %1387 = vmatmul.mubr.f32.gmra.mxu0 %v1287
    %v1388 = vpop.f32.mrf.mxu0
    %v1389 = vadd.f32 0.0, %v1388
    %v1390 = vpop.f32.mrf.mxu0
    %1391 = vmatprep.mubr.f32.mxu0 0.0
    %1392 = vmatmul.mubr.f32.gmra.mxu0 %v1292
    %v1393 = vpop.f32.mrf.mxu0
    %v1394 = vadd.f32 0.0, %v1393
    %v1395 = vpop.f32.mrf.mxu0
    %1396 = vmatprep.mubr.f32.mxu0 0.0
    %1397 = vmatmul.mubr.f32.gmra.mxu0 %v1297
    %v1398 = vpop.f32.mrf.mxu0
    %v1399 = vadd.f32 0.0, %v1398
    %v1400 = vpop.f32.mrf.mxu0
    %1401 = vdwg.mxu0
    %v1402 = vadd.f32 %v1206, %v1384
    %v1403 = vadd.f32 %v1207, %v1389
    %v1404 = vadd.f32 %v1208, %v1394
    %v1405 = vadd.f32 %v1209, %v1399
    %s1406 = scalar_lea.vmem %s3, 192
    %v1407 = vld [vmem:[%s1406] sm:$0xff]
    %v1408 = vld [vmem:[%s1406 + $0x8] sm:$0xff]
    %v1409 = vld [vmem:[%s1406 + $0x10] sm:$0xff]
    %v1410 = vld [vmem:[%s1406 + $0x18] sm:$0xff]
    %1411 = vmatprep.subr.mxu0 0.0
    %1412 = vmatpush1.msra.mxu0 %v239
    %1413 = vmatprep.subr.mxu0 0.0
    %1414 = vmatpush1.msra.mxu0 %v238
    %1415 = vmatprep.subr.mxu0 0.0
    %1416 = vmatpush1.msra.mxu0 %v237
    %1417 = vmatprep.subr.mxu0 0.0
    %1418 = vmatpush1.msra.mxu0 %v236
    %1419 = vmatprep.subr.mxu0 0.0
    %1420 = vmatpush1.msra.mxu0 %v235
    %1421 = vmatprep.subr.mxu0 0.0
    %1422 = vmatpush1.msra.mxu0 %v234
    %1423 = vmatprep.subr.mxu0 0.0
    %1424 = vmatpush1.msra.mxu0 %v233
    %1425 = vmatprep.subr.mxu0 0.0
    %1426 = vmatpush1.msra.mxu0 %v232
    %1427 = vmatprep.subr.mxu0 0.0
    %1428 = vmatpush1.msra.mxu0 %v231
    %1429 = vmatprep.subr.mxu0 0.0
    %1430 = vmatpush1.msra.mxu0 %v230
    %1431 = vmatprep.subr.mxu0 0.0
    %1432 = vmatpush1.msra.mxu0 %v229
    %1433 = vmatprep.subr.mxu0 0.0
    %1434 = vmatpush1.msra.mxu0 %v228
    %1435 = vmatprep.subr.mxu0 0.0
    %1436 = vmatpush1.msra.mxu0 %v227
    %1437 = vmatprep.subr.mxu0 0.0
    %1438 = vmatpush1.msra.mxu0 %v226
    %1439 = vmatprep.subr.mxu0 0.0
    %1440 = vmatpush1.msra.mxu0 %v225
    %1441 = vmatprep.subr.mxu0 0.0
    %1442 = vmatpush1.msra.mxu0 %v224
    %1443 = vmatprep.subr.mxu0 0.0
    %1444 = vmatpush2.msra.mxu0 0.0
    %1445 = vmatprep.subr.mxu0 0.0
    %1446 = vmatpush2.msra.mxu0 0.0
    %1447 = vmatprep.subr.mxu0 0.0
    %1448 = vmatpush2.msra.mxu0 0.0
    %1449 = vmatprep.subr.mxu0 0.0
    %1450 = vmatpush2.msra.mxu0 0.0
    %1451 = vmatprep.subr.mxu0 0.0
    %1452 = vmatpush2.msra.mxu0 0.0
    %1453 = vmatprep.subr.mxu0 0.0
    %1454 = vmatpush2.msra.mxu0 0.0
    %1455 = vmatprep.subr.mxu0 0.0
    %1456 = vmatpush2.msra.mxu0 0.0
    %1457 = vmatprep.subr.mxu0 0.0
    %1458 = vmatpush2.msra.mxu0 0.0
    %1459 = vmatprep.subr.mxu0 0.0
    %1460 = vmatpush2.msra.mxu0 0.0
    %1461 = vmatprep.subr.mxu0 0.0
    %1462 = vmatpush2.msra.mxu0 0.0
    %1463 = vmatprep.subr.mxu0 0.0
    %1464 = vmatpush2.msra.mxu0 0.0
    %1465 = vmatprep.subr.mxu0 0.0
    %1466 = vmatpush2.msra.mxu0 0.0
    %1467 = vmatprep.subr.mxu0 0.0
    %1468 = vmatpush2.msra.mxu0 0.0
    %1469 = vmatprep.subr.mxu0 0.0
    %1470 = vmatpush2.msra.mxu0 0.0
    %1471 = vmatprep.subr.mxu0 0.0
    %1472 = vmatpush2.msra.mxu0 0.0
    %1473 = vmatprep.subr.mxu0 0.0
    %1474 = vmatpush2.msra.mxu0 0.0
    %1475 = vmatprep.mubr.f32.mxu0 0.0
    %1476 = vmatmul.mubr.f32.gmra.mxu0 %v1407
    %v1477 = vpop.f32.mrf.mxu0
    %v1478 = vadd.f32 0.0, %v1477
    %v1479 = vpop.f32.mrf.mxu0
    %1480 = vmatprep.mubr.f32.mxu0 0.0
    %1481 = vmatmul.mubr.f32.gmra.mxu0 %v1408
    %v1482 = vpop.f32.mrf.mxu0
    %v1483 = vadd.f32 0.0, %v1482
    %v1484 = vpop.f32.mrf.mxu0
    %1485 = vmatprep.mubr.f32.mxu0 0.0
    %1486 = vmatmul.mubr.f32.gmra.mxu0 %v1409
    %v1487 = vpop.f32.mrf.mxu0
    %v1488 = vadd.f32 0.0, %v1487
    %v1489 = vpop.f32.mrf.mxu0
    %1490 = vmatprep.mubr.f32.mxu0 0.0
    %1491 = vmatmul.mubr.f32.gmra.mxu0 %v1410
    %v1492 = vpop.f32.mrf.mxu0
    %v1493 = vadd.f32 0.0, %v1492
    %v1494 = vpop.f32.mrf.mxu0
    %1495 = vdwg.mxu0
    %s1496 = scalar_lea.vmem %s4, 768
    %v1497 = vld [vmem:[%s1496] sm:$0xff]
    %v1498 = vld [vmem:[%s1496 + $0x8] sm:$0xff]
    %v1499 = vld [vmem:[%s1496 + $0x10] sm:$0xff]
    %v1500 = vld [vmem:[%s1496 + $0x18] sm:$0xff]
    %v1501 = vld [vmem:[%s1496 + $0x20] sm:$0xff]
    %v1502 = vld [vmem:[%s1496 + $0x28] sm:$0xff]
    %v1503 = vld [vmem:[%s1496 + $0x30] sm:$0xff]
    %v1504 = vld [vmem:[%s1496 + $0x38] sm:$0xff]
    %v1505 = vld [vmem:[%s1496 + $0x40] sm:$0xff]
    %v1506 = vld [vmem:[%s1496 + $0x48] sm:$0xff]
    %v1507 = vld [vmem:[%s1496 + $0x50] sm:$0xff]
    %v1508 = vld [vmem:[%s1496 + $0x58] sm:$0xff]
    %v1509 = vld [vmem:[%s1496 + $0x60] sm:$0xff]
    %v1510 = vld [vmem:[%s1496 + $0x68] sm:$0xff]
    %v1511 = vld [vmem:[%s1496 + $0x70] sm:$0xff]
    %v1512 = vld [vmem:[%s1496 + $0x78] sm:$0xff]
    %1513 = vmatprep.subr.mxu0 0.0
    %1514 = vmatpush1.msra.mxu0 %v1512
    %1515 = vmatprep.subr.mxu0 0.0
    %1516 = vmatpush1.msra.mxu0 %v1511
    %1517 = vmatprep.subr.mxu0 0.0
    %1518 = vmatpush1.msra.mxu0 %v1510
    %1519 = vmatprep.subr.mxu0 0.0
    %1520 = vmatpush1.msra.mxu0 %v1509
    %1521 = vmatprep.subr.mxu0 0.0
    %1522 = vmatpush1.msra.mxu0 %v1508
    %1523 = vmatprep.subr.mxu0 0.0
    %1524 = vmatpush1.msra.mxu0 %v1507
    %1525 = vmatprep.subr.mxu0 0.0
    %1526 = vmatpush1.msra.mxu0 %v1506
    %1527 = vmatprep.subr.mxu0 0.0
    %1528 = vmatpush1.msra.mxu0 %v1505
    %1529 = vmatprep.subr.mxu0 0.0
    %1530 = vmatpush1.msra.mxu0 %v1504
    %1531 = vmatprep.subr.mxu0 0.0
    %1532 = vmatpush1.msra.mxu0 %v1503
    %1533 = vmatprep.subr.mxu0 0.0
    %1534 = vmatpush1.msra.mxu0 %v1502
    %1535 = vmatprep.subr.mxu0 0.0
    %1536 = vmatpush1.msra.mxu0 %v1501
    %1537 = vmatprep.subr.mxu0 0.0
    %1538 = vmatpush1.msra.mxu0 %v1500
    %1539 = vmatprep.subr.mxu0 0.0
    %1540 = vmatpush1.msra.mxu0 %v1499
    %1541 = vmatprep.subr.mxu0 0.0
    %1542 = vmatpush1.msra.mxu0 %v1498
    %1543 = vmatprep.subr.mxu0 0.0
    %1544 = vmatpush1.msra.mxu0 %v1497
    %1545 = vmatprep.subr.mxu0 0.0
    %1546 = vmatpush2.msra.mxu0 0.0
    %1547 = vmatprep.subr.mxu0 0.0
    %1548 = vmatpush2.msra.mxu0 0.0
    %1549 = vmatprep.subr.mxu0 0.0
    %1550 = vmatpush2.msra.mxu0 0.0
    %1551 = vmatprep.subr.mxu0 0.0
    %1552 = vmatpush2.msra.mxu0 0.0
    %1553 = vmatprep.subr.mxu0 0.0
    %1554 = vmatpush2.msra.mxu0 0.0
    %1555 = vmatprep.subr.mxu0 0.0
    %1556 = vmatpush2.msra.mxu0 0.0
    %1557 = vmatprep.subr.mxu0 0.0
    %1558 = vmatpush2.msra.mxu0 0.0
    %1559 = vmatprep.subr.mxu0 0.0
    %1560 = vmatpush2.msra.mxu0 0.0
    %1561 = vmatprep.subr.mxu0 0.0
    %1562 = vmatpush2.msra.mxu0 0.0
    %1563 = vmatprep.subr.mxu0 0.0
    %1564 = vmatpush2.msra.mxu0 0.0
    %1565 = vmatprep.subr.mxu0 0.0
    %1566 = vmatpush2.msra.mxu0 0.0
    %1567 = vmatprep.subr.mxu0 0.0
    %1568 = vmatpush2.msra.mxu0 0.0
    %1569 = vmatprep.subr.mxu0 0.0
    %1570 = vmatpush2.msra.mxu0 0.0
    %1571 = vmatprep.subr.mxu0 0.0
    %1572 = vmatpush2.msra.mxu0 0.0
    %1573 = vmatprep.subr.mxu0 0.0
    %1574 = vmatpush2.msra.mxu0 0.0
    %1575 = vmatprep.subr.mxu0 0.0
    %1576 = vmatpush2.msra.mxu0 0.0
    %1577 = vmatprep.mubr.f32.mxu0 0.0
    %1578 = vmatmul.mubr.f32.gmra.mxu0 %v1478
    %v1579 = vpop.f32.mrf.mxu0
    %v1580 = vadd.f32 0.0, %v1579
    %v1581 = vpop.f32.mrf.mxu0
    %1582 = vmatprep.mubr.f32.mxu0 0.0
    %1583 = vmatmul.mubr.f32.gmra.mxu0 %v1483
    %v1584 = vpop.f32.mrf.mxu0
    %v1585 = vadd.f32 0.0, %v1584
    %v1586 = vpop.f32.mrf.mxu0
    %1587 = vmatprep.mubr.f32.mxu0 0.0
    %1588 = vmatmul.mubr.f32.gmra.mxu0 %v1488
    %v1589 = vpop.f32.mrf.mxu0
    %v1590 = vadd.f32 0.0, %v1589
    %v1591 = vpop.f32.mrf.mxu0
    %1592 = vmatprep.mubr.f32.mxu0 0.0
    %1593 = vmatmul.mubr.f32.gmra.mxu0 %v1493
    %v1594 = vpop.f32.mrf.mxu0
    %v1595 = vadd.f32 0.0, %v1594
    %v1596 = vpop.f32.mrf.mxu0
    %1597 = vdwg.mxu0
    %v1598 = vadd.f32 %v1402, %v1580
    %v1599 = vadd.f32 %v1403, %v1585
    %v1600 = vadd.f32 %v1404, %v1590
    %v1601 = vadd.f32 %v1405, %v1595
    %s1602 = scalar_lea.vmem %s3, 224
    %v1603 = vld [vmem:[%s1602] sm:$0xff]
    %v1604 = vld [vmem:[%s1602 + $0x8] sm:$0xff]
    %v1605 = vld [vmem:[%s1602 + $0x10] sm:$0xff]
    %v1606 = vld [vmem:[%s1602 + $0x18] sm:$0xff]
    %1607 = vmatprep.subr.mxu0 0.0
    %1608 = vmatpush1.msra.mxu0 %v239
    %1609 = vmatprep.subr.mxu0 0.0
    %1610 = vmatpush1.msra.mxu0 %v238
    %1611 = vmatprep.subr.mxu0 0.0
    %1612 = vmatpush1.msra.mxu0 %v237
    %1613 = vmatprep.subr.mxu0 0.0
    %1614 = vmatpush1.msra.mxu0 %v236
    %1615 = vmatprep.subr.mxu0 0.0
    %1616 = vmatpush1.msra.mxu0 %v235
    %1617 = vmatprep.subr.mxu0 0.0
    %1618 = vmatpush1.msra.mxu0 %v234
    %1619 = vmatprep.subr.mxu0 0.0
    %1620 = vmatpush1.msra.mxu0 %v233
    %1621 = vmatprep.subr.mxu0 0.0
    %1622 = vmatpush1.msra.mxu0 %v232
    %1623 = vmatprep.subr.mxu0 0.0
    %1624 = vmatpush1.msra.mxu0 %v231
    %1625 = vmatprep.subr.mxu0 0.0
    %1626 = vmatpush1.msra.mxu0 %v230
    %1627 = vmatprep.subr.mxu0 0.0
    %1628 = vmatpush1.msra.mxu0 %v229
    %1629 = vmatprep.subr.mxu0 0.0
    %1630 = vmatpush1.msra.mxu0 %v228
    %1631 = vmatprep.subr.mxu0 0.0
    %1632 = vmatpush1.msra.mxu0 %v227
    %1633 = vmatprep.subr.mxu0 0.0
    %1634 = vmatpush1.msra.mxu0 %v226
    %1635 = vmatprep.subr.mxu0 0.0
    %1636 = vmatpush1.msra.mxu0 %v225
    %1637 = vmatprep.subr.mxu0 0.0
    %1638 = vmatpush1.msra.mxu0 %v224
    %1639 = vmatprep.subr.mxu0 0.0
    %1640 = vmatpush2.msra.mxu0 0.0
    %1641 = vmatprep.subr.mxu0 0.0
    %1642 = vmatpush2.msra.mxu0 0.0
    %1643 = vmatprep.subr.mxu0 0.0
    %1644 = vmatpush2.msra.mxu0 0.0
    %1645 = vmatprep.subr.mxu0 0.0
    %1646 = vmatpush2.msra.mxu0 0.0
    %1647 = vmatprep.subr.mxu0 0.0
    %1648 = vmatpush2.msra.mxu0 0.0
    %1649 = vmatprep.subr.mxu0 0.0
    %1650 = vmatpush2.msra.mxu0 0.0
    %1651 = vmatprep.subr.mxu0 0.0
    %1652 = vmatpush2.msra.mxu0 0.0
    %1653 = vmatprep.subr.mxu0 0.0
    %1654 = vmatpush2.msra.mxu0 0.0
    %1655 = vmatprep.subr.mxu0 0.0
    %1656 = vmatpush2.msra.mxu0 0.0
    %1657 = vmatprep.subr.mxu0 0.0
    %1658 = vmatpush2.msra.mxu0 0.0
    %1659 = vmatprep.subr.mxu0 0.0
    %1660 = vmatpush2.msra.mxu0 0.0
    %1661 = vmatprep.subr.mxu0 0.0
    %1662 = vmatpush2.msra.mxu0 0.0
    %1663 = vmatprep.subr.mxu0 0.0
    %1664 = vmatpush2.msra.mxu0 0.0
    %1665 = vmatprep.subr.mxu0 0.0
    %1666 = vmatpush2.msra.mxu0 0.0
    %1667 = vmatprep.subr.mxu0 0.0
    %1668 = vmatpush2.msra.mxu0 0.0
    %1669 = vmatprep.subr.mxu0 0.0
    %1670 = vmatpush2.msra.mxu0 0.0
    %1671 = vmatprep.mubr.f32.mxu0 0.0
    %1672 = vmatmul.mubr.f32.gmra.mxu0 %v1603
    %v1673 = vpop.f32.mrf.mxu0
    %v1674 = vadd.f32 0.0, %v1673
    %v1675 = vpop.f32.mrf.mxu0
    %1676 = vmatprep.mubr.f32.mxu0 0.0
    %1677 = vmatmul.mubr.f32.gmra.mxu0 %v1604
    %v1678 = vpop.f32.mrf.mxu0
    %v1679 = vadd.f32 0.0, %v1678
    %v1680 = vpop.f32.mrf.mxu0
    %1681 = vmatprep.mubr.f32.mxu0 0.0
    %1682 = vmatmul.mubr.f32.gmra.mxu0 %v1605
    %v1683 = vpop.f32.mrf.mxu0
    %v1684 = vadd.f32 0.0, %v1683
    %v1685 = vpop.f32.mrf.mxu0
    %1686 = vmatprep.mubr.f32.mxu0 0.0
    %1687 = vmatmul.mubr.f32.gmra.mxu0 %v1606
    %v1688 = vpop.f32.mrf.mxu0
    %v1689 = vadd.f32 0.0, %v1688
    %v1690 = vpop.f32.mrf.mxu0
    %1691 = vdwg.mxu0
    %s1692 = scalar_lea.vmem %s4, 896
    %v1693 = vld [vmem:[%s1692] sm:$0xff]
    %v1694 = vld [vmem:[%s1692 + $0x8] sm:$0xff]
    %v1695 = vld [vmem:[%s1692 + $0x10] sm:$0xff]
    %v1696 = vld [vmem:[%s1692 + $0x18] sm:$0xff]
    %v1697 = vld [vmem:[%s1692 + $0x20] sm:$0xff]
    %v1698 = vld [vmem:[%s1692 + $0x28] sm:$0xff]
    %v1699 = vld [vmem:[%s1692 + $0x30] sm:$0xff]
    %v1700 = vld [vmem:[%s1692 + $0x38] sm:$0xff]
    %v1701 = vld [vmem:[%s1692 + $0x40] sm:$0xff]
    %v1702 = vld [vmem:[%s1692 + $0x48] sm:$0xff]
    %v1703 = vld [vmem:[%s1692 + $0x50] sm:$0xff]
    %v1704 = vld [vmem:[%s1692 + $0x58] sm:$0xff]
    %v1705 = vld [vmem:[%s1692 + $0x60] sm:$0xff]
    %v1706 = vld [vmem:[%s1692 + $0x68] sm:$0xff]
    %v1707 = vld [vmem:[%s1692 + $0x70] sm:$0xff]
    %v1708 = vld [vmem:[%s1692 + $0x78] sm:$0xff]
    %1709 = vmatprep.subr.mxu0 0.0
    %1710 = vmatpush1.msra.mxu0 %v1708
    %1711 = vmatprep.subr.mxu0 0.0
    %1712 = vmatpush1.msra.mxu0 %v1707
    %1713 = vmatprep.subr.mxu0 0.0
    %1714 = vmatpush1.msra.mxu0 %v1706
    %1715 = vmatprep.subr.mxu0 0.0
    %1716 = vmatpush1.msra.mxu0 %v1705
    %1717 = vmatprep.subr.mxu0 0.0
    %1718 = vmatpush1.msra.mxu0 %v1704
    %1719 = vmatprep.subr.mxu0 0.0
    %1720 = vmatpush1.msra.mxu0 %v1703
    %1721 = vmatprep.subr.mxu0 0.0
    %1722 = vmatpush1.msra.mxu0 %v1702
    %1723 = vmatprep.subr.mxu0 0.0
    %1724 = vmatpush1.msra.mxu0 %v1701
    %1725 = vmatprep.subr.mxu0 0.0
    %1726 = vmatpush1.msra.mxu0 %v1700
    %1727 = vmatprep.subr.mxu0 0.0
    %1728 = vmatpush1.msra.mxu0 %v1699
    %1729 = vmatprep.subr.mxu0 0.0
    %1730 = vmatpush1.msra.mxu0 %v1698
    %1731 = vmatprep.subr.mxu0 0.0
    %1732 = vmatpush1.msra.mxu0 %v1697
    %1733 = vmatprep.subr.mxu0 0.0
    %1734 = vmatpush1.msra.mxu0 %v1696
    %1735 = vmatprep.subr.mxu0 0.0
    %1736 = vmatpush1.msra.mxu0 %v1695
    %1737 = vmatprep.subr.mxu0 0.0
    %1738 = vmatpush1.msra.mxu0 %v1694
    %1739 = vmatprep.subr.mxu0 0.0
    %1740 = vmatpush1.msra.mxu0 %v1693
    %1741 = vmatprep.subr.mxu0 0.0
    %1742 = vmatpush2.msra.mxu0 0.0
    %1743 = vmatprep.subr.mxu0 0.0
    %1744 = vmatpush2.msra.mxu0 0.0
    %1745 = vmatprep.subr.mxu0 0.0
    %1746 = vmatpush2.msra.mxu0 0.0
    %1747 = vmatprep.subr.mxu0 0.0
    %1748 = vmatpush2.msra.mxu0 0.0
    %1749 = vmatprep.subr.mxu0 0.0
    %1750 = vmatpush2.msra.mxu0 0.0
    %1751 = vmatprep.subr.mxu0 0.0
    %1752 = vmatpush2.msra.mxu0 0.0
    %1753 = vmatprep.subr.mxu0 0.0
    %1754 = vmatpush2.msra.mxu0 0.0
    %1755 = vmatprep.subr.mxu0 0.0
    %1756 = vmatpush2.msra.mxu0 0.0
    %1757 = vmatprep.subr.mxu0 0.0
    %1758 = vmatpush2.msra.mxu0 0.0
    %1759 = vmatprep.subr.mxu0 0.0
    %1760 = vmatpush2.msra.mxu0 0.0
    %1761 = vmatprep.subr.mxu0 0.0
    %1762 = vmatpush2.msra.mxu0 0.0
    %1763 = vmatprep.subr.mxu0 0.0
    %1764 = vmatpush2.msra.mxu0 0.0
    %1765 = vmatprep.subr.mxu0 0.0
    %1766 = vmatpush2.msra.mxu0 0.0
    %1767 = vmatprep.subr.mxu0 0.0
    %1768 = vmatpush2.msra.mxu0 0.0
    %1769 = vmatprep.subr.mxu0 0.0
    %1770 = vmatpush2.msra.mxu0 0.0
    %1771 = vmatprep.subr.mxu0 0.0
    %1772 = vmatpush2.msra.mxu0 0.0
    %1773 = vmatprep.mubr.f32.mxu0 0.0
    %1774 = vmatmul.mubr.f32.gmra.mxu0 %v1674
    %v1775 = vpop.f32.mrf.mxu0
    %v1776 = vadd.f32 0.0, %v1775
    %v1777 = vpop.f32.mrf.mxu0
    %1778 = vmatprep.mubr.f32.mxu0 0.0
    %1779 = vmatmul.mubr.f32.gmra.mxu0 %v1679
    %v1780 = vpop.f32.mrf.mxu0
    %v1781 = vadd.f32 0.0, %v1780
    %v1782 = vpop.f32.mrf.mxu0
    %1783 = vmatprep.mubr.f32.mxu0 0.0
    %1784 = vmatmul.mubr.f32.gmra.mxu0 %v1684
    %v1785 = vpop.f32.mrf.mxu0
    %v1786 = vadd.f32 0.0, %v1785
    %v1787 = vpop.f32.mrf.mxu0
    %1788 = vmatprep.mubr.f32.mxu0 0.0
    %1789 = vmatmul.mubr.f32.gmra.mxu0 %v1689
    %v1790 = vpop.f32.mrf.mxu0
    %v1791 = vadd.f32 0.0, %v1790
    %v1792 = vpop.f32.mrf.mxu0
    %1793 = vdwg.mxu0
    %v1794 = vadd.f32 %v1598, %v1776
    %v1795 = vadd.f32 %v1599, %v1781
    %v1796 = vadd.f32 %v1600, %v1786
    %v1797 = vadd.f32 %v1601, %v1791
    %s1798 = scalar_lea.vmem %s3, 256
    %v1799 = vld [vmem:[%s1798] sm:$0xff]
    %v1800 = vld [vmem:[%s1798 + $0x8] sm:$0xff]
    %v1801 = vld [vmem:[%s1798 + $0x10] sm:$0xff]
    %v1802 = vld [vmem:[%s1798 + $0x18] sm:$0xff]
    %1803 = vmatprep.subr.mxu0 0.0
    %1804 = vmatpush1.msra.mxu0 %v239
    %1805 = vmatprep.subr.mxu0 0.0
    %1806 = vmatpush1.msra.mxu0 %v238
    %1807 = vmatprep.subr.mxu0 0.0
    %1808 = vmatpush1.msra.mxu0 %v237
    %1809 = vmatprep.subr.mxu0 0.0
    %1810 = vmatpush1.msra.mxu0 %v236
    %1811 = vmatprep.subr.mxu0 0.0
    %1812 = vmatpush1.msra.mxu0 %v235
    %1813 = vmatprep.subr.mxu0 0.0
    %1814 = vmatpush1.msra.mxu0 %v234
    %1815 = vmatprep.subr.mxu0 0.0
    %1816 = vmatpush1.msra.mxu0 %v233
    %1817 = vmatprep.subr.mxu0 0.0
    %1818 = vmatpush1.msra.mxu0 %v232
    %1819 = vmatprep.subr.mxu0 0.0
    %1820 = vmatpush1.msra.mxu0 %v231
    %1821 = vmatprep.subr.mxu0 0.0
    %1822 = vmatpush1.msra.mxu0 %v230
    %1823 = vmatprep.subr.mxu0 0.0
    %1824 = vmatpush1.msra.mxu0 %v229
    %1825 = vmatprep.subr.mxu0 0.0
    %1826 = vmatpush1.msra.mxu0 %v228
    %1827 = vmatprep.subr.mxu0 0.0
    %1828 = vmatpush1.msra.mxu0 %v227
    %1829 = vmatprep.subr.mxu0 0.0
    %1830 = vmatpush1.msra.mxu0 %v226
    %1831 = vmatprep.subr.mxu0 0.0
    %1832 = vmatpush1.msra.mxu0 %v225
    %1833 = vmatprep.subr.mxu0 0.0
    %1834 = vmatpush1.msra.mxu0 %v224
    %1835 = vmatprep.subr.mxu0 0.0
    %1836 = vmatpush2.msra.mxu0 0.0
    %1837 = vmatprep.subr.mxu0 0.0
    %1838 = vmatpush2.msra.mxu0 0.0
    %1839 = vmatprep.subr.mxu0 0.0
    %1840 = vmatpush2.msra.mxu0 0.0
    %1841 = vmatprep.subr.mxu0 0.0
    %1842 = vmatpush2.msra.mxu0 0.0
    %1843 = vmatprep.subr.mxu0 0.0
    %1844 = vmatpush2.msra.mxu0 0.0
    %1845 = vmatprep.subr.mxu0 0.0
    %1846 = vmatpush2.msra.mxu0 0.0
    %1847 = vmatprep.subr.mxu0 0.0
    %1848 = vmatpush2.msra.mxu0 0.0
    %1849 = vmatprep.subr.mxu0 0.0
    %1850 = vmatpush2.msra.mxu0 0.0
    %1851 = vmatprep.subr.mxu0 0.0
    %1852 = vmatpush2.msra.mxu0 0.0
    %1853 = vmatprep.subr.mxu0 0.0
    %1854 = vmatpush2.msra.mxu0 0.0
    %1855 = vmatprep.subr.mxu0 0.0
    %1856 = vmatpush2.msra.mxu0 0.0
    %1857 = vmatprep.subr.mxu0 0.0
    %1858 = vmatpush2.msra.mxu0 0.0
    %1859 = vmatprep.subr.mxu0 0.0
    %1860 = vmatpush2.msra.mxu0 0.0
    %1861 = vmatprep.subr.mxu0 0.0
    %1862 = vmatpush2.msra.mxu0 0.0
    %1863 = vmatprep.subr.mxu0 0.0
    %1864 = vmatpush2.msra.mxu0 0.0
    %1865 = vmatprep.subr.mxu0 0.0
    %1866 = vmatpush2.msra.mxu0 0.0
    %1867 = vmatprep.mubr.f32.mxu0 0.0
    %1868 = vmatmul.mubr.f32.gmra.mxu0 %v1799
    %v1869 = vpop.f32.mrf.mxu0
    %v1870 = vadd.f32 0.0, %v1869
    %v1871 = vpop.f32.mrf.mxu0
    %1872 = vmatprep.mubr.f32.mxu0 0.0
    %1873 = vmatmul.mubr.f32.gmra.mxu0 %v1800
    %v1874 = vpop.f32.mrf.mxu0
    %v1875 = vadd.f32 0.0, %v1874
    %v1876 = vpop.f32.mrf.mxu0
    %1877 = vmatprep.mubr.f32.mxu0 0.0
    %1878 = vmatmul.mubr.f32.gmra.mxu0 %v1801
    %v1879 = vpop.f32.mrf.mxu0
    %v1880 = vadd.f32 0.0, %v1879
    %v1881 = vpop.f32.mrf.mxu0
    %1882 = vmatprep.mubr.f32.mxu0 0.0
    %1883 = vmatmul.mubr.f32.gmra.mxu0 %v1802
    %v1884 = vpop.f32.mrf.mxu0
    %v1885 = vadd.f32 0.0, %v1884
    %v1886 = vpop.f32.mrf.mxu0
    %1887 = vdwg.mxu0
    %s1888 = scalar_lea.vmem %s4, 1024
    %v1889 = vld [vmem:[%s1888] sm:$0xff]
    %v1890 = vld [vmem:[%s1888 + $0x8] sm:$0xff]
    %v1891 = vld [vmem:[%s1888 + $0x10] sm:$0xff]
    %v1892 = vld [vmem:[%s1888 + $0x18] sm:$0xff]
    %v1893 = vld [vmem:[%s1888 + $0x20] sm:$0xff]
    %v1894 = vld [vmem:[%s1888 + $0x28] sm:$0xff]
    %v1895 = vld [vmem:[%s1888 + $0x30] sm:$0xff]
    %v1896 = vld [vmem:[%s1888 + $0x38] sm:$0xff]
    %v1897 = vld [vmem:[%s1888 + $0x40] sm:$0xff]
    %v1898 = vld [vmem:[%s1888 + $0x48] sm:$0xff]
    %v1899 = vld [vmem:[%s1888 + $0x50] sm:$0xff]
    %v1900 = vld [vmem:[%s1888 + $0x58] sm:$0xff]
    %v1901 = vld [vmem:[%s1888 + $0x60] sm:$0xff]
    %v1902 = vld [vmem:[%s1888 + $0x68] sm:$0xff]
    %v1903 = vld [vmem:[%s1888 + $0x70] sm:$0xff]
    %v1904 = vld [vmem:[%s1888 + $0x78] sm:$0xff]
    %1905 = vmatprep.subr.mxu0 0.0
    %1906 = vmatpush1.msra.mxu0 %v1904
    %1907 = vmatprep.subr.mxu0 0.0
    %1908 = vmatpush1.msra.mxu0 %v1903
    %1909 = vmatprep.subr.mxu0 0.0
    %1910 = vmatpush1.msra.mxu0 %v1902
    %1911 = vmatprep.subr.mxu0 0.0
    %1912 = vmatpush1.msra.mxu0 %v1901
    %1913 = vmatprep.subr.mxu0 0.0
    %1914 = vmatpush1.msra.mxu0 %v1900
    %1915 = vmatprep.subr.mxu0 0.0
    %1916 = vmatpush1.msra.mxu0 %v1899
    %1917 = vmatprep.subr.mxu0 0.0
    %1918 = vmatpush1.msra.mxu0 %v1898
    %1919 = vmatprep.subr.mxu0 0.0
    %1920 = vmatpush1.msra.mxu0 %v1897
    %1921 = vmatprep.subr.mxu0 0.0
    %1922 = vmatpush1.msra.mxu0 %v1896
    %1923 = vmatprep.subr.mxu0 0.0
    %1924 = vmatpush1.msra.mxu0 %v1895
    %1925 = vmatprep.subr.mxu0 0.0
    %1926 = vmatpush1.msra.mxu0 %v1894
    %1927 = vmatprep.subr.mxu0 0.0
    %1928 = vmatpush1.msra.mxu0 %v1893
    %1929 = vmatprep.subr.mxu0 0.0
    %1930 = vmatpush1.msra.mxu0 %v1892
    %1931 = vmatprep.subr.mxu0 0.0
    %1932 = vmatpush1.msra.mxu0 %v1891
    %1933 = vmatprep.subr.mxu0 0.0
    %1934 = vmatpush1.msra.mxu0 %v1890
    %1935 = vmatprep.subr.mxu0 0.0
    %1936 = vmatpush1.msra.mxu0 %v1889
    %1937 = vmatprep.subr.mxu0 0.0
    %1938 = vmatpush2.msra.mxu0 0.0
    %1939 = vmatprep.subr.mxu0 0.0
    %1940 = vmatpush2.msra.mxu0 0.0
    %1941 = vmatprep.subr.mxu0 0.0
    %1942 = vmatpush2.msra.mxu0 0.0
    %1943 = vmatprep.subr.mxu0 0.0
    %1944 = vmatpush2.msra.mxu0 0.0
    %1945 = vmatprep.subr.mxu0 0.0
    %1946 = vmatpush2.msra.mxu0 0.0
    %1947 = vmatprep.subr.mxu0 0.0
    %1948 = vmatpush2.msra.mxu0 0.0
    %1949 = vmatprep.subr.mxu0 0.0
    %1950 = vmatpush2.msra.mxu0 0.0
    %1951 = vmatprep.subr.mxu0 0.0
    %1952 = vmatpush2.msra.mxu0 0.0
    %1953 = vmatprep.subr.mxu0 0.0
    %1954 = vmatpush2.msra.mxu0 0.0
    %1955 = vmatprep.subr.mxu0 0.0
    %1956 = vmatpush2.msra.mxu0 0.0
    %1957 = vmatprep.subr.mxu0 0.0
    %1958 = vmatpush2.msra.mxu0 0.0
    %1959 = vmatprep.subr.mxu0 0.0
    %1960 = vmatpush2.msra.mxu0 0.0
    %1961 = vmatprep.subr.mxu0 0.0
    %1962 = vmatpush2.msra.mxu0 0.0
    %1963 = vmatprep.subr.mxu0 0.0
    %1964 = vmatpush2.msra.mxu0 0.0
    %1965 = vmatprep.subr.mxu0 0.0
    %1966 = vmatpush2.msra.mxu0 0.0
    %1967 = vmatprep.subr.mxu0 0.0
    %1968 = vmatpush2.msra.mxu0 0.0
    %1969 = vmatprep.mubr.f32.mxu0 0.0
    %1970 = vmatmul.mubr.f32.gmra.mxu0 %v1870
    %v1971 = vpop.f32.mrf.mxu0
    %v1972 = vadd.f32 0.0, %v1971
    %v1973 = vpop.f32.mrf.mxu0
    %1974 = vmatprep.mubr.f32.mxu0 0.0
    %1975 = vmatmul.mubr.f32.gmra.mxu0 %v1875
    %v1976 = vpop.f32.mrf.mxu0
    %v1977 = vadd.f32 0.0, %v1976
    %v1978 = vpop.f32.mrf.mxu0
    %1979 = vmatprep.mubr.f32.mxu0 0.0
    %1980 = vmatmul.mubr.f32.gmra.mxu0 %v1880
    %v1981 = vpop.f32.mrf.mxu0
    %v1982 = vadd.f32 0.0, %v1981
    %v1983 = vpop.f32.mrf.mxu0
    %1984 = vmatprep.mubr.f32.mxu0 0.0
    %1985 = vmatmul.mubr.f32.gmra.mxu0 %v1885
    %v1986 = vpop.f32.mrf.mxu0
    %v1987 = vadd.f32 0.0, %v1986
    %v1988 = vpop.f32.mrf.mxu0
    %1989 = vdwg.mxu0
    %v1990 = vadd.f32 %v1794, %v1972
    %v1991 = vadd.f32 %v1795, %v1977
    %v1992 = vadd.f32 %v1796, %v1982
    %v1993 = vadd.f32 %v1797, %v1987
    %s1994 = scalar_lea.vmem %s3, 288
    %v1995 = vld [vmem:[%s1994] sm:$0xff]
    %v1996 = vld [vmem:[%s1994 + $0x8] sm:$0xff]
    %v1997 = vld [vmem:[%s1994 + $0x10] sm:$0xff]
    %v1998 = vld [vmem:[%s1994 + $0x18] sm:$0xff]
    %1999 = vmatprep.subr.mxu0 0.0
    %2000 = vmatpush1.msra.mxu0 %v239
    %2001 = vmatprep.subr.mxu0 0.0
    %2002 = vmatpush1.msra.mxu0 %v238
    %2003 = vmatprep.subr.mxu0 0.0
    %2004 = vmatpush1.msra.mxu0 %v237
    %2005 = vmatprep.subr.mxu0 0.0
    %2006 = vmatpush1.msra.mxu0 %v236
    %2007 = vmatprep.subr.mxu0 0.0
    %2008 = vmatpush1.msra.mxu0 %v235
    %2009 = vmatprep.subr.mxu0 0.0
    %2010 = vmatpush1.msra.mxu0 %v234
    %2011 = vmatprep.subr.mxu0 0.0
    %2012 = vmatpush1.msra.mxu0 %v233
    %2013 = vmatprep.subr.mxu0 0.0
    %2014 = vmatpush1.msra.mxu0 %v232
    %2015 = vmatprep.subr.mxu0 0.0
    %2016 = vmatpush1.msra.mxu0 %v231
    %2017 = vmatprep.subr.mxu0 0.0
    %2018 = vmatpush1.msra.mxu0 %v230
    %2019 = vmatprep.subr.mxu0 0.0
    %2020 = vmatpush1.msra.mxu0 %v229
    %2021 = vmatprep.subr.mxu0 0.0
    %2022 = vmatpush1.msra.mxu0 %v228
    %2023 = vmatprep.subr.mxu0 0.0
    %2024 = vmatpush1.msra.mxu0 %v227
    %2025 = vmatprep.subr.mxu0 0.0
    %2026 = vmatpush1.msra.mxu0 %v226
    %2027 = vmatprep.subr.mxu0 0.0
    %2028 = vmatpush1.msra.mxu0 %v225
    %2029 = vmatprep.subr.mxu0 0.0
    %2030 = vmatpush1.msra.mxu0 %v224
    %2031 = vmatprep.subr.mxu0 0.0
    %2032 = vmatpush2.msra.mxu0 0.0
    %2033 = vmatprep.subr.mxu0 0.0
    %2034 = vmatpush2.msra.mxu0 0.0
    %2035 = vmatprep.subr.mxu0 0.0
    %2036 = vmatpush2.msra.mxu0 0.0
    %2037 = vmatprep.subr.mxu0 0.0
    %2038 = vmatpush2.msra.mxu0 0.0
    %2039 = vmatprep.subr.mxu0 0.0
    %2040 = vmatpush2.msra.mxu0 0.0
    %2041 = vmatprep.subr.mxu0 0.0
    %2042 = vmatpush2.msra.mxu0 0.0
    %2043 = vmatprep.subr.mxu0 0.0
    %2044 = vmatpush2.msra.mxu0 0.0
    %2045 = vmatprep.subr.mxu0 0.0
    %2046 = vmatpush2.msra.mxu0 0.0
    %2047 = vmatprep.subr.mxu0 0.0
    %2048 = vmatpush2.msra.mxu0 0.0
    %2049 = vmatprep.subr.mxu0 0.0
    %2050 = vmatpush2.msra.mxu0 0.0
    %2051 = vmatprep.subr.mxu0 0.0
    %2052 = vmatpush2.msra.mxu0 0.0
    %2053 = vmatprep.subr.mxu0 0.0
    %2054 = vmatpush2.msra.mxu0 0.0
    %2055 = vmatprep.subr.mxu0 0.0
    %2056 = vmatpush2.msra.mxu0 0.0
    %2057 = vmatprep.subr.mxu0 0.0
    %2058 = vmatpush2.msra.mxu0 0.0
    %2059 = vmatprep.subr.mxu0 0.0
    %2060 = vmatpush2.msra.mxu0 0.0
    %2061 = vmatprep.subr.mxu0 0.0
    %2062 = vmatpush2.msra.mxu0 0.0
    %2063 = vmatprep.mubr.f32.mxu0 0.0
    %2064 = vmatmul.mubr.f32.gmra.mxu0 %v1995
    %v2065 = vpop.f32.mrf.mxu0
    %v2066 = vadd.f32 0.0, %v2065
    %v2067 = vpop.f32.mrf.mxu0
    %2068 = vmatprep.mubr.f32.mxu0 0.0
    %2069 = vmatmul.mubr.f32.gmra.mxu0 %v1996
    %v2070 = vpop.f32.mrf.mxu0
    %v2071 = vadd.f32 0.0, %v2070
    %v2072 = vpop.f32.mrf.mxu0
    %2073 = vmatprep.mubr.f32.mxu0 0.0
    %2074 = vmatmul.mubr.f32.gmra.mxu0 %v1997
    %v2075 = vpop.f32.mrf.mxu0
    %v2076 = vadd.f32 0.0, %v2075
    %v2077 = vpop.f32.mrf.mxu0
    %2078 = vmatprep.mubr.f32.mxu0 0.0
    %2079 = vmatmul.mubr.f32.gmra.mxu0 %v1998
    %v2080 = vpop.f32.mrf.mxu0
    %v2081 = vadd.f32 0.0, %v2080
    %v2082 = vpop.f32.mrf.mxu0
    %2083 = vdwg.mxu0
    %s2084 = scalar_lea.vmem %s4, 1152
    %v2085 = vld [vmem:[%s2084] sm:$0xff]
    %v2086 = vld [vmem:[%s2084 + $0x8] sm:$0xff]
    %v2087 = vld [vmem:[%s2084 + $0x10] sm:$0xff]
    %v2088 = vld [vmem:[%s2084 + $0x18] sm:$0xff]
    %v2089 = vld [vmem:[%s2084 + $0x20] sm:$0xff]
    %v2090 = vld [vmem:[%s2084 + $0x28] sm:$0xff]
    %v2091 = vld [vmem:[%s2084 + $0x30] sm:$0xff]
    %v2092 = vld [vmem:[%s2084 + $0x38] sm:$0xff]
    %v2093 = vld [vmem:[%s2084 + $0x40] sm:$0xff]
    %v2094 = vld [vmem:[%s2084 + $0x48] sm:$0xff]
    %v2095 = vld [vmem:[%s2084 + $0x50] sm:$0xff]
    %v2096 = vld [vmem:[%s2084 + $0x58] sm:$0xff]
    %v2097 = vld [vmem:[%s2084 + $0x60] sm:$0xff]
    %v2098 = vld [vmem:[%s2084 + $0x68] sm:$0xff]
    %v2099 = vld [vmem:[%s2084 + $0x70] sm:$0xff]
    %v2100 = vld [vmem:[%s2084 + $0x78] sm:$0xff]
    %2101 = vmatprep.subr.mxu0 0.0
    %2102 = vmatpush1.msra.mxu0 %v2100
    %2103 = vmatprep.subr.mxu0 0.0
    %2104 = vmatpush1.msra.mxu0 %v2099
    %2105 = vmatprep.subr.mxu0 0.0
    %2106 = vmatpush1.msra.mxu0 %v2098
    %2107 = vmatprep.subr.mxu0 0.0
    %2108 = vmatpush1.msra.mxu0 %v2097
    %2109 = vmatprep.subr.mxu0 0.0
    %2110 = vmatpush1.msra.mxu0 %v2096
    %2111 = vmatprep.subr.mxu0 0.0
    %2112 = vmatpush1.msra.mxu0 %v2095
    %2113 = vmatprep.subr.mxu0 0.0
    %2114 = vmatpush1.msra.mxu0 %v2094
    %2115 = vmatprep.subr.mxu0 0.0
    %2116 = vmatpush1.msra.mxu0 %v2093
    %2117 = vmatprep.subr.mxu0 0.0
    %2118 = vmatpush1.msra.mxu0 %v2092
    %2119 = vmatprep.subr.mxu0 0.0
    %2120 = vmatpush1.msra.mxu0 %v2091
    %2121 = vmatprep.subr.mxu0 0.0
    %2122 = vmatpush1.msra.mxu0 %v2090
    %2123 = vmatprep.subr.mxu0 0.0
    %2124 = vmatpush1.msra.mxu0 %v2089
    %2125 = vmatprep.subr.mxu0 0.0
    %2126 = vmatpush1.msra.mxu0 %v2088
    %2127 = vmatprep.subr.mxu0 0.0
    %2128 = vmatpush1.msra.mxu0 %v2087
    %2129 = vmatprep.subr.mxu0 0.0
    %2130 = vmatpush1.msra.mxu0 %v2086
    %2131 = vmatprep.subr.mxu0 0.0
    %2132 = vmatpush1.msra.mxu0 %v2085
    %2133 = vmatprep.subr.mxu0 0.0
    %2134 = vmatpush2.msra.mxu0 0.0
    %2135 = vmatprep.subr.mxu0 0.0
    %2136 = vmatpush2.msra.mxu0 0.0
    %2137 = vmatprep.subr.mxu0 0.0
    %2138 = vmatpush2.msra.mxu0 0.0
    %2139 = vmatprep.subr.mxu0 0.0
    %2140 = vmatpush2.msra.mxu0 0.0
    %2141 = vmatprep.subr.mxu0 0.0
    %2142 = vmatpush2.msra.mxu0 0.0
    %2143 = vmatprep.subr.mxu0 0.0
    %2144 = vmatpush2.msra.mxu0 0.0
    %2145 = vmatprep.subr.mxu0 0.0
    %2146 = vmatpush2.msra.mxu0 0.0
    %2147 = vmatprep.subr.mxu0 0.0
    %2148 = vmatpush2.msra.mxu0 0.0
    %2149 = vmatprep.subr.mxu0 0.0
    %2150 = vmatpush2.msra.mxu0 0.0
    %2151 = vmatprep.subr.mxu0 0.0
    %2152 = vmatpush2.msra.mxu0 0.0
    %2153 = vmatprep.subr.mxu0 0.0
    %2154 = vmatpush2.msra.mxu0 0.0
    %2155 = vmatprep.subr.mxu0 0.0
    %2156 = vmatpush2.msra.mxu0 0.0
    %2157 = vmatprep.subr.mxu0 0.0
    %2158 = vmatpush2.msra.mxu0 0.0
    %2159 = vmatprep.subr.mxu0 0.0
    %2160 = vmatpush2.msra.mxu0 0.0
    %2161 = vmatprep.subr.mxu0 0.0
    %2162 = vmatpush2.msra.mxu0 0.0
    %2163 = vmatprep.subr.mxu0 0.0
    %2164 = vmatpush2.msra.mxu0 0.0
    %2165 = vmatprep.mubr.f32.mxu0 0.0
    %2166 = vmatmul.mubr.f32.gmra.mxu0 %v2066
    %v2167 = vpop.f32.mrf.mxu0
    %v2168 = vadd.f32 0.0, %v2167
    %v2169 = vpop.f32.mrf.mxu0
    %2170 = vmatprep.mubr.f32.mxu0 0.0
    %2171 = vmatmul.mubr.f32.gmra.mxu0 %v2071
    %v2172 = vpop.f32.mrf.mxu0
    %v2173 = vadd.f32 0.0, %v2172
    %v2174 = vpop.f32.mrf.mxu0
    %2175 = vmatprep.mubr.f32.mxu0 0.0
    %2176 = vmatmul.mubr.f32.gmra.mxu0 %v2076
    %v2177 = vpop.f32.mrf.mxu0
    %v2178 = vadd.f32 0.0, %v2177
    %v2179 = vpop.f32.mrf.mxu0
    %2180 = vmatprep.mubr.f32.mxu0 0.0
    %2181 = vmatmul.mubr.f32.gmra.mxu0 %v2081
    %v2182 = vpop.f32.mrf.mxu0
    %v2183 = vadd.f32 0.0, %v2182
    %v2184 = vpop.f32.mrf.mxu0
    %2185 = vdwg.mxu0
    %v2186 = vadd.f32 %v1990, %v2168
    %v2187 = vadd.f32 %v1991, %v2173
    %v2188 = vadd.f32 %v1992, %v2178
    %v2189 = vadd.f32 %v1993, %v2183
    %s2190 = scalar_lea.vmem %s3, 320
    %v2191 = vld [vmem:[%s2190] sm:$0xff]
    %v2192 = vld [vmem:[%s2190 + $0x8] sm:$0xff]
    %v2193 = vld [vmem:[%s2190 + $0x10] sm:$0xff]
    %v2194 = vld [vmem:[%s2190 + $0x18] sm:$0xff]
    %2195 = vmatprep.subr.mxu0 0.0
    %2196 = vmatpush1.msra.mxu0 %v239
    %2197 = vmatprep.subr.mxu0 0.0
    %2198 = vmatpush1.msra.mxu0 %v238
    %2199 = vmatprep.subr.mxu0 0.0
    %2200 = vmatpush1.msra.mxu0 %v237
    %2201 = vmatprep.subr.mxu0 0.0
    %2202 = vmatpush1.msra.mxu0 %v236
    %2203 = vmatprep.subr.mxu0 0.0
    %2204 = vmatpush1.msra.mxu0 %v235
    %2205 = vmatprep.subr.mxu0 0.0
    %2206 = vmatpush1.msra.mxu0 %v234
    %2207 = vmatprep.subr.mxu0 0.0
    %2208 = vmatpush1.msra.mxu0 %v233
    %2209 = vmatprep.subr.mxu0 0.0
    %2210 = vmatpush1.msra.mxu0 %v232
    %2211 = vmatprep.subr.mxu0 0.0
    %2212 = vmatpush1.msra.mxu0 %v231
    %2213 = vmatprep.subr.mxu0 0.0
    %2214 = vmatpush1.msra.mxu0 %v230
    %2215 = vmatprep.subr.mxu0 0.0
    %2216 = vmatpush1.msra.mxu0 %v229
    %2217 = vmatprep.subr.mxu0 0.0
    %2218 = vmatpush1.msra.mxu0 %v228
    %2219 = vmatprep.subr.mxu0 0.0
    %2220 = vmatpush1.msra.mxu0 %v227
    %2221 = vmatprep.subr.mxu0 0.0
    %2222 = vmatpush1.msra.mxu0 %v226
    %2223 = vmatprep.subr.mxu0 0.0
    %2224 = vmatpush1.msra.mxu0 %v225
    %2225 = vmatprep.subr.mxu0 0.0
    %2226 = vmatpush1.msra.mxu0 %v224
    %2227 = vmatprep.subr.mxu0 0.0
    %2228 = vmatpush2.msra.mxu0 0.0
    %2229 = vmatprep.subr.mxu0 0.0
    %2230 = vmatpush2.msra.mxu0 0.0
    %2231 = vmatprep.subr.mxu0 0.0
    %2232 = vmatpush2.msra.mxu0 0.0
    %2233 = vmatprep.subr.mxu0 0.0
    %2234 = vmatpush2.msra.mxu0 0.0
    %2235 = vmatprep.subr.mxu0 0.0
    %2236 = vmatpush2.msra.mxu0 0.0
    %2237 = vmatprep.subr.mxu0 0.0
    %2238 = vmatpush2.msra.mxu0 0.0
    %2239 = vmatprep.subr.mxu0 0.0
    %2240 = vmatpush2.msra.mxu0 0.0
    %2241 = vmatprep.subr.mxu0 0.0
    %2242 = vmatpush2.msra.mxu0 0.0
    %2243 = vmatprep.subr.mxu0 0.0
    %2244 = vmatpush2.msra.mxu0 0.0
    %2245 = vmatprep.subr.mxu0 0.0
    %2246 = vmatpush2.msra.mxu0 0.0
    %2247 = vmatprep.subr.mxu0 0.0
    %2248 = vmatpush2.msra.mxu0 0.0
    %2249 = vmatprep.subr.mxu0 0.0
    %2250 = vmatpush2.msra.mxu0 0.0
    %2251 = vmatprep.subr.mxu0 0.0
    %2252 = vmatpush2.msra.mxu0 0.0
    %2253 = vmatprep.subr.mxu0 0.0
    %2254 = vmatpush2.msra.mxu0 0.0
    %2255 = vmatprep.subr.mxu0 0.0
    %2256 = vmatpush2.msra.mxu0 0.0
    %2257 = vmatprep.subr.mxu0 0.0
    %2258 = vmatpush2.msra.mxu0 0.0
    %2259 = vmatprep.mubr.f32.mxu0 0.0
    %2260 = vmatmul.mubr.f32.gmra.mxu0 %v2191
    %v2261 = vpop.f32.mrf.mxu0
    %v2262 = vadd.f32 0.0, %v2261
    %v2263 = vpop.f32.mrf.mxu0
    %2264 = vmatprep.mubr.f32.mxu0 0.0
    %2265 = vmatmul.mubr.f32.gmra.mxu0 %v2192
    %v2266 = vpop.f32.mrf.mxu0
    %v2267 = vadd.f32 0.0, %v2266
    %v2268 = vpop.f32.mrf.mxu0
    %2269 = vmatprep.mubr.f32.mxu0 0.0
    %2270 = vmatmul.mubr.f32.gmra.mxu0 %v2193
    %v2271 = vpop.f32.mrf.mxu0
    %v2272 = vadd.f32 0.0, %v2271
    %v2273 = vpop.f32.mrf.mxu0
    %2274 = vmatprep.mubr.f32.mxu0 0.0
    %2275 = vmatmul.mubr.f32.gmra.mxu0 %v2194
    %v2276 = vpop.f32.mrf.mxu0
    %v2277 = vadd.f32 0.0, %v2276
    %v2278 = vpop.f32.mrf.mxu0
    %2279 = vdwg.mxu0
    %s2280 = scalar_lea.vmem %s4, 1280
    %v2281 = vld [vmem:[%s2280] sm:$0xff]
    %v2282 = vld [vmem:[%s2280 + $0x8] sm:$0xff]
    %v2283 = vld [vmem:[%s2280 + $0x10] sm:$0xff]
    %v2284 = vld [vmem:[%s2280 + $0x18] sm:$0xff]
    %v2285 = vld [vmem:[%s2280 + $0x20] sm:$0xff]
    %v2286 = vld [vmem:[%s2280 + $0x28] sm:$0xff]
    %v2287 = vld [vmem:[%s2280 + $0x30] sm:$0xff]
    %v2288 = vld [vmem:[%s2280 + $0x38] sm:$0xff]
    %v2289 = vld [vmem:[%s2280 + $0x40] sm:$0xff]
    %v2290 = vld [vmem:[%s2280 + $0x48] sm:$0xff]
    %v2291 = vld [vmem:[%s2280 + $0x50] sm:$0xff]
    %v2292 = vld [vmem:[%s2280 + $0x58] sm:$0xff]
    %v2293 = vld [vmem:[%s2280 + $0x60] sm:$0xff]
    %v2294 = vld [vmem:[%s2280 + $0x68] sm:$0xff]
    %v2295 = vld [vmem:[%s2280 + $0x70] sm:$0xff]
    %v2296 = vld [vmem:[%s2280 + $0x78] sm:$0xff]
    %2297 = vmatprep.subr.mxu0 0.0
    %2298 = vmatpush1.msra.mxu0 %v2296
    %2299 = vmatprep.subr.mxu0 0.0
    %2300 = vmatpush1.msra.mxu0 %v2295
    %2301 = vmatprep.subr.mxu0 0.0
    %2302 = vmatpush1.msra.mxu0 %v2294
    %2303 = vmatprep.subr.mxu0 0.0
    %2304 = vmatpush1.msra.mxu0 %v2293
    %2305 = vmatprep.subr.mxu0 0.0
    %2306 = vmatpush1.msra.mxu0 %v2292
    %2307 = vmatprep.subr.mxu0 0.0
    %2308 = vmatpush1.msra.mxu0 %v2291
    %2309 = vmatprep.subr.mxu0 0.0
    %2310 = vmatpush1.msra.mxu0 %v2290
    %2311 = vmatprep.subr.mxu0 0.0
    %2312 = vmatpush1.msra.mxu0 %v2289
    %2313 = vmatprep.subr.mxu0 0.0
    %2314 = vmatpush1.msra.mxu0 %v2288
    %2315 = vmatprep.subr.mxu0 0.0
    %2316 = vmatpush1.msra.mxu0 %v2287
    %2317 = vmatprep.subr.mxu0 0.0
    %2318 = vmatpush1.msra.mxu0 %v2286
    %2319 = vmatprep.subr.mxu0 0.0
    %2320 = vmatpush1.msra.mxu0 %v2285
    %2321 = vmatprep.subr.mxu0 0.0
    %2322 = vmatpush1.msra.mxu0 %v2284
    %2323 = vmatprep.subr.mxu0 0.0
    %2324 = vmatpush1.msra.mxu0 %v2283
    %2325 = vmatprep.subr.mxu0 0.0
    %2326 = vmatpush1.msra.mxu0 %v2282
    %2327 = vmatprep.subr.mxu0 0.0
    %2328 = vmatpush1.msra.mxu0 %v2281
    %2329 = vmatprep.subr.mxu0 0.0
    %2330 = vmatpush2.msra.mxu0 0.0
    %2331 = vmatprep.subr.mxu0 0.0
    %2332 = vmatpush2.msra.mxu0 0.0
    %2333 = vmatprep.subr.mxu0 0.0
    %2334 = vmatpush2.msra.mxu0 0.0
    %2335 = vmatprep.subr.mxu0 0.0
    %2336 = vmatpush2.msra.mxu0 0.0
    %2337 = vmatprep.subr.mxu0 0.0
    %2338 = vmatpush2.msra.mxu0 0.0
    %2339 = vmatprep.subr.mxu0 0.0
    %2340 = vmatpush2.msra.mxu0 0.0
    %2341 = vmatprep.subr.mxu0 0.0
    %2342 = vmatpush2.msra.mxu0 0.0
    %2343 = vmatprep.subr.mxu0 0.0
    %2344 = vmatpush2.msra.mxu0 0.0
    %2345 = vmatprep.subr.mxu0 0.0
    %2346 = vmatpush2.msra.mxu0 0.0
    %2347 = vmatprep.subr.mxu0 0.0
    %2348 = vmatpush2.msra.mxu0 0.0
    %2349 = vmatprep.subr.mxu0 0.0
    %2350 = vmatpush2.msra.mxu0 0.0
    %2351 = vmatprep.subr.mxu0 0.0
    %2352 = vmatpush2.msra.mxu0 0.0
    %2353 = vmatprep.subr.mxu0 0.0
    %2354 = vmatpush2.msra.mxu0 0.0
    %2355 = vmatprep.subr.mxu0 0.0
    %2356 = vmatpush2.msra.mxu0 0.0
    %2357 = vmatprep.subr.mxu0 0.0
    %2358 = vmatpush2.msra.mxu0 0.0
    %2359 = vmatprep.subr.mxu0 0.0
    %2360 = vmatpush2.msra.mxu0 0.0
    %2361 = vmatprep.mubr.f32.mxu0 0.0
    %2362 = vmatmul.mubr.f32.gmra.mxu0 %v2262
    %v2363 = vpop.f32.mrf.mxu0
    %v2364 = vadd.f32 0.0, %v2363
    %v2365 = vpop.f32.mrf.mxu0
    %2366 = vmatprep.mubr.f32.mxu0 0.0
    %2367 = vmatmul.mubr.f32.gmra.mxu0 %v2267
    %v2368 = vpop.f32.mrf.mxu0
    %v2369 = vadd.f32 0.0, %v2368
    %v2370 = vpop.f32.mrf.mxu0
    %2371 = vmatprep.mubr.f32.mxu0 0.0
    %2372 = vmatmul.mubr.f32.gmra.mxu0 %v2272
    %v2373 = vpop.f32.mrf.mxu0
    %v2374 = vadd.f32 0.0, %v2373
    %v2375 = vpop.f32.mrf.mxu0
    %2376 = vmatprep.mubr.f32.mxu0 0.0
    %2377 = vmatmul.mubr.f32.gmra.mxu0 %v2277
    %v2378 = vpop.f32.mrf.mxu0
    %v2379 = vadd.f32 0.0, %v2378
    %v2380 = vpop.f32.mrf.mxu0
    %2381 = vdwg.mxu0
    %v2382 = vadd.f32 %v2186, %v2364
    %v2383 = vadd.f32 %v2187, %v2369
    %v2384 = vadd.f32 %v2188, %v2374
    %v2385 = vadd.f32 %v2189, %v2379
    %s2386 = scalar_lea.vmem %s3, 352
    %v2387 = vld [vmem:[%s2386] sm:$0xff]
    %v2388 = vld [vmem:[%s2386 + $0x8] sm:$0xff]
    %v2389 = vld [vmem:[%s2386 + $0x10] sm:$0xff]
    %v2390 = vld [vmem:[%s2386 + $0x18] sm:$0xff]
    %2391 = vmatprep.subr.mxu0 0.0
    %2392 = vmatpush1.msra.mxu0 %v239
    %2393 = vmatprep.subr.mxu0 0.0
    %2394 = vmatpush1.msra.mxu0 %v238
    %2395 = vmatprep.subr.mxu0 0.0
    %2396 = vmatpush1.msra.mxu0 %v237
    %2397 = vmatprep.subr.mxu0 0.0
    %2398 = vmatpush1.msra.mxu0 %v236
    %2399 = vmatprep.subr.mxu0 0.0
    %2400 = vmatpush1.msra.mxu0 %v235
    %2401 = vmatprep.subr.mxu0 0.0
    %2402 = vmatpush1.msra.mxu0 %v234
    %2403 = vmatprep.subr.mxu0 0.0
    %2404 = vmatpush1.msra.mxu0 %v233
    %2405 = vmatprep.subr.mxu0 0.0
    %2406 = vmatpush1.msra.mxu0 %v232
    %2407 = vmatprep.subr.mxu0 0.0
    %2408 = vmatpush1.msra.mxu0 %v231
    %2409 = vmatprep.subr.mxu0 0.0
    %2410 = vmatpush1.msra.mxu0 %v230
    %2411 = vmatprep.subr.mxu0 0.0
    %2412 = vmatpush1.msra.mxu0 %v229
    %2413 = vmatprep.subr.mxu0 0.0
    %2414 = vmatpush1.msra.mxu0 %v228
    %2415 = vmatprep.subr.mxu0 0.0
    %2416 = vmatpush1.msra.mxu0 %v227
    %2417 = vmatprep.subr.mxu0 0.0
    %2418 = vmatpush1.msra.mxu0 %v226
    %2419 = vmatprep.subr.mxu0 0.0
    %2420 = vmatpush1.msra.mxu0 %v225
    %2421 = vmatprep.subr.mxu0 0.0
    %2422 = vmatpush1.msra.mxu0 %v224
    %2423 = vmatprep.subr.mxu0 0.0
    %2424 = vmatpush2.msra.mxu0 0.0
    %2425 = vmatprep.subr.mxu0 0.0
    %2426 = vmatpush2.msra.mxu0 0.0
    %2427 = vmatprep.subr.mxu0 0.0
    %2428 = vmatpush2.msra.mxu0 0.0
    %2429 = vmatprep.subr.mxu0 0.0
    %2430 = vmatpush2.msra.mxu0 0.0
    %2431 = vmatprep.subr.mxu0 0.0
    %2432 = vmatpush2.msra.mxu0 0.0
    %2433 = vmatprep.subr.mxu0 0.0
    %2434 = vmatpush2.msra.mxu0 0.0
    %2435 = vmatprep.subr.mxu0 0.0
    %2436 = vmatpush2.msra.mxu0 0.0
    %2437 = vmatprep.subr.mxu0 0.0
    %2438 = vmatpush2.msra.mxu0 0.0
    %2439 = vmatprep.subr.mxu0 0.0
    %2440 = vmatpush2.msra.mxu0 0.0
    %2441 = vmatprep.subr.mxu0 0.0
    %2442 = vmatpush2.msra.mxu0 0.0
    %2443 = vmatprep.subr.mxu0 0.0
    %2444 = vmatpush2.msra.mxu0 0.0
    %2445 = vmatprep.subr.mxu0 0.0
    %2446 = vmatpush2.msra.mxu0 0.0
    %2447 = vmatprep.subr.mxu0 0.0
    %2448 = vmatpush2.msra.mxu0 0.0
    %2449 = vmatprep.subr.mxu0 0.0
    %2450 = vmatpush2.msra.mxu0 0.0
    %2451 = vmatprep.subr.mxu0 0.0
    %2452 = vmatpush2.msra.mxu0 0.0
    %2453 = vmatprep.subr.mxu0 0.0
    %2454 = vmatpush2.msra.mxu0 0.0
    %2455 = vmatprep.mubr.f32.mxu0 0.0
    %2456 = vmatmul.mubr.f32.gmra.mxu0 %v2387
    %v2457 = vpop.f32.mrf.mxu0
    %v2458 = vadd.f32 0.0, %v2457
    %v2459 = vpop.f32.mrf.mxu0
    %2460 = vmatprep.mubr.f32.mxu0 0.0
    %2461 = vmatmul.mubr.f32.gmra.mxu0 %v2388
    %v2462 = vpop.f32.mrf.mxu0
    %v2463 = vadd.f32 0.0, %v2462
    %v2464 = vpop.f32.mrf.mxu0
    %2465 = vmatprep.mubr.f32.mxu0 0.0
    %2466 = vmatmul.mubr.f32.gmra.mxu0 %v2389
    %v2467 = vpop.f32.mrf.mxu0
    %v2468 = vadd.f32 0.0, %v2467
    %v2469 = vpop.f32.mrf.mxu0
    %2470 = vmatprep.mubr.f32.mxu0 0.0
    %2471 = vmatmul.mubr.f32.gmra.mxu0 %v2390
    %v2472 = vpop.f32.mrf.mxu0
    %v2473 = vadd.f32 0.0, %v2472
    %v2474 = vpop.f32.mrf.mxu0
    %2475 = vdwg.mxu0
    %s2476 = scalar_lea.vmem %s4, 1408
    %v2477 = vld [vmem:[%s2476] sm:$0xff]
    %v2478 = vld [vmem:[%s2476 + $0x8] sm:$0xff]
    %v2479 = vld [vmem:[%s2476 + $0x10] sm:$0xff]
    %v2480 = vld [vmem:[%s2476 + $0x18] sm:$0xff]
    %v2481 = vld [vmem:[%s2476 + $0x20] sm:$0xff]
    %v2482 = vld [vmem:[%s2476 + $0x28] sm:$0xff]
    %v2483 = vld [vmem:[%s2476 + $0x30] sm:$0xff]
    %v2484 = vld [vmem:[%s2476 + $0x38] sm:$0xff]
    %v2485 = vld [vmem:[%s2476 + $0x40] sm:$0xff]
    %v2486 = vld [vmem:[%s2476 + $0x48] sm:$0xff]
    %v2487 = vld [vmem:[%s2476 + $0x50] sm:$0xff]
    %v2488 = vld [vmem:[%s2476 + $0x58] sm:$0xff]
    %v2489 = vld [vmem:[%s2476 + $0x60] sm:$0xff]
    %v2490 = vld [vmem:[%s2476 + $0x68] sm:$0xff]
    %v2491 = vld [vmem:[%s2476 + $0x70] sm:$0xff]
    %v2492 = vld [vmem:[%s2476 + $0x78] sm:$0xff]
    %2493 = vmatprep.subr.mxu0 0.0
    %2494 = vmatpush1.msra.mxu0 %v2492
    %2495 = vmatprep.subr.mxu0 0.0
    %2496 = vmatpush1.msra.mxu0 %v2491
    %2497 = vmatprep.subr.mxu0 0.0
    %2498 = vmatpush1.msra.mxu0 %v2490
    %2499 = vmatprep.subr.mxu0 0.0
    %2500 = vmatpush1.msra.mxu0 %v2489
    %2501 = vmatprep.subr.mxu0 0.0
    %2502 = vmatpush1.msra.mxu0 %v2488
    %2503 = vmatprep.subr.mxu0 0.0
    %2504 = vmatpush1.msra.mxu0 %v2487
    %2505 = vmatprep.subr.mxu0 0.0
    %2506 = vmatpush1.msra.mxu0 %v2486
    %2507 = vmatprep.subr.mxu0 0.0
    %2508 = vmatpush1.msra.mxu0 %v2485
    %2509 = vmatprep.subr.mxu0 0.0
    %2510 = vmatpush1.msra.mxu0 %v2484
    %2511 = vmatprep.subr.mxu0 0.0
    %2512 = vmatpush1.msra.mxu0 %v2483
    %2513 = vmatprep.subr.mxu0 0.0
    %2514 = vmatpush1.msra.mxu0 %v2482
    %2515 = vmatprep.subr.mxu0 0.0
    %2516 = vmatpush1.msra.mxu0 %v2481
    %2517 = vmatprep.subr.mxu0 0.0
    %2518 = vmatpush1.msra.mxu0 %v2480
    %2519 = vmatprep.subr.mxu0 0.0
    %2520 = vmatpush1.msra.mxu0 %v2479
    %2521 = vmatprep.subr.mxu0 0.0
    %2522 = vmatpush1.msra.mxu0 %v2478
    %2523 = vmatprep.subr.mxu0 0.0
    %2524 = vmatpush1.msra.mxu0 %v2477
    %2525 = vmatprep.subr.mxu0 0.0
    %2526 = vmatpush2.msra.mxu0 0.0
    %2527 = vmatprep.subr.mxu0 0.0
    %2528 = vmatpush2.msra.mxu0 0.0
    %2529 = vmatprep.subr.mxu0 0.0
    %2530 = vmatpush2.msra.mxu0 0.0
    %2531 = vmatprep.subr.mxu0 0.0
    %2532 = vmatpush2.msra.mxu0 0.0
    %2533 = vmatprep.subr.mxu0 0.0
    %2534 = vmatpush2.msra.mxu0 0.0
    %2535 = vmatprep.subr.mxu0 0.0
    %2536 = vmatpush2.msra.mxu0 0.0
    %2537 = vmatprep.subr.mxu0 0.0
    %2538 = vmatpush2.msra.mxu0 0.0
    %2539 = vmatprep.subr.mxu0 0.0
    %2540 = vmatpush2.msra.mxu0 0.0
    %2541 = vmatprep.subr.mxu0 0.0
    %2542 = vmatpush2.msra.mxu0 0.0
    %2543 = vmatprep.subr.mxu0 0.0
    %2544 = vmatpush2.msra.mxu0 0.0
    %2545 = vmatprep.subr.mxu0 0.0
    %2546 = vmatpush2.msra.mxu0 0.0
    %2547 = vmatprep.subr.mxu0 0.0
    %2548 = vmatpush2.msra.mxu0 0.0
    %2549 = vmatprep.subr.mxu0 0.0
    %2550 = vmatpush2.msra.mxu0 0.0
    %2551 = vmatprep.subr.mxu0 0.0
    %2552 = vmatpush2.msra.mxu0 0.0
    %2553 = vmatprep.subr.mxu0 0.0
    %2554 = vmatpush2.msra.mxu0 0.0
    %2555 = vmatprep.subr.mxu0 0.0
    %2556 = vmatpush2.msra.mxu0 0.0
    %2557 = vmatprep.mubr.f32.mxu0 0.0
    %2558 = vmatmul.mubr.f32.gmra.mxu0 %v2458
    %v2559 = vpop.f32.mrf.mxu0
    %v2560 = vadd.f32 0.0, %v2559
    %v2561 = vpop.f32.mrf.mxu0
    %2562 = vmatprep.mubr.f32.mxu0 0.0
    %2563 = vmatmul.mubr.f32.gmra.mxu0 %v2463
    %v2564 = vpop.f32.mrf.mxu0
    %v2565 = vadd.f32 0.0, %v2564
    %v2566 = vpop.f32.mrf.mxu0
    %2567 = vmatprep.mubr.f32.mxu0 0.0
    %2568 = vmatmul.mubr.f32.gmra.mxu0 %v2468
    %v2569 = vpop.f32.mrf.mxu0
    %v2570 = vadd.f32 0.0, %v2569
    %v2571 = vpop.f32.mrf.mxu0
    %2572 = vmatprep.mubr.f32.mxu0 0.0
    %2573 = vmatmul.mubr.f32.gmra.mxu0 %v2473
    %v2574 = vpop.f32.mrf.mxu0
    %v2575 = vadd.f32 0.0, %v2574
    %v2576 = vpop.f32.mrf.mxu0
    %2577 = vdwg.mxu0
    %v2578 = vadd.f32 %v2382, %v2560
    %v2579 = vadd.f32 %v2383, %v2565
    %v2580 = vadd.f32 %v2384, %v2570
    %v2581 = vadd.f32 %v2385, %v2575
    %s2582 = scalar_lea.vmem %s3, 384
    %v2583 = vld [vmem:[%s2582] sm:$0xff]
    %v2584 = vld [vmem:[%s2582 + $0x8] sm:$0xff]
    %v2585 = vld [vmem:[%s2582 + $0x10] sm:$0xff]
    %v2586 = vld [vmem:[%s2582 + $0x18] sm:$0xff]
    %2587 = vmatprep.subr.mxu0 0.0
    %2588 = vmatpush1.msra.mxu0 %v239
    %2589 = vmatprep.subr.mxu0 0.0
    %2590 = vmatpush1.msra.mxu0 %v238
    %2591 = vmatprep.subr.mxu0 0.0
    %2592 = vmatpush1.msra.mxu0 %v237
    %2593 = vmatprep.subr.mxu0 0.0
    %2594 = vmatpush1.msra.mxu0 %v236
    %2595 = vmatprep.subr.mxu0 0.0
    %2596 = vmatpush1.msra.mxu0 %v235
    %2597 = vmatprep.subr.mxu0 0.0
    %2598 = vmatpush1.msra.mxu0 %v234
    %2599 = vmatprep.subr.mxu0 0.0
    %2600 = vmatpush1.msra.mxu0 %v233
    %2601 = vmatprep.subr.mxu0 0.0
    %2602 = vmatpush1.msra.mxu0 %v232
    %2603 = vmatprep.subr.mxu0 0.0
    %2604 = vmatpush1.msra.mxu0 %v231
    %2605 = vmatprep.subr.mxu0 0.0
    %2606 = vmatpush1.msra.mxu0 %v230
    %2607 = vmatprep.subr.mxu0 0.0
    %2608 = vmatpush1.msra.mxu0 %v229
    %2609 = vmatprep.subr.mxu0 0.0
    %2610 = vmatpush1.msra.mxu0 %v228
    %2611 = vmatprep.subr.mxu0 0.0
    %2612 = vmatpush1.msra.mxu0 %v227
    %2613 = vmatprep.subr.mxu0 0.0
    %2614 = vmatpush1.msra.mxu0 %v226
    %2615 = vmatprep.subr.mxu0 0.0
    %2616 = vmatpush1.msra.mxu0 %v225
    %2617 = vmatprep.subr.mxu0 0.0
    %2618 = vmatpush1.msra.mxu0 %v224
    %2619 = vmatprep.subr.mxu0 0.0
    %2620 = vmatpush2.msra.mxu0 0.0
    %2621 = vmatprep.subr.mxu0 0.0
    %2622 = vmatpush2.msra.mxu0 0.0
    %2623 = vmatprep.subr.mxu0 0.0
    %2624 = vmatpush2.msra.mxu0 0.0
    %2625 = vmatprep.subr.mxu0 0.0
    %2626 = vmatpush2.msra.mxu0 0.0
    %2627 = vmatprep.subr.mxu0 0.0
    %2628 = vmatpush2.msra.mxu0 0.0
    %2629 = vmatprep.subr.mxu0 0.0
    %2630 = vmatpush2.msra.mxu0 0.0
    %2631 = vmatprep.subr.mxu0 0.0
    %2632 = vmatpush2.msra.mxu0 0.0
    %2633 = vmatprep.subr.mxu0 0.0
    %2634 = vmatpush2.msra.mxu0 0.0
    %2635 = vmatprep.subr.mxu0 0.0
    %2636 = vmatpush2.msra.mxu0 0.0
    %2637 = vmatprep.subr.mxu0 0.0
    %2638 = vmatpush2.msra.mxu0 0.0
    %2639 = vmatprep.subr.mxu0 0.0
    %2640 = vmatpush2.msra.mxu0 0.0
    %2641 = vmatprep.subr.mxu0 0.0
    %2642 = vmatpush2.msra.mxu0 0.0
    %2643 = vmatprep.subr.mxu0 0.0
    %2644 = vmatpush2.msra.mxu0 0.0
    %2645 = vmatprep.subr.mxu0 0.0
    %2646 = vmatpush2.msra.mxu0 0.0
    %2647 = vmatprep.subr.mxu0 0.0
    %2648 = vmatpush2.msra.mxu0 0.0
    %2649 = vmatprep.subr.mxu0 0.0
    %2650 = vmatpush2.msra.mxu0 0.0
    %2651 = vmatprep.mubr.f32.mxu0 0.0
    %2652 = vmatmul.mubr.f32.gmra.mxu0 %v2583
    %v2653 = vpop.f32.mrf.mxu0
    %v2654 = vadd.f32 0.0, %v2653
    %v2655 = vpop.f32.mrf.mxu0
    %2656 = vmatprep.mubr.f32.mxu0 0.0
    %2657 = vmatmul.mubr.f32.gmra.mxu0 %v2584
    %v2658 = vpop.f32.mrf.mxu0
    %v2659 = vadd.f32 0.0, %v2658
    %v2660 = vpop.f32.mrf.mxu0
    %2661 = vmatprep.mubr.f32.mxu0 0.0
    %2662 = vmatmul.mubr.f32.gmra.mxu0 %v2585
    %v2663 = vpop.f32.mrf.mxu0
    %v2664 = vadd.f32 0.0, %v2663
    %v2665 = vpop.f32.mrf.mxu0
    %2666 = vmatprep.mubr.f32.mxu0 0.0
    %2667 = vmatmul.mubr.f32.gmra.mxu0 %v2586
    %v2668 = vpop.f32.mrf.mxu0
    %v2669 = vadd.f32 0.0, %v2668
    %v2670 = vpop.f32.mrf.mxu0
    %2671 = vdwg.mxu0
    %s2672 = scalar_lea.vmem %s4, 1536
    %v2673 = vld [vmem:[%s2672] sm:$0xff]
    %v2674 = vld [vmem:[%s2672 + $0x8] sm:$0xff]
    %v2675 = vld [vmem:[%s2672 + $0x10] sm:$0xff]
    %v2676 = vld [vmem:[%s2672 + $0x18] sm:$0xff]
    %v2677 = vld [vmem:[%s2672 + $0x20] sm:$0xff]
    %v2678 = vld [vmem:[%s2672 + $0x28] sm:$0xff]
    %v2679 = vld [vmem:[%s2672 + $0x30] sm:$0xff]
    %v2680 = vld [vmem:[%s2672 + $0x38] sm:$0xff]
    %v2681 = vld [vmem:[%s2672 + $0x40] sm:$0xff]
    %v2682 = vld [vmem:[%s2672 + $0x48] sm:$0xff]
    %v2683 = vld [vmem:[%s2672 + $0x50] sm:$0xff]
    %v2684 = vld [vmem:[%s2672 + $0x58] sm:$0xff]
    %v2685 = vld [vmem:[%s2672 + $0x60] sm:$0xff]
    %v2686 = vld [vmem:[%s2672 + $0x68] sm:$0xff]
    %v2687 = vld [vmem:[%s2672 + $0x70] sm:$0xff]
    %v2688 = vld [vmem:[%s2672 + $0x78] sm:$0xff]
    %2689 = vmatprep.subr.mxu0 0.0
    %2690 = vmatpush1.msra.mxu0 %v2688
    %2691 = vmatprep.subr.mxu0 0.0
    %2692 = vmatpush1.msra.mxu0 %v2687
    %2693 = vmatprep.subr.mxu0 0.0
    %2694 = vmatpush1.msra.mxu0 %v2686
    %2695 = vmatprep.subr.mxu0 0.0
    %2696 = vmatpush1.msra.mxu0 %v2685
    %2697 = vmatprep.subr.mxu0 0.0
    %2698 = vmatpush1.msra.mxu0 %v2684
    %2699 = vmatprep.subr.mxu0 0.0
    %2700 = vmatpush1.msra.mxu0 %v2683
    %2701 = vmatprep.subr.mxu0 0.0
    %2702 = vmatpush1.msra.mxu0 %v2682
    %2703 = vmatprep.subr.mxu0 0.0
    %2704 = vmatpush1.msra.mxu0 %v2681
    %2705 = vmatprep.subr.mxu0 0.0
    %2706 = vmatpush1.msra.mxu0 %v2680
    %2707 = vmatprep.subr.mxu0 0.0
    %2708 = vmatpush1.msra.mxu0 %v2679
    %2709 = vmatprep.subr.mxu0 0.0
    %2710 = vmatpush1.msra.mxu0 %v2678
    %2711 = vmatprep.subr.mxu0 0.0
    %2712 = vmatpush1.msra.mxu0 %v2677
    %2713 = vmatprep.subr.mxu0 0.0
    %2714 = vmatpush1.msra.mxu0 %v2676
    %2715 = vmatprep.subr.mxu0 0.0
    %2716 = vmatpush1.msra.mxu0 %v2675
    %2717 = vmatprep.subr.mxu0 0.0
    %2718 = vmatpush1.msra.mxu0 %v2674
    %2719 = vmatprep.subr.mxu0 0.0
    %2720 = vmatpush1.msra.mxu0 %v2673
    %2721 = vmatprep.subr.mxu0 0.0
    %2722 = vmatpush2.msra.mxu0 0.0
    %2723 = vmatprep.subr.mxu0 0.0
    %2724 = vmatpush2.msra.mxu0 0.0
    %2725 = vmatprep.subr.mxu0 0.0
    %2726 = vmatpush2.msra.mxu0 0.0
    %2727 = vmatprep.subr.mxu0 0.0
    %2728 = vmatpush2.msra.mxu0 0.0
    %2729 = vmatprep.subr.mxu0 0.0
    %2730 = vmatpush2.msra.mxu0 0.0
    %2731 = vmatprep.subr.mxu0 0.0
    %2732 = vmatpush2.msra.mxu0 0.0
    %2733 = vmatprep.subr.mxu0 0.0
    %2734 = vmatpush2.msra.mxu0 0.0
    %2735 = vmatprep.subr.mxu0 0.0
    %2736 = vmatpush2.msra.mxu0 0.0
    %2737 = vmatprep.subr.mxu0 0.0
    %2738 = vmatpush2.msra.mxu0 0.0
    %2739 = vmatprep.subr.mxu0 0.0
    %2740 = vmatpush2.msra.mxu0 0.0
    %2741 = vmatprep.subr.mxu0 0.0
    %2742 = vmatpush2.msra.mxu0 0.0
    %2743 = vmatprep.subr.mxu0 0.0
    %2744 = vmatpush2.msra.mxu0 0.0
    %2745 = vmatprep.subr.mxu0 0.0
    %2746 = vmatpush2.msra.mxu0 0.0
    %2747 = vmatprep.subr.mxu0 0.0
    %2748 = vmatpush2.msra.mxu0 0.0
    %2749 = vmatprep.subr.mxu0 0.0
    %2750 = vmatpush2.msra.mxu0 0.0
    %2751 = vmatprep.subr.mxu0 0.0
    %2752 = vmatpush2.msra.mxu0 0.0
    %2753 = vmatprep.mubr.f32.mxu0 0.0
    %2754 = vmatmul.mubr.f32.gmra.mxu0 %v2654
    %v2755 = vpop.f32.mrf.mxu0
    %v2756 = vadd.f32 0.0, %v2755
    %v2757 = vpop.f32.mrf.mxu0
    %2758 = vmatprep.mubr.f32.mxu0 0.0
    %2759 = vmatmul.mubr.f32.gmra.mxu0 %v2659
    %v2760 = vpop.f32.mrf.mxu0
    %v2761 = vadd.f32 0.0, %v2760
    %v2762 = vpop.f32.mrf.mxu0
    %2763 = vmatprep.mubr.f32.mxu0 0.0
    %2764 = vmatmul.mubr.f32.gmra.mxu0 %v2664
    %v2765 = vpop.f32.mrf.mxu0
    %v2766 = vadd.f32 0.0, %v2765
    %v2767 = vpop.f32.mrf.mxu0
    %2768 = vmatprep.mubr.f32.mxu0 0.0
    %2769 = vmatmul.mubr.f32.gmra.mxu0 %v2669
    %v2770 = vpop.f32.mrf.mxu0
    %v2771 = vadd.f32 0.0, %v2770
    %v2772 = vpop.f32.mrf.mxu0
    %2773 = vdwg.mxu0
    %v2774 = vadd.f32 %v2578, %v2756
    %v2775 = vadd.f32 %v2579, %v2761
    %v2776 = vadd.f32 %v2580, %v2766
    %v2777 = vadd.f32 %v2581, %v2771
    %s2778 = scalar_lea.vmem %s3, 416
    %v2779 = vld [vmem:[%s2778] sm:$0xff]
    %v2780 = vld [vmem:[%s2778 + $0x8] sm:$0xff]
    %v2781 = vld [vmem:[%s2778 + $0x10] sm:$0xff]
    %v2782 = vld [vmem:[%s2778 + $0x18] sm:$0xff]
    %2783 = vmatprep.subr.mxu0 0.0
    %2784 = vmatpush1.msra.mxu0 %v239
    %2785 = vmatprep.subr.mxu0 0.0
    %2786 = vmatpush1.msra.mxu0 %v238
    %2787 = vmatprep.subr.mxu0 0.0
    %2788 = vmatpush1.msra.mxu0 %v237
    %2789 = vmatprep.subr.mxu0 0.0
    %2790 = vmatpush1.msra.mxu0 %v236
    %2791 = vmatprep.subr.mxu0 0.0
    %2792 = vmatpush1.msra.mxu0 %v235
    %2793 = vmatprep.subr.mxu0 0.0
    %2794 = vmatpush1.msra.mxu0 %v234
    %2795 = vmatprep.subr.mxu0 0.0
    %2796 = vmatpush1.msra.mxu0 %v233
    %2797 = vmatprep.subr.mxu0 0.0
    %2798 = vmatpush1.msra.mxu0 %v232
    %2799 = vmatprep.subr.mxu0 0.0
    %2800 = vmatpush1.msra.mxu0 %v231
    %2801 = vmatprep.subr.mxu0 0.0
    %2802 = vmatpush1.msra.mxu0 %v230
    %2803 = vmatprep.subr.mxu0 0.0
    %2804 = vmatpush1.msra.mxu0 %v229
    %2805 = vmatprep.subr.mxu0 0.0
    %2806 = vmatpush1.msra.mxu0 %v228
    %2807 = vmatprep.subr.mxu0 0.0
    %2808 = vmatpush1.msra.mxu0 %v227
    %2809 = vmatprep.subr.mxu0 0.0
    %2810 = vmatpush1.msra.mxu0 %v226
    %2811 = vmatprep.subr.mxu0 0.0
    %2812 = vmatpush1.msra.mxu0 %v225
    %2813 = vmatprep.subr.mxu0 0.0
    %2814 = vmatpush1.msra.mxu0 %v224
    %2815 = vmatprep.subr.mxu0 0.0
    %2816 = vmatpush2.msra.mxu0 0.0
    %2817 = vmatprep.subr.mxu0 0.0
    %2818 = vmatpush2.msra.mxu0 0.0
    %2819 = vmatprep.subr.mxu0 0.0
    %2820 = vmatpush2.msra.mxu0 0.0
    %2821 = vmatprep.subr.mxu0 0.0
    %2822 = vmatpush2.msra.mxu0 0.0
    %2823 = vmatprep.subr.mxu0 0.0
    %2824 = vmatpush2.msra.mxu0 0.0
    %2825 = vmatprep.subr.mxu0 0.0
    %2826 = vmatpush2.msra.mxu0 0.0
    %2827 = vmatprep.subr.mxu0 0.0
    %2828 = vmatpush2.msra.mxu0 0.0
    %2829 = vmatprep.subr.mxu0 0.0
    %2830 = vmatpush2.msra.mxu0 0.0
    %2831 = vmatprep.subr.mxu0 0.0
    %2832 = vmatpush2.msra.mxu0 0.0
    %2833 = vmatprep.subr.mxu0 0.0
    %2834 = vmatpush2.msra.mxu0 0.0
    %2835 = vmatprep.subr.mxu0 0.0
    %2836 = vmatpush2.msra.mxu0 0.0
    %2837 = vmatprep.subr.mxu0 0.0
    %2838 = vmatpush2.msra.mxu0 0.0
    %2839 = vmatprep.subr.mxu0 0.0
    %2840 = vmatpush2.msra.mxu0 0.0
    %2841 = vmatprep.subr.mxu0 0.0
    %2842 = vmatpush2.msra.mxu0 0.0
    %2843 = vmatprep.subr.mxu0 0.0
    %2844 = vmatpush2.msra.mxu0 0.0
    %2845 = vmatprep.subr.mxu0 0.0
    %2846 = vmatpush2.msra.mxu0 0.0
    %2847 = vmatprep.mubr.f32.mxu0 0.0
    %2848 = vmatmul.mubr.f32.gmra.mxu0 %v2779
    %v2849 = vpop.f32.mrf.mxu0
    %v2850 = vadd.f32 0.0, %v2849
    %v2851 = vpop.f32.mrf.mxu0
    %2852 = vmatprep.mubr.f32.mxu0 0.0
    %2853 = vmatmul.mubr.f32.gmra.mxu0 %v2780
    %v2854 = vpop.f32.mrf.mxu0
    %v2855 = vadd.f32 0.0, %v2854
    %v2856 = vpop.f32.mrf.mxu0
    %2857 = vmatprep.mubr.f32.mxu0 0.0
    %2858 = vmatmul.mubr.f32.gmra.mxu0 %v2781
    %v2859 = vpop.f32.mrf.mxu0
    %v2860 = vadd.f32 0.0, %v2859
    %v2861 = vpop.f32.mrf.mxu0
    %2862 = vmatprep.mubr.f32.mxu0 0.0
    %2863 = vmatmul.mubr.f32.gmra.mxu0 %v2782
    %v2864 = vpop.f32.mrf.mxu0
    %v2865 = vadd.f32 0.0, %v2864
    %v2866 = vpop.f32.mrf.mxu0
    %2867 = vdwg.mxu0
    %s2868 = scalar_lea.vmem %s4, 1664
    %v2869 = vld [vmem:[%s2868] sm:$0xff]
    %v2870 = vld [vmem:[%s2868 + $0x8] sm:$0xff]
    %v2871 = vld [vmem:[%s2868 + $0x10] sm:$0xff]
    %v2872 = vld [vmem:[%s2868 + $0x18] sm:$0xff]
    %v2873 = vld [vmem:[%s2868 + $0x20] sm:$0xff]
    %v2874 = vld [vmem:[%s2868 + $0x28] sm:$0xff]
    %v2875 = vld [vmem:[%s2868 + $0x30] sm:$0xff]
    %v2876 = vld [vmem:[%s2868 + $0x38] sm:$0xff]
    %v2877 = vld [vmem:[%s2868 + $0x40] sm:$0xff]
    %v2878 = vld [vmem:[%s2868 + $0x48] sm:$0xff]
    %v2879 = vld [vmem:[%s2868 + $0x50] sm:$0xff]
    %v2880 = vld [vmem:[%s2868 + $0x58] sm:$0xff]
    %v2881 = vld [vmem:[%s2868 + $0x60] sm:$0xff]
    %v2882 = vld [vmem:[%s2868 + $0x68] sm:$0xff]
    %v2883 = vld [vmem:[%s2868 + $0x70] sm:$0xff]
    %v2884 = vld [vmem:[%s2868 + $0x78] sm:$0xff]
    %2885 = vmatprep.subr.mxu0 0.0
    %2886 = vmatpush1.msra.mxu0 %v2884
    %2887 = vmatprep.subr.mxu0 0.0
    %2888 = vmatpush1.msra.mxu0 %v2883
    %2889 = vmatprep.subr.mxu0 0.0
    %2890 = vmatpush1.msra.mxu0 %v2882
    %2891 = vmatprep.subr.mxu0 0.0
    %2892 = vmatpush1.msra.mxu0 %v2881
    %2893 = vmatprep.subr.mxu0 0.0
    %2894 = vmatpush1.msra.mxu0 %v2880
    %2895 = vmatprep.subr.mxu0 0.0
    %2896 = vmatpush1.msra.mxu0 %v2879
    %2897 = vmatprep.subr.mxu0 0.0
    %2898 = vmatpush1.msra.mxu0 %v2878
    %2899 = vmatprep.subr.mxu0 0.0
    %2900 = vmatpush1.msra.mxu0 %v2877
    %2901 = vmatprep.subr.mxu0 0.0
    %2902 = vmatpush1.msra.mxu0 %v2876
    %2903 = vmatprep.subr.mxu0 0.0
    %2904 = vmatpush1.msra.mxu0 %v2875
    %2905 = vmatprep.subr.mxu0 0.0
    %2906 = vmatpush1.msra.mxu0 %v2874
    %2907 = vmatprep.subr.mxu0 0.0
    %2908 = vmatpush1.msra.mxu0 %v2873
    %2909 = vmatprep.subr.mxu0 0.0
    %2910 = vmatpush1.msra.mxu0 %v2872
    %2911 = vmatprep.subr.mxu0 0.0
    %2912 = vmatpush1.msra.mxu0 %v2871
    %2913 = vmatprep.subr.mxu0 0.0
    %2914 = vmatpush1.msra.mxu0 %v2870
    %2915 = vmatprep.subr.mxu0 0.0
    %2916 = vmatpush1.msra.mxu0 %v2869
    %2917 = vmatprep.subr.mxu0 0.0
    %2918 = vmatpush2.msra.mxu0 0.0
    %2919 = vmatprep.subr.mxu0 0.0
    %2920 = vmatpush2.msra.mxu0 0.0
    %2921 = vmatprep.subr.mxu0 0.0
    %2922 = vmatpush2.msra.mxu0 0.0
    %2923 = vmatprep.subr.mxu0 0.0
    %2924 = vmatpush2.msra.mxu0 0.0
    %2925 = vmatprep.subr.mxu0 0.0
    %2926 = vmatpush2.msra.mxu0 0.0
    %2927 = vmatprep.subr.mxu0 0.0
    %2928 = vmatpush2.msra.mxu0 0.0
    %2929 = vmatprep.subr.mxu0 0.0
    %2930 = vmatpush2.msra.mxu0 0.0
    %2931 = vmatprep.subr.mxu0 0.0
    %2932 = vmatpush2.msra.mxu0 0.0
    %2933 = vmatprep.subr.mxu0 0.0
    %2934 = vmatpush2.msra.mxu0 0.0
    %2935 = vmatprep.subr.mxu0 0.0
    %2936 = vmatpush2.msra.mxu0 0.0
    %2937 = vmatprep.subr.mxu0 0.0
    %2938 = vmatpush2.msra.mxu0 0.0
    %2939 = vmatprep.subr.mxu0 0.0
    %2940 = vmatpush2.msra.mxu0 0.0
    %2941 = vmatprep.subr.mxu0 0.0
    %2942 = vmatpush2.msra.mxu0 0.0
    %2943 = vmatprep.subr.mxu0 0.0
    %2944 = vmatpush2.msra.mxu0 0.0
    %2945 = vmatprep.subr.mxu0 0.0
    %2946 = vmatpush2.msra.mxu0 0.0
    %2947 = vmatprep.subr.mxu0 0.0
    %2948 = vmatpush2.msra.mxu0 0.0
    %2949 = vmatprep.mubr.f32.mxu0 0.0
    %2950 = vmatmul.mubr.f32.gmra.mxu0 %v2850
    %v2951 = vpop.f32.mrf.mxu0
    %v2952 = vadd.f32 0.0, %v2951
    %v2953 = vpop.f32.mrf.mxu0
    %2954 = vmatprep.mubr.f32.mxu0 0.0
    %2955 = vmatmul.mubr.f32.gmra.mxu0 %v2855
    %v2956 = vpop.f32.mrf.mxu0
    %v2957 = vadd.f32 0.0, %v2956
    %v2958 = vpop.f32.mrf.mxu0
    %2959 = vmatprep.mubr.f32.mxu0 0.0
    %2960 = vmatmul.mubr.f32.gmra.mxu0 %v2860
    %v2961 = vpop.f32.mrf.mxu0
    %v2962 = vadd.f32 0.0, %v2961
    %v2963 = vpop.f32.mrf.mxu0
    %2964 = vmatprep.mubr.f32.mxu0 0.0
    %2965 = vmatmul.mubr.f32.gmra.mxu0 %v2865
    %v2966 = vpop.f32.mrf.mxu0
    %v2967 = vadd.f32 0.0, %v2966
    %v2968 = vpop.f32.mrf.mxu0
    %2969 = vdwg.mxu0
    %v2970 = vadd.f32 %v2774, %v2952
    %v2971 = vadd.f32 %v2775, %v2957
    %v2972 = vadd.f32 %v2776, %v2962
    %v2973 = vadd.f32 %v2777, %v2967
    %s2974 = scalar_lea.vmem %s3, 448
    %v2975 = vld [vmem:[%s2974] sm:$0xff]
    %v2976 = vld [vmem:[%s2974 + $0x8] sm:$0xff]
    %v2977 = vld [vmem:[%s2974 + $0x10] sm:$0xff]
    %v2978 = vld [vmem:[%s2974 + $0x18] sm:$0xff]
    %2979 = vmatprep.subr.mxu0 0.0
    %2980 = vmatpush1.msra.mxu0 %v239
    %2981 = vmatprep.subr.mxu0 0.0
    %2982 = vmatpush1.msra.mxu0 %v238
    %2983 = vmatprep.subr.mxu0 0.0
    %2984 = vmatpush1.msra.mxu0 %v237
    %2985 = vmatprep.subr.mxu0 0.0
    %2986 = vmatpush1.msra.mxu0 %v236
    %2987 = vmatprep.subr.mxu0 0.0
    %2988 = vmatpush1.msra.mxu0 %v235
    %2989 = vmatprep.subr.mxu0 0.0
    %2990 = vmatpush1.msra.mxu0 %v234
    %2991 = vmatprep.subr.mxu0 0.0
    %2992 = vmatpush1.msra.mxu0 %v233
    %2993 = vmatprep.subr.mxu0 0.0
    %2994 = vmatpush1.msra.mxu0 %v232
    %2995 = vmatprep.subr.mxu0 0.0
    %2996 = vmatpush1.msra.mxu0 %v231
    %2997 = vmatprep.subr.mxu0 0.0
    %2998 = vmatpush1.msra.mxu0 %v230
    %2999 = vmatprep.subr.mxu0 0.0
    %3000 = vmatpush1.msra.mxu0 %v229
    %3001 = vmatprep.subr.mxu0 0.0
    %3002 = vmatpush1.msra.mxu0 %v228
    %3003 = vmatprep.subr.mxu0 0.0
    %3004 = vmatpush1.msra.mxu0 %v227
    %3005 = vmatprep.subr.mxu0 0.0
    %3006 = vmatpush1.msra.mxu0 %v226
    %3007 = vmatprep.subr.mxu0 0.0
    %3008 = vmatpush1.msra.mxu0 %v225
    %3009 = vmatprep.subr.mxu0 0.0
    %3010 = vmatpush1.msra.mxu0 %v224
    %3011 = vmatprep.subr.mxu0 0.0
    %3012 = vmatpush2.msra.mxu0 0.0
    %3013 = vmatprep.subr.mxu0 0.0
    %3014 = vmatpush2.msra.mxu0 0.0
    %3015 = vmatprep.subr.mxu0 0.0
    %3016 = vmatpush2.msra.mxu0 0.0
    %3017 = vmatprep.subr.mxu0 0.0
    %3018 = vmatpush2.msra.mxu0 0.0
    %3019 = vmatprep.subr.mxu0 0.0
    %3020 = vmatpush2.msra.mxu0 0.0
    %3021 = vmatprep.subr.mxu0 0.0
    %3022 = vmatpush2.msra.mxu0 0.0
    %3023 = vmatprep.subr.mxu0 0.0
    %3024 = vmatpush2.msra.mxu0 0.0
    %3025 = vmatprep.subr.mxu0 0.0
    %3026 = vmatpush2.msra.mxu0 0.0
    %3027 = vmatprep.subr.mxu0 0.0
    %3028 = vmatpush2.msra.mxu0 0.0
    %3029 = vmatprep.subr.mxu0 0.0
    %3030 = vmatpush2.msra.mxu0 0.0
    %3031 = vmatprep.subr.mxu0 0.0
    %3032 = vmatpush2.msra.mxu0 0.0
    %3033 = vmatprep.subr.mxu0 0.0
    %3034 = vmatpush2.msra.mxu0 0.0
    %3035 = vmatprep.subr.mxu0 0.0
    %3036 = vmatpush2.msra.mxu0 0.0
    %3037 = vmatprep.subr.mxu0 0.0
    %3038 = vmatpush2.msra.mxu0 0.0
    %3039 = vmatprep.subr.mxu0 0.0
    %3040 = vmatpush2.msra.mxu0 0.0
    %3041 = vmatprep.subr.mxu0 0.0
    %3042 = vmatpush2.msra.mxu0 0.0
    %3043 = vmatprep.mubr.f32.mxu0 0.0
    %3044 = vmatmul.mubr.f32.gmra.mxu0 %v2975
    %v3045 = vpop.f32.mrf.mxu0
    %v3046 = vadd.f32 0.0, %v3045
    %v3047 = vpop.f32.mrf.mxu0
    %3048 = vmatprep.mubr.f32.mxu0 0.0
    %3049 = vmatmul.mubr.f32.gmra.mxu0 %v2976
    %v3050 = vpop.f32.mrf.mxu0
    %v3051 = vadd.f32 0.0, %v3050
    %v3052 = vpop.f32.mrf.mxu0
    %3053 = vmatprep.mubr.f32.mxu0 0.0
    %3054 = vmatmul.mubr.f32.gmra.mxu0 %v2977
    %v3055 = vpop.f32.mrf.mxu0
    %v3056 = vadd.f32 0.0, %v3055
    %v3057 = vpop.f32.mrf.mxu0
    %3058 = vmatprep.mubr.f32.mxu0 0.0
    %3059 = vmatmul.mubr.f32.gmra.mxu0 %v2978
    %v3060 = vpop.f32.mrf.mxu0
    %v3061 = vadd.f32 0.0, %v3060
    %v3062 = vpop.f32.mrf.mxu0
    %3063 = vdwg.mxu0
    %s3064 = scalar_lea.vmem %s4, 1792
    %v3065 = vld [vmem:[%s3064] sm:$0xff]
    %v3066 = vld [vmem:[%s3064 + $0x8] sm:$0xff]
    %v3067 = vld [vmem:[%s3064 + $0x10] sm:$0xff]
    %v3068 = vld [vmem:[%s3064 + $0x18] sm:$0xff]
    %v3069 = vld [vmem:[%s3064 + $0x20] sm:$0xff]
    %v3070 = vld [vmem:[%s3064 + $0x28] sm:$0xff]
    %v3071 = vld [vmem:[%s3064 + $0x30] sm:$0xff]
    %v3072 = vld [vmem:[%s3064 + $0x38] sm:$0xff]
    %v3073 = vld [vmem:[%s3064 + $0x40] sm:$0xff]
    %v3074 = vld [vmem:[%s3064 + $0x48] sm:$0xff]
    %v3075 = vld [vmem:[%s3064 + $0x50] sm:$0xff]
    %v3076 = vld [vmem:[%s3064 + $0x58] sm:$0xff]
    %v3077 = vld [vmem:[%s3064 + $0x60] sm:$0xff]
    %v3078 = vld [vmem:[%s3064 + $0x68] sm:$0xff]
    %v3079 = vld [vmem:[%s3064 + $0x70] sm:$0xff]
    %v3080 = vld [vmem:[%s3064 + $0x78] sm:$0xff]
    %3081 = vmatprep.subr.mxu0 0.0
    %3082 = vmatpush1.msra.mxu0 %v3080
    %3083 = vmatprep.subr.mxu0 0.0
    %3084 = vmatpush1.msra.mxu0 %v3079
    %3085 = vmatprep.subr.mxu0 0.0
    %3086 = vmatpush1.msra.mxu0 %v3078
    %3087 = vmatprep.subr.mxu0 0.0
    %3088 = vmatpush1.msra.mxu0 %v3077
    %3089 = vmatprep.subr.mxu0 0.0
    %3090 = vmatpush1.msra.mxu0 %v3076
    %3091 = vmatprep.subr.mxu0 0.0
    %3092 = vmatpush1.msra.mxu0 %v3075
    %3093 = vmatprep.subr.mxu0 0.0
    %3094 = vmatpush1.msra.mxu0 %v3074
    %3095 = vmatprep.subr.mxu0 0.0
    %3096 = vmatpush1.msra.mxu0 %v3073
    %3097 = vmatprep.subr.mxu0 0.0
    %3098 = vmatpush1.msra.mxu0 %v3072
    %3099 = vmatprep.subr.mxu0 0.0
    %3100 = vmatpush1.msra.mxu0 %v3071
    %3101 = vmatprep.subr.mxu0 0.0
    %3102 = vmatpush1.msra.mxu0 %v3070
    %3103 = vmatprep.subr.mxu0 0.0
    %3104 = vmatpush1.msra.mxu0 %v3069
    %3105 = vmatprep.subr.mxu0 0.0
    %3106 = vmatpush1.msra.mxu0 %v3068
    %3107 = vmatprep.subr.mxu0 0.0
    %3108 = vmatpush1.msra.mxu0 %v3067
    %3109 = vmatprep.subr.mxu0 0.0
    %3110 = vmatpush1.msra.mxu0 %v3066
    %3111 = vmatprep.subr.mxu0 0.0
    %3112 = vmatpush1.msra.mxu0 %v3065
    %3113 = vmatprep.subr.mxu0 0.0
    %3114 = vmatpush2.msra.mxu0 0.0
    %3115 = vmatprep.subr.mxu0 0.0
    %3116 = vmatpush2.msra.mxu0 0.0
    %3117 = vmatprep.subr.mxu0 0.0
    %3118 = vmatpush2.msra.mxu0 0.0
    %3119 = vmatprep.subr.mxu0 0.0
    %3120 = vmatpush2.msra.mxu0 0.0
    %3121 = vmatprep.subr.mxu0 0.0
    %3122 = vmatpush2.msra.mxu0 0.0
    %3123 = vmatprep.subr.mxu0 0.0
    %3124 = vmatpush2.msra.mxu0 0.0
    %3125 = vmatprep.subr.mxu0 0.0
    %3126 = vmatpush2.msra.mxu0 0.0
    %3127 = vmatprep.subr.mxu0 0.0
    %3128 = vmatpush2.msra.mxu0 0.0
    %3129 = vmatprep.subr.mxu0 0.0
    %3130 = vmatpush2.msra.mxu0 0.0
    %3131 = vmatprep.subr.mxu0 0.0
    %3132 = vmatpush2.msra.mxu0 0.0
    %3133 = vmatprep.subr.mxu0 0.0
    %3134 = vmatpush2.msra.mxu0 0.0
    %3135 = vmatprep.subr.mxu0 0.0
    %3136 = vmatpush2.msra.mxu0 0.0
    %3137 = vmatprep.subr.mxu0 0.0
    %3138 = vmatpush2.msra.mxu0 0.0
    %3139 = vmatprep.subr.mxu0 0.0
    %3140 = vmatpush2.msra.mxu0 0.0
    %3141 = vmatprep.subr.mxu0 0.0
    %3142 = vmatpush2.msra.mxu0 0.0
    %3143 = vmatprep.subr.mxu0 0.0
    %3144 = vmatpush2.msra.mxu0 0.0
    %3145 = vmatprep.mubr.f32.mxu0 0.0
    %3146 = vmatmul.mubr.f32.gmra.mxu0 %v3046
    %v3147 = vpop.f32.mrf.mxu0
    %v3148 = vadd.f32 0.0, %v3147
    %v3149 = vpop.f32.mrf.mxu0
    %3150 = vmatprep.mubr.f32.mxu0 0.0
    %3151 = vmatmul.mubr.f32.gmra.mxu0 %v3051
    %v3152 = vpop.f32.mrf.mxu0
    %v3153 = vadd.f32 0.0, %v3152
    %v3154 = vpop.f32.mrf.mxu0
    %3155 = vmatprep.mubr.f32.mxu0 0.0
    %3156 = vmatmul.mubr.f32.gmra.mxu0 %v3056
    %v3157 = vpop.f32.mrf.mxu0
    %v3158 = vadd.f32 0.0, %v3157
    %v3159 = vpop.f32.mrf.mxu0
    %3160 = vmatprep.mubr.f32.mxu0 0.0
    %3161 = vmatmul.mubr.f32.gmra.mxu0 %v3061
    %v3162 = vpop.f32.mrf.mxu0
    %v3163 = vadd.f32 0.0, %v3162
    %v3164 = vpop.f32.mrf.mxu0
    %3165 = vdwg.mxu0
    %v3166 = vadd.f32 %v2970, %v3148
    %v3167 = vadd.f32 %v2971, %v3153
    %v3168 = vadd.f32 %v2972, %v3158
    %v3169 = vadd.f32 %v2973, %v3163
    %s3170 = scalar_lea.vmem %s3, 480
    %v3171 = vld [vmem:[%s3170] sm:$0xff]
    %v3172 = vld [vmem:[%s3170 + $0x8] sm:$0xff]
    %v3173 = vld [vmem:[%s3170 + $0x10] sm:$0xff]
    %v3174 = vld [vmem:[%s3170 + $0x18] sm:$0xff]
    %3175 = vmatprep.subr.mxu0 0.0
    %3176 = vmatpush1.msra.mxu0 %v239
    %3177 = vmatprep.subr.mxu0 0.0
    %3178 = vmatpush1.msra.mxu0 %v238
    %3179 = vmatprep.subr.mxu0 0.0
    %3180 = vmatpush1.msra.mxu0 %v237
    %3181 = vmatprep.subr.mxu0 0.0
    %3182 = vmatpush1.msra.mxu0 %v236
    %3183 = vmatprep.subr.mxu0 0.0
    %3184 = vmatpush1.msra.mxu0 %v235
    %3185 = vmatprep.subr.mxu0 0.0
    %3186 = vmatpush1.msra.mxu0 %v234
    %3187 = vmatprep.subr.mxu0 0.0
    %3188 = vmatpush1.msra.mxu0 %v233
    %3189 = vmatprep.subr.mxu0 0.0
    %3190 = vmatpush1.msra.mxu0 %v232
    %3191 = vmatprep.subr.mxu0 0.0
    %3192 = vmatpush1.msra.mxu0 %v231
    %3193 = vmatprep.subr.mxu0 0.0
    %3194 = vmatpush1.msra.mxu0 %v230
    %3195 = vmatprep.subr.mxu0 0.0
    %3196 = vmatpush1.msra.mxu0 %v229
    %3197 = vmatprep.subr.mxu0 0.0
    %3198 = vmatpush1.msra.mxu0 %v228
    %3199 = vmatprep.subr.mxu0 0.0
    %3200 = vmatpush1.msra.mxu0 %v227
    %3201 = vmatprep.subr.mxu0 0.0
    %3202 = vmatpush1.msra.mxu0 %v226
    %3203 = vmatprep.subr.mxu0 0.0
    %3204 = vmatpush1.msra.mxu0 %v225
    %3205 = vmatprep.subr.mxu0 0.0
    %3206 = vmatpush1.msra.mxu0 %v224
    %3207 = vmatprep.subr.mxu0 0.0
    %3208 = vmatpush2.msra.mxu0 0.0
    %3209 = vmatprep.subr.mxu0 0.0
    %3210 = vmatpush2.msra.mxu0 0.0
    %3211 = vmatprep.subr.mxu0 0.0
    %3212 = vmatpush2.msra.mxu0 0.0
    %3213 = vmatprep.subr.mxu0 0.0
    %3214 = vmatpush2.msra.mxu0 0.0
    %3215 = vmatprep.subr.mxu0 0.0
    %3216 = vmatpush2.msra.mxu0 0.0
    %3217 = vmatprep.subr.mxu0 0.0
    %3218 = vmatpush2.msra.mxu0 0.0
    %3219 = vmatprep.subr.mxu0 0.0
    %3220 = vmatpush2.msra.mxu0 0.0
    %3221 = vmatprep.subr.mxu0 0.0
    %3222 = vmatpush2.msra.mxu0 0.0
    %3223 = vmatprep.subr.mxu0 0.0
    %3224 = vmatpush2.msra.mxu0 0.0
    %3225 = vmatprep.subr.mxu0 0.0
    %3226 = vmatpush2.msra.mxu0 0.0
    %3227 = vmatprep.subr.mxu0 0.0
    %3228 = vmatpush2.msra.mxu0 0.0
    %3229 = vmatprep.subr.mxu0 0.0
    %3230 = vmatpush2.msra.mxu0 0.0
    %3231 = vmatprep.subr.mxu0 0.0
    %3232 = vmatpush2.msra.mxu0 0.0
    %3233 = vmatprep.subr.mxu0 0.0
    %3234 = vmatpush2.msra.mxu0 0.0
    %3235 = vmatprep.subr.mxu0 0.0
    %3236 = vmatpush2.msra.mxu0 0.0
    %3237 = vmatprep.subr.mxu0 0.0
    %3238 = vmatpush2.msra.mxu0 0.0
    %3239 = vmatprep.mubr.f32.mxu0 0.0
    %3240 = vmatmul.mubr.f32.gmra.mxu0 %v3171
    %v3241 = vpop.f32.mrf.mxu0
    %v3242 = vadd.f32 0.0, %v3241
    %v3243 = vpop.f32.mrf.mxu0
    %3244 = vmatprep.mubr.f32.mxu0 0.0
    %3245 = vmatmul.mubr.f32.gmra.mxu0 %v3172
    %v3246 = vpop.f32.mrf.mxu0
    %v3247 = vadd.f32 0.0, %v3246
    %v3248 = vpop.f32.mrf.mxu0
    %3249 = vmatprep.mubr.f32.mxu0 0.0
    %3250 = vmatmul.mubr.f32.gmra.mxu0 %v3173
    %v3251 = vpop.f32.mrf.mxu0
    %v3252 = vadd.f32 0.0, %v3251
    %v3253 = vpop.f32.mrf.mxu0
    %3254 = vmatprep.mubr.f32.mxu0 0.0
    %3255 = vmatmul.mubr.f32.gmra.mxu0 %v3174
    %v3256 = vpop.f32.mrf.mxu0
    %v3257 = vadd.f32 0.0, %v3256
    %v3258 = vpop.f32.mrf.mxu0
    %3259 = vdwg.mxu0
    %s3260 = scalar_lea.vmem %s4, 1920
    %v3261 = vld [vmem:[%s3260] sm:$0xff]
    %v3262 = vld [vmem:[%s3260 + $0x8] sm:$0xff]
    %v3263 = vld [vmem:[%s3260 + $0x10] sm:$0xff]
    %v3264 = vld [vmem:[%s3260 + $0x18] sm:$0xff]
    %v3265 = vld [vmem:[%s3260 + $0x20] sm:$0xff]
    %v3266 = vld [vmem:[%s3260 + $0x28] sm:$0xff]
    %v3267 = vld [vmem:[%s3260 + $0x30] sm:$0xff]
    %v3268 = vld [vmem:[%s3260 + $0x38] sm:$0xff]
    %v3269 = vld [vmem:[%s3260 + $0x40] sm:$0xff]
    %v3270 = vld [vmem:[%s3260 + $0x48] sm:$0xff]
    %v3271 = vld [vmem:[%s3260 + $0x50] sm:$0xff]
    %v3272 = vld [vmem:[%s3260 + $0x58] sm:$0xff]
    %v3273 = vld [vmem:[%s3260 + $0x60] sm:$0xff]
    %v3274 = vld [vmem:[%s3260 + $0x68] sm:$0xff]
    %v3275 = vld [vmem:[%s3260 + $0x70] sm:$0xff]
    %v3276 = vld [vmem:[%s3260 + $0x78] sm:$0xff]
    %3277 = vmatprep.subr.mxu0 0.0
    %3278 = vmatpush1.msra.mxu0 %v3276
    %3279 = vmatprep.subr.mxu0 0.0
    %3280 = vmatpush1.msra.mxu0 %v3275
    %3281 = vmatprep.subr.mxu0 0.0
    %3282 = vmatpush1.msra.mxu0 %v3274
    %3283 = vmatprep.subr.mxu0 0.0
    %3284 = vmatpush1.msra.mxu0 %v3273
    %3285 = vmatprep.subr.mxu0 0.0
    %3286 = vmatpush1.msra.mxu0 %v3272
    %3287 = vmatprep.subr.mxu0 0.0
    %3288 = vmatpush1.msra.mxu0 %v3271
    %3289 = vmatprep.subr.mxu0 0.0
    %3290 = vmatpush1.msra.mxu0 %v3270
    %3291 = vmatprep.subr.mxu0 0.0
    %3292 = vmatpush1.msra.mxu0 %v3269
    %3293 = vmatprep.subr.mxu0 0.0
    %3294 = vmatpush1.msra.mxu0 %v3268
    %3295 = vmatprep.subr.mxu0 0.0
    %3296 = vmatpush1.msra.mxu0 %v3267
    %3297 = vmatprep.subr.mxu0 0.0
    %3298 = vmatpush1.msra.mxu0 %v3266
    %3299 = vmatprep.subr.mxu0 0.0
    %3300 = vmatpush1.msra.mxu0 %v3265
    %3301 = vmatprep.subr.mxu0 0.0
    %3302 = vmatpush1.msra.mxu0 %v3264
    %3303 = vmatprep.subr.mxu0 0.0
    %3304 = vmatpush1.msra.mxu0 %v3263
    %3305 = vmatprep.subr.mxu0 0.0
    %3306 = vmatpush1.msra.mxu0 %v3262
    %3307 = vmatprep.subr.mxu0 0.0
    %3308 = vmatpush1.msra.mxu0 %v3261
    %3309 = vmatprep.subr.mxu0 0.0
    %3310 = vmatpush2.msra.mxu0 0.0
    %3311 = vmatprep.subr.mxu0 0.0
    %3312 = vmatpush2.msra.mxu0 0.0
    %3313 = vmatprep.subr.mxu0 0.0
    %3314 = vmatpush2.msra.mxu0 0.0
    %3315 = vmatprep.subr.mxu0 0.0
    %3316 = vmatpush2.msra.mxu0 0.0
    %3317 = vmatprep.subr.mxu0 0.0
    %3318 = vmatpush2.msra.mxu0 0.0
    %3319 = vmatprep.subr.mxu0 0.0
    %3320 = vmatpush2.msra.mxu0 0.0
    %3321 = vmatprep.subr.mxu0 0.0
    %3322 = vmatpush2.msra.mxu0 0.0
    %3323 = vmatprep.subr.mxu0 0.0
    %3324 = vmatpush2.msra.mxu0 0.0
    %3325 = vmatprep.subr.mxu0 0.0
    %3326 = vmatpush2.msra.mxu0 0.0
    %3327 = vmatprep.subr.mxu0 0.0
    %3328 = vmatpush2.msra.mxu0 0.0
    %3329 = vmatprep.subr.mxu0 0.0
    %3330 = vmatpush2.msra.mxu0 0.0
    %3331 = vmatprep.subr.mxu0 0.0
    %3332 = vmatpush2.msra.mxu0 0.0
    %3333 = vmatprep.subr.mxu0 0.0
    %3334 = vmatpush2.msra.mxu0 0.0
    %3335 = vmatprep.subr.mxu0 0.0
    %3336 = vmatpush2.msra.mxu0 0.0
    %3337 = vmatprep.subr.mxu0 0.0
    %3338 = vmatpush2.msra.mxu0 0.0
    %3339 = vmatprep.subr.mxu0 0.0
    %3340 = vmatpush2.msra.mxu0 0.0
    %3341 = vmatprep.mubr.f32.mxu0 0.0
    %3342 = vmatmul.mubr.f32.gmra.mxu0 %v3242
    %v3343 = vpop.f32.mrf.mxu0
    %v3344 = vadd.f32 0.0, %v3343
    %v3345 = vpop.f32.mrf.mxu0
    %3346 = vmatprep.mubr.f32.mxu0 0.0
    %3347 = vmatmul.mubr.f32.gmra.mxu0 %v3247
    %v3348 = vpop.f32.mrf.mxu0
    %v3349 = vadd.f32 0.0, %v3348
    %v3350 = vpop.f32.mrf.mxu0
    %3351 = vmatprep.mubr.f32.mxu0 0.0
    %3352 = vmatmul.mubr.f32.gmra.mxu0 %v3252
    %v3353 = vpop.f32.mrf.mxu0
    %v3354 = vadd.f32 0.0, %v3353
    %v3355 = vpop.f32.mrf.mxu0
    %3356 = vmatprep.mubr.f32.mxu0 0.0
    %3357 = vmatmul.mubr.f32.gmra.mxu0 %v3257
    %v3358 = vpop.f32.mrf.mxu0
    %v3359 = vadd.f32 0.0, %v3358
    %v3360 = vpop.f32.mrf.mxu0
    %3361 = vdwg.mxu0
    %v3362 = vadd.f32 %v3166, %v3344
    %v3363 = vadd.f32 %v3167, %v3349
    %v3364 = vadd.f32 %v3168, %v3354
    %v3365 = vadd.f32 %v3169, %v3359
    %v3366 = vld [vmem:[%s2 + $0x1] sm:$0x1]
    %v3367 = vlaneseq
    %v3368 = vshrl.u32 %v3367, 7
    %v3369 = vsub.s32 0, %v3368
    %v3370 = vrot.slane %v3366, %v3369
    %v3371 = vadd.f32 %v3362, %v3370
    %v3372 = vadd.f32 %v3363, %v3370
    %v3373 = vadd.f32 %v3364, %v3370
    %v3374 = vadd.f32 %v3365, %v3370
    %v3375 = vmax.f32 %v3371, 0.0
    %v3376 = vmax.f32 %v3372, 0.0
    %v3377 = vmax.f32 %v3373, 0.0
    %v3378 = vmax.f32 %v3374, 0.0
    %v3379 = vld [vmem:[%s5] sm:$0xff]
    %v3380 = vld [vmem:[%s5 + $0x8] sm:$0xff]
    %v3381 = vld [vmem:[%s5 + $0x10] sm:$0xff]
    %v3382 = vld [vmem:[%s5 + $0x18] sm:$0xff]
    %vm3383 = vcmask 261120
    %v3385 = vsel %vm3383, %v3379, 0
    %v3388 = vsel %vm3383, %v3380, 0
    %v3391 = vsel %vm3383, %v3381, 0
    %v3394 = vsel %vm3383, %v3382, 0
    %3396 = vmatprep.subr.mxu0 0.0
    %3397 = vmatpush1.msra.mxu0 0.0
    %3398 = vmatprep.subr.mxu0 0.0
    %3399 = vmatpush1.msra.mxu0 0.0
    %3400 = vmatprep.subr.mxu0 0.0
    %3401 = vmatpush1.msra.mxu0 0.0
    %3402 = vmatprep.subr.mxu0 0.0
    %3403 = vmatpush1.msra.mxu0 0.0
    %3404 = vmatprep.subr.mxu0 0.0
    %3405 = vmatpush1.msra.mxu0 0.0
    %3406 = vmatprep.subr.mxu0 0.0
    %3407 = vmatpush1.msra.mxu0 0.0
    %3408 = vmatprep.subr.mxu0 0.0
    %3409 = vmatpush1.msra.mxu0 0.0
    %3410 = vmatprep.subr.mxu0 0.0
    %3411 = vmatpush1.msra.mxu0 0.0
    %3412 = vmatprep.subr.mxu0 0.0
    %3413 = vmatpush1.msra.mxu0 0.0
    %3414 = vmatprep.subr.mxu0 0.0
    %3415 = vmatpush1.msra.mxu0 0.0
    %3416 = vmatprep.subr.mxu0 0.0
    %3417 = vmatpush1.msra.mxu0 0.0
    %3418 = vmatprep.subr.mxu0 0.0
    %3419 = vmatpush1.msra.mxu0 0.0
    %3420 = vmatprep.subr.mxu0 0.0
    %3421 = vmatpush1.msra.mxu0 %v3378
    %3422 = vmatprep.subr.mxu0 0.0
    %3423 = vmatpush1.msra.mxu0 %v3377
    %3424 = vmatprep.subr.mxu0 0.0
    %3425 = vmatpush1.msra.mxu0 %v3376
    %3426 = vmatprep.subr.mxu0 0.0
    %3427 = vmatpush1.msra.mxu0 %v3375
    %3428 = vmatprep.subr.mxu0 0.0
    %3429 = vmatpush2.msra.mxu0 0.0
    %3430 = vmatprep.subr.mxu0 0.0
    %3431 = vmatpush2.msra.mxu0 0.0
    %3432 = vmatprep.subr.mxu0 0.0
    %3433 = vmatpush2.msra.mxu0 0.0
    %3434 = vmatprep.subr.mxu0 0.0
    %3435 = vmatpush2.msra.mxu0 0.0
    %3436 = vmatprep.subr.mxu0 0.0
    %3437 = vmatpush2.msra.mxu0 0.0
    %3438 = vmatprep.subr.mxu0 0.0
    %3439 = vmatpush2.msra.mxu0 0.0
    %3440 = vmatprep.subr.mxu0 0.0
    %3441 = vmatpush2.msra.mxu0 0.0
    %3442 = vmatprep.subr.mxu0 0.0
    %3443 = vmatpush2.msra.mxu0 0.0
    %3444 = vmatprep.subr.mxu0 0.0
    %3445 = vmatpush2.msra.mxu0 0.0
    %3446 = vmatprep.subr.mxu0 0.0
    %3447 = vmatpush2.msra.mxu0 0.0
    %3448 = vmatprep.subr.mxu0 0.0
    %3449 = vmatpush2.msra.mxu0 0.0
    %3450 = vmatprep.subr.mxu0 0.0
    %3451 = vmatpush2.msra.mxu0 0.0
    %3452 = vmatprep.subr.mxu0 0.0
    %3453 = vmatpush2.msra.mxu0 0.0
    %3454 = vmatprep.subr.mxu0 0.0
    %3455 = vmatpush2.msra.mxu0 0.0
    %3456 = vmatprep.subr.mxu0 0.0
    %3457 = vmatpush2.msra.mxu0 0.0
    %3458 = vmatprep.subr.mxu0 0.0
    %3459 = vmatpush2.msra.mxu0 0.0
    %3460 = vmatprep.mubr.f32.mxu0 0.0
    %3461 = vmatmul.mubr.f32.gmra.mxu0 %v3385
    %v3462 = vpop.f32.mrf.mxu0
    %v3463 = vadd.f32 0.0, %v3462
    %v3464 = vpop.f32.mrf.mxu0
    %3465 = vmatprep.mubr.f32.mxu0 0.0
    %3466 = vmatmul.mubr.f32.gmra.mxu0 %v3388
    %v3467 = vpop.f32.mrf.mxu0
    %v3468 = vadd.f32 0.0, %v3467
    %v3469 = vpop.f32.mrf.mxu0
    %3470 = vmatprep.mubr.f32.mxu0 0.0
    %3471 = vmatmul.mubr.f32.gmra.mxu0 %v3391
    %v3472 = vpop.f32.mrf.mxu0
    %v3473 = vadd.f32 0.0, %v3472
    %v3474 = vpop.f32.mrf.mxu0
    %3475 = vmatprep.mubr.f32.mxu0 0.0
    %3476 = vmatmul.mubr.f32.gmra.mxu0 %v3394
    %v3477 = vpop.f32.mrf.mxu0
    %v3478 = vadd.f32 0.0, %v3477
    %v3479 = vpop.f32.mrf.mxu0
    %3480 = vdwg.mxu0
    %v3481 = vld [vmem:[%s6] sm:$0xff]
    %v3482 = vld [vmem:[%s6 + $0x8] sm:$0xff]
    %v3483 = vld [vmem:[%s6 + $0x10] sm:$0xff]
    %v3484 = vld [vmem:[%s6 + $0x18] sm:$0xff]
    %v3485 = vld [vmem:[%s6 + $0x20] sm:$0xff]
    %v3486 = vld [vmem:[%s6 + $0x28] sm:$0xff]
    %v3487 = vld [vmem:[%s6 + $0x30] sm:$0xff]
    %v3488 = vld [vmem:[%s6 + $0x38] sm:$0xff]
    %v3489 = vld [vmem:[%s6 + $0x40] sm:$0xff]
    %v3490 = vld [vmem:[%s6 + $0x48] sm:$0xff]
    %v3491 = vld [vmem:[%s6 + $0x50] sm:$0xff]
    %v3492 = vld [vmem:[%s6 + $0x58] sm:$0xff]
    %v3493 = vld [vmem:[%s6 + $0x60] sm:$0xff]
    %v3494 = vld [vmem:[%s6 + $0x68] sm:$0xff]
    %v3495 = vld [vmem:[%s6 + $0x70] sm:$0xff]
    %v3496 = vld [vmem:[%s6 + $0x78] sm:$0xff]
    %s3497 = scalar_lea.vmem %s5, 32
    %v3498 = vld [vmem:[%s3497] sm:$0xff]
    %v3499 = vld [vmem:[%s3497 + $0x8] sm:$0xff]
    %v3500 = vld [vmem:[%s3497 + $0x10] sm:$0xff]
    %v3501 = vld [vmem:[%s3497 + $0x18] sm:$0xff]
    %v3503 = vsel %vm3383, %v3498, 0
    %v3506 = vsel %vm3383, %v3499, 0
    %v3509 = vsel %vm3383, %v3500, 0
    %v3512 = vsel %vm3383, %v3501, 0
    %3514 = vmatprep.subr.mxu0 0.0
    %3515 = vmatpush1.msra.mxu0 0.0
    %3516 = vmatprep.subr.mxu0 0.0
    %3517 = vmatpush1.msra.mxu0 0.0
    %3518 = vmatprep.subr.mxu0 0.0
    %3519 = vmatpush1.msra.mxu0 0.0
    %3520 = vmatprep.subr.mxu0 0.0
    %3521 = vmatpush1.msra.mxu0 0.0
    %3522 = vmatprep.subr.mxu0 0.0
    %3523 = vmatpush1.msra.mxu0 0.0
    %3524 = vmatprep.subr.mxu0 0.0
    %3525 = vmatpush1.msra.mxu0 0.0
    %3526 = vmatprep.subr.mxu0 0.0
    %3527 = vmatpush1.msra.mxu0 0.0
    %3528 = vmatprep.subr.mxu0 0.0
    %3529 = vmatpush1.msra.mxu0 0.0
    %3530 = vmatprep.subr.mxu0 0.0
    %3531 = vmatpush1.msra.mxu0 0.0
    %3532 = vmatprep.subr.mxu0 0.0
    %3533 = vmatpush1.msra.mxu0 0.0
    %3534 = vmatprep.subr.mxu0 0.0
    %3535 = vmatpush1.msra.mxu0 0.0
    %3536 = vmatprep.subr.mxu0 0.0
    %3537 = vmatpush1.msra.mxu0 0.0
    %3538 = vmatprep.subr.mxu0 0.0
    %3539 = vmatpush1.msra.mxu0 %v3378
    %3540 = vmatprep.subr.mxu0 0.0
    %3541 = vmatpush1.msra.mxu0 %v3377
    %3542 = vmatprep.subr.mxu0 0.0
    %3543 = vmatpush1.msra.mxu0 %v3376
    %3544 = vmatprep.subr.mxu0 0.0
    %3545 = vmatpush1.msra.mxu0 %v3375
    %3546 = vmatprep.subr.mxu0 0.0
    %3547 = vmatpush2.msra.mxu0 0.0
    %3548 = vmatprep.subr.mxu0 0.0
    %3549 = vmatpush2.msra.mxu0 0.0
    %3550 = vmatprep.subr.mxu0 0.0
    %3551 = vmatpush2.msra.mxu0 0.0
    %3552 = vmatprep.subr.mxu0 0.0
    %3553 = vmatpush2.msra.mxu0 0.0
    %3554 = vmatprep.subr.mxu0 0.0
    %3555 = vmatpush2.msra.mxu0 0.0
    %3556 = vmatprep.subr.mxu0 0.0
    %3557 = vmatpush2.msra.mxu0 0.0
    %3558 = vmatprep.subr.mxu0 0.0
    %3559 = vmatpush2.msra.mxu0 0.0
    %3560 = vmatprep.subr.mxu0 0.0
    %3561 = vmatpush2.msra.mxu0 0.0
    %3562 = vmatprep.subr.mxu0 0.0
    %3563 = vmatpush2.msra.mxu0 0.0
    %3564 = vmatprep.subr.mxu0 0.0
    %3565 = vmatpush2.msra.mxu0 0.0
    %3566 = vmatprep.subr.mxu0 0.0
    %3567 = vmatpush2.msra.mxu0 0.0
    %3568 = vmatprep.subr.mxu0 0.0
    %3569 = vmatpush2.msra.mxu0 0.0
    %3570 = vmatprep.subr.mxu0 0.0
    %3571 = vmatpush2.msra.mxu0 0.0
    %3572 = vmatprep.subr.mxu0 0.0
    %3573 = vmatpush2.msra.mxu0 0.0
    %3574 = vmatprep.subr.mxu0 0.0
    %3575 = vmatpush2.msra.mxu0 0.0
    %3576 = vmatprep.subr.mxu0 0.0
    %3577 = vmatpush2.msra.mxu0 0.0
    %3578 = vmatprep.mubr.f32.mxu0 0.0
    %3579 = vmatmul.mubr.f32.gmra.mxu0 %v3503
    %v3580 = vpop.f32.mrf.mxu0
    %v3581 = vadd.f32 0.0, %v3580
    %v3582 = vpop.f32.mrf.mxu0
    %3583 = vmatprep.mubr.f32.mxu0 0.0
    %3584 = vmatmul.mubr.f32.gmra.mxu0 %v3506
    %v3585 = vpop.f32.mrf.mxu0
    %v3586 = vadd.f32 0.0, %v3585
    %v3587 = vpop.f32.mrf.mxu0
    %3588 = vmatprep.mubr.f32.mxu0 0.0
    %3589 = vmatmul.mubr.f32.gmra.mxu0 %v3509
    %v3590 = vpop.f32.mrf.mxu0
    %v3591 = vadd.f32 0.0, %v3590
    %v3592 = vpop.f32.mrf.mxu0
    %3593 = vmatprep.mubr.f32.mxu0 0.0
    %3594 = vmatmul.mubr.f32.gmra.mxu0 %v3512
    %v3595 = vpop.f32.mrf.mxu0
    %v3596 = vadd.f32 0.0, %v3595
    %v3597 = vpop.f32.mrf.mxu0
    %3598 = vdwg.mxu0
    %s3599 = scalar_lea.vmem %s6, 128
    %v3600 = vld [vmem:[%s3599] sm:$0xff]
    %v3601 = vld [vmem:[%s3599 + $0x8] sm:$0xff]
    %v3602 = vld [vmem:[%s3599 + $0x10] sm:$0xff]
    %v3603 = vld [vmem:[%s3599 + $0x18] sm:$0xff]
    %v3604 = vld [vmem:[%s3599 + $0x20] sm:$0xff]
    %v3605 = vld [vmem:[%s3599 + $0x28] sm:$0xff]
    %v3606 = vld [vmem:[%s3599 + $0x30] sm:$0xff]
    %v3607 = vld [vmem:[%s3599 + $0x38] sm:$0xff]
    %v3608 = vld [vmem:[%s3599 + $0x40] sm:$0xff]
    %v3609 = vld [vmem:[%s3599 + $0x48] sm:$0xff]
    %v3610 = vld [vmem:[%s3599 + $0x50] sm:$0xff]
    %v3611 = vld [vmem:[%s3599 + $0x58] sm:$0xff]
    %v3612 = vld [vmem:[%s3599 + $0x60] sm:$0xff]
    %v3613 = vld [vmem:[%s3599 + $0x68] sm:$0xff]
    %v3614 = vld [vmem:[%s3599 + $0x70] sm:$0xff]
    %v3615 = vld [vmem:[%s3599 + $0x78] sm:$0xff]
    %3616 = vmatprep.subr.mxu0 0.0
    %3617 = vmatpush1.msra.mxu0 %v3615
    %3618 = vmatprep.subr.mxu0 0.0
    %3619 = vmatpush1.msra.mxu0 %v3614
    %3620 = vmatprep.subr.mxu0 0.0
    %3621 = vmatpush1.msra.mxu0 %v3613
    %3622 = vmatprep.subr.mxu0 0.0
    %3623 = vmatpush1.msra.mxu0 %v3612
    %3624 = vmatprep.subr.mxu0 0.0
    %3625 = vmatpush1.msra.mxu0 %v3611
    %3626 = vmatprep.subr.mxu0 0.0
    %3627 = vmatpush1.msra.mxu0 %v3610
    %3628 = vmatprep.subr.mxu0 0.0
    %3629 = vmatpush1.msra.mxu0 %v3609
    %3630 = vmatprep.subr.mxu0 0.0
    %3631 = vmatpush1.msra.mxu0 %v3608
    %3632 = vmatprep.subr.mxu0 0.0
    %3633 = vmatpush1.msra.mxu0 %v3607
    %3634 = vmatprep.subr.mxu0 0.0
    %3635 = vmatpush1.msra.mxu0 %v3606
    %3636 = vmatprep.subr.mxu0 0.0
    %3637 = vmatpush1.msra.mxu0 %v3605
    %3638 = vmatprep.subr.mxu0 0.0
    %3639 = vmatpush1.msra.mxu0 %v3604
    %3640 = vmatprep.subr.mxu0 0.0
    %3641 = vmatpush1.msra.mxu0 %v3603
    %3642 = vmatprep.subr.mxu0 0.0
    %3643 = vmatpush1.msra.mxu0 %v3602
    %3644 = vmatprep.subr.mxu0 0.0
    %3645 = vmatpush1.msra.mxu0 %v3601
    %3646 = vmatprep.subr.mxu0 0.0
    %3647 = vmatpush1.msra.mxu0 %v3600
    %3648 = vmatprep.subr.mxu0 0.0
    %3649 = vmatpush2.msra.mxu0 0.0
    %3650 = vmatprep.subr.mxu0 0.0
    %3651 = vmatpush2.msra.mxu0 0.0
    %3652 = vmatprep.subr.mxu0 0.0
    %3653 = vmatpush2.msra.mxu0 0.0
    %3654 = vmatprep.subr.mxu0 0.0
    %3655 = vmatpush2.msra.mxu0 0.0
    %3656 = vmatprep.subr.mxu0 0.0
    %3657 = vmatpush2.msra.mxu0 0.0
    %3658 = vmatprep.subr.mxu0 0.0
    %3659 = vmatpush2.msra.mxu0 0.0
    %3660 = vmatprep.subr.mxu0 0.0
    %3661 = vmatpush2.msra.mxu0 0.0
    %3662 = vmatprep.subr.mxu0 0.0
    %3663 = vmatpush2.msra.mxu0 0.0
    %3664 = vmatprep.subr.mxu0 0.0
    %3665 = vmatpush2.msra.mxu0 0.0
    %3666 = vmatprep.subr.mxu0 0.0
    %3667 = vmatpush2.msra.mxu0 0.0
    %3668 = vmatprep.subr.mxu0 0.0
    %3669 = vmatpush2.msra.mxu0 0.0
    %3670 = vmatprep.subr.mxu0 0.0
    %3671 = vmatpush2.msra.mxu0 0.0
    %3672 = vmatprep.subr.mxu0 0.0
    %3673 = vmatpush2.msra.mxu0 0.0
    %3674 = vmatprep.subr.mxu0 0.0
    %3675 = vmatpush2.msra.mxu0 0.0
    %3676 = vmatprep.subr.mxu0 0.0
    %3677 = vmatpush2.msra.mxu0 0.0
    %3678 = vmatprep.subr.mxu0 0.0
    %3679 = vmatpush2.msra.mxu0 0.0
    %3680 = vmatprep.mubr.f32.mxu0 0.0
    %3681 = vmatmul.mubr.f32.gmra.mxu0 %v3581
    %v3682 = vpop.f32.mrf.mxu0
    %v3683 = vadd.f32 0.0, %v3682
    %v3684 = vpop.f32.mrf.mxu0
    %3685 = vmatprep.mubr.f32.mxu0 0.0
    %3686 = vmatmul.mubr.f32.gmra.mxu0 %v3586
    %v3687 = vpop.f32.mrf.mxu0
    %v3688 = vadd.f32 0.0, %v3687
    %v3689 = vpop.f32.mrf.mxu0
    %3690 = vmatprep.mubr.f32.mxu0 0.0
    %3691 = vmatmul.mubr.f32.gmra.mxu0 %v3591
    %v3692 = vpop.f32.mrf.mxu0
    %v3693 = vadd.f32 0.0, %v3692
    %v3694 = vpop.f32.mrf.mxu0
    %3695 = vmatprep.mubr.f32.mxu0 0.0
    %3696 = vmatmul.mubr.f32.gmra.mxu0 %v3596
    %v3697 = vpop.f32.mrf.mxu0
    %v3698 = vadd.f32 0.0, %v3697
    %v3699 = vpop.f32.mrf.mxu0
    %3700 = vdwg.mxu0
    %3701 = vmatprep.subr.mxu0 0.0
    %3702 = vmatpush1.msra.mxu0 %v3496
    %3703 = vmatprep.subr.mxu0 0.0
    %3704 = vmatpush1.msra.mxu0 %v3495
    %3705 = vmatprep.subr.mxu0 0.0
    %3706 = vmatpush1.msra.mxu0 %v3494
    %3707 = vmatprep.subr.mxu0 0.0
    %3708 = vmatpush1.msra.mxu0 %v3493
    %3709 = vmatprep.subr.mxu0 0.0
    %3710 = vmatpush1.msra.mxu0 %v3492
    %3711 = vmatprep.subr.mxu0 0.0
    %3712 = vmatpush1.msra.mxu0 %v3491
    %3713 = vmatprep.subr.mxu0 0.0
    %3714 = vmatpush1.msra.mxu0 %v3490
    %3715 = vmatprep.subr.mxu0 0.0
    %3716 = vmatpush1.msra.mxu0 %v3489
    %3717 = vmatprep.subr.mxu0 0.0
    %3718 = vmatpush1.msra.mxu0 %v3488
    %3719 = vmatprep.subr.mxu0 0.0
    %3720 = vmatpush1.msra.mxu0 %v3487
    %3721 = vmatprep.subr.mxu0 0.0
    %3722 = vmatpush1.msra.mxu0 %v3486
    %3723 = vmatprep.subr.mxu0 0.0
    %3724 = vmatpush1.msra.mxu0 %v3485
    %3725 = vmatprep.subr.mxu0 0.0
    %3726 = vmatpush1.msra.mxu0 %v3484
    %3727 = vmatprep.subr.mxu0 0.0
    %3728 = vmatpush1.msra.mxu0 %v3483
    %3729 = vmatprep.subr.mxu0 0.0
    %3730 = vmatpush1.msra.mxu0 %v3482
    %3731 = vmatprep.subr.mxu0 0.0
    %3732 = vmatpush1.msra.mxu0 %v3481
    %3733 = vmatprep.subr.mxu0 0.0
    %3734 = vmatpush2.msra.mxu0 0.0
    %3735 = vmatprep.subr.mxu0 0.0
    %3736 = vmatpush2.msra.mxu0 0.0
    %3737 = vmatprep.subr.mxu0 0.0
    %3738 = vmatpush2.msra.mxu0 0.0
    %3739 = vmatprep.subr.mxu0 0.0
    %3740 = vmatpush2.msra.mxu0 0.0
    %3741 = vmatprep.subr.mxu0 0.0
    %3742 = vmatpush2.msra.mxu0 0.0
    %3743 = vmatprep.subr.mxu0 0.0
    %3744 = vmatpush2.msra.mxu0 0.0
    %3745 = vmatprep.subr.mxu0 0.0
    %3746 = vmatpush2.msra.mxu0 0.0
    %3747 = vmatprep.subr.mxu0 0.0
    %3748 = vmatpush2.msra.mxu0 0.0
    %3749 = vmatprep.subr.mxu0 0.0
    %3750 = vmatpush2.msra.mxu0 0.0
    %3751 = vmatprep.subr.mxu0 0.0
    %3752 = vmatpush2.msra.mxu0 0.0
    %3753 = vmatprep.subr.mxu0 0.0
    %3754 = vmatpush2.msra.mxu0 0.0
    %3755 = vmatprep.subr.mxu0 0.0
    %3756 = vmatpush2.msra.mxu0 0.0
    %3757 = vmatprep.subr.mxu0 0.0
    %3758 = vmatpush2.msra.mxu0 0.0
    %3759 = vmatprep.subr.mxu0 0.0
    %3760 = vmatpush2.msra.mxu0 0.0
    %3761 = vmatprep.subr.mxu0 0.0
    %3762 = vmatpush2.msra.mxu0 0.0
    %3763 = vmatprep.subr.mxu0 0.0
    %3764 = vmatpush2.msra.mxu0 0.0
    %3765 = vmatprep.mubr.f32.mxu0 0.0
    %3766 = vmatmul.mubr.f32.gmra.mxu0 %v3463
    %v3767 = vpop.f32.mrf.mxu0
    %v3768 = vadd.f32 %v3683, %v3767
    %v3769 = vpop.f32.mrf.mxu0
    %3770 = vmatprep.mubr.f32.mxu0 0.0
    %3771 = vmatmul.mubr.f32.gmra.mxu0 %v3468
    %v3772 = vpop.f32.mrf.mxu0
    %v3773 = vadd.f32 %v3688, %v3772
    %v3774 = vpop.f32.mrf.mxu0
    %3775 = vmatprep.mubr.f32.mxu0 0.0
    %3776 = vmatmul.mubr.f32.gmra.mxu0 %v3473
    %v3777 = vpop.f32.mrf.mxu0
    %v3778 = vadd.f32 %v3693, %v3777
    %v3779 = vpop.f32.mrf.mxu0
    %3780 = vmatprep.mubr.f32.mxu0 0.0
    %3781 = vmatmul.mubr.f32.gmra.mxu0 %v3478
    %v3782 = vpop.f32.mrf.mxu0
    %v3783 = vadd.f32 %v3698, %v3782
    %v3784 = vpop.f32.mrf.mxu0
    %3785 = vdwg.mxu0
    %s3786 = scalar_lea.vmem %s5, 64
    %v3787 = vld [vmem:[%s3786] sm:$0xff]
    %v3788 = vld [vmem:[%s3786 + $0x8] sm:$0xff]
    %v3789 = vld [vmem:[%s3786 + $0x10] sm:$0xff]
    %v3790 = vld [vmem:[%s3786 + $0x18] sm:$0xff]
    %v3792 = vsel %vm3383, %v3787, 0
    %v3795 = vsel %vm3383, %v3788, 0
    %v3798 = vsel %vm3383, %v3789, 0
    %v3801 = vsel %vm3383, %v3790, 0
    %3803 = vmatprep.subr.mxu0 0.0
    %3804 = vmatpush1.msra.mxu0 0.0
    %3805 = vmatprep.subr.mxu0 0.0
    %3806 = vmatpush1.msra.mxu0 0.0
    %3807 = vmatprep.subr.mxu0 0.0
    %3808 = vmatpush1.msra.mxu0 0.0
    %3809 = vmatprep.subr.mxu0 0.0
    %3810 = vmatpush1.msra.mxu0 0.0
    %3811 = vmatprep.subr.mxu0 0.0
    %3812 = vmatpush1.msra.mxu0 0.0
    %3813 = vmatprep.subr.mxu0 0.0
    %3814 = vmatpush1.msra.mxu0 0.0
    %3815 = vmatprep.subr.mxu0 0.0
    %3816 = vmatpush1.msra.mxu0 0.0
    %3817 = vmatprep.subr.mxu0 0.0
    %3818 = vmatpush1.msra.mxu0 0.0
    %3819 = vmatprep.subr.mxu0 0.0
    %3820 = vmatpush1.msra.mxu0 0.0
    %3821 = vmatprep.subr.mxu0 0.0
    %3822 = vmatpush1.msra.mxu0 0.0
    %3823 = vmatprep.subr.mxu0 0.0
    %3824 = vmatpush1.msra.mxu0 0.0
    %3825 = vmatprep.subr.mxu0 0.0
    %3826 = vmatpush1.msra.mxu0 0.0
    %3827 = vmatprep.subr.mxu0 0.0
    %3828 = vmatpush1.msra.mxu0 %v3378
    %3829 = vmatprep.subr.mxu0 0.0
    %3830 = vmatpush1.msra.mxu0 %v3377
    %3831 = vmatprep.subr.mxu0 0.0
    %3832 = vmatpush1.msra.mxu0 %v3376
    %3833 = vmatprep.subr.mxu0 0.0
    %3834 = vmatpush1.msra.mxu0 %v3375
    %3835 = vmatprep.subr.mxu0 0.0
    %3836 = vmatpush2.msra.mxu0 0.0
    %3837 = vmatprep.subr.mxu0 0.0
    %3838 = vmatpush2.msra.mxu0 0.0
    %3839 = vmatprep.subr.mxu0 0.0
    %3840 = vmatpush2.msra.mxu0 0.0
    %3841 = vmatprep.subr.mxu0 0.0
    %3842 = vmatpush2.msra.mxu0 0.0
    %3843 = vmatprep.subr.mxu0 0.0
    %3844 = vmatpush2.msra.mxu0 0.0
    %3845 = vmatprep.subr.mxu0 0.0
    %3846 = vmatpush2.msra.mxu0 0.0
    %3847 = vmatprep.subr.mxu0 0.0
    %3848 = vmatpush2.msra.mxu0 0.0
    %3849 = vmatprep.subr.mxu0 0.0
    %3850 = vmatpush2.msra.mxu0 0.0
    %3851 = vmatprep.subr.mxu0 0.0
    %3852 = vmatpush2.msra.mxu0 0.0
    %3853 = vmatprep.subr.mxu0 0.0
    %3854 = vmatpush2.msra.mxu0 0.0
    %3855 = vmatprep.subr.mxu0 0.0
    %3856 = vmatpush2.msra.mxu0 0.0
    %3857 = vmatprep.subr.mxu0 0.0
    %3858 = vmatpush2.msra.mxu0 0.0
    %3859 = vmatprep.subr.mxu0 0.0
    %3860 = vmatpush2.msra.mxu0 0.0
    %3861 = vmatprep.subr.mxu0 0.0
    %3862 = vmatpush2.msra.mxu0 0.0
    %3863 = vmatprep.subr.mxu0 0.0
    %3864 = vmatpush2.msra.mxu0 0.0
    %3865 = vmatprep.subr.mxu0 0.0
    %3866 = vmatpush2.msra.mxu0 0.0
    %3867 = vmatprep.mubr.f32.mxu0 0.0
    %3868 = vmatmul.mubr.f32.gmra.mxu0 %v3792
    %v3869 = vpop.f32.mrf.mxu0
    %v3870 = vadd.f32 0.0, %v3869
    %v3871 = vpop.f32.mrf.mxu0
    %3872 = vmatprep.mubr.f32.mxu0 0.0
    %3873 = vmatmul.mubr.f32.gmra.mxu0 %v3795
    %v3874 = vpop.f32.mrf.mxu0
    %v3875 = vadd.f32 0.0, %v3874
    %v3876 = vpop.f32.mrf.mxu0
    %3877 = vmatprep.mubr.f32.mxu0 0.0
    %3878 = vmatmul.mubr.f32.gmra.mxu0 %v3798
    %v3879 = vpop.f32.mrf.mxu0
    %v3880 = vadd.f32 0.0, %v3879
    %v3881 = vpop.f32.mrf.mxu0
    %3882 = vmatprep.mubr.f32.mxu0 0.0
    %3883 = vmatmul.mubr.f32.gmra.mxu0 %v3801
    %v3884 = vpop.f32.mrf.mxu0
    %v3885 = vadd.f32 0.0, %v3884
    %v3886 = vpop.f32.mrf.mxu0
    %3887 = vdwg.mxu0
    %s3888 = scalar_lea.vmem %s6, 256
    %v3889 = vld [vmem:[%s3888] sm:$0xff]
    %v3890 = vld [vmem:[%s3888 + $0x8] sm:$0xff]
    %v3891 = vld [vmem:[%s3888 + $0x10] sm:$0xff]
    %v3892 = vld [vmem:[%s3888 + $0x18] sm:$0xff]
    %v3893 = vld [vmem:[%s3888 + $0x20] sm:$0xff]
    %v3894 = vld [vmem:[%s3888 + $0x28] sm:$0xff]
    %v3895 = vld [vmem:[%s3888 + $0x30] sm:$0xff]
    %v3896 = vld [vmem:[%s3888 + $0x38] sm:$0xff]
    %v3897 = vld [vmem:[%s3888 + $0x40] sm:$0xff]
    %v3898 = vld [vmem:[%s3888 + $0x48] sm:$0xff]
    %v3899 = vld [vmem:[%s3888 + $0x50] sm:$0xff]
    %v3900 = vld [vmem:[%s3888 + $0x58] sm:$0xff]
    %v3901 = vld [vmem:[%s3888 + $0x60] sm:$0xff]
    %v3902 = vld [vmem:[%s3888 + $0x68] sm:$0xff]
    %v3903 = vld [vmem:[%s3888 + $0x70] sm:$0xff]
    %v3904 = vld [vmem:[%s3888 + $0x78] sm:$0xff]
    %3905 = vmatprep.subr.mxu0 0.0
    %3906 = vmatpush1.msra.mxu0 %v3904
    %3907 = vmatprep.subr.mxu0 0.0
    %3908 = vmatpush1.msra.mxu0 %v3903
    %3909 = vmatprep.subr.mxu0 0.0
    %3910 = vmatpush1.msra.mxu0 %v3902
    %3911 = vmatprep.subr.mxu0 0.0
    %3912 = vmatpush1.msra.mxu0 %v3901
    %3913 = vmatprep.subr.mxu0 0.0
    %3914 = vmatpush1.msra.mxu0 %v3900
    %3915 = vmatprep.subr.mxu0 0.0
    %3916 = vmatpush1.msra.mxu0 %v3899
    %3917 = vmatprep.subr.mxu0 0.0
    %3918 = vmatpush1.msra.mxu0 %v3898
    %3919 = vmatprep.subr.mxu0 0.0
    %3920 = vmatpush1.msra.mxu0 %v3897
    %3921 = vmatprep.subr.mxu0 0.0
    %3922 = vmatpush1.msra.mxu0 %v3896
    %3923 = vmatprep.subr.mxu0 0.0
    %3924 = vmatpush1.msra.mxu0 %v3895
    %3925 = vmatprep.subr.mxu0 0.0
    %3926 = vmatpush1.msra.mxu0 %v3894
    %3927 = vmatprep.subr.mxu0 0.0
    %3928 = vmatpush1.msra.mxu0 %v3893
    %3929 = vmatprep.subr.mxu0 0.0
    %3930 = vmatpush1.msra.mxu0 %v3892
    %3931 = vmatprep.subr.mxu0 0.0
    %3932 = vmatpush1.msra.mxu0 %v3891
    %3933 = vmatprep.subr.mxu0 0.0
    %3934 = vmatpush1.msra.mxu0 %v3890
    %3935 = vmatprep.subr.mxu0 0.0
    %3936 = vmatpush1.msra.mxu0 %v3889
    %3937 = vmatprep.subr.mxu0 0.0
    %3938 = vmatpush2.msra.mxu0 0.0
    %3939 = vmatprep.subr.mxu0 0.0
    %3940 = vmatpush2.msra.mxu0 0.0
    %3941 = vmatprep.subr.mxu0 0.0
    %3942 = vmatpush2.msra.mxu0 0.0
    %3943 = vmatprep.subr.mxu0 0.0
    %3944 = vmatpush2.msra.mxu0 0.0
    %3945 = vmatprep.subr.mxu0 0.0
    %3946 = vmatpush2.msra.mxu0 0.0
    %3947 = vmatprep.subr.mxu0 0.0
    %3948 = vmatpush2.msra.mxu0 0.0
    %3949 = vmatprep.subr.mxu0 0.0
    %3950 = vmatpush2.msra.mxu0 0.0
    %3951 = vmatprep.subr.mxu0 0.0
    %3952 = vmatpush2.msra.mxu0 0.0
    %3953 = vmatprep.subr.mxu0 0.0
    %3954 = vmatpush2.msra.mxu0 0.0
    %3955 = vmatprep.subr.mxu0 0.0
    %3956 = vmatpush2.msra.mxu0 0.0
    %3957 = vmatprep.subr.mxu0 0.0
    %3958 = vmatpush2.msra.mxu0 0.0
    %3959 = vmatprep.subr.mxu0 0.0
    %3960 = vmatpush2.msra.mxu0 0.0
    %3961 = vmatprep.subr.mxu0 0.0
    %3962 = vmatpush2.msra.mxu0 0.0
    %3963 = vmatprep.subr.mxu0 0.0
    %3964 = vmatpush2.msra.mxu0 0.0
    %3965 = vmatprep.subr.mxu0 0.0
    %3966 = vmatpush2.msra.mxu0 0.0
    %3967 = vmatprep.subr.mxu0 0.0
    %3968 = vmatpush2.msra.mxu0 0.0
    %3969 = vmatprep.mubr.f32.mxu0 0.0
    %3970 = vmatmul.mubr.f32.gmra.mxu0 %v3870
    %v3971 = vpop.f32.mrf.mxu0
    %v3972 = vadd.f32 0.0, %v3971
    %v3973 = vpop.f32.mrf.mxu0
    %3974 = vmatprep.mubr.f32.mxu0 0.0
    %3975 = vmatmul.mubr.f32.gmra.mxu0 %v3875
    %v3976 = vpop.f32.mrf.mxu0
    %v3977 = vadd.f32 0.0, %v3976
    %v3978 = vpop.f32.mrf.mxu0
    %3979 = vmatprep.mubr.f32.mxu0 0.0
    %3980 = vmatmul.mubr.f32.gmra.mxu0 %v3880
    %v3981 = vpop.f32.mrf.mxu0
    %v3982 = vadd.f32 0.0, %v3981
    %v3983 = vpop.f32.mrf.mxu0
    %3984 = vmatprep.mubr.f32.mxu0 0.0
    %3985 = vmatmul.mubr.f32.gmra.mxu0 %v3885
    %v3986 = vpop.f32.mrf.mxu0
    %v3987 = vadd.f32 0.0, %v3986
    %v3988 = vpop.f32.mrf.mxu0
    %3989 = vdwg.mxu0
    %v3990 = vadd.f32 %v3768, %v3972
    %v3991 = vadd.f32 %v3773, %v3977
    %v3992 = vadd.f32 %v3778, %v3982
    %v3993 = vadd.f32 %v3783, %v3987
    %s3994 = scalar_lea.vmem %s5, 96
    %v3995 = vld [vmem:[%s3994] sm:$0xff]
    %v3996 = vld [vmem:[%s3994 + $0x8] sm:$0xff]
    %v3997 = vld [vmem:[%s3994 + $0x10] sm:$0xff]
    %v3998 = vld [vmem:[%s3994 + $0x18] sm:$0xff]
    %v4000 = vsel %vm3383, %v3995, 0
    %v4003 = vsel %vm3383, %v3996, 0
    %v4006 = vsel %vm3383, %v3997, 0
    %v4009 = vsel %vm3383, %v3998, 0
    %4011 = vmatprep.subr.mxu0 0.0
    %4012 = vmatpush1.msra.mxu0 0.0
    %4013 = vmatprep.subr.mxu0 0.0
    %4014 = vmatpush1.msra.mxu0 0.0
    %4015 = vmatprep.subr.mxu0 0.0
    %4016 = vmatpush1.msra.mxu0 0.0
    %4017 = vmatprep.subr.mxu0 0.0
    %4018 = vmatpush1.msra.mxu0 0.0
    %4019 = vmatprep.subr.mxu0 0.0
    %4020 = vmatpush1.msra.mxu0 0.0
    %4021 = vmatprep.subr.mxu0 0.0
    %4022 = vmatpush1.msra.mxu0 0.0
    %4023 = vmatprep.subr.mxu0 0.0
    %4024 = vmatpush1.msra.mxu0 0.0
    %4025 = vmatprep.subr.mxu0 0.0
    %4026 = vmatpush1.msra.mxu0 0.0
    %4027 = vmatprep.subr.mxu0 0.0
    %4028 = vmatpush1.msra.mxu0 0.0
    %4029 = vmatprep.subr.mxu0 0.0
    %4030 = vmatpush1.msra.mxu0 0.0
    %4031 = vmatprep.subr.mxu0 0.0
    %4032 = vmatpush1.msra.mxu0 0.0
    %4033 = vmatprep.subr.mxu0 0.0
    %4034 = vmatpush1.msra.mxu0 0.0
    %4035 = vmatprep.subr.mxu0 0.0
    %4036 = vmatpush1.msra.mxu0 %v3378
    %4037 = vmatprep.subr.mxu0 0.0
    %4038 = vmatpush1.msra.mxu0 %v3377
    %4039 = vmatprep.subr.mxu0 0.0
    %4040 = vmatpush1.msra.mxu0 %v3376
    %4041 = vmatprep.subr.mxu0 0.0
    %4042 = vmatpush1.msra.mxu0 %v3375
    %4043 = vmatprep.subr.mxu0 0.0
    %4044 = vmatpush2.msra.mxu0 0.0
    %4045 = vmatprep.subr.mxu0 0.0
    %4046 = vmatpush2.msra.mxu0 0.0
    %4047 = vmatprep.subr.mxu0 0.0
    %4048 = vmatpush2.msra.mxu0 0.0
    %4049 = vmatprep.subr.mxu0 0.0
    %4050 = vmatpush2.msra.mxu0 0.0
    %4051 = vmatprep.subr.mxu0 0.0
    %4052 = vmatpush2.msra.mxu0 0.0
    %4053 = vmatprep.subr.mxu0 0.0
    %4054 = vmatpush2.msra.mxu0 0.0
    %4055 = vmatprep.subr.mxu0 0.0
    %4056 = vmatpush2.msra.mxu0 0.0
    %4057 = vmatprep.subr.mxu0 0.0
    %4058 = vmatpush2.msra.mxu0 0.0
    %4059 = vmatprep.subr.mxu0 0.0
    %4060 = vmatpush2.msra.mxu0 0.0
    %4061 = vmatprep.subr.mxu0 0.0
    %4062 = vmatpush2.msra.mxu0 0.0
    %4063 = vmatprep.subr.mxu0 0.0
    %4064 = vmatpush2.msra.mxu0 0.0
    %4065 = vmatprep.subr.mxu0 0.0
    %4066 = vmatpush2.msra.mxu0 0.0
    %4067 = vmatprep.subr.mxu0 0.0
    %4068 = vmatpush2.msra.mxu0 0.0
    %4069 = vmatprep.subr.mxu0 0.0
    %4070 = vmatpush2.msra.mxu0 0.0
    %4071 = vmatprep.subr.mxu0 0.0
    %4072 = vmatpush2.msra.mxu0 0.0
    %4073 = vmatprep.subr.mxu0 0.0
    %4074 = vmatpush2.msra.mxu0 0.0
    %4075 = vmatprep.mubr.f32.mxu0 0.0
    %4076 = vmatmul.mubr.f32.gmra.mxu0 %v4000
    %v4077 = vpop.f32.mrf.mxu0
    %v4078 = vadd.f32 0.0, %v4077
    %v4079 = vpop.f32.mrf.mxu0
    %4080 = vmatprep.mubr.f32.mxu0 0.0
    %4081 = vmatmul.mubr.f32.gmra.mxu0 %v4003
    %v4082 = vpop.f32.mrf.mxu0
    %v4083 = vadd.f32 0.0, %v4082
    %v4084 = vpop.f32.mrf.mxu0
    %4085 = vmatprep.mubr.f32.mxu0 0.0
    %4086 = vmatmul.mubr.f32.gmra.mxu0 %v4006
    %v4087 = vpop.f32.mrf.mxu0
    %v4088 = vadd.f32 0.0, %v4087
    %v4089 = vpop.f32.mrf.mxu0
    %4090 = vmatprep.mubr.f32.mxu0 0.0
    %4091 = vmatmul.mubr.f32.gmra.mxu0 %v4009
    %v4092 = vpop.f32.mrf.mxu0
    %v4093 = vadd.f32 0.0, %v4092
    %v4094 = vpop.f32.mrf.mxu0
    %4095 = vdwg.mxu0
    %s4096 = scalar_lea.vmem %s6, 384
    %v4097 = vld [vmem:[%s4096] sm:$0xff]
    %v4098 = vld [vmem:[%s4096 + $0x8] sm:$0xff]
    %v4099 = vld [vmem:[%s4096 + $0x10] sm:$0xff]
    %v4100 = vld [vmem:[%s4096 + $0x18] sm:$0xff]
    %v4101 = vld [vmem:[%s4096 + $0x20] sm:$0xff]
    %v4102 = vld [vmem:[%s4096 + $0x28] sm:$0xff]
    %v4103 = vld [vmem:[%s4096 + $0x30] sm:$0xff]
    %v4104 = vld [vmem:[%s4096 + $0x38] sm:$0xff]
    %v4105 = vld [vmem:[%s4096 + $0x40] sm:$0xff]
    %v4106 = vld [vmem:[%s4096 + $0x48] sm:$0xff]
    %v4107 = vld [vmem:[%s4096 + $0x50] sm:$0xff]
    %v4108 = vld [vmem:[%s4096 + $0x58] sm:$0xff]
    %v4109 = vld [vmem:[%s4096 + $0x60] sm:$0xff]
    %v4110 = vld [vmem:[%s4096 + $0x68] sm:$0xff]
    %v4111 = vld [vmem:[%s4096 + $0x70] sm:$0xff]
    %v4112 = vld [vmem:[%s4096 + $0x78] sm:$0xff]
    %4113 = vmatprep.subr.mxu0 0.0
    %4114 = vmatpush1.msra.mxu0 %v4112
    %4115 = vmatprep.subr.mxu0 0.0
    %4116 = vmatpush1.msra.mxu0 %v4111
    %4117 = vmatprep.subr.mxu0 0.0
    %4118 = vmatpush1.msra.mxu0 %v4110
    %4119 = vmatprep.subr.mxu0 0.0
    %4120 = vmatpush1.msra.mxu0 %v4109
    %4121 = vmatprep.subr.mxu0 0.0
    %4122 = vmatpush1.msra.mxu0 %v4108
    %4123 = vmatprep.subr.mxu0 0.0
    %4124 = vmatpush1.msra.mxu0 %v4107
    %4125 = vmatprep.subr.mxu0 0.0
    %4126 = vmatpush1.msra.mxu0 %v4106
    %4127 = vmatprep.subr.mxu0 0.0
    %4128 = vmatpush1.msra.mxu0 %v4105
    %4129 = vmatprep.subr.mxu0 0.0
    %4130 = vmatpush1.msra.mxu0 %v4104
    %4131 = vmatprep.subr.mxu0 0.0
    %4132 = vmatpush1.msra.mxu0 %v4103
    %4133 = vmatprep.subr.mxu0 0.0
    %4134 = vmatpush1.msra.mxu0 %v4102
    %4135 = vmatprep.subr.mxu0 0.0
    %4136 = vmatpush1.msra.mxu0 %v4101
    %4137 = vmatprep.subr.mxu0 0.0
    %4138 = vmatpush1.msra.mxu0 %v4100
    %4139 = vmatprep.subr.mxu0 0.0
    %4140 = vmatpush1.msra.mxu0 %v4099
    %4141 = vmatprep.subr.mxu0 0.0
    %4142 = vmatpush1.msra.mxu0 %v4098
    %4143 = vmatprep.subr.mxu0 0.0
    %4144 = vmatpush1.msra.mxu0 %v4097
    %4145 = vmatprep.subr.mxu0 0.0
    %4146 = vmatpush2.msra.mxu0 0.0
    %4147 = vmatprep.subr.mxu0 0.0
    %4148 = vmatpush2.msra.mxu0 0.0
    %4149 = vmatprep.subr.mxu0 0.0
    %4150 = vmatpush2.msra.mxu0 0.0
    %4151 = vmatprep.subr.mxu0 0.0
    %4152 = vmatpush2.msra.mxu0 0.0
    %4153 = vmatprep.subr.mxu0 0.0
    %4154 = vmatpush2.msra.mxu0 0.0
    %4155 = vmatprep.subr.mxu0 0.0
    %4156 = vmatpush2.msra.mxu0 0.0
    %4157 = vmatprep.subr.mxu0 0.0
    %4158 = vmatpush2.msra.mxu0 0.0
    %4159 = vmatprep.subr.mxu0 0.0
    %4160 = vmatpush2.msra.mxu0 0.0
    %4161 = vmatprep.subr.mxu0 0.0
    %4162 = vmatpush2.msra.mxu0 0.0
    %4163 = vmatprep.subr.mxu0 0.0
    %4164 = vmatpush2.msra.mxu0 0.0
    %4165 = vmatprep.subr.mxu0 0.0
    %4166 = vmatpush2.msra.mxu0 0.0
    %4167 = vmatprep.subr.mxu0 0.0
    %4168 = vmatpush2.msra.mxu0 0.0
    %4169 = vmatprep.subr.mxu0 0.0
    %4170 = vmatpush2.msra.mxu0 0.0
    %4171 = vmatprep.subr.mxu0 0.0
    %4172 = vmatpush2.msra.mxu0 0.0
    %4173 = vmatprep.subr.mxu0 0.0
    %4174 = vmatpush2.msra.mxu0 0.0
    %4175 = vmatprep.subr.mxu0 0.0
    %4176 = vmatpush2.msra.mxu0 0.0
    %4177 = vmatprep.mubr.f32.mxu0 0.0
    %4178 = vmatmul.mubr.f32.gmra.mxu0 %v4078
    %v4179 = vpop.f32.mrf.mxu0
    %v4180 = vadd.f32 0.0, %v4179
    %v4181 = vpop.f32.mrf.mxu0
    %4182 = vmatprep.mubr.f32.mxu0 0.0
    %4183 = vmatmul.mubr.f32.gmra.mxu0 %v4083
    %v4184 = vpop.f32.mrf.mxu0
    %v4185 = vadd.f32 0.0, %v4184
    %v4186 = vpop.f32.mrf.mxu0
    %4187 = vmatprep.mubr.f32.mxu0 0.0
    %4188 = vmatmul.mubr.f32.gmra.mxu0 %v4088
    %v4189 = vpop.f32.mrf.mxu0
    %v4190 = vadd.f32 0.0, %v4189
    %v4191 = vpop.f32.mrf.mxu0
    %4192 = vmatprep.mubr.f32.mxu0 0.0
    %4193 = vmatmul.mubr.f32.gmra.mxu0 %v4093
    %v4194 = vpop.f32.mrf.mxu0
    %v4195 = vadd.f32 0.0, %v4194
    %v4196 = vpop.f32.mrf.mxu0
    %4197 = vdwg.mxu0
    %v4198 = vadd.f32 %v3990, %v4180
    %v4199 = vadd.f32 %v3991, %v4185
    %v4200 = vadd.f32 %v3992, %v4190
    %v4201 = vadd.f32 %v3993, %v4195
    %s4202 = scalar_lea.vmem %s5, 128
    %v4203 = vld [vmem:[%s4202] sm:$0xff]
    %v4204 = vld [vmem:[%s4202 + $0x8] sm:$0xff]
    %v4205 = vld [vmem:[%s4202 + $0x10] sm:$0xff]
    %v4206 = vld [vmem:[%s4202 + $0x18] sm:$0xff]
    %v4208 = vsel %vm3383, %v4203, 0
    %v4211 = vsel %vm3383, %v4204, 0
    %v4214 = vsel %vm3383, %v4205, 0
    %v4217 = vsel %vm3383, %v4206, 0
    %4219 = vmatprep.subr.mxu0 0.0
    %4220 = vmatpush1.msra.mxu0 0.0
    %4221 = vmatprep.subr.mxu0 0.0
    %4222 = vmatpush1.msra.mxu0 0.0
    %4223 = vmatprep.subr.mxu0 0.0
    %4224 = vmatpush1.msra.mxu0 0.0
    %4225 = vmatprep.subr.mxu0 0.0
    %4226 = vmatpush1.msra.mxu0 0.0
    %4227 = vmatprep.subr.mxu0 0.0
    %4228 = vmatpush1.msra.mxu0 0.0
    %4229 = vmatprep.subr.mxu0 0.0
    %4230 = vmatpush1.msra.mxu0 0.0
    %4231 = vmatprep.subr.mxu0 0.0
    %4232 = vmatpush1.msra.mxu0 0.0
    %4233 = vmatprep.subr.mxu0 0.0
    %4234 = vmatpush1.msra.mxu0 0.0
    %4235 = vmatprep.subr.mxu0 0.0
    %4236 = vmatpush1.msra.mxu0 0.0
    %4237 = vmatprep.subr.mxu0 0.0
    %4238 = vmatpush1.msra.mxu0 0.0
    %4239 = vmatprep.subr.mxu0 0.0
    %4240 = vmatpush1.msra.mxu0 0.0
    %4241 = vmatprep.subr.mxu0 0.0
    %4242 = vmatpush1.msra.mxu0 0.0
    %4243 = vmatprep.subr.mxu0 0.0
    %4244 = vmatpush1.msra.mxu0 %v3378
    %4245 = vmatprep.subr.mxu0 0.0
    %4246 = vmatpush1.msra.mxu0 %v3377
    %4247 = vmatprep.subr.mxu0 0.0
    %4248 = vmatpush1.msra.mxu0 %v3376
    %4249 = vmatprep.subr.mxu0 0.0
    %4250 = vmatpush1.msra.mxu0 %v3375
    %4251 = vmatprep.subr.mxu0 0.0
    %4252 = vmatpush2.msra.mxu0 0.0
    %4253 = vmatprep.subr.mxu0 0.0
    %4254 = vmatpush2.msra.mxu0 0.0
    %4255 = vmatprep.subr.mxu0 0.0
    %4256 = vmatpush2.msra.mxu0 0.0
    %4257 = vmatprep.subr.mxu0 0.0
    %4258 = vmatpush2.msra.mxu0 0.0
    %4259 = vmatprep.subr.mxu0 0.0
    %4260 = vmatpush2.msra.mxu0 0.0
    %4261 = vmatprep.subr.mxu0 0.0
    %4262 = vmatpush2.msra.mxu0 0.0
    %4263 = vmatprep.subr.mxu0 0.0
    %4264 = vmatpush2.msra.mxu0 0.0
    %4265 = vmatprep.subr.mxu0 0.0
    %4266 = vmatpush2.msra.mxu0 0.0
    %4267 = vmatprep.subr.mxu0 0.0
    %4268 = vmatpush2.msra.mxu0 0.0
    %4269 = vmatprep.subr.mxu0 0.0
    %4270 = vmatpush2.msra.mxu0 0.0
    %4271 = vmatprep.subr.mxu0 0.0
    %4272 = vmatpush2.msra.mxu0 0.0
    %4273 = vmatprep.subr.mxu0 0.0
    %4274 = vmatpush2.msra.mxu0 0.0
    %4275 = vmatprep.subr.mxu0 0.0
    %4276 = vmatpush2.msra.mxu0 0.0
    %4277 = vmatprep.subr.mxu0 0.0
    %4278 = vmatpush2.msra.mxu0 0.0
    %4279 = vmatprep.subr.mxu0 0.0
    %4280 = vmatpush2.msra.mxu0 0.0
    %4281 = vmatprep.subr.mxu0 0.0
    %4282 = vmatpush2.msra.mxu0 0.0
    %4283 = vmatprep.mubr.f32.mxu0 0.0
    %4284 = vmatmul.mubr.f32.gmra.mxu0 %v4208
    %v4285 = vpop.f32.mrf.mxu0
    %v4286 = vadd.f32 0.0, %v4285
    %v4287 = vpop.f32.mrf.mxu0
    %4288 = vmatprep.mubr.f32.mxu0 0.0
    %4289 = vmatmul.mubr.f32.gmra.mxu0 %v4211
    %v4290 = vpop.f32.mrf.mxu0
    %v4291 = vadd.f32 0.0, %v4290
    %v4292 = vpop.f32.mrf.mxu0
    %4293 = vmatprep.mubr.f32.mxu0 0.0
    %4294 = vmatmul.mubr.f32.gmra.mxu0 %v4214
    %v4295 = vpop.f32.mrf.mxu0
    %v4296 = vadd.f32 0.0, %v4295
    %v4297 = vpop.f32.mrf.mxu0
    %4298 = vmatprep.mubr.f32.mxu0 0.0
    %4299 = vmatmul.mubr.f32.gmra.mxu0 %v4217
    %v4300 = vpop.f32.mrf.mxu0
    %v4301 = vadd.f32 0.0, %v4300
    %v4302 = vpop.f32.mrf.mxu0
    %4303 = vdwg.mxu0
    %s4304 = scalar_lea.vmem %s6, 512
    %v4305 = vld [vmem:[%s4304] sm:$0xff]
    %v4306 = vld [vmem:[%s4304 + $0x8] sm:$0xff]
    %v4307 = vld [vmem:[%s4304 + $0x10] sm:$0xff]
    %v4308 = vld [vmem:[%s4304 + $0x18] sm:$0xff]
    %v4309 = vld [vmem:[%s4304 + $0x20] sm:$0xff]
    %v4310 = vld [vmem:[%s4304 + $0x28] sm:$0xff]
    %v4311 = vld [vmem:[%s4304 + $0x30] sm:$0xff]
    %v4312 = vld [vmem:[%s4304 + $0x38] sm:$0xff]
    %v4313 = vld [vmem:[%s4304 + $0x40] sm:$0xff]
    %v4314 = vld [vmem:[%s4304 + $0x48] sm:$0xff]
    %v4315 = vld [vmem:[%s4304 + $0x50] sm:$0xff]
    %v4316 = vld [vmem:[%s4304 + $0x58] sm:$0xff]
    %v4317 = vld [vmem:[%s4304 + $0x60] sm:$0xff]
    %v4318 = vld [vmem:[%s4304 + $0x68] sm:$0xff]
    %v4319 = vld [vmem:[%s4304 + $0x70] sm:$0xff]
    %v4320 = vld [vmem:[%s4304 + $0x78] sm:$0xff]
    %4321 = vmatprep.subr.mxu0 0.0
    %4322 = vmatpush1.msra.mxu0 %v4320
    %4323 = vmatprep.subr.mxu0 0.0
    %4324 = vmatpush1.msra.mxu0 %v4319
    %4325 = vmatprep.subr.mxu0 0.0
    %4326 = vmatpush1.msra.mxu0 %v4318
    %4327 = vmatprep.subr.mxu0 0.0
    %4328 = vmatpush1.msra.mxu0 %v4317
    %4329 = vmatprep.subr.mxu0 0.0
    %4330 = vmatpush1.msra.mxu0 %v4316
    %4331 = vmatprep.subr.mxu0 0.0
    %4332 = vmatpush1.msra.mxu0 %v4315
    %4333 = vmatprep.subr.mxu0 0.0
    %4334 = vmatpush1.msra.mxu0 %v4314
    %4335 = vmatprep.subr.mxu0 0.0
    %4336 = vmatpush1.msra.mxu0 %v4313
    %4337 = vmatprep.subr.mxu0 0.0
    %4338 = vmatpush1.msra.mxu0 %v4312
    %4339 = vmatprep.subr.mxu0 0.0
    %4340 = vmatpush1.msra.mxu0 %v4311
    %4341 = vmatprep.subr.mxu0 0.0
    %4342 = vmatpush1.msra.mxu0 %v4310
    %4343 = vmatprep.subr.mxu0 0.0
    %4344 = vmatpush1.msra.mxu0 %v4309
    %4345 = vmatprep.subr.mxu0 0.0
    %4346 = vmatpush1.msra.mxu0 %v4308
    %4347 = vmatprep.subr.mxu0 0.0
    %4348 = vmatpush1.msra.mxu0 %v4307
    %4349 = vmatprep.subr.mxu0 0.0
    %4350 = vmatpush1.msra.mxu0 %v4306
    %4351 = vmatprep.subr.mxu0 0.0
    %4352 = vmatpush1.msra.mxu0 %v4305
    %4353 = vmatprep.subr.mxu0 0.0
    %4354 = vmatpush2.msra.mxu0 0.0
    %4355 = vmatprep.subr.mxu0 0.0
    %4356 = vmatpush2.msra.mxu0 0.0
    %4357 = vmatprep.subr.mxu0 0.0
    %4358 = vmatpush2.msra.mxu0 0.0
    %4359 = vmatprep.subr.mxu0 0.0
    %4360 = vmatpush2.msra.mxu0 0.0
    %4361 = vmatprep.subr.mxu0 0.0
    %4362 = vmatpush2.msra.mxu0 0.0
    %4363 = vmatprep.subr.mxu0 0.0
    %4364 = vmatpush2.msra.mxu0 0.0
    %4365 = vmatprep.subr.mxu0 0.0
    %4366 = vmatpush2.msra.mxu0 0.0
    %4367 = vmatprep.subr.mxu0 0.0
    %4368 = vmatpush2.msra.mxu0 0.0
    %4369 = vmatprep.subr.mxu0 0.0
    %4370 = vmatpush2.msra.mxu0 0.0
    %4371 = vmatprep.subr.mxu0 0.0
    %4372 = vmatpush2.msra.mxu0 0.0
    %4373 = vmatprep.subr.mxu0 0.0
    %4374 = vmatpush2.msra.mxu0 0.0
    %4375 = vmatprep.subr.mxu0 0.0
    %4376 = vmatpush2.msra.mxu0 0.0
    %4377 = vmatprep.subr.mxu0 0.0
    %4378 = vmatpush2.msra.mxu0 0.0
    %4379 = vmatprep.subr.mxu0 0.0
    %4380 = vmatpush2.msra.mxu0 0.0
    %4381 = vmatprep.subr.mxu0 0.0
    %4382 = vmatpush2.msra.mxu0 0.0
    %4383 = vmatprep.subr.mxu0 0.0
    %4384 = vmatpush2.msra.mxu0 0.0
    %4385 = vmatprep.mubr.f32.mxu0 0.0
    %4386 = vmatmul.mubr.f32.gmra.mxu0 %v4286
    %v4387 = vpop.f32.mrf.mxu0
    %v4388 = vadd.f32 0.0, %v4387
    %v4389 = vpop.f32.mrf.mxu0
    %4390 = vmatprep.mubr.f32.mxu0 0.0
    %4391 = vmatmul.mubr.f32.gmra.mxu0 %v4291
    %v4392 = vpop.f32.mrf.mxu0
    %v4393 = vadd.f32 0.0, %v4392
    %v4394 = vpop.f32.mrf.mxu0
    %4395 = vmatprep.mubr.f32.mxu0 0.0
    %4396 = vmatmul.mubr.f32.gmra.mxu0 %v4296
    %v4397 = vpop.f32.mrf.mxu0
    %v4398 = vadd.f32 0.0, %v4397
    %v4399 = vpop.f32.mrf.mxu0
    %4400 = vmatprep.mubr.f32.mxu0 0.0
    %4401 = vmatmul.mubr.f32.gmra.mxu0 %v4301
    %v4402 = vpop.f32.mrf.mxu0
    %v4403 = vadd.f32 0.0, %v4402
    %v4404 = vpop.f32.mrf.mxu0
    %4405 = vdwg.mxu0
    %v4406 = vadd.f32 %v4198, %v4388
    %v4407 = vadd.f32 %v4199, %v4393
    %v4408 = vadd.f32 %v4200, %v4398
    %v4409 = vadd.f32 %v4201, %v4403
    %s4410 = scalar_lea.vmem %s5, 160
    %v4411 = vld [vmem:[%s4410] sm:$0xff]
    %v4412 = vld [vmem:[%s4410 + $0x8] sm:$0xff]
    %v4413 = vld [vmem:[%s4410 + $0x10] sm:$0xff]
    %v4414 = vld [vmem:[%s4410 + $0x18] sm:$0xff]
    %v4416 = vsel %vm3383, %v4411, 0
    %v4419 = vsel %vm3383, %v4412, 0
    %v4422 = vsel %vm3383, %v4413, 0
    %v4425 = vsel %vm3383, %v4414, 0
    %4427 = vmatprep.subr.mxu0 0.0
    %4428 = vmatpush1.msra.mxu0 0.0
    %4429 = vmatprep.subr.mxu0 0.0
    %4430 = vmatpush1.msra.mxu0 0.0
    %4431 = vmatprep.subr.mxu0 0.0
    %4432 = vmatpush1.msra.mxu0 0.0
    %4433 = vmatprep.subr.mxu0 0.0
    %4434 = vmatpush1.msra.mxu0 0.0
    %4435 = vmatprep.subr.mxu0 0.0
    %4436 = vmatpush1.msra.mxu0 0.0
    %4437 = vmatprep.subr.mxu0 0.0
    %4438 = vmatpush1.msra.mxu0 0.0
    %4439 = vmatprep.subr.mxu0 0.0
    %4440 = vmatpush1.msra.mxu0 0.0
    %4441 = vmatprep.subr.mxu0 0.0
    %4442 = vmatpush1.msra.mxu0 0.0
    %4443 = vmatprep.subr.mxu0 0.0
    %4444 = vmatpush1.msra.mxu0 0.0
    %4445 = vmatprep.subr.mxu0 0.0
    %4446 = vmatpush1.msra.mxu0 0.0
    %4447 = vmatprep.subr.mxu0 0.0
    %4448 = vmatpush1.msra.mxu0 0.0
    %4449 = vmatprep.subr.mxu0 0.0
    %4450 = vmatpush1.msra.mxu0 0.0
    %4451 = vmatprep.subr.mxu0 0.0
    %4452 = vmatpush1.msra.mxu0 %v3378
    %4453 = vmatprep.subr.mxu0 0.0
    %4454 = vmatpush1.msra.mxu0 %v3377
    %4455 = vmatprep.subr.mxu0 0.0
    %4456 = vmatpush1.msra.mxu0 %v3376
    %4457 = vmatprep.subr.mxu0 0.0
    %4458 = vmatpush1.msra.mxu0 %v3375
    %4459 = vmatprep.subr.mxu0 0.0
    %4460 = vmatpush2.msra.mxu0 0.0
    %4461 = vmatprep.subr.mxu0 0.0
    %4462 = vmatpush2.msra.mxu0 0.0
    %4463 = vmatprep.subr.mxu0 0.0
    %4464 = vmatpush2.msra.mxu0 0.0
    %4465 = vmatprep.subr.mxu0 0.0
    %4466 = vmatpush2.msra.mxu0 0.0
    %4467 = vmatprep.subr.mxu0 0.0
    %4468 = vmatpush2.msra.mxu0 0.0
    %4469 = vmatprep.subr.mxu0 0.0
    %4470 = vmatpush2.msra.mxu0 0.0
    %4471 = vmatprep.subr.mxu0 0.0
    %4472 = vmatpush2.msra.mxu0 0.0
    %4473 = vmatprep.subr.mxu0 0.0
    %4474 = vmatpush2.msra.mxu0 0.0
    %4475 = vmatprep.subr.mxu0 0.0
    %4476 = vmatpush2.msra.mxu0 0.0
    %4477 = vmatprep.subr.mxu0 0.0
    %4478 = vmatpush2.msra.mxu0 0.0
    %4479 = vmatprep.subr.mxu0 0.0
    %4480 = vmatpush2.msra.mxu0 0.0
    %4481 = vmatprep.subr.mxu0 0.0
    %4482 = vmatpush2.msra.mxu0 0.0
    %4483 = vmatprep.subr.mxu0 0.0
    %4484 = vmatpush2.msra.mxu0 0.0
    %4485 = vmatprep.subr.mxu0 0.0
    %4486 = vmatpush2.msra.mxu0 0.0
    %4487 = vmatprep.subr.mxu0 0.0
    %4488 = vmatpush2.msra.mxu0 0.0
    %4489 = vmatprep.subr.mxu0 0.0
    %4490 = vmatpush2.msra.mxu0 0.0
    %4491 = vmatprep.mubr.f32.mxu0 0.0
    %4492 = vmatmul.mubr.f32.gmra.mxu0 %v4416
    %v4493 = vpop.f32.mrf.mxu0
    %v4494 = vadd.f32 0.0, %v4493
    %v4495 = vpop.f32.mrf.mxu0
    %4496 = vmatprep.mubr.f32.mxu0 0.0
    %4497 = vmatmul.mubr.f32.gmra.mxu0 %v4419
    %v4498 = vpop.f32.mrf.mxu0
    %v4499 = vadd.f32 0.0, %v4498
    %v4500 = vpop.f32.mrf.mxu0
    %4501 = vmatprep.mubr.f32.mxu0 0.0
    %4502 = vmatmul.mubr.f32.gmra.mxu0 %v4422
    %v4503 = vpop.f32.mrf.mxu0
    %v4504 = vadd.f32 0.0, %v4503
    %v4505 = vpop.f32.mrf.mxu0
    %4506 = vmatprep.mubr.f32.mxu0 0.0
    %4507 = vmatmul.mubr.f32.gmra.mxu0 %v4425
    %v4508 = vpop.f32.mrf.mxu0
    %v4509 = vadd.f32 0.0, %v4508
    %v4510 = vpop.f32.mrf.mxu0
    %4511 = vdwg.mxu0
    %s4512 = scalar_lea.vmem %s6, 640
    %v4513 = vld [vmem:[%s4512] sm:$0xff]
    %v4514 = vld [vmem:[%s4512 + $0x8] sm:$0xff]
    %v4515 = vld [vmem:[%s4512 + $0x10] sm:$0xff]
    %v4516 = vld [vmem:[%s4512 + $0x18] sm:$0xff]
    %v4517 = vld [vmem:[%s4512 + $0x20] sm:$0xff]
    %v4518 = vld [vmem:[%s4512 + $0x28] sm:$0xff]
    %v4519 = vld [vmem:[%s4512 + $0x30] sm:$0xff]
    %v4520 = vld [vmem:[%s4512 + $0x38] sm:$0xff]
    %v4521 = vld [vmem:[%s4512 + $0x40] sm:$0xff]
    %v4522 = vld [vmem:[%s4512 + $0x48] sm:$0xff]
    %v4523 = vld [vmem:[%s4512 + $0x50] sm:$0xff]
    %v4524 = vld [vmem:[%s4512 + $0x58] sm:$0xff]
    %v4525 = vld [vmem:[%s4512 + $0x60] sm:$0xff]
    %v4526 = vld [vmem:[%s4512 + $0x68] sm:$0xff]
    %v4527 = vld [vmem:[%s4512 + $0x70] sm:$0xff]
    %v4528 = vld [vmem:[%s4512 + $0x78] sm:$0xff]
    %4529 = vmatprep.subr.mxu0 0.0
    %4530 = vmatpush1.msra.mxu0 %v4528
    %4531 = vmatprep.subr.mxu0 0.0
    %4532 = vmatpush1.msra.mxu0 %v4527
    %4533 = vmatprep.subr.mxu0 0.0
    %4534 = vmatpush1.msra.mxu0 %v4526
    %4535 = vmatprep.subr.mxu0 0.0
    %4536 = vmatpush1.msra.mxu0 %v4525
    %4537 = vmatprep.subr.mxu0 0.0
    %4538 = vmatpush1.msra.mxu0 %v4524
    %4539 = vmatprep.subr.mxu0 0.0
    %4540 = vmatpush1.msra.mxu0 %v4523
    %4541 = vmatprep.subr.mxu0 0.0
    %4542 = vmatpush1.msra.mxu0 %v4522
    %4543 = vmatprep.subr.mxu0 0.0
    %4544 = vmatpush1.msra.mxu0 %v4521
    %4545 = vmatprep.subr.mxu0 0.0
    %4546 = vmatpush1.msra.mxu0 %v4520
    %4547 = vmatprep.subr.mxu0 0.0
    %4548 = vmatpush1.msra.mxu0 %v4519
    %4549 = vmatprep.subr.mxu0 0.0
    %4550 = vmatpush1.msra.mxu0 %v4518
    %4551 = vmatprep.subr.mxu0 0.0
    %4552 = vmatpush1.msra.mxu0 %v4517
    %4553 = vmatprep.subr.mxu0 0.0
    %4554 = vmatpush1.msra.mxu0 %v4516
    %4555 = vmatprep.subr.mxu0 0.0
    %4556 = vmatpush1.msra.mxu0 %v4515
    %4557 = vmatprep.subr.mxu0 0.0
    %4558 = vmatpush1.msra.mxu0 %v4514
    %4559 = vmatprep.subr.mxu0 0.0
    %4560 = vmatpush1.msra.mxu0 %v4513
    %4561 = vmatprep.subr.mxu0 0.0
    %4562 = vmatpush2.msra.mxu0 0.0
    %4563 = vmatprep.subr.mxu0 0.0
    %4564 = vmatpush2.msra.mxu0 0.0
    %4565 = vmatprep.subr.mxu0 0.0
    %4566 = vmatpush2.msra.mxu0 0.0
    %4567 = vmatprep.subr.mxu0 0.0
    %4568 = vmatpush2.msra.mxu0 0.0
    %4569 = vmatprep.subr.mxu0 0.0
    %4570 = vmatpush2.msra.mxu0 0.0
    %4571 = vmatprep.subr.mxu0 0.0
    %4572 = vmatpush2.msra.mxu0 0.0
    %4573 = vmatprep.subr.mxu0 0.0
    %4574 = vmatpush2.msra.mxu0 0.0
    %4575 = vmatprep.subr.mxu0 0.0
    %4576 = vmatpush2.msra.mxu0 0.0
    %4577 = vmatprep.subr.mxu0 0.0
    %4578 = vmatpush2.msra.mxu0 0.0
    %4579 = vmatprep.subr.mxu0 0.0
    %4580 = vmatpush2.msra.mxu0 0.0
    %4581 = vmatprep.subr.mxu0 0.0
    %4582 = vmatpush2.msra.mxu0 0.0
    %4583 = vmatprep.subr.mxu0 0.0
    %4584 = vmatpush2.msra.mxu0 0.0
    %4585 = vmatprep.subr.mxu0 0.0
    %4586 = vmatpush2.msra.mxu0 0.0
    %4587 = vmatprep.subr.mxu0 0.0
    %4588 = vmatpush2.msra.mxu0 0.0
    %4589 = vmatprep.subr.mxu0 0.0
    %4590 = vmatpush2.msra.mxu0 0.0
    %4591 = vmatprep.subr.mxu0 0.0
    %4592 = vmatpush2.msra.mxu0 0.0
    %4593 = vmatprep.mubr.f32.mxu0 0.0
    %4594 = vmatmul.mubr.f32.gmra.mxu0 %v4494
    %v4595 = vpop.f32.mrf.mxu0
    %v4596 = vadd.f32 0.0, %v4595
    %v4597 = vpop.f32.mrf.mxu0
    %4598 = vmatprep.mubr.f32.mxu0 0.0
    %4599 = vmatmul.mubr.f32.gmra.mxu0 %v4499
    %v4600 = vpop.f32.mrf.mxu0
    %v4601 = vadd.f32 0.0, %v4600
    %v4602 = vpop.f32.mrf.mxu0
    %4603 = vmatprep.mubr.f32.mxu0 0.0
    %4604 = vmatmul.mubr.f32.gmra.mxu0 %v4504
    %v4605 = vpop.f32.mrf.mxu0
    %v4606 = vadd.f32 0.0, %v4605
    %v4607 = vpop.f32.mrf.mxu0
    %4608 = vmatprep.mubr.f32.mxu0 0.0
    %4609 = vmatmul.mubr.f32.gmra.mxu0 %v4509
    %v4610 = vpop.f32.mrf.mxu0
    %v4611 = vadd.f32 0.0, %v4610
    %v4612 = vpop.f32.mrf.mxu0
    %4613 = vdwg.mxu0
    %v4614 = vadd.f32 %v4406, %v4596
    %v4615 = vadd.f32 %v4407, %v4601
    %v4616 = vadd.f32 %v4408, %v4606
    %v4617 = vadd.f32 %v4409, %v4611
    %s4618 = scalar_lea.vmem %s5, 192
    %v4619 = vld [vmem:[%s4618] sm:$0xff]
    %v4620 = vld [vmem:[%s4618 + $0x8] sm:$0xff]
    %v4621 = vld [vmem:[%s4618 + $0x10] sm:$0xff]
    %v4622 = vld [vmem:[%s4618 + $0x18] sm:$0xff]
    %v4624 = vsel %vm3383, %v4619, 0
    %v4627 = vsel %vm3383, %v4620, 0
    %v4630 = vsel %vm3383, %v4621, 0
    %v4633 = vsel %vm3383, %v4622, 0
    %4635 = vmatprep.subr.mxu0 0.0
    %4636 = vmatpush1.msra.mxu0 0.0
    %4637 = vmatprep.subr.mxu0 0.0
    %4638 = vmatpush1.msra.mxu0 0.0
    %4639 = vmatprep.subr.mxu0 0.0
    %4640 = vmatpush1.msra.mxu0 0.0
    %4641 = vmatprep.subr.mxu0 0.0
    %4642 = vmatpush1.msra.mxu0 0.0
    %4643 = vmatprep.subr.mxu0 0.0
    %4644 = vmatpush1.msra.mxu0 0.0
    %4645 = vmatprep.subr.mxu0 0.0
    %4646 = vmatpush1.msra.mxu0 0.0
    %4647 = vmatprep.subr.mxu0 0.0
    %4648 = vmatpush1.msra.mxu0 0.0
    %4649 = vmatprep.subr.mxu0 0.0
    %4650 = vmatpush1.msra.mxu0 0.0
    %4651 = vmatprep.subr.mxu0 0.0
    %4652 = vmatpush1.msra.mxu0 0.0
    %4653 = vmatprep.subr.mxu0 0.0
    %4654 = vmatpush1.msra.mxu0 0.0
    %4655 = vmatprep.subr.mxu0 0.0
    %4656 = vmatpush1.msra.mxu0 0.0
    %4657 = vmatprep.subr.mxu0 0.0
    %4658 = vmatpush1.msra.mxu0 0.0
    %4659 = vmatprep.subr.mxu0 0.0
    %4660 = vmatpush1.msra.mxu0 %v3378
    %4661 = vmatprep.subr.mxu0 0.0
    %4662 = vmatpush1.msra.mxu0 %v3377
    %4663 = vmatprep.subr.mxu0 0.0
    %4664 = vmatpush1.msra.mxu0 %v3376
    %4665 = vmatprep.subr.mxu0 0.0
    %4666 = vmatpush1.msra.mxu0 %v3375
    %4667 = vmatprep.subr.mxu0 0.0
    %4668 = vmatpush2.msra.mxu0 0.0
    %4669 = vmatprep.subr.mxu0 0.0
    %4670 = vmatpush2.msra.mxu0 0.0
    %4671 = vmatprep.subr.mxu0 0.0
    %4672 = vmatpush2.msra.mxu0 0.0
    %4673 = vmatprep.subr.mxu0 0.0
    %4674 = vmatpush2.msra.mxu0 0.0
    %4675 = vmatprep.subr.mxu0 0.0
    %4676 = vmatpush2.msra.mxu0 0.0
    %4677 = vmatprep.subr.mxu0 0.0
    %4678 = vmatpush2.msra.mxu0 0.0
    %4679 = vmatprep.subr.mxu0 0.0
    %4680 = vmatpush2.msra.mxu0 0.0
    %4681 = vmatprep.subr.mxu0 0.0
    %4682 = vmatpush2.msra.mxu0 0.0
    %4683 = vmatprep.subr.mxu0 0.0
    %4684 = vmatpush2.msra.mxu0 0.0
    %4685 = vmatprep.subr.mxu0 0.0
    %4686 = vmatpush2.msra.mxu0 0.0
    %4687 = vmatprep.subr.mxu0 0.0
    %4688 = vmatpush2.msra.mxu0 0.0
    %4689 = vmatprep.subr.mxu0 0.0
    %4690 = vmatpush2.msra.mxu0 0.0
    %4691 = vmatprep.subr.mxu0 0.0
    %4692 = vmatpush2.msra.mxu0 0.0
    %4693 = vmatprep.subr.mxu0 0.0
    %4694 = vmatpush2.msra.mxu0 0.0
    %4695 = vmatprep.subr.mxu0 0.0
    %4696 = vmatpush2.msra.mxu0 0.0
    %4697 = vmatprep.subr.mxu0 0.0
    %4698 = vmatpush2.msra.mxu0 0.0
    %4699 = vmatprep.mubr.f32.mxu0 0.0
    %4700 = vmatmul.mubr.f32.gmra.mxu0 %v4624
    %v4701 = vpop.f32.mrf.mxu0
    %v4702 = vadd.f32 0.0, %v4701
    %v4703 = vpop.f32.mrf.mxu0
    %4704 = vmatprep.mubr.f32.mxu0 0.0
    %4705 = vmatmul.mubr.f32.gmra.mxu0 %v4627
    %v4706 = vpop.f32.mrf.mxu0
    %v4707 = vadd.f32 0.0, %v4706
    %v4708 = vpop.f32.mrf.mxu0
    %4709 = vmatprep.mubr.f32.mxu0 0.0
    %4710 = vmatmul.mubr.f32.gmra.mxu0 %v4630
    %v4711 = vpop.f32.mrf.mxu0
    %v4712 = vadd.f32 0.0, %v4711
    %v4713 = vpop.f32.mrf.mxu0
    %4714 = vmatprep.mubr.f32.mxu0 0.0
    %4715 = vmatmul.mubr.f32.gmra.mxu0 %v4633
    %v4716 = vpop.f32.mrf.mxu0
    %v4717 = vadd.f32 0.0, %v4716
    %v4718 = vpop.f32.mrf.mxu0
    %4719 = vdwg.mxu0
    %s4720 = scalar_lea.vmem %s6, 768
    %v4721 = vld [vmem:[%s4720] sm:$0xff]
    %v4722 = vld [vmem:[%s4720 + $0x8] sm:$0xff]
    %v4723 = vld [vmem:[%s4720 + $0x10] sm:$0xff]
    %v4724 = vld [vmem:[%s4720 + $0x18] sm:$0xff]
    %v4725 = vld [vmem:[%s4720 + $0x20] sm:$0xff]
    %v4726 = vld [vmem:[%s4720 + $0x28] sm:$0xff]
    %v4727 = vld [vmem:[%s4720 + $0x30] sm:$0xff]
    %v4728 = vld [vmem:[%s4720 + $0x38] sm:$0xff]
    %v4729 = vld [vmem:[%s4720 + $0x40] sm:$0xff]
    %v4730 = vld [vmem:[%s4720 + $0x48] sm:$0xff]
    %v4731 = vld [vmem:[%s4720 + $0x50] sm:$0xff]
    %v4732 = vld [vmem:[%s4720 + $0x58] sm:$0xff]
    %v4733 = vld [vmem:[%s4720 + $0x60] sm:$0xff]
    %v4734 = vld [vmem:[%s4720 + $0x68] sm:$0xff]
    %v4735 = vld [vmem:[%s4720 + $0x70] sm:$0xff]
    %v4736 = vld [vmem:[%s4720 + $0x78] sm:$0xff]
    %4737 = vmatprep.subr.mxu0 0.0
    %4738 = vmatpush1.msra.mxu0 %v4736
    %4739 = vmatprep.subr.mxu0 0.0
    %4740 = vmatpush1.msra.mxu0 %v4735
    %4741 = vmatprep.subr.mxu0 0.0
    %4742 = vmatpush1.msra.mxu0 %v4734
    %4743 = vmatprep.subr.mxu0 0.0
    %4744 = vmatpush1.msra.mxu0 %v4733
    %4745 = vmatprep.subr.mxu0 0.0
    %4746 = vmatpush1.msra.mxu0 %v4732
    %4747 = vmatprep.subr.mxu0 0.0
    %4748 = vmatpush1.msra.mxu0 %v4731
    %4749 = vmatprep.subr.mxu0 0.0
    %4750 = vmatpush1.msra.mxu0 %v4730
    %4751 = vmatprep.subr.mxu0 0.0
    %4752 = vmatpush1.msra.mxu0 %v4729
    %4753 = vmatprep.subr.mxu0 0.0
    %4754 = vmatpush1.msra.mxu0 %v4728
    %4755 = vmatprep.subr.mxu0 0.0
    %4756 = vmatpush1.msra.mxu0 %v4727
    %4757 = vmatprep.subr.mxu0 0.0
    %4758 = vmatpush1.msra.mxu0 %v4726
    %4759 = vmatprep.subr.mxu0 0.0
    %4760 = vmatpush1.msra.mxu0 %v4725
    %4761 = vmatprep.subr.mxu0 0.0
    %4762 = vmatpush1.msra.mxu0 %v4724
    %4763 = vmatprep.subr.mxu0 0.0
    %4764 = vmatpush1.msra.mxu0 %v4723
    %4765 = vmatprep.subr.mxu0 0.0
    %4766 = vmatpush1.msra.mxu0 %v4722
    %4767 = vmatprep.subr.mxu0 0.0
    %4768 = vmatpush1.msra.mxu0 %v4721
    %4769 = vmatprep.subr.mxu0 0.0
    %4770 = vmatpush2.msra.mxu0 0.0
    %4771 = vmatprep.subr.mxu0 0.0
    %4772 = vmatpush2.msra.mxu0 0.0
    %4773 = vmatprep.subr.mxu0 0.0
    %4774 = vmatpush2.msra.mxu0 0.0
    %4775 = vmatprep.subr.mxu0 0.0
    %4776 = vmatpush2.msra.mxu0 0.0
    %4777 = vmatprep.subr.mxu0 0.0
    %4778 = vmatpush2.msra.mxu0 0.0
    %4779 = vmatprep.subr.mxu0 0.0
    %4780 = vmatpush2.msra.mxu0 0.0
    %4781 = vmatprep.subr.mxu0 0.0
    %4782 = vmatpush2.msra.mxu0 0.0
    %4783 = vmatprep.subr.mxu0 0.0
    %4784 = vmatpush2.msra.mxu0 0.0
    %4785 = vmatprep.subr.mxu0 0.0
    %4786 = vmatpush2.msra.mxu0 0.0
    %4787 = vmatprep.subr.mxu0 0.0
    %4788 = vmatpush2.msra.mxu0 0.0
    %4789 = vmatprep.subr.mxu0 0.0
    %4790 = vmatpush2.msra.mxu0 0.0
    %4791 = vmatprep.subr.mxu0 0.0
    %4792 = vmatpush2.msra.mxu0 0.0
    %4793 = vmatprep.subr.mxu0 0.0
    %4794 = vmatpush2.msra.mxu0 0.0
    %4795 = vmatprep.subr.mxu0 0.0
    %4796 = vmatpush2.msra.mxu0 0.0
    %4797 = vmatprep.subr.mxu0 0.0
    %4798 = vmatpush2.msra.mxu0 0.0
    %4799 = vmatprep.subr.mxu0 0.0
    %4800 = vmatpush2.msra.mxu0 0.0
    %4801 = vmatprep.mubr.f32.mxu0 0.0
    %4802 = vmatmul.mubr.f32.gmra.mxu0 %v4702
    %v4803 = vpop.f32.mrf.mxu0
    %v4804 = vadd.f32 0.0, %v4803
    %v4805 = vpop.f32.mrf.mxu0
    %4806 = vmatprep.mubr.f32.mxu0 0.0
    %4807 = vmatmul.mubr.f32.gmra.mxu0 %v4707
    %v4808 = vpop.f32.mrf.mxu0
    %v4809 = vadd.f32 0.0, %v4808
    %v4810 = vpop.f32.mrf.mxu0
    %4811 = vmatprep.mubr.f32.mxu0 0.0
    %4812 = vmatmul.mubr.f32.gmra.mxu0 %v4712
    %v4813 = vpop.f32.mrf.mxu0
    %v4814 = vadd.f32 0.0, %v4813
    %v4815 = vpop.f32.mrf.mxu0
    %4816 = vmatprep.mubr.f32.mxu0 0.0
    %4817 = vmatmul.mubr.f32.gmra.mxu0 %v4717
    %v4818 = vpop.f32.mrf.mxu0
    %v4819 = vadd.f32 0.0, %v4818
    %v4820 = vpop.f32.mrf.mxu0
    %4821 = vdwg.mxu0
    %v4822 = vadd.f32 %v4614, %v4804
    %v4823 = vadd.f32 %v4615, %v4809
    %v4824 = vadd.f32 %v4616, %v4814
    %v4825 = vadd.f32 %v4617, %v4819
    %s4826 = scalar_lea.vmem %s5, 224
    %v4827 = vld [vmem:[%s4826] sm:$0xff]
    %v4828 = vld [vmem:[%s4826 + $0x8] sm:$0xff]
    %v4829 = vld [vmem:[%s4826 + $0x10] sm:$0xff]
    %v4830 = vld [vmem:[%s4826 + $0x18] sm:$0xff]
    %v4832 = vsel %vm3383, %v4827, 0
    %v4835 = vsel %vm3383, %v4828, 0
    %v4838 = vsel %vm3383, %v4829, 0
    %v4841 = vsel %vm3383, %v4830, 0
    %4843 = vmatprep.subr.mxu0 0.0
    %4844 = vmatpush1.msra.mxu0 0.0
    %4845 = vmatprep.subr.mxu0 0.0
    %4846 = vmatpush1.msra.mxu0 0.0
    %4847 = vmatprep.subr.mxu0 0.0
    %4848 = vmatpush1.msra.mxu0 0.0
    %4849 = vmatprep.subr.mxu0 0.0
    %4850 = vmatpush1.msra.mxu0 0.0
    %4851 = vmatprep.subr.mxu0 0.0
    %4852 = vmatpush1.msra.mxu0 0.0
    %4853 = vmatprep.subr.mxu0 0.0
    %4854 = vmatpush1.msra.mxu0 0.0
    %4855 = vmatprep.subr.mxu0 0.0
    %4856 = vmatpush1.msra.mxu0 0.0
    %4857 = vmatprep.subr.mxu0 0.0
    %4858 = vmatpush1.msra.mxu0 0.0
    %4859 = vmatprep.subr.mxu0 0.0
    %4860 = vmatpush1.msra.mxu0 0.0
    %4861 = vmatprep.subr.mxu0 0.0
    %4862 = vmatpush1.msra.mxu0 0.0
    %4863 = vmatprep.subr.mxu0 0.0
    %4864 = vmatpush1.msra.mxu0 0.0
    %4865 = vmatprep.subr.mxu0 0.0
    %4866 = vmatpush1.msra.mxu0 0.0
    %4867 = vmatprep.subr.mxu0 0.0
    %4868 = vmatpush1.msra.mxu0 %v3378
    %4869 = vmatprep.subr.mxu0 0.0
    %4870 = vmatpush1.msra.mxu0 %v3377
    %4871 = vmatprep.subr.mxu0 0.0
    %4872 = vmatpush1.msra.mxu0 %v3376
    %4873 = vmatprep.subr.mxu0 0.0
    %4874 = vmatpush1.msra.mxu0 %v3375
    %4875 = vmatprep.subr.mxu0 0.0
    %4876 = vmatpush2.msra.mxu0 0.0
    %4877 = vmatprep.subr.mxu0 0.0
    %4878 = vmatpush2.msra.mxu0 0.0
    %4879 = vmatprep.subr.mxu0 0.0
    %4880 = vmatpush2.msra.mxu0 0.0
    %4881 = vmatprep.subr.mxu0 0.0
    %4882 = vmatpush2.msra.mxu0 0.0
    %4883 = vmatprep.subr.mxu0 0.0
    %4884 = vmatpush2.msra.mxu0 0.0
    %4885 = vmatprep.subr.mxu0 0.0
    %4886 = vmatpush2.msra.mxu0 0.0
    %4887 = vmatprep.subr.mxu0 0.0
    %4888 = vmatpush2.msra.mxu0 0.0
    %4889 = vmatprep.subr.mxu0 0.0
    %4890 = vmatpush2.msra.mxu0 0.0
    %4891 = vmatprep.subr.mxu0 0.0
    %4892 = vmatpush2.msra.mxu0 0.0
    %4893 = vmatprep.subr.mxu0 0.0
    %4894 = vmatpush2.msra.mxu0 0.0
    %4895 = vmatprep.subr.mxu0 0.0
    %4896 = vmatpush2.msra.mxu0 0.0
    %4897 = vmatprep.subr.mxu0 0.0
    %4898 = vmatpush2.msra.mxu0 0.0
    %4899 = vmatprep.subr.mxu0 0.0
    %4900 = vmatpush2.msra.mxu0 0.0
    %4901 = vmatprep.subr.mxu0 0.0
    %4902 = vmatpush2.msra.mxu0 0.0
    %4903 = vmatprep.subr.mxu0 0.0
    %4904 = vmatpush2.msra.mxu0 0.0
    %4905 = vmatprep.subr.mxu0 0.0
    %4906 = vmatpush2.msra.mxu0 0.0
    %4907 = vmatprep.mubr.f32.mxu0 0.0
    %4908 = vmatmul.mubr.f32.gmra.mxu0 %v4832
    %v4909 = vpop.f32.mrf.mxu0
    %v4910 = vadd.f32 0.0, %v4909
    %v4911 = vpop.f32.mrf.mxu0
    %4912 = vmatprep.mubr.f32.mxu0 0.0
    %4913 = vmatmul.mubr.f32.gmra.mxu0 %v4835
    %v4914 = vpop.f32.mrf.mxu0
    %v4915 = vadd.f32 0.0, %v4914
    %v4916 = vpop.f32.mrf.mxu0
    %4917 = vmatprep.mubr.f32.mxu0 0.0
    %4918 = vmatmul.mubr.f32.gmra.mxu0 %v4838
    %v4919 = vpop.f32.mrf.mxu0
    %v4920 = vadd.f32 0.0, %v4919
    %v4921 = vpop.f32.mrf.mxu0
    %4922 = vmatprep.mubr.f32.mxu0 0.0
    %4923 = vmatmul.mubr.f32.gmra.mxu0 %v4841
    %v4924 = vpop.f32.mrf.mxu0
    %v4925 = vadd.f32 0.0, %v4924
    %v4926 = vpop.f32.mrf.mxu0
    %4927 = vdwg.mxu0
    %s4928 = scalar_lea.vmem %s6, 896
    %v4929 = vld [vmem:[%s4928] sm:$0xff]
    %v4930 = vld [vmem:[%s4928 + $0x8] sm:$0xff]
    %v4931 = vld [vmem:[%s4928 + $0x10] sm:$0xff]
    %v4932 = vld [vmem:[%s4928 + $0x18] sm:$0xff]
    %v4933 = vld [vmem:[%s4928 + $0x20] sm:$0xff]
    %v4934 = vld [vmem:[%s4928 + $0x28] sm:$0xff]
    %v4935 = vld [vmem:[%s4928 + $0x30] sm:$0xff]
    %v4936 = vld [vmem:[%s4928 + $0x38] sm:$0xff]
    %v4937 = vld [vmem:[%s4928 + $0x40] sm:$0xff]
    %v4938 = vld [vmem:[%s4928 + $0x48] sm:$0xff]
    %v4939 = vld [vmem:[%s4928 + $0x50] sm:$0xff]
    %v4940 = vld [vmem:[%s4928 + $0x58] sm:$0xff]
    %v4941 = vld [vmem:[%s4928 + $0x60] sm:$0xff]
    %v4942 = vld [vmem:[%s4928 + $0x68] sm:$0xff]
    %v4943 = vld [vmem:[%s4928 + $0x70] sm:$0xff]
    %v4944 = vld [vmem:[%s4928 + $0x78] sm:$0xff]
    %4945 = vmatprep.subr.mxu0 0.0
    %4946 = vmatpush1.msra.mxu0 %v4944
    %4947 = vmatprep.subr.mxu0 0.0
    %4948 = vmatpush1.msra.mxu0 %v4943
    %4949 = vmatprep.subr.mxu0 0.0
    %4950 = vmatpush1.msra.mxu0 %v4942
    %4951 = vmatprep.subr.mxu0 0.0
    %4952 = vmatpush1.msra.mxu0 %v4941
    %4953 = vmatprep.subr.mxu0 0.0
    %4954 = vmatpush1.msra.mxu0 %v4940
    %4955 = vmatprep.subr.mxu0 0.0
    %4956 = vmatpush1.msra.mxu0 %v4939
    %4957 = vmatprep.subr.mxu0 0.0
    %4958 = vmatpush1.msra.mxu0 %v4938
    %4959 = vmatprep.subr.mxu0 0.0
    %4960 = vmatpush1.msra.mxu0 %v4937
    %4961 = vmatprep.subr.mxu0 0.0
    %4962 = vmatpush1.msra.mxu0 %v4936
    %4963 = vmatprep.subr.mxu0 0.0
    %4964 = vmatpush1.msra.mxu0 %v4935
    %4965 = vmatprep.subr.mxu0 0.0
    %4966 = vmatpush1.msra.mxu0 %v4934
    %4967 = vmatprep.subr.mxu0 0.0
    %4968 = vmatpush1.msra.mxu0 %v4933
    %4969 = vmatprep.subr.mxu0 0.0
    %4970 = vmatpush1.msra.mxu0 %v4932
    %4971 = vmatprep.subr.mxu0 0.0
    %4972 = vmatpush1.msra.mxu0 %v4931
    %4973 = vmatprep.subr.mxu0 0.0
    %4974 = vmatpush1.msra.mxu0 %v4930
    %4975 = vmatprep.subr.mxu0 0.0
    %4976 = vmatpush1.msra.mxu0 %v4929
    %4977 = vmatprep.subr.mxu0 0.0
    %4978 = vmatpush2.msra.mxu0 0.0
    %4979 = vmatprep.subr.mxu0 0.0
    %4980 = vmatpush2.msra.mxu0 0.0
    %4981 = vmatprep.subr.mxu0 0.0
    %4982 = vmatpush2.msra.mxu0 0.0
    %4983 = vmatprep.subr.mxu0 0.0
    %4984 = vmatpush2.msra.mxu0 0.0
    %4985 = vmatprep.subr.mxu0 0.0
    %4986 = vmatpush2.msra.mxu0 0.0
    %4987 = vmatprep.subr.mxu0 0.0
    %4988 = vmatpush2.msra.mxu0 0.0
    %4989 = vmatprep.subr.mxu0 0.0
    %4990 = vmatpush2.msra.mxu0 0.0
    %4991 = vmatprep.subr.mxu0 0.0
    %4992 = vmatpush2.msra.mxu0 0.0
    %4993 = vmatprep.subr.mxu0 0.0
    %4994 = vmatpush2.msra.mxu0 0.0
    %4995 = vmatprep.subr.mxu0 0.0
    %4996 = vmatpush2.msra.mxu0 0.0
    %4997 = vmatprep.subr.mxu0 0.0
    %4998 = vmatpush2.msra.mxu0 0.0
    %4999 = vmatprep.subr.mxu0 0.0
    %5000 = vmatpush2.msra.mxu0 0.0
    %5001 = vmatprep.subr.mxu0 0.0
    %5002 = vmatpush2.msra.mxu0 0.0
    %5003 = vmatprep.subr.mxu0 0.0
    %5004 = vmatpush2.msra.mxu0 0.0
    %5005 = vmatprep.subr.mxu0 0.0
    %5006 = vmatpush2.msra.mxu0 0.0
    %5007 = vmatprep.subr.mxu0 0.0
    %5008 = vmatpush2.msra.mxu0 0.0
    %5009 = vmatprep.mubr.f32.mxu0 0.0
    %5010 = vmatmul.mubr.f32.gmra.mxu0 %v4910
    %v5011 = vpop.f32.mrf.mxu0
    %v5012 = vadd.f32 0.0, %v5011
    %v5013 = vpop.f32.mrf.mxu0
    %5014 = vmatprep.mubr.f32.mxu0 0.0
    %5015 = vmatmul.mubr.f32.gmra.mxu0 %v4915
    %v5016 = vpop.f32.mrf.mxu0
    %v5017 = vadd.f32 0.0, %v5016
    %v5018 = vpop.f32.mrf.mxu0
    %5019 = vmatprep.mubr.f32.mxu0 0.0
    %5020 = vmatmul.mubr.f32.gmra.mxu0 %v4920
    %v5021 = vpop.f32.mrf.mxu0
    %v5022 = vadd.f32 0.0, %v5021
    %v5023 = vpop.f32.mrf.mxu0
    %5024 = vmatprep.mubr.f32.mxu0 0.0
    %5025 = vmatmul.mubr.f32.gmra.mxu0 %v4925
    %v5026 = vpop.f32.mrf.mxu0
    %v5027 = vadd.f32 0.0, %v5026
    %v5028 = vpop.f32.mrf.mxu0
    %5029 = vdwg.mxu0
    %v5030 = vadd.f32 %v4822, %v5012
    %v5031 = vadd.f32 %v4823, %v5017
    %v5032 = vadd.f32 %v4824, %v5022
    %v5033 = vadd.f32 %v4825, %v5027
    %s5034 = scalar_lea.vmem %s5, 256
    %v5035 = vld [vmem:[%s5034] sm:$0xff]
    %v5036 = vld [vmem:[%s5034 + $0x8] sm:$0xff]
    %v5037 = vld [vmem:[%s5034 + $0x10] sm:$0xff]
    %v5038 = vld [vmem:[%s5034 + $0x18] sm:$0xff]
    %v5040 = vsel %vm3383, %v5035, 0
    %v5043 = vsel %vm3383, %v5036, 0
    %v5046 = vsel %vm3383, %v5037, 0
    %v5049 = vsel %vm3383, %v5038, 0
    %5051 = vmatprep.subr.mxu0 0.0
    %5052 = vmatpush1.msra.mxu0 0.0
    %5053 = vmatprep.subr.mxu0 0.0
    %5054 = vmatpush1.msra.mxu0 0.0
    %5055 = vmatprep.subr.mxu0 0.0
    %5056 = vmatpush1.msra.mxu0 0.0
    %5057 = vmatprep.subr.mxu0 0.0
    %5058 = vmatpush1.msra.mxu0 0.0
    %5059 = vmatprep.subr.mxu0 0.0
    %5060 = vmatpush1.msra.mxu0 0.0
    %5061 = vmatprep.subr.mxu0 0.0
    %5062 = vmatpush1.msra.mxu0 0.0
    %5063 = vmatprep.subr.mxu0 0.0
    %5064 = vmatpush1.msra.mxu0 0.0
    %5065 = vmatprep.subr.mxu0 0.0
    %5066 = vmatpush1.msra.mxu0 0.0
    %5067 = vmatprep.subr.mxu0 0.0
    %5068 = vmatpush1.msra.mxu0 0.0
    %5069 = vmatprep.subr.mxu0 0.0
    %5070 = vmatpush1.msra.mxu0 0.0
    %5071 = vmatprep.subr.mxu0 0.0
    %5072 = vmatpush1.msra.mxu0 0.0
    %5073 = vmatprep.subr.mxu0 0.0
    %5074 = vmatpush1.msra.mxu0 0.0
    %5075 = vmatprep.subr.mxu0 0.0
    %5076 = vmatpush1.msra.mxu0 %v3378
    %5077 = vmatprep.subr.mxu0 0.0
    %5078 = vmatpush1.msra.mxu0 %v3377
    %5079 = vmatprep.subr.mxu0 0.0
    %5080 = vmatpush1.msra.mxu0 %v3376
    %5081 = vmatprep.subr.mxu0 0.0
    %5082 = vmatpush1.msra.mxu0 %v3375
    %5083 = vmatprep.subr.mxu0 0.0
    %5084 = vmatpush2.msra.mxu0 0.0
    %5085 = vmatprep.subr.mxu0 0.0
    %5086 = vmatpush2.msra.mxu0 0.0
    %5087 = vmatprep.subr.mxu0 0.0
    %5088 = vmatpush2.msra.mxu0 0.0
    %5089 = vmatprep.subr.mxu0 0.0
    %5090 = vmatpush2.msra.mxu0 0.0
    %5091 = vmatprep.subr.mxu0 0.0
    %5092 = vmatpush2.msra.mxu0 0.0
    %5093 = vmatprep.subr.mxu0 0.0
    %5094 = vmatpush2.msra.mxu0 0.0
    %5095 = vmatprep.subr.mxu0 0.0
    %5096 = vmatpush2.msra.mxu0 0.0
    %5097 = vmatprep.subr.mxu0 0.0
    %5098 = vmatpush2.msra.mxu0 0.0
    %5099 = vmatprep.subr.mxu0 0.0
    %5100 = vmatpush2.msra.mxu0 0.0
    %5101 = vmatprep.subr.mxu0 0.0
    %5102 = vmatpush2.msra.mxu0 0.0
    %5103 = vmatprep.subr.mxu0 0.0
    %5104 = vmatpush2.msra.mxu0 0.0
    %5105 = vmatprep.subr.mxu0 0.0
    %5106 = vmatpush2.msra.mxu0 0.0
    %5107 = vmatprep.subr.mxu0 0.0
    %5108 = vmatpush2.msra.mxu0 0.0
    %5109 = vmatprep.subr.mxu0 0.0
    %5110 = vmatpush2.msra.mxu0 0.0
    %5111 = vmatprep.subr.mxu0 0.0
    %5112 = vmatpush2.msra.mxu0 0.0
    %5113 = vmatprep.subr.mxu0 0.0
    %5114 = vmatpush2.msra.mxu0 0.0
    %5115 = vmatprep.mubr.f32.mxu0 0.0
    %5116 = vmatmul.mubr.f32.gmra.mxu0 %v5040
    %v5117 = vpop.f32.mrf.mxu0
    %v5118 = vadd.f32 0.0, %v5117
    %v5119 = vpop.f32.mrf.mxu0
    %5120 = vmatprep.mubr.f32.mxu0 0.0
    %5121 = vmatmul.mubr.f32.gmra.mxu0 %v5043
    %v5122 = vpop.f32.mrf.mxu0
    %v5123 = vadd.f32 0.0, %v5122
    %v5124 = vpop.f32.mrf.mxu0
    %5125 = vmatprep.mubr.f32.mxu0 0.0
    %5126 = vmatmul.mubr.f32.gmra.mxu0 %v5046
    %v5127 = vpop.f32.mrf.mxu0
    %v5128 = vadd.f32 0.0, %v5127
    %v5129 = vpop.f32.mrf.mxu0
    %5130 = vmatprep.mubr.f32.mxu0 0.0
    %5131 = vmatmul.mubr.f32.gmra.mxu0 %v5049
    %v5132 = vpop.f32.mrf.mxu0
    %v5133 = vadd.f32 0.0, %v5132
    %v5134 = vpop.f32.mrf.mxu0
    %5135 = vdwg.mxu0
    %s5136 = scalar_lea.vmem %s6, 1024
    %v5137 = vld [vmem:[%s5136] sm:$0xff]
    %v5138 = vld [vmem:[%s5136 + $0x8] sm:$0xff]
    %v5139 = vld [vmem:[%s5136 + $0x10] sm:$0xff]
    %v5140 = vld [vmem:[%s5136 + $0x18] sm:$0xff]
    %v5141 = vld [vmem:[%s5136 + $0x20] sm:$0xff]
    %v5142 = vld [vmem:[%s5136 + $0x28] sm:$0xff]
    %v5143 = vld [vmem:[%s5136 + $0x30] sm:$0xff]
    %v5144 = vld [vmem:[%s5136 + $0x38] sm:$0xff]
    %v5145 = vld [vmem:[%s5136 + $0x40] sm:$0xff]
    %v5146 = vld [vmem:[%s5136 + $0x48] sm:$0xff]
    %v5147 = vld [vmem:[%s5136 + $0x50] sm:$0xff]
    %v5148 = vld [vmem:[%s5136 + $0x58] sm:$0xff]
    %v5149 = vld [vmem:[%s5136 + $0x60] sm:$0xff]
    %v5150 = vld [vmem:[%s5136 + $0x68] sm:$0xff]
    %v5151 = vld [vmem:[%s5136 + $0x70] sm:$0xff]
    %v5152 = vld [vmem:[%s5136 + $0x78] sm:$0xff]
    %5153 = vmatprep.subr.mxu0 0.0
    %5154 = vmatpush1.msra.mxu0 %v5152
    %5155 = vmatprep.subr.mxu0 0.0
    %5156 = vmatpush1.msra.mxu0 %v5151
    %5157 = vmatprep.subr.mxu0 0.0
    %5158 = vmatpush1.msra.mxu0 %v5150
    %5159 = vmatprep.subr.mxu0 0.0
    %5160 = vmatpush1.msra.mxu0 %v5149
    %5161 = vmatprep.subr.mxu0 0.0
    %5162 = vmatpush1.msra.mxu0 %v5148
    %5163 = vmatprep.subr.mxu0 0.0
    %5164 = vmatpush1.msra.mxu0 %v5147
    %5165 = vmatprep.subr.mxu0 0.0
    %5166 = vmatpush1.msra.mxu0 %v5146
    %5167 = vmatprep.subr.mxu0 0.0
    %5168 = vmatpush1.msra.mxu0 %v5145
    %5169 = vmatprep.subr.mxu0 0.0
    %5170 = vmatpush1.msra.mxu0 %v5144
    %5171 = vmatprep.subr.mxu0 0.0
    %5172 = vmatpush1.msra.mxu0 %v5143
    %5173 = vmatprep.subr.mxu0 0.0
    %5174 = vmatpush1.msra.mxu0 %v5142
    %5175 = vmatprep.subr.mxu0 0.0
    %5176 = vmatpush1.msra.mxu0 %v5141
    %5177 = vmatprep.subr.mxu0 0.0
    %5178 = vmatpush1.msra.mxu0 %v5140
    %5179 = vmatprep.subr.mxu0 0.0
    %5180 = vmatpush1.msra.mxu0 %v5139
    %5181 = vmatprep.subr.mxu0 0.0
    %5182 = vmatpush1.msra.mxu0 %v5138
    %5183 = vmatprep.subr.mxu0 0.0
    %5184 = vmatpush1.msra.mxu0 %v5137
    %5185 = vmatprep.subr.mxu0 0.0
    %5186 = vmatpush2.msra.mxu0 0.0
    %5187 = vmatprep.subr.mxu0 0.0
    %5188 = vmatpush2.msra.mxu0 0.0
    %5189 = vmatprep.subr.mxu0 0.0
    %5190 = vmatpush2.msra.mxu0 0.0
    %5191 = vmatprep.subr.mxu0 0.0
    %5192 = vmatpush2.msra.mxu0 0.0
    %5193 = vmatprep.subr.mxu0 0.0
    %5194 = vmatpush2.msra.mxu0 0.0
    %5195 = vmatprep.subr.mxu0 0.0
    %5196 = vmatpush2.msra.mxu0 0.0
    %5197 = vmatprep.subr.mxu0 0.0
    %5198 = vmatpush2.msra.mxu0 0.0
    %5199 = vmatprep.subr.mxu0 0.0
    %5200 = vmatpush2.msra.mxu0 0.0
    %5201 = vmatprep.subr.mxu0 0.0
    %5202 = vmatpush2.msra.mxu0 0.0
    %5203 = vmatprep.subr.mxu0 0.0
    %5204 = vmatpush2.msra.mxu0 0.0
    %5205 = vmatprep.subr.mxu0 0.0
    %5206 = vmatpush2.msra.mxu0 0.0
    %5207 = vmatprep.subr.mxu0 0.0
    %5208 = vmatpush2.msra.mxu0 0.0
    %5209 = vmatprep.subr.mxu0 0.0
    %5210 = vmatpush2.msra.mxu0 0.0
    %5211 = vmatprep.subr.mxu0 0.0
    %5212 = vmatpush2.msra.mxu0 0.0
    %5213 = vmatprep.subr.mxu0 0.0
    %5214 = vmatpush2.msra.mxu0 0.0
    %5215 = vmatprep.subr.mxu0 0.0
    %5216 = vmatpush2.msra.mxu0 0.0
    %5217 = vmatprep.mubr.f32.mxu0 0.0
    %5218 = vmatmul.mubr.f32.gmra.mxu0 %v5118
    %v5219 = vpop.f32.mrf.mxu0
    %v5220 = vadd.f32 0.0, %v5219
    %v5221 = vpop.f32.mrf.mxu0
    %5222 = vmatprep.mubr.f32.mxu0 0.0
    %5223 = vmatmul.mubr.f32.gmra.mxu0 %v5123
    %v5224 = vpop.f32.mrf.mxu0
    %v5225 = vadd.f32 0.0, %v5224
    %v5226 = vpop.f32.mrf.mxu0
    %5227 = vmatprep.mubr.f32.mxu0 0.0
    %5228 = vmatmul.mubr.f32.gmra.mxu0 %v5128
    %v5229 = vpop.f32.mrf.mxu0
    %v5230 = vadd.f32 0.0, %v5229
    %v5231 = vpop.f32.mrf.mxu0
    %5232 = vmatprep.mubr.f32.mxu0 0.0
    %5233 = vmatmul.mubr.f32.gmra.mxu0 %v5133
    %v5234 = vpop.f32.mrf.mxu0
    %v5235 = vadd.f32 0.0, %v5234
    %v5236 = vpop.f32.mrf.mxu0
    %5237 = vdwg.mxu0
    %v5238 = vadd.f32 %v5030, %v5220
    %v5239 = vadd.f32 %v5031, %v5225
    %v5240 = vadd.f32 %v5032, %v5230
    %v5241 = vadd.f32 %v5033, %v5235
    %v5242 = vld [vmem:[%s2 + $0x2] sm:$0x1]
    %v5243 = vlaneseq
    %v5244 = vshrl.u32 %v5243, 7
    %v5245 = vsub.s32 0, %v5244
    %v5246 = vrot.slane %v5242, %v5245
    %v5247 = vadd.f32 %v5238, %v5246
    %v5248 = vadd.f32 %v5239, %v5246
    %v5249 = vadd.f32 %v5240, %v5246
    %v5250 = vadd.f32 %v5241, %v5246
    %v5251 = vmax.f32 %v5247, 0.0
    %v5252 = vmax.f32 %v5248, 0.0
    %v5253 = vmax.f32 %v5249, 0.0
    %v5254 = vmax.f32 %v5250, 0.0
    %5255 = vmatprep.subr.mxu0 0.0
    %5256 = vmatpush1.msra.mxu0 0.0
    %5257 = vmatprep.subr.mxu0 0.0
    %5258 = vmatpush1.msra.mxu0 0.0
    %5259 = vmatprep.subr.mxu0 0.0
    %5260 = vmatpush1.msra.mxu0 0.0
    %5261 = vmatprep.subr.mxu0 0.0
    %5262 = vmatpush1.msra.mxu0 0.0
    %5263 = vmatprep.subr.mxu0 0.0
    %5264 = vmatpush1.msra.mxu0 0.0
    %5265 = vmatprep.subr.mxu0 0.0
    %5266 = vmatpush1.msra.mxu0 0.0
    %5267 = vmatprep.subr.mxu0 0.0
    %5268 = vmatpush1.msra.mxu0 0.0
    %5269 = vmatprep.subr.mxu0 0.0
    %5270 = vmatpush1.msra.mxu0 0.0
    %5271 = vmatprep.subr.mxu0 0.0
    %5272 = vmatpush1.msra.mxu0 0.0
    %5273 = vmatprep.subr.mxu0 0.0
    %5274 = vmatpush1.msra.mxu0 0.0
    %5275 = vmatprep.subr.mxu0 0.0
    %5276 = vmatpush1.msra.mxu0 0.0
    %5277 = vmatprep.subr.mxu0 0.0
    %5278 = vmatpush1.msra.mxu0 0.0
    %5279 = vmatprep.subr.mxu0 0.0
    %5280 = vmatpush1.msra.mxu0 %v5254
    %5281 = vmatprep.subr.mxu0 0.0
    %5282 = vmatpush1.msra.mxu0 %v5253
    %5283 = vmatprep.subr.mxu0 0.0
    %5284 = vmatpush1.msra.mxu0 %v5252
    %5285 = vmatprep.subr.mxu0 0.0
    %5286 = vmatpush1.msra.mxu0 %v5251
    %5287 = vmatprep.subr.mxu0 0.0
    %5288 = vmatpush2.msra.mxu0 0.0
    %5289 = vmatprep.subr.mxu0 0.0
    %5290 = vmatpush2.msra.mxu0 0.0
    %5291 = vmatprep.subr.mxu0 0.0
    %5292 = vmatpush2.msra.mxu0 0.0
    %5293 = vmatprep.subr.mxu0 0.0
    %5294 = vmatpush2.msra.mxu0 0.0
    %5295 = vmatprep.subr.mxu0 0.0
    %5296 = vmatpush2.msra.mxu0 0.0
    %5297 = vmatprep.subr.mxu0 0.0
    %5298 = vmatpush2.msra.mxu0 0.0
    %5299 = vmatprep.subr.mxu0 0.0
    %5300 = vmatpush2.msra.mxu0 0.0
    %5301 = vmatprep.subr.mxu0 0.0
    %5302 = vmatpush2.msra.mxu0 0.0
    %5303 = vmatprep.subr.mxu0 0.0
    %5304 = vmatpush2.msra.mxu0 0.0
    %5305 = vmatprep.subr.mxu0 0.0
    %5306 = vmatpush2.msra.mxu0 0.0
    %5307 = vmatprep.subr.mxu0 0.0
    %5308 = vmatpush2.msra.mxu0 0.0
    %5309 = vmatprep.subr.mxu0 0.0
    %5310 = vmatpush2.msra.mxu0 0.0
    %5311 = vmatprep.subr.mxu0 0.0
    %5312 = vmatpush2.msra.mxu0 0.0
    %5313 = vmatprep.subr.mxu0 0.0
    %5314 = vmatpush2.msra.mxu0 0.0
    %5315 = vmatprep.subr.mxu0 0.0
    %5316 = vmatpush2.msra.mxu0 0.0
    %5317 = vmatprep.subr.mxu0 0.0
    %5318 = vmatpush2.msra.mxu0 0.0
    %5319 = vmatprep.mubr.f32.mxu0 0.0
    %5320 = vmatmul.mubr.f32.gmra.mxu0 %v3385
    %v5321 = vpop.f32.mrf.mxu0
    %v5322 = vadd.f32 0.0, %v5321
    %v5323 = vpop.f32.mrf.mxu0
    %5324 = vmatprep.mubr.f32.mxu0 0.0
    %5325 = vmatmul.mubr.f32.gmra.mxu0 %v3388
    %v5326 = vpop.f32.mrf.mxu0
    %v5327 = vadd.f32 0.0, %v5326
    %v5328 = vpop.f32.mrf.mxu0
    %5329 = vmatprep.mubr.f32.mxu0 0.0
    %5330 = vmatmul.mubr.f32.gmra.mxu0 %v3391
    %v5331 = vpop.f32.mrf.mxu0
    %v5332 = vadd.f32 0.0, %v5331
    %v5333 = vpop.f32.mrf.mxu0
    %5334 = vmatprep.mubr.f32.mxu0 0.0
    %5335 = vmatmul.mubr.f32.gmra.mxu0 %v3394
    %v5336 = vpop.f32.mrf.mxu0
    %v5337 = vadd.f32 0.0, %v5336
    %v5338 = vpop.f32.mrf.mxu0
    %5339 = vdwg.mxu0
    %v5340 = vld [vmem:[%s7] sm:$0xff]
    %v5341 = vld [vmem:[%s7 + $0x8] sm:$0xff]
    %v5342 = vld [vmem:[%s7 + $0x10] sm:$0xff]
    %v5343 = vld [vmem:[%s7 + $0x18] sm:$0xff]
    %v5344 = vld [vmem:[%s7 + $0x20] sm:$0xff]
    %v5345 = vld [vmem:[%s7 + $0x28] sm:$0xff]
    %v5346 = vld [vmem:[%s7 + $0x30] sm:$0xff]
    %v5347 = vld [vmem:[%s7 + $0x38] sm:$0xff]
    %v5348 = vld [vmem:[%s7 + $0x40] sm:$0xff]
    %v5349 = vld [vmem:[%s7 + $0x48] sm:$0xff]
    %v5350 = vld [vmem:[%s7 + $0x50] sm:$0xff]
    %v5351 = vld [vmem:[%s7 + $0x58] sm:$0xff]
    %v5352 = vld [vmem:[%s7 + $0x60] sm:$0xff]
    %v5353 = vld [vmem:[%s7 + $0x68] sm:$0xff]
    %v5354 = vld [vmem:[%s7 + $0x70] sm:$0xff]
    %v5355 = vld [vmem:[%s7 + $0x78] sm:$0xff]
    %5356 = vmatprep.subr.mxu0 0.0
    %5357 = vmatpush1.msra.mxu0 0.0
    %5358 = vmatprep.subr.mxu0 0.0
    %5359 = vmatpush1.msra.mxu0 0.0
    %5360 = vmatprep.subr.mxu0 0.0
    %5361 = vmatpush1.msra.mxu0 0.0
    %5362 = vmatprep.subr.mxu0 0.0
    %5363 = vmatpush1.msra.mxu0 0.0
    %5364 = vmatprep.subr.mxu0 0.0
    %5365 = vmatpush1.msra.mxu0 0.0
    %5366 = vmatprep.subr.mxu0 0.0
    %5367 = vmatpush1.msra.mxu0 0.0
    %5368 = vmatprep.subr.mxu0 0.0
    %5369 = vmatpush1.msra.mxu0 0.0
    %5370 = vmatprep.subr.mxu0 0.0
    %5371 = vmatpush1.msra.mxu0 0.0
    %5372 = vmatprep.subr.mxu0 0.0
    %5373 = vmatpush1.msra.mxu0 0.0
    %5374 = vmatprep.subr.mxu0 0.0
    %5375 = vmatpush1.msra.mxu0 0.0
    %5376 = vmatprep.subr.mxu0 0.0
    %5377 = vmatpush1.msra.mxu0 0.0
    %5378 = vmatprep.subr.mxu0 0.0
    %5379 = vmatpush1.msra.mxu0 0.0
    %5380 = vmatprep.subr.mxu0 0.0
    %5381 = vmatpush1.msra.mxu0 %v5254
    %5382 = vmatprep.subr.mxu0 0.0
    %5383 = vmatpush1.msra.mxu0 %v5253
    %5384 = vmatprep.subr.mxu0 0.0
    %5385 = vmatpush1.msra.mxu0 %v5252
    %5386 = vmatprep.subr.mxu0 0.0
    %5387 = vmatpush1.msra.mxu0 %v5251
    %5388 = vmatprep.subr.mxu0 0.0
    %5389 = vmatpush2.msra.mxu0 0.0
    %5390 = vmatprep.subr.mxu0 0.0
    %5391 = vmatpush2.msra.mxu0 0.0
    %5392 = vmatprep.subr.mxu0 0.0
    %5393 = vmatpush2.msra.mxu0 0.0
    %5394 = vmatprep.subr.mxu0 0.0
    %5395 = vmatpush2.msra.mxu0 0.0
    %5396 = vmatprep.subr.mxu0 0.0
    %5397 = vmatpush2.msra.mxu0 0.0
    %5398 = vmatprep.subr.mxu0 0.0
    %5399 = vmatpush2.msra.mxu0 0.0
    %5400 = vmatprep.subr.mxu0 0.0
    %5401 = vmatpush2.msra.mxu0 0.0
    %5402 = vmatprep.subr.mxu0 0.0
    %5403 = vmatpush2.msra.mxu0 0.0
    %5404 = vmatprep.subr.mxu0 0.0
    %5405 = vmatpush2.msra.mxu0 0.0
    %5406 = vmatprep.subr.mxu0 0.0
    %5407 = vmatpush2.msra.mxu0 0.0
    %5408 = vmatprep.subr.mxu0 0.0
    %5409 = vmatpush2.msra.mxu0 0.0
    %5410 = vmatprep.subr.mxu0 0.0
    %5411 = vmatpush2.msra.mxu0 0.0
    %5412 = vmatprep.subr.mxu0 0.0
    %5413 = vmatpush2.msra.mxu0 0.0
    %5414 = vmatprep.subr.mxu0 0.0
    %5415 = vmatpush2.msra.mxu0 0.0
    %5416 = vmatprep.subr.mxu0 0.0
    %5417 = vmatpush2.msra.mxu0 0.0
    %5418 = vmatprep.subr.mxu0 0.0
    %5419 = vmatpush2.msra.mxu0 0.0
    %5420 = vmatprep.mubr.f32.mxu0 0.0
    %5421 = vmatmul.mubr.f32.gmra.mxu0 %v3503
    %v5422 = vpop.f32.mrf.mxu0
    %v5423 = vadd.f32 0.0, %v5422
    %v5424 = vpop.f32.mrf.mxu0
    %5425 = vmatprep.mubr.f32.mxu0 0.0
    %5426 = vmatmul.mubr.f32.gmra.mxu0 %v3506
    %v5427 = vpop.f32.mrf.mxu0
    %v5428 = vadd.f32 0.0, %v5427
    %v5429 = vpop.f32.mrf.mxu0
    %5430 = vmatprep.mubr.f32.mxu0 0.0
    %5431 = vmatmul.mubr.f32.gmra.mxu0 %v3509
    %v5432 = vpop.f32.mrf.mxu0
    %v5433 = vadd.f32 0.0, %v5432
    %v5434 = vpop.f32.mrf.mxu0
    %5435 = vmatprep.mubr.f32.mxu0 0.0
    %5436 = vmatmul.mubr.f32.gmra.mxu0 %v3512
    %v5437 = vpop.f32.mrf.mxu0
    %v5438 = vadd.f32 0.0, %v5437
    %v5439 = vpop.f32.mrf.mxu0
    %5440 = vdwg.mxu0
    %s5441 = scalar_lea.vmem %s7, 128
    %v5442 = vld [vmem:[%s5441] sm:$0xff]
    %v5443 = vld [vmem:[%s5441 + $0x8] sm:$0xff]
    %v5444 = vld [vmem:[%s5441 + $0x10] sm:$0xff]
    %v5445 = vld [vmem:[%s5441 + $0x18] sm:$0xff]
    %v5446 = vld [vmem:[%s5441 + $0x20] sm:$0xff]
    %v5447 = vld [vmem:[%s5441 + $0x28] sm:$0xff]
    %v5448 = vld [vmem:[%s5441 + $0x30] sm:$0xff]
    %v5449 = vld [vmem:[%s5441 + $0x38] sm:$0xff]
    %v5450 = vld [vmem:[%s5441 + $0x40] sm:$0xff]
    %v5451 = vld [vmem:[%s5441 + $0x48] sm:$0xff]
    %v5452 = vld [vmem:[%s5441 + $0x50] sm:$0xff]
    %v5453 = vld [vmem:[%s5441 + $0x58] sm:$0xff]
    %v5454 = vld [vmem:[%s5441 + $0x60] sm:$0xff]
    %v5455 = vld [vmem:[%s5441 + $0x68] sm:$0xff]
    %v5456 = vld [vmem:[%s5441 + $0x70] sm:$0xff]
    %v5457 = vld [vmem:[%s5441 + $0x78] sm:$0xff]
    %5458 = vmatprep.subr.mxu0 0.0
    %5459 = vmatpush1.msra.mxu0 %v5457
    %5460 = vmatprep.subr.mxu0 0.0
    %5461 = vmatpush1.msra.mxu0 %v5456
    %5462 = vmatprep.subr.mxu0 0.0
    %5463 = vmatpush1.msra.mxu0 %v5455
    %5464 = vmatprep.subr.mxu0 0.0
    %5465 = vmatpush1.msra.mxu0 %v5454
    %5466 = vmatprep.subr.mxu0 0.0
    %5467 = vmatpush1.msra.mxu0 %v5453
    %5468 = vmatprep.subr.mxu0 0.0
    %5469 = vmatpush1.msra.mxu0 %v5452
    %5470 = vmatprep.subr.mxu0 0.0
    %5471 = vmatpush1.msra.mxu0 %v5451
    %5472 = vmatprep.subr.mxu0 0.0
    %5473 = vmatpush1.msra.mxu0 %v5450
    %5474 = vmatprep.subr.mxu0 0.0
    %5475 = vmatpush1.msra.mxu0 %v5449
    %5476 = vmatprep.subr.mxu0 0.0
    %5477 = vmatpush1.msra.mxu0 %v5448
    %5478 = vmatprep.subr.mxu0 0.0
    %5479 = vmatpush1.msra.mxu0 %v5447
    %5480 = vmatprep.subr.mxu0 0.0
    %5481 = vmatpush1.msra.mxu0 %v5446
    %5482 = vmatprep.subr.mxu0 0.0
    %5483 = vmatpush1.msra.mxu0 %v5445
    %5484 = vmatprep.subr.mxu0 0.0
    %5485 = vmatpush1.msra.mxu0 %v5444
    %5486 = vmatprep.subr.mxu0 0.0
    %5487 = vmatpush1.msra.mxu0 %v5443
    %5488 = vmatprep.subr.mxu0 0.0
    %5489 = vmatpush1.msra.mxu0 %v5442
    %5490 = vmatprep.subr.mxu0 0.0
    %5491 = vmatpush2.msra.mxu0 0.0
    %5492 = vmatprep.subr.mxu0 0.0
    %5493 = vmatpush2.msra.mxu0 0.0
    %5494 = vmatprep.subr.mxu0 0.0
    %5495 = vmatpush2.msra.mxu0 0.0
    %5496 = vmatprep.subr.mxu0 0.0
    %5497 = vmatpush2.msra.mxu0 0.0
    %5498 = vmatprep.subr.mxu0 0.0
    %5499 = vmatpush2.msra.mxu0 0.0
    %5500 = vmatprep.subr.mxu0 0.0
    %5501 = vmatpush2.msra.mxu0 0.0
    %5502 = vmatprep.subr.mxu0 0.0
    %5503 = vmatpush2.msra.mxu0 0.0
    %5504 = vmatprep.subr.mxu0 0.0
    %5505 = vmatpush2.msra.mxu0 0.0
    %5506 = vmatprep.subr.mxu0 0.0
    %5507 = vmatpush2.msra.mxu0 0.0
    %5508 = vmatprep.subr.mxu0 0.0
    %5509 = vmatpush2.msra.mxu0 0.0
    %5510 = vmatprep.subr.mxu0 0.0
    %5511 = vmatpush2.msra.mxu0 0.0
    %5512 = vmatprep.subr.mxu0 0.0
    %5513 = vmatpush2.msra.mxu0 0.0
    %5514 = vmatprep.subr.mxu0 0.0
    %5515 = vmatpush2.msra.mxu0 0.0
    %5516 = vmatprep.subr.mxu0 0.0
    %5517 = vmatpush2.msra.mxu0 0.0
    %5518 = vmatprep.subr.mxu0 0.0
    %5519 = vmatpush2.msra.mxu0 0.0
    %5520 = vmatprep.subr.mxu0 0.0
    %5521 = vmatpush2.msra.mxu0 0.0
    %5522 = vmatprep.mubr.f32.mxu0 0.0
    %5523 = vmatmul.mubr.f32.gmra.mxu0 %v5423
    %v5524 = vpop.f32.mrf.mxu0
    %v5525 = vadd.f32 0.0, %v5524
    %v5526 = vpop.f32.mrf.mxu0
    %5527 = vmatprep.mubr.f32.mxu0 0.0
    %5528 = vmatmul.mubr.f32.gmra.mxu0 %v5428
    %v5529 = vpop.f32.mrf.mxu0
    %v5530 = vadd.f32 0.0, %v5529
    %v5531 = vpop.f32.mrf.mxu0
    %5532 = vmatprep.mubr.f32.mxu0 0.0
    %5533 = vmatmul.mubr.f32.gmra.mxu0 %v5433
    %v5534 = vpop.f32.mrf.mxu0
    %v5535 = vadd.f32 0.0, %v5534
    %v5536 = vpop.f32.mrf.mxu0
    %5537 = vmatprep.mubr.f32.mxu0 0.0
    %5538 = vmatmul.mubr.f32.gmra.mxu0 %v5438
    %v5539 = vpop.f32.mrf.mxu0
    %v5540 = vadd.f32 0.0, %v5539
    %v5541 = vpop.f32.mrf.mxu0
    %5542 = vdwg.mxu0
    %5543 = vmatprep.subr.mxu0 0.0
    %5544 = vmatpush1.msra.mxu0 %v5355
    %5545 = vmatprep.subr.mxu0 0.0
    %5546 = vmatpush1.msra.mxu0 %v5354
    %5547 = vmatprep.subr.mxu0 0.0
    %5548 = vmatpush1.msra.mxu0 %v5353
    %5549 = vmatprep.subr.mxu0 0.0
    %5550 = vmatpush1.msra.mxu0 %v5352
    %5551 = vmatprep.subr.mxu0 0.0
    %5552 = vmatpush1.msra.mxu0 %v5351
    %5553 = vmatprep.subr.mxu0 0.0
    %5554 = vmatpush1.msra.mxu0 %v5350
    %5555 = vmatprep.subr.mxu0 0.0
    %5556 = vmatpush1.msra.mxu0 %v5349
    %5557 = vmatprep.subr.mxu0 0.0
    %5558 = vmatpush1.msra.mxu0 %v5348
    %5559 = vmatprep.subr.mxu0 0.0
    %5560 = vmatpush1.msra.mxu0 %v5347
    %5561 = vmatprep.subr.mxu0 0.0
    %5562 = vmatpush1.msra.mxu0 %v5346
    %5563 = vmatprep.subr.mxu0 0.0
    %5564 = vmatpush1.msra.mxu0 %v5345
    %5565 = vmatprep.subr.mxu0 0.0
    %5566 = vmatpush1.msra.mxu0 %v5344
    %5567 = vmatprep.subr.mxu0 0.0
    %5568 = vmatpush1.msra.mxu0 %v5343
    %5569 = vmatprep.subr.mxu0 0.0
    %5570 = vmatpush1.msra.mxu0 %v5342
    %5571 = vmatprep.subr.mxu0 0.0
    %5572 = vmatpush1.msra.mxu0 %v5341
    %5573 = vmatprep.subr.mxu0 0.0
    %5574 = vmatpush1.msra.mxu0 %v5340
    %5575 = vmatprep.subr.mxu0 0.0
    %5576 = vmatpush2.msra.mxu0 0.0
    %5577 = vmatprep.subr.mxu0 0.0
    %5578 = vmatpush2.msra.mxu0 0.0
    %5579 = vmatprep.subr.mxu0 0.0
    %5580 = vmatpush2.msra.mxu0 0.0
    %5581 = vmatprep.subr.mxu0 0.0
    %5582 = vmatpush2.msra.mxu0 0.0
    %5583 = vmatprep.subr.mxu0 0.0
    %5584 = vmatpush2.msra.mxu0 0.0
    %5585 = vmatprep.subr.mxu0 0.0
    %5586 = vmatpush2.msra.mxu0 0.0
    %5587 = vmatprep.subr.mxu0 0.0
    %5588 = vmatpush2.msra.mxu0 0.0
    %5589 = vmatprep.subr.mxu0 0.0
    %5590 = vmatpush2.msra.mxu0 0.0
    %5591 = vmatprep.subr.mxu0 0.0
    %5592 = vmatpush2.msra.mxu0 0.0
    %5593 = vmatprep.subr.mxu0 0.0
    %5594 = vmatpush2.msra.mxu0 0.0
    %5595 = vmatprep.subr.mxu0 0.0
    %5596 = vmatpush2.msra.mxu0 0.0
    %5597 = vmatprep.subr.mxu0 0.0
    %5598 = vmatpush2.msra.mxu0 0.0
    %5599 = vmatprep.subr.mxu0 0.0
    %5600 = vmatpush2.msra.mxu0 0.0
    %5601 = vmatprep.subr.mxu0 0.0
    %5602 = vmatpush2.msra.mxu0 0.0
    %5603 = vmatprep.subr.mxu0 0.0
    %5604 = vmatpush2.msra.mxu0 0.0
    %5605 = vmatprep.subr.mxu0 0.0
    %5606 = vmatpush2.msra.mxu0 0.0
    %5607 = vmatprep.mubr.f32.mxu0 0.0
    %5608 = vmatmul.mubr.f32.gmra.mxu0 %v5322
    %v5609 = vpop.f32.mrf.mxu0
    %v5610 = vadd.f32 %v5525, %v5609
    %v5611 = vpop.f32.mrf.mxu0
    %5612 = vmatprep.mubr.f32.mxu0 0.0
    %5613 = vmatmul.mubr.f32.gmra.mxu0 %v5327
    %v5614 = vpop.f32.mrf.mxu0
    %v5615 = vadd.f32 %v5530, %v5614
    %v5616 = vpop.f32.mrf.mxu0
    %5617 = vmatprep.mubr.f32.mxu0 0.0
    %5618 = vmatmul.mubr.f32.gmra.mxu0 %v5332
    %v5619 = vpop.f32.mrf.mxu0
    %v5620 = vadd.f32 %v5535, %v5619
    %v5621 = vpop.f32.mrf.mxu0
    %5622 = vmatprep.mubr.f32.mxu0 0.0
    %5623 = vmatmul.mubr.f32.gmra.mxu0 %v5337
    %v5624 = vpop.f32.mrf.mxu0
    %v5625 = vadd.f32 %v5540, %v5624
    %v5626 = vpop.f32.mrf.mxu0
    %5627 = vdwg.mxu0
    %5628 = vmatprep.subr.mxu0 0.0
    %5629 = vmatpush1.msra.mxu0 0.0
    %5630 = vmatprep.subr.mxu0 0.0
    %5631 = vmatpush1.msra.mxu0 0.0
    %5632 = vmatprep.subr.mxu0 0.0
    %5633 = vmatpush1.msra.mxu0 0.0
    %5634 = vmatprep.subr.mxu0 0.0
    %5635 = vmatpush1.msra.mxu0 0.0
    %5636 = vmatprep.subr.mxu0 0.0
    %5637 = vmatpush1.msra.mxu0 0.0
    %5638 = vmatprep.subr.mxu0 0.0
    %5639 = vmatpush1.msra.mxu0 0.0
    %5640 = vmatprep.subr.mxu0 0.0
    %5641 = vmatpush1.msra.mxu0 0.0
    %5642 = vmatprep.subr.mxu0 0.0
    %5643 = vmatpush1.msra.mxu0 0.0
    %5644 = vmatprep.subr.mxu0 0.0
    %5645 = vmatpush1.msra.mxu0 0.0
    %5646 = vmatprep.subr.mxu0 0.0
    %5647 = vmatpush1.msra.mxu0 0.0
    %5648 = vmatprep.subr.mxu0 0.0
    %5649 = vmatpush1.msra.mxu0 0.0
    %5650 = vmatprep.subr.mxu0 0.0
    %5651 = vmatpush1.msra.mxu0 0.0
    %5652 = vmatprep.subr.mxu0 0.0
    %5653 = vmatpush1.msra.mxu0 %v5254
    %5654 = vmatprep.subr.mxu0 0.0
    %5655 = vmatpush1.msra.mxu0 %v5253
    %5656 = vmatprep.subr.mxu0 0.0
    %5657 = vmatpush1.msra.mxu0 %v5252
    %5658 = vmatprep.subr.mxu0 0.0
    %5659 = vmatpush1.msra.mxu0 %v5251
    %5660 = vmatprep.subr.mxu0 0.0
    %5661 = vmatpush2.msra.mxu0 0.0
    %5662 = vmatprep.subr.mxu0 0.0
    %5663 = vmatpush2.msra.mxu0 0.0
    %5664 = vmatprep.subr.mxu0 0.0
    %5665 = vmatpush2.msra.mxu0 0.0
    %5666 = vmatprep.subr.mxu0 0.0
    %5667 = vmatpush2.msra.mxu0 0.0
    %5668 = vmatprep.subr.mxu0 0.0
    %5669 = vmatpush2.msra.mxu0 0.0
    %5670 = vmatprep.subr.mxu0 0.0
    %5671 = vmatpush2.msra.mxu0 0.0
    %5672 = vmatprep.subr.mxu0 0.0
    %5673 = vmatpush2.msra.mxu0 0.0
    %5674 = vmatprep.subr.mxu0 0.0
    %5675 = vmatpush2.msra.mxu0 0.0
    %5676 = vmatprep.subr.mxu0 0.0
    %5677 = vmatpush2.msra.mxu0 0.0
    %5678 = vmatprep.subr.mxu0 0.0
    %5679 = vmatpush2.msra.mxu0 0.0
    %5680 = vmatprep.subr.mxu0 0.0
    %5681 = vmatpush2.msra.mxu0 0.0
    %5682 = vmatprep.subr.mxu0 0.0
    %5683 = vmatpush2.msra.mxu0 0.0
    %5684 = vmatprep.subr.mxu0 0.0
    %5685 = vmatpush2.msra.mxu0 0.0
    %5686 = vmatprep.subr.mxu0 0.0
    %5687 = vmatpush2.msra.mxu0 0.0
    %5688 = vmatprep.subr.mxu0 0.0
    %5689 = vmatpush2.msra.mxu0 0.0
    %5690 = vmatprep.subr.mxu0 0.0
    %5691 = vmatpush2.msra.mxu0 0.0
    %5692 = vmatprep.mubr.f32.mxu0 0.0
    %5693 = vmatmul.mubr.f32.gmra.mxu0 %v3792
    %v5694 = vpop.f32.mrf.mxu0
    %v5695 = vadd.f32 0.0, %v5694
    %v5696 = vpop.f32.mrf.mxu0
    %5697 = vmatprep.mubr.f32.mxu0 0.0
    %5698 = vmatmul.mubr.f32.gmra.mxu0 %v3795
    %v5699 = vpop.f32.mrf.mxu0
    %v5700 = vadd.f32 0.0, %v5699
    %v5701 = vpop.f32.mrf.mxu0
    %5702 = vmatprep.mubr.f32.mxu0 0.0
    %5703 = vmatmul.mubr.f32.gmra.mxu0 %v3798
    %v5704 = vpop.f32.mrf.mxu0
    %v5705 = vadd.f32 0.0, %v5704
    %v5706 = vpop.f32.mrf.mxu0
    %5707 = vmatprep.mubr.f32.mxu0 0.0
    %5708 = vmatmul.mubr.f32.gmra.mxu0 %v3801
    %v5709 = vpop.f32.mrf.mxu0
    %v5710 = vadd.f32 0.0, %v5709
    %v5711 = vpop.f32.mrf.mxu0
    %5712 = vdwg.mxu0
    %s5713 = scalar_lea.vmem %s7, 256
    %v5714 = vld [vmem:[%s5713] sm:$0xff]
    %v5715 = vld [vmem:[%s5713 + $0x8] sm:$0xff]
    %v5716 = vld [vmem:[%s5713 + $0x10] sm:$0xff]
    %v5717 = vld [vmem:[%s5713 + $0x18] sm:$0xff]
    %v5718 = vld [vmem:[%s5713 + $0x20] sm:$0xff]
    %v5719 = vld [vmem:[%s5713 + $0x28] sm:$0xff]
    %v5720 = vld [vmem:[%s5713 + $0x30] sm:$0xff]
    %v5721 = vld [vmem:[%s5713 + $0x38] sm:$0xff]
    %v5722 = vld [vmem:[%s5713 + $0x40] sm:$0xff]
    %v5723 = vld [vmem:[%s5713 + $0x48] sm:$0xff]
    %v5724 = vld [vmem:[%s5713 + $0x50] sm:$0xff]
    %v5725 = vld [vmem:[%s5713 + $0x58] sm:$0xff]
    %v5726 = vld [vmem:[%s5713 + $0x60] sm:$0xff]
    %v5727 = vld [vmem:[%s5713 + $0x68] sm:$0xff]
    %v5728 = vld [vmem:[%s5713 + $0x70] sm:$0xff]
    %v5729 = vld [vmem:[%s5713 + $0x78] sm:$0xff]
    %5730 = vmatprep.subr.mxu0 0.0
    %5731 = vmatpush1.msra.mxu0 %v5729
    %5732 = vmatprep.subr.mxu0 0.0
    %5733 = vmatpush1.msra.mxu0 %v5728
    %5734 = vmatprep.subr.mxu0 0.0
    %5735 = vmatpush1.msra.mxu0 %v5727
    %5736 = vmatprep.subr.mxu0 0.0
    %5737 = vmatpush1.msra.mxu0 %v5726
    %5738 = vmatprep.subr.mxu0 0.0
    %5739 = vmatpush1.msra.mxu0 %v5725
    %5740 = vmatprep.subr.mxu0 0.0
    %5741 = vmatpush1.msra.mxu0 %v5724
    %5742 = vmatprep.subr.mxu0 0.0
    %5743 = vmatpush1.msra.mxu0 %v5723
    %5744 = vmatprep.subr.mxu0 0.0
    %5745 = vmatpush1.msra.mxu0 %v5722
    %5746 = vmatprep.subr.mxu0 0.0
    %5747 = vmatpush1.msra.mxu0 %v5721
    %5748 = vmatprep.subr.mxu0 0.0
    %5749 = vmatpush1.msra.mxu0 %v5720
    %5750 = vmatprep.subr.mxu0 0.0
    %5751 = vmatpush1.msra.mxu0 %v5719
    %5752 = vmatprep.subr.mxu0 0.0
    %5753 = vmatpush1.msra.mxu0 %v5718
    %5754 = vmatprep.subr.mxu0 0.0
    %5755 = vmatpush1.msra.mxu0 %v5717
    %5756 = vmatprep.subr.mxu0 0.0
    %5757 = vmatpush1.msra.mxu0 %v5716
    %5758 = vmatprep.subr.mxu0 0.0
    %5759 = vmatpush1.msra.mxu0 %v5715
    %5760 = vmatprep.subr.mxu0 0.0
    %5761 = vmatpush1.msra.mxu0 %v5714
    %5762 = vmatprep.subr.mxu0 0.0
    %5763 = vmatpush2.msra.mxu0 0.0
    %5764 = vmatprep.subr.mxu0 0.0
    %5765 = vmatpush2.msra.mxu0 0.0
    %5766 = vmatprep.subr.mxu0 0.0
    %5767 = vmatpush2.msra.mxu0 0.0
    %5768 = vmatprep.subr.mxu0 0.0
    %5769 = vmatpush2.msra.mxu0 0.0
    %5770 = vmatprep.subr.mxu0 0.0
    %5771 = vmatpush2.msra.mxu0 0.0
    %5772 = vmatprep.subr.mxu0 0.0
    %5773 = vmatpush2.msra.mxu0 0.0
    %5774 = vmatprep.subr.mxu0 0.0
    %5775 = vmatpush2.msra.mxu0 0.0
    %5776 = vmatprep.subr.mxu0 0.0
    %5777 = vmatpush2.msra.mxu0 0.0
    %5778 = vmatprep.subr.mxu0 0.0
    %5779 = vmatpush2.msra.mxu0 0.0
    %5780 = vmatprep.subr.mxu0 0.0
    %5781 = vmatpush2.msra.mxu0 0.0
    %5782 = vmatprep.subr.mxu0 0.0
    %5783 = vmatpush2.msra.mxu0 0.0
    %5784 = vmatprep.subr.mxu0 0.0
    %5785 = vmatpush2.msra.mxu0 0.0
    %5786 = vmatprep.subr.mxu0 0.0
    %5787 = vmatpush2.msra.mxu0 0.0
    %5788 = vmatprep.subr.mxu0 0.0
    %5789 = vmatpush2.msra.mxu0 0.0
    %5790 = vmatprep.subr.mxu0 0.0
    %5791 = vmatpush2.msra.mxu0 0.0
    %5792 = vmatprep.subr.mxu0 0.0
    %5793 = vmatpush2.msra.mxu0 0.0
    %5794 = vmatprep.mubr.f32.mxu0 0.0
    %5795 = vmatmul.mubr.f32.gmra.mxu0 %v5695
    %v5796 = vpop.f32.mrf.mxu0
    %v5797 = vadd.f32 0.0, %v5796
    %v5798 = vpop.f32.mrf.mxu0
    %5799 = vmatprep.mubr.f32.mxu0 0.0
    %5800 = vmatmul.mubr.f32.gmra.mxu0 %v5700
    %v5801 = vpop.f32.mrf.mxu0
    %v5802 = vadd.f32 0.0, %v5801
    %v5803 = vpop.f32.mrf.mxu0
    %5804 = vmatprep.mubr.f32.mxu0 0.0
    %5805 = vmatmul.mubr.f32.gmra.mxu0 %v5705
    %v5806 = vpop.f32.mrf.mxu0
    %v5807 = vadd.f32 0.0, %v5806
    %v5808 = vpop.f32.mrf.mxu0
    %5809 = vmatprep.mubr.f32.mxu0 0.0
    %5810 = vmatmul.mubr.f32.gmra.mxu0 %v5710
    %v5811 = vpop.f32.mrf.mxu0
    %v5812 = vadd.f32 0.0, %v5811
    %v5813 = vpop.f32.mrf.mxu0
    %5814 = vdwg.mxu0
    %v5815 = vadd.f32 %v5610, %v5797
    %v5816 = vadd.f32 %v5615, %v5802
    %v5817 = vadd.f32 %v5620, %v5807
    %v5818 = vadd.f32 %v5625, %v5812
    %5819 = vmatprep.subr.mxu0 0.0
    %5820 = vmatpush1.msra.mxu0 0.0
    %5821 = vmatprep.subr.mxu0 0.0
    %5822 = vmatpush1.msra.mxu0 0.0
    %5823 = vmatprep.subr.mxu0 0.0
    %5824 = vmatpush1.msra.mxu0 0.0
    %5825 = vmatprep.subr.mxu0 0.0
    %5826 = vmatpush1.msra.mxu0 0.0
    %5827 = vmatprep.subr.mxu0 0.0
    %5828 = vmatpush1.msra.mxu0 0.0
    %5829 = vmatprep.subr.mxu0 0.0
    %5830 = vmatpush1.msra.mxu0 0.0
    %5831 = vmatprep.subr.mxu0 0.0
    %5832 = vmatpush1.msra.mxu0 0.0
    %5833 = vmatprep.subr.mxu0 0.0
    %5834 = vmatpush1.msra.mxu0 0.0
    %5835 = vmatprep.subr.mxu0 0.0
    %5836 = vmatpush1.msra.mxu0 0.0
    %5837 = vmatprep.subr.mxu0 0.0
    %5838 = vmatpush1.msra.mxu0 0.0
    %5839 = vmatprep.subr.mxu0 0.0
    %5840 = vmatpush1.msra.mxu0 0.0
    %5841 = vmatprep.subr.mxu0 0.0
    %5842 = vmatpush1.msra.mxu0 0.0
    %5843 = vmatprep.subr.mxu0 0.0
    %5844 = vmatpush1.msra.mxu0 %v5254
    %5845 = vmatprep.subr.mxu0 0.0
    %5846 = vmatpush1.msra.mxu0 %v5253
    %5847 = vmatprep.subr.mxu0 0.0
    %5848 = vmatpush1.msra.mxu0 %v5252
    %5849 = vmatprep.subr.mxu0 0.0
    %5850 = vmatpush1.msra.mxu0 %v5251
    %5851 = vmatprep.subr.mxu0 0.0
    %5852 = vmatpush2.msra.mxu0 0.0
    %5853 = vmatprep.subr.mxu0 0.0
    %5854 = vmatpush2.msra.mxu0 0.0
    %5855 = vmatprep.subr.mxu0 0.0
    %5856 = vmatpush2.msra.mxu0 0.0
    %5857 = vmatprep.subr.mxu0 0.0
    %5858 = vmatpush2.msra.mxu0 0.0
    %5859 = vmatprep.subr.mxu0 0.0
    %5860 = vmatpush2.msra.mxu0 0.0
    %5861 = vmatprep.subr.mxu0 0.0
    %5862 = vmatpush2.msra.mxu0 0.0
    %5863 = vmatprep.subr.mxu0 0.0
    %5864 = vmatpush2.msra.mxu0 0.0
    %5865 = vmatprep.subr.mxu0 0.0
    %5866 = vmatpush2.msra.mxu0 0.0
    %5867 = vmatprep.subr.mxu0 0.0
    %5868 = vmatpush2.msra.mxu0 0.0
    %5869 = vmatprep.subr.mxu0 0.0
    %5870 = vmatpush2.msra.mxu0 0.0
    %5871 = vmatprep.subr.mxu0 0.0
    %5872 = vmatpush2.msra.mxu0 0.0
    %5873 = vmatprep.subr.mxu0 0.0
    %5874 = vmatpush2.msra.mxu0 0.0
    %5875 = vmatprep.subr.mxu0 0.0
    %5876 = vmatpush2.msra.mxu0 0.0
    %5877 = vmatprep.subr.mxu0 0.0
    %5878 = vmatpush2.msra.mxu0 0.0
    %5879 = vmatprep.subr.mxu0 0.0
    %5880 = vmatpush2.msra.mxu0 0.0
    %5881 = vmatprep.subr.mxu0 0.0
    %5882 = vmatpush2.msra.mxu0 0.0
    %5883 = vmatprep.mubr.f32.mxu0 0.0
    %5884 = vmatmul.mubr.f32.gmra.mxu0 %v4000
    %v5885 = vpop.f32.mrf.mxu0
    %v5886 = vadd.f32 0.0, %v5885
    %v5887 = vpop.f32.mrf.mxu0
    %5888 = vmatprep.mubr.f32.mxu0 0.0
    %5889 = vmatmul.mubr.f32.gmra.mxu0 %v4003
    %v5890 = vpop.f32.mrf.mxu0
    %v5891 = vadd.f32 0.0, %v5890
    %v5892 = vpop.f32.mrf.mxu0
    %5893 = vmatprep.mubr.f32.mxu0 0.0
    %5894 = vmatmul.mubr.f32.gmra.mxu0 %v4006
    %v5895 = vpop.f32.mrf.mxu0
    %v5896 = vadd.f32 0.0, %v5895
    %v5897 = vpop.f32.mrf.mxu0
    %5898 = vmatprep.mubr.f32.mxu0 0.0
    %5899 = vmatmul.mubr.f32.gmra.mxu0 %v4009
    %v5900 = vpop.f32.mrf.mxu0
    %v5901 = vadd.f32 0.0, %v5900
    %v5902 = vpop.f32.mrf.mxu0
    %5903 = vdwg.mxu0
    %s5904 = scalar_lea.vmem %s7, 384
    %v5905 = vld [vmem:[%s5904] sm:$0xff]
    %v5906 = vld [vmem:[%s5904 + $0x8] sm:$0xff]
    %v5907 = vld [vmem:[%s5904 + $0x10] sm:$0xff]
    %v5908 = vld [vmem:[%s5904 + $0x18] sm:$0xff]
    %v5909 = vld [vmem:[%s5904 + $0x20] sm:$0xff]
    %v5910 = vld [vmem:[%s5904 + $0x28] sm:$0xff]
    %v5911 = vld [vmem:[%s5904 + $0x30] sm:$0xff]
    %v5912 = vld [vmem:[%s5904 + $0x38] sm:$0xff]
    %v5913 = vld [vmem:[%s5904 + $0x40] sm:$0xff]
    %v5914 = vld [vmem:[%s5904 + $0x48] sm:$0xff]
    %v5915 = vld [vmem:[%s5904 + $0x50] sm:$0xff]
    %v5916 = vld [vmem:[%s5904 + $0x58] sm:$0xff]
    %v5917 = vld [vmem:[%s5904 + $0x60] sm:$0xff]
    %v5918 = vld [vmem:[%s5904 + $0x68] sm:$0xff]
    %v5919 = vld [vmem:[%s5904 + $0x70] sm:$0xff]
    %v5920 = vld [vmem:[%s5904 + $0x78] sm:$0xff]
    %5921 = vmatprep.subr.mxu0 0.0
    %5922 = vmatpush1.msra.mxu0 %v5920
    %5923 = vmatprep.subr.mxu0 0.0
    %5924 = vmatpush1.msra.mxu0 %v5919
    %5925 = vmatprep.subr.mxu0 0.0
    %5926 = vmatpush1.msra.mxu0 %v5918
    %5927 = vmatprep.subr.mxu0 0.0
    %5928 = vmatpush1.msra.mxu0 %v5917
    %5929 = vmatprep.subr.mxu0 0.0
    %5930 = vmatpush1.msra.mxu0 %v5916
    %5931 = vmatprep.subr.mxu0 0.0
    %5932 = vmatpush1.msra.mxu0 %v5915
    %5933 = vmatprep.subr.mxu0 0.0
    %5934 = vmatpush1.msra.mxu0 %v5914
    %5935 = vmatprep.subr.mxu0 0.0
    %5936 = vmatpush1.msra.mxu0 %v5913
    %5937 = vmatprep.subr.mxu0 0.0
    %5938 = vmatpush1.msra.mxu0 %v5912
    %5939 = vmatprep.subr.mxu0 0.0
    %5940 = vmatpush1.msra.mxu0 %v5911
    %5941 = vmatprep.subr.mxu0 0.0
    %5942 = vmatpush1.msra.mxu0 %v5910
    %5943 = vmatprep.subr.mxu0 0.0
    %5944 = vmatpush1.msra.mxu0 %v5909
    %5945 = vmatprep.subr.mxu0 0.0
    %5946 = vmatpush1.msra.mxu0 %v5908
    %5947 = vmatprep.subr.mxu0 0.0
    %5948 = vmatpush1.msra.mxu0 %v5907
    %5949 = vmatprep.subr.mxu0 0.0
    %5950 = vmatpush1.msra.mxu0 %v5906
    %5951 = vmatprep.subr.mxu0 0.0
    %5952 = vmatpush1.msra.mxu0 %v5905
    %5953 = vmatprep.subr.mxu0 0.0
    %5954 = vmatpush2.msra.mxu0 0.0
    %5955 = vmatprep.subr.mxu0 0.0
    %5956 = vmatpush2.msra.mxu0 0.0
    %5957 = vmatprep.subr.mxu0 0.0
    %5958 = vmatpush2.msra.mxu0 0.0
    %5959 = vmatprep.subr.mxu0 0.0
    %5960 = vmatpush2.msra.mxu0 0.0
    %5961 = vmatprep.subr.mxu0 0.0
    %5962 = vmatpush2.msra.mxu0 0.0
    %5963 = vmatprep.subr.mxu0 0.0
    %5964 = vmatpush2.msra.mxu0 0.0
    %5965 = vmatprep.subr.mxu0 0.0
    %5966 = vmatpush2.msra.mxu0 0.0
    %5967 = vmatprep.subr.mxu0 0.0
    %5968 = vmatpush2.msra.mxu0 0.0
    %5969 = vmatprep.subr.mxu0 0.0
    %5970 = vmatpush2.msra.mxu0 0.0
    %5971 = vmatprep.subr.mxu0 0.0
    %5972 = vmatpush2.msra.mxu0 0.0
    %5973 = vmatprep.subr.mxu0 0.0
    %5974 = vmatpush2.msra.mxu0 0.0
    %5975 = vmatprep.subr.mxu0 0.0
    %5976 = vmatpush2.msra.mxu0 0.0
    %5977 = vmatprep.subr.mxu0 0.0
    %5978 = vmatpush2.msra.mxu0 0.0
    %5979 = vmatprep.subr.mxu0 0.0
    %5980 = vmatpush2.msra.mxu0 0.0
    %5981 = vmatprep.subr.mxu0 0.0
    %5982 = vmatpush2.msra.mxu0 0.0
    %5983 = vmatprep.subr.mxu0 0.0
    %5984 = vmatpush2.msra.mxu0 0.0
    %5985 = vmatprep.mubr.f32.mxu0 0.0
    %5986 = vmatmul.mubr.f32.gmra.mxu0 %v5886
    %v5987 = vpop.f32.mrf.mxu0
    %v5988 = vadd.f32 0.0, %v5987
    %v5989 = vpop.f32.mrf.mxu0
    %5990 = vmatprep.mubr.f32.mxu0 0.0
    %5991 = vmatmul.mubr.f32.gmra.mxu0 %v5891
    %v5992 = vpop.f32.mrf.mxu0
    %v5993 = vadd.f32 0.0, %v5992
    %v5994 = vpop.f32.mrf.mxu0
    %5995 = vmatprep.mubr.f32.mxu0 0.0
    %5996 = vmatmul.mubr.f32.gmra.mxu0 %v5896
    %v5997 = vpop.f32.mrf.mxu0
    %v5998 = vadd.f32 0.0, %v5997
    %v5999 = vpop.f32.mrf.mxu0
    %6000 = vmatprep.mubr.f32.mxu0 0.0
    %6001 = vmatmul.mubr.f32.gmra.mxu0 %v5901
    %v6002 = vpop.f32.mrf.mxu0
    %v6003 = vadd.f32 0.0, %v6002
    %v6004 = vpop.f32.mrf.mxu0
    %6005 = vdwg.mxu0
    %v6006 = vadd.f32 %v5815, %v5988
    %v6007 = vadd.f32 %v5816, %v5993
    %v6008 = vadd.f32 %v5817, %v5998
    %v6009 = vadd.f32 %v5818, %v6003
    %6010 = vmatprep.subr.mxu0 0.0
    %6011 = vmatpush1.msra.mxu0 0.0
    %6012 = vmatprep.subr.mxu0 0.0
    %6013 = vmatpush1.msra.mxu0 0.0
    %6014 = vmatprep.subr.mxu0 0.0
    %6015 = vmatpush1.msra.mxu0 0.0
    %6016 = vmatprep.subr.mxu0 0.0
    %6017 = vmatpush1.msra.mxu0 0.0
    %6018 = vmatprep.subr.mxu0 0.0
    %6019 = vmatpush1.msra.mxu0 0.0
    %6020 = vmatprep.subr.mxu0 0.0
    %6021 = vmatpush1.msra.mxu0 0.0
    %6022 = vmatprep.subr.mxu0 0.0
    %6023 = vmatpush1.msra.mxu0 0.0
    %6024 = vmatprep.subr.mxu0 0.0
    %6025 = vmatpush1.msra.mxu0 0.0
    %6026 = vmatprep.subr.mxu0 0.0
    %6027 = vmatpush1.msra.mxu0 0.0
    %6028 = vmatprep.subr.mxu0 0.0
    %6029 = vmatpush1.msra.mxu0 0.0
    %6030 = vmatprep.subr.mxu0 0.0
    %6031 = vmatpush1.msra.mxu0 0.0
    %6032 = vmatprep.subr.mxu0 0.0
    %6033 = vmatpush1.msra.mxu0 0.0
    %6034 = vmatprep.subr.mxu0 0.0
    %6035 = vmatpush1.msra.mxu0 %v5254
    %6036 = vmatprep.subr.mxu0 0.0
    %6037 = vmatpush1.msra.mxu0 %v5253
    %6038 = vmatprep.subr.mxu0 0.0
    %6039 = vmatpush1.msra.mxu0 %v5252
    %6040 = vmatprep.subr.mxu0 0.0
    %6041 = vmatpush1.msra.mxu0 %v5251
    %6042 = vmatprep.subr.mxu0 0.0
    %6043 = vmatpush2.msra.mxu0 0.0
    %6044 = vmatprep.subr.mxu0 0.0
    %6045 = vmatpush2.msra.mxu0 0.0
    %6046 = vmatprep.subr.mxu0 0.0
    %6047 = vmatpush2.msra.mxu0 0.0
    %6048 = vmatprep.subr.mxu0 0.0
    %6049 = vmatpush2.msra.mxu0 0.0
    %6050 = vmatprep.subr.mxu0 0.0
    %6051 = vmatpush2.msra.mxu0 0.0
    %6052 = vmatprep.subr.mxu0 0.0
    %6053 = vmatpush2.msra.mxu0 0.0
    %6054 = vmatprep.subr.mxu0 0.0
    %6055 = vmatpush2.msra.mxu0 0.0
    %6056 = vmatprep.subr.mxu0 0.0
    %6057 = vmatpush2.msra.mxu0 0.0
    %6058 = vmatprep.subr.mxu0 0.0
    %6059 = vmatpush2.msra.mxu0 0.0
    %6060 = vmatprep.subr.mxu0 0.0
    %6061 = vmatpush2.msra.mxu0 0.0
    %6062 = vmatprep.subr.mxu0 0.0
    %6063 = vmatpush2.msra.mxu0 0.0
    %6064 = vmatprep.subr.mxu0 0.0
    %6065 = vmatpush2.msra.mxu0 0.0
    %6066 = vmatprep.subr.mxu0 0.0
    %6067 = vmatpush2.msra.mxu0 0.0
    %6068 = vmatprep.subr.mxu0 0.0
    %6069 = vmatpush2.msra.mxu0 0.0
    %6070 = vmatprep.subr.mxu0 0.0
    %6071 = vmatpush2.msra.mxu0 0.0
    %6072 = vmatprep.subr.mxu0 0.0
    %6073 = vmatpush2.msra.mxu0 0.0
    %6074 = vmatprep.mubr.f32.mxu0 0.0
    %6075 = vmatmul.mubr.f32.gmra.mxu0 %v4208
    %v6076 = vpop.f32.mrf.mxu0
    %v6077 = vadd.f32 0.0, %v6076
    %v6078 = vpop.f32.mrf.mxu0
    %6079 = vmatprep.mubr.f32.mxu0 0.0
    %6080 = vmatmul.mubr.f32.gmra.mxu0 %v4211
    %v6081 = vpop.f32.mrf.mxu0
    %v6082 = vadd.f32 0.0, %v6081
    %v6083 = vpop.f32.mrf.mxu0
    %6084 = vmatprep.mubr.f32.mxu0 0.0
    %6085 = vmatmul.mubr.f32.gmra.mxu0 %v4214
    %v6086 = vpop.f32.mrf.mxu0
    %v6087 = vadd.f32 0.0, %v6086
    %v6088 = vpop.f32.mrf.mxu0
    %6089 = vmatprep.mubr.f32.mxu0 0.0
    %6090 = vmatmul.mubr.f32.gmra.mxu0 %v4217
    %v6091 = vpop.f32.mrf.mxu0
    %v6092 = vadd.f32 0.0, %v6091
    %v6093 = vpop.f32.mrf.mxu0
    %6094 = vdwg.mxu0
    %s6095 = scalar_lea.vmem %s7, 512
    %v6096 = vld [vmem:[%s6095] sm:$0xff]
    %v6097 = vld [vmem:[%s6095 + $0x8] sm:$0xff]
    %v6098 = vld [vmem:[%s6095 + $0x10] sm:$0xff]
    %v6099 = vld [vmem:[%s6095 + $0x18] sm:$0xff]
    %v6100 = vld [vmem:[%s6095 + $0x20] sm:$0xff]
    %v6101 = vld [vmem:[%s6095 + $0x28] sm:$0xff]
    %v6102 = vld [vmem:[%s6095 + $0x30] sm:$0xff]
    %v6103 = vld [vmem:[%s6095 + $0x38] sm:$0xff]
    %v6104 = vld [vmem:[%s6095 + $0x40] sm:$0xff]
    %v6105 = vld [vmem:[%s6095 + $0x48] sm:$0xff]
    %v6106 = vld [vmem:[%s6095 + $0x50] sm:$0xff]
    %v6107 = vld [vmem:[%s6095 + $0x58] sm:$0xff]
    %v6108 = vld [vmem:[%s6095 + $0x60] sm:$0xff]
    %v6109 = vld [vmem:[%s6095 + $0x68] sm:$0xff]
    %v6110 = vld [vmem:[%s6095 + $0x70] sm:$0xff]
    %v6111 = vld [vmem:[%s6095 + $0x78] sm:$0xff]
    %6112 = vmatprep.subr.mxu0 0.0
    %6113 = vmatpush1.msra.mxu0 %v6111
    %6114 = vmatprep.subr.mxu0 0.0
    %6115 = vmatpush1.msra.mxu0 %v6110
    %6116 = vmatprep.subr.mxu0 0.0
    %6117 = vmatpush1.msra.mxu0 %v6109
    %6118 = vmatprep.subr.mxu0 0.0
    %6119 = vmatpush1.msra.mxu0 %v6108
    %6120 = vmatprep.subr.mxu0 0.0
    %6121 = vmatpush1.msra.mxu0 %v6107
    %6122 = vmatprep.subr.mxu0 0.0
    %6123 = vmatpush1.msra.mxu0 %v6106
    %6124 = vmatprep.subr.mxu0 0.0
    %6125 = vmatpush1.msra.mxu0 %v6105
    %6126 = vmatprep.subr.mxu0 0.0
    %6127 = vmatpush1.msra.mxu0 %v6104
    %6128 = vmatprep.subr.mxu0 0.0
    %6129 = vmatpush1.msra.mxu0 %v6103
    %6130 = vmatprep.subr.mxu0 0.0
    %6131 = vmatpush1.msra.mxu0 %v6102
    %6132 = vmatprep.subr.mxu0 0.0
    %6133 = vmatpush1.msra.mxu0 %v6101
    %6134 = vmatprep.subr.mxu0 0.0
    %6135 = vmatpush1.msra.mxu0 %v6100
    %6136 = vmatprep.subr.mxu0 0.0
    %6137 = vmatpush1.msra.mxu0 %v6099
    %6138 = vmatprep.subr.mxu0 0.0
    %6139 = vmatpush1.msra.mxu0 %v6098
    %6140 = vmatprep.subr.mxu0 0.0
    %6141 = vmatpush1.msra.mxu0 %v6097
    %6142 = vmatprep.subr.mxu0 0.0
    %6143 = vmatpush1.msra.mxu0 %v6096
    %6144 = vmatprep.subr.mxu0 0.0
    %6145 = vmatpush2.msra.mxu0 0.0
    %6146 = vmatprep.subr.mxu0 0.0
    %6147 = vmatpush2.msra.mxu0 0.0
    %6148 = vmatprep.subr.mxu0 0.0
    %6149 = vmatpush2.msra.mxu0 0.0
    %6150 = vmatprep.subr.mxu0 0.0
    %6151 = vmatpush2.msra.mxu0 0.0
    %6152 = vmatprep.subr.mxu0 0.0
    %6153 = vmatpush2.msra.mxu0 0.0
    %6154 = vmatprep.subr.mxu0 0.0
    %6155 = vmatpush2.msra.mxu0 0.0
    %6156 = vmatprep.subr.mxu0 0.0
    %6157 = vmatpush2.msra.mxu0 0.0
    %6158 = vmatprep.subr.mxu0 0.0
    %6159 = vmatpush2.msra.mxu0 0.0
    %6160 = vmatprep.subr.mxu0 0.0
    %6161 = vmatpush2.msra.mxu0 0.0
    %6162 = vmatprep.subr.mxu0 0.0
    %6163 = vmatpush2.msra.mxu0 0.0
    %6164 = vmatprep.subr.mxu0 0.0
    %6165 = vmatpush2.msra.mxu0 0.0
    %6166 = vmatprep.subr.mxu0 0.0
    %6167 = vmatpush2.msra.mxu0 0.0
    %6168 = vmatprep.subr.mxu0 0.0
    %6169 = vmatpush2.msra.mxu0 0.0
    %6170 = vmatprep.subr.mxu0 0.0
    %6171 = vmatpush2.msra.mxu0 0.0
    %6172 = vmatprep.subr.mxu0 0.0
    %6173 = vmatpush2.msra.mxu0 0.0
    %6174 = vmatprep.subr.mxu0 0.0
    %6175 = vmatpush2.msra.mxu0 0.0
    %6176 = vmatprep.mubr.f32.mxu0 0.0
    %6177 = vmatmul.mubr.f32.gmra.mxu0 %v6077
    %v6178 = vpop.f32.mrf.mxu0
    %v6179 = vadd.f32 0.0, %v6178
    %v6180 = vpop.f32.mrf.mxu0
    %6181 = vmatprep.mubr.f32.mxu0 0.0
    %6182 = vmatmul.mubr.f32.gmra.mxu0 %v6082
    %v6183 = vpop.f32.mrf.mxu0
    %v6184 = vadd.f32 0.0, %v6183
    %v6185 = vpop.f32.mrf.mxu0
    %6186 = vmatprep.mubr.f32.mxu0 0.0
    %6187 = vmatmul.mubr.f32.gmra.mxu0 %v6087
    %v6188 = vpop.f32.mrf.mxu0
    %v6189 = vadd.f32 0.0, %v6188
    %v6190 = vpop.f32.mrf.mxu0
    %6191 = vmatprep.mubr.f32.mxu0 0.0
    %6192 = vmatmul.mubr.f32.gmra.mxu0 %v6092
    %v6193 = vpop.f32.mrf.mxu0
    %v6194 = vadd.f32 0.0, %v6193
    %v6195 = vpop.f32.mrf.mxu0
    %6196 = vdwg.mxu0
    %v6197 = vadd.f32 %v6006, %v6179
    %v6198 = vadd.f32 %v6007, %v6184
    %v6199 = vadd.f32 %v6008, %v6189
    %v6200 = vadd.f32 %v6009, %v6194
    %6201 = vmatprep.subr.mxu0 0.0
    %6202 = vmatpush1.msra.mxu0 0.0
    %6203 = vmatprep.subr.mxu0 0.0
    %6204 = vmatpush1.msra.mxu0 0.0
    %6205 = vmatprep.subr.mxu0 0.0
    %6206 = vmatpush1.msra.mxu0 0.0
    %6207 = vmatprep.subr.mxu0 0.0
    %6208 = vmatpush1.msra.mxu0 0.0
    %6209 = vmatprep.subr.mxu0 0.0
    %6210 = vmatpush1.msra.mxu0 0.0
    %6211 = vmatprep.subr.mxu0 0.0
    %6212 = vmatpush1.msra.mxu0 0.0
    %6213 = vmatprep.subr.mxu0 0.0
    %6214 = vmatpush1.msra.mxu0 0.0
    %6215 = vmatprep.subr.mxu0 0.0
    %6216 = vmatpush1.msra.mxu0 0.0
    %6217 = vmatprep.subr.mxu0 0.0
    %6218 = vmatpush1.msra.mxu0 0.0
    %6219 = vmatprep.subr.mxu0 0.0
    %6220 = vmatpush1.msra.mxu0 0.0
    %6221 = vmatprep.subr.mxu0 0.0
    %6222 = vmatpush1.msra.mxu0 0.0
    %6223 = vmatprep.subr.mxu0 0.0
    %6224 = vmatpush1.msra.mxu0 0.0
    %6225 = vmatprep.subr.mxu0 0.0
    %6226 = vmatpush1.msra.mxu0 %v5254
    %6227 = vmatprep.subr.mxu0 0.0
    %6228 = vmatpush1.msra.mxu0 %v5253
    %6229 = vmatprep.subr.mxu0 0.0
    %6230 = vmatpush1.msra.mxu0 %v5252
    %6231 = vmatprep.subr.mxu0 0.0
    %6232 = vmatpush1.msra.mxu0 %v5251
    %6233 = vmatprep.subr.mxu0 0.0
    %6234 = vmatpush2.msra.mxu0 0.0
    %6235 = vmatprep.subr.mxu0 0.0
    %6236 = vmatpush2.msra.mxu0 0.0
    %6237 = vmatprep.subr.mxu0 0.0
    %6238 = vmatpush2.msra.mxu0 0.0
    %6239 = vmatprep.subr.mxu0 0.0
    %6240 = vmatpush2.msra.mxu0 0.0
    %6241 = vmatprep.subr.mxu0 0.0
    %6242 = vmatpush2.msra.mxu0 0.0
    %6243 = vmatprep.subr.mxu0 0.0
    %6244 = vmatpush2.msra.mxu0 0.0
    %6245 = vmatprep.subr.mxu0 0.0
    %6246 = vmatpush2.msra.mxu0 0.0
    %6247 = vmatprep.subr.mxu0 0.0
    %6248 = vmatpush2.msra.mxu0 0.0
    %6249 = vmatprep.subr.mxu0 0.0
    %6250 = vmatpush2.msra.mxu0 0.0
    %6251 = vmatprep.subr.mxu0 0.0
    %6252 = vmatpush2.msra.mxu0 0.0
    %6253 = vmatprep.subr.mxu0 0.0
    %6254 = vmatpush2.msra.mxu0 0.0
    %6255 = vmatprep.subr.mxu0 0.0
    %6256 = vmatpush2.msra.mxu0 0.0
    %6257 = vmatprep.subr.mxu0 0.0
    %6258 = vmatpush2.msra.mxu0 0.0
    %6259 = vmatprep.subr.mxu0 0.0
    %6260 = vmatpush2.msra.mxu0 0.0
    %6261 = vmatprep.subr.mxu0 0.0
    %6262 = vmatpush2.msra.mxu0 0.0
    %6263 = vmatprep.subr.mxu0 0.0
    %6264 = vmatpush2.msra.mxu0 0.0
    %6265 = vmatprep.mubr.f32.mxu0 0.0
    %6266 = vmatmul.mubr.f32.gmra.mxu0 %v4416
    %v6267 = vpop.f32.mrf.mxu0
    %v6268 = vadd.f32 0.0, %v6267
    %v6269 = vpop.f32.mrf.mxu0
    %6270 = vmatprep.mubr.f32.mxu0 0.0
    %6271 = vmatmul.mubr.f32.gmra.mxu0 %v4419
    %v6272 = vpop.f32.mrf.mxu0
    %v6273 = vadd.f32 0.0, %v6272
    %v6274 = vpop.f32.mrf.mxu0
    %6275 = vmatprep.mubr.f32.mxu0 0.0
    %6276 = vmatmul.mubr.f32.gmra.mxu0 %v4422
    %v6277 = vpop.f32.mrf.mxu0
    %v6278 = vadd.f32 0.0, %v6277
    %v6279 = vpop.f32.mrf.mxu0
    %6280 = vmatprep.mubr.f32.mxu0 0.0
    %6281 = vmatmul.mubr.f32.gmra.mxu0 %v4425
    %v6282 = vpop.f32.mrf.mxu0
    %v6283 = vadd.f32 0.0, %v6282
    %v6284 = vpop.f32.mrf.mxu0
    %6285 = vdwg.mxu0
    %s6286 = scalar_lea.vmem %s7, 640
    %v6287 = vld [vmem:[%s6286] sm:$0xff]
    %v6288 = vld [vmem:[%s6286 + $0x8] sm:$0xff]
    %v6289 = vld [vmem:[%s6286 + $0x10] sm:$0xff]
    %v6290 = vld [vmem:[%s6286 + $0x18] sm:$0xff]
    %v6291 = vld [vmem:[%s6286 + $0x20] sm:$0xff]
    %v6292 = vld [vmem:[%s6286 + $0x28] sm:$0xff]
    %v6293 = vld [vmem:[%s6286 + $0x30] sm:$0xff]
    %v6294 = vld [vmem:[%s6286 + $0x38] sm:$0xff]
    %v6295 = vld [vmem:[%s6286 + $0x40] sm:$0xff]
    %v6296 = vld [vmem:[%s6286 + $0x48] sm:$0xff]
    %v6297 = vld [vmem:[%s6286 + $0x50] sm:$0xff]
    %v6298 = vld [vmem:[%s6286 + $0x58] sm:$0xff]
    %v6299 = vld [vmem:[%s6286 + $0x60] sm:$0xff]
    %v6300 = vld [vmem:[%s6286 + $0x68] sm:$0xff]
    %v6301 = vld [vmem:[%s6286 + $0x70] sm:$0xff]
    %v6302 = vld [vmem:[%s6286 + $0x78] sm:$0xff]
    %6303 = vmatprep.subr.mxu0 0.0
    %6304 = vmatpush1.msra.mxu0 %v6302
    %6305 = vmatprep.subr.mxu0 0.0
    %6306 = vmatpush1.msra.mxu0 %v6301
    %6307 = vmatprep.subr.mxu0 0.0
    %6308 = vmatpush1.msra.mxu0 %v6300
    %6309 = vmatprep.subr.mxu0 0.0
    %6310 = vmatpush1.msra.mxu0 %v6299
    %6311 = vmatprep.subr.mxu0 0.0
    %6312 = vmatpush1.msra.mxu0 %v6298
    %6313 = vmatprep.subr.mxu0 0.0
    %6314 = vmatpush1.msra.mxu0 %v6297
    %6315 = vmatprep.subr.mxu0 0.0
    %6316 = vmatpush1.msra.mxu0 %v6296
    %6317 = vmatprep.subr.mxu0 0.0
    %6318 = vmatpush1.msra.mxu0 %v6295
    %6319 = vmatprep.subr.mxu0 0.0
    %6320 = vmatpush1.msra.mxu0 %v6294
    %6321 = vmatprep.subr.mxu0 0.0
    %6322 = vmatpush1.msra.mxu0 %v6293
    %6323 = vmatprep.subr.mxu0 0.0
    %6324 = vmatpush1.msra.mxu0 %v6292
    %6325 = vmatprep.subr.mxu0 0.0
    %6326 = vmatpush1.msra.mxu0 %v6291
    %6327 = vmatprep.subr.mxu0 0.0
    %6328 = vmatpush1.msra.mxu0 %v6290
    %6329 = vmatprep.subr.mxu0 0.0
    %6330 = vmatpush1.msra.mxu0 %v6289
    %6331 = vmatprep.subr.mxu0 0.0
    %6332 = vmatpush1.msra.mxu0 %v6288
    %6333 = vmatprep.subr.mxu0 0.0
    %6334 = vmatpush1.msra.mxu0 %v6287
    %6335 = vmatprep.subr.mxu0 0.0
    %6336 = vmatpush2.msra.mxu0 0.0
    %6337 = vmatprep.subr.mxu0 0.0
    %6338 = vmatpush2.msra.mxu0 0.0
    %6339 = vmatprep.subr.mxu0 0.0
    %6340 = vmatpush2.msra.mxu0 0.0
    %6341 = vmatprep.subr.mxu0 0.0
    %6342 = vmatpush2.msra.mxu0 0.0
    %6343 = vmatprep.subr.mxu0 0.0
    %6344 = vmatpush2.msra.mxu0 0.0
    %6345 = vmatprep.subr.mxu0 0.0
    %6346 = vmatpush2.msra.mxu0 0.0
    %6347 = vmatprep.subr.mxu0 0.0
    %6348 = vmatpush2.msra.mxu0 0.0
    %6349 = vmatprep.subr.mxu0 0.0
    %6350 = vmatpush2.msra.mxu0 0.0
    %6351 = vmatprep.subr.mxu0 0.0
    %6352 = vmatpush2.msra.mxu0 0.0
    %6353 = vmatprep.subr.mxu0 0.0
    %6354 = vmatpush2.msra.mxu0 0.0
    %6355 = vmatprep.subr.mxu0 0.0
    %6356 = vmatpush2.msra.mxu0 0.0
    %6357 = vmatprep.subr.mxu0 0.0
    %6358 = vmatpush2.msra.mxu0 0.0
    %6359 = vmatprep.subr.mxu0 0.0
    %6360 = vmatpush2.msra.mxu0 0.0
    %6361 = vmatprep.subr.mxu0 0.0
    %6362 = vmatpush2.msra.mxu0 0.0
    %6363 = vmatprep.subr.mxu0 0.0
    %6364 = vmatpush2.msra.mxu0 0.0
    %6365 = vmatprep.subr.mxu0 0.0
    %6366 = vmatpush2.msra.mxu0 0.0
    %6367 = vmatprep.mubr.f32.mxu0 0.0
    %6368 = vmatmul.mubr.f32.gmra.mxu0 %v6268
    %v6369 = vpop.f32.mrf.mxu0
    %v6370 = vadd.f32 0.0, %v6369
    %v6371 = vpop.f32.mrf.mxu0
    %6372 = vmatprep.mubr.f32.mxu0 0.0
    %6373 = vmatmul.mubr.f32.gmra.mxu0 %v6273
    %v6374 = vpop.f32.mrf.mxu0
    %v6375 = vadd.f32 0.0, %v6374
    %v6376 = vpop.f32.mrf.mxu0
    %6377 = vmatprep.mubr.f32.mxu0 0.0
    %6378 = vmatmul.mubr.f32.gmra.mxu0 %v6278
    %v6379 = vpop.f32.mrf.mxu0
    %v6380 = vadd.f32 0.0, %v6379
    %v6381 = vpop.f32.mrf.mxu0
    %6382 = vmatprep.mubr.f32.mxu0 0.0
    %6383 = vmatmul.mubr.f32.gmra.mxu0 %v6283
    %v6384 = vpop.f32.mrf.mxu0
    %v6385 = vadd.f32 0.0, %v6384
    %v6386 = vpop.f32.mrf.mxu0
    %6387 = vdwg.mxu0
    %v6388 = vadd.f32 %v6197, %v6370
    %v6389 = vadd.f32 %v6198, %v6375
    %v6390 = vadd.f32 %v6199, %v6380
    %v6391 = vadd.f32 %v6200, %v6385
    %6392 = vmatprep.subr.mxu0 0.0
    %6393 = vmatpush1.msra.mxu0 0.0
    %6394 = vmatprep.subr.mxu0 0.0
    %6395 = vmatpush1.msra.mxu0 0.0
    %6396 = vmatprep.subr.mxu0 0.0
    %6397 = vmatpush1.msra.mxu0 0.0
    %6398 = vmatprep.subr.mxu0 0.0
    %6399 = vmatpush1.msra.mxu0 0.0
    %6400 = vmatprep.subr.mxu0 0.0
    %6401 = vmatpush1.msra.mxu0 0.0
    %6402 = vmatprep.subr.mxu0 0.0
    %6403 = vmatpush1.msra.mxu0 0.0
    %6404 = vmatprep.subr.mxu0 0.0
    %6405 = vmatpush1.msra.mxu0 0.0
    %6406 = vmatprep.subr.mxu0 0.0
    %6407 = vmatpush1.msra.mxu0 0.0
    %6408 = vmatprep.subr.mxu0 0.0
    %6409 = vmatpush1.msra.mxu0 0.0
    %6410 = vmatprep.subr.mxu0 0.0
    %6411 = vmatpush1.msra.mxu0 0.0
    %6412 = vmatprep.subr.mxu0 0.0
    %6413 = vmatpush1.msra.mxu0 0.0
    %6414 = vmatprep.subr.mxu0 0.0
    %6415 = vmatpush1.msra.mxu0 0.0
    %6416 = vmatprep.subr.mxu0 0.0
    %6417 = vmatpush1.msra.mxu0 %v5254
    %6418 = vmatprep.subr.mxu0 0.0
    %6419 = vmatpush1.msra.mxu0 %v5253
    %6420 = vmatprep.subr.mxu0 0.0
    %6421 = vmatpush1.msra.mxu0 %v5252
    %6422 = vmatprep.subr.mxu0 0.0
    %6423 = vmatpush1.msra.mxu0 %v5251
    %6424 = vmatprep.subr.mxu0 0.0
    %6425 = vmatpush2.msra.mxu0 0.0
    %6426 = vmatprep.subr.mxu0 0.0
    %6427 = vmatpush2.msra.mxu0 0.0
    %6428 = vmatprep.subr.mxu0 0.0
    %6429 = vmatpush2.msra.mxu0 0.0
    %6430 = vmatprep.subr.mxu0 0.0
    %6431 = vmatpush2.msra.mxu0 0.0
    %6432 = vmatprep.subr.mxu0 0.0
    %6433 = vmatpush2.msra.mxu0 0.0
    %6434 = vmatprep.subr.mxu0 0.0
    %6435 = vmatpush2.msra.mxu0 0.0
    %6436 = vmatprep.subr.mxu0 0.0
    %6437 = vmatpush2.msra.mxu0 0.0
    %6438 = vmatprep.subr.mxu0 0.0
    %6439 = vmatpush2.msra.mxu0 0.0
    %6440 = vmatprep.subr.mxu0 0.0
    %6441 = vmatpush2.msra.mxu0 0.0
    %6442 = vmatprep.subr.mxu0 0.0
    %6443 = vmatpush2.msra.mxu0 0.0
    %6444 = vmatprep.subr.mxu0 0.0
    %6445 = vmatpush2.msra.mxu0 0.0
    %6446 = vmatprep.subr.mxu0 0.0
    %6447 = vmatpush2.msra.mxu0 0.0
    %6448 = vmatprep.subr.mxu0 0.0
    %6449 = vmatpush2.msra.mxu0 0.0
    %6450 = vmatprep.subr.mxu0 0.0
    %6451 = vmatpush2.msra.mxu0 0.0
    %6452 = vmatprep.subr.mxu0 0.0
    %6453 = vmatpush2.msra.mxu0 0.0
    %6454 = vmatprep.subr.mxu0 0.0
    %6455 = vmatpush2.msra.mxu0 0.0
    %6456 = vmatprep.mubr.f32.mxu0 0.0
    %6457 = vmatmul.mubr.f32.gmra.mxu0 %v4624
    %v6458 = vpop.f32.mrf.mxu0
    %v6459 = vadd.f32 0.0, %v6458
    %v6460 = vpop.f32.mrf.mxu0
    %6461 = vmatprep.mubr.f32.mxu0 0.0
    %6462 = vmatmul.mubr.f32.gmra.mxu0 %v4627
    %v6463 = vpop.f32.mrf.mxu0
    %v6464 = vadd.f32 0.0, %v6463
    %v6465 = vpop.f32.mrf.mxu0
    %6466 = vmatprep.mubr.f32.mxu0 0.0
    %6467 = vmatmul.mubr.f32.gmra.mxu0 %v4630
    %v6468 = vpop.f32.mrf.mxu0
    %v6469 = vadd.f32 0.0, %v6468
    %v6470 = vpop.f32.mrf.mxu0
    %6471 = vmatprep.mubr.f32.mxu0 0.0
    %6472 = vmatmul.mubr.f32.gmra.mxu0 %v4633
    %v6473 = vpop.f32.mrf.mxu0
    %v6474 = vadd.f32 0.0, %v6473
    %v6475 = vpop.f32.mrf.mxu0
    %6476 = vdwg.mxu0
    %s6477 = scalar_lea.vmem %s7, 768
    %v6478 = vld [vmem:[%s6477] sm:$0xff]
    %v6479 = vld [vmem:[%s6477 + $0x8] sm:$0xff]
    %v6480 = vld [vmem:[%s6477 + $0x10] sm:$0xff]
    %v6481 = vld [vmem:[%s6477 + $0x18] sm:$0xff]
    %v6482 = vld [vmem:[%s6477 + $0x20] sm:$0xff]
    %v6483 = vld [vmem:[%s6477 + $0x28] sm:$0xff]
    %v6484 = vld [vmem:[%s6477 + $0x30] sm:$0xff]
    %v6485 = vld [vmem:[%s6477 + $0x38] sm:$0xff]
    %v6486 = vld [vmem:[%s6477 + $0x40] sm:$0xff]
    %v6487 = vld [vmem:[%s6477 + $0x48] sm:$0xff]
    %v6488 = vld [vmem:[%s6477 + $0x50] sm:$0xff]
    %v6489 = vld [vmem:[%s6477 + $0x58] sm:$0xff]
    %v6490 = vld [vmem:[%s6477 + $0x60] sm:$0xff]
    %v6491 = vld [vmem:[%s6477 + $0x68] sm:$0xff]
    %v6492 = vld [vmem:[%s6477 + $0x70] sm:$0xff]
    %v6493 = vld [vmem:[%s6477 + $0x78] sm:$0xff]
    %6494 = vmatprep.subr.mxu0 0.0
    %6495 = vmatpush1.msra.mxu0 %v6493
    %6496 = vmatprep.subr.mxu0 0.0
    %6497 = vmatpush1.msra.mxu0 %v6492
    %6498 = vmatprep.subr.mxu0 0.0
    %6499 = vmatpush1.msra.mxu0 %v6491
    %6500 = vmatprep.subr.mxu0 0.0
    %6501 = vmatpush1.msra.mxu0 %v6490
    %6502 = vmatprep.subr.mxu0 0.0
    %6503 = vmatpush1.msra.mxu0 %v6489
    %6504 = vmatprep.subr.mxu0 0.0
    %6505 = vmatpush1.msra.mxu0 %v6488
    %6506 = vmatprep.subr.mxu0 0.0
    %6507 = vmatpush1.msra.mxu0 %v6487
    %6508 = vmatprep.subr.mxu0 0.0
    %6509 = vmatpush1.msra.mxu0 %v6486
    %6510 = vmatprep.subr.mxu0 0.0
    %6511 = vmatpush1.msra.mxu0 %v6485
    %6512 = vmatprep.subr.mxu0 0.0
    %6513 = vmatpush1.msra.mxu0 %v6484
    %6514 = vmatprep.subr.mxu0 0.0
    %6515 = vmatpush1.msra.mxu0 %v6483
    %6516 = vmatprep.subr.mxu0 0.0
    %6517 = vmatpush1.msra.mxu0 %v6482
    %6518 = vmatprep.subr.mxu0 0.0
    %6519 = vmatpush1.msra.mxu0 %v6481
    %6520 = vmatprep.subr.mxu0 0.0
    %6521 = vmatpush1.msra.mxu0 %v6480
    %6522 = vmatprep.subr.mxu0 0.0
    %6523 = vmatpush1.msra.mxu0 %v6479
    %6524 = vmatprep.subr.mxu0 0.0
    %6525 = vmatpush1.msra.mxu0 %v6478
    %6526 = vmatprep.subr.mxu0 0.0
    %6527 = vmatpush2.msra.mxu0 0.0
    %6528 = vmatprep.subr.mxu0 0.0
    %6529 = vmatpush2.msra.mxu0 0.0
    %6530 = vmatprep.subr.mxu0 0.0
    %6531 = vmatpush2.msra.mxu0 0.0
    %6532 = vmatprep.subr.mxu0 0.0
    %6533 = vmatpush2.msra.mxu0 0.0
    %6534 = vmatprep.subr.mxu0 0.0
    %6535 = vmatpush2.msra.mxu0 0.0
    %6536 = vmatprep.subr.mxu0 0.0
    %6537 = vmatpush2.msra.mxu0 0.0
    %6538 = vmatprep.subr.mxu0 0.0
    %6539 = vmatpush2.msra.mxu0 0.0
    %6540 = vmatprep.subr.mxu0 0.0
    %6541 = vmatpush2.msra.mxu0 0.0
    %6542 = vmatprep.subr.mxu0 0.0
    %6543 = vmatpush2.msra.mxu0 0.0
    %6544 = vmatprep.subr.mxu0 0.0
    %6545 = vmatpush2.msra.mxu0 0.0
    %6546 = vmatprep.subr.mxu0 0.0
    %6547 = vmatpush2.msra.mxu0 0.0
    %6548 = vmatprep.subr.mxu0 0.0
    %6549 = vmatpush2.msra.mxu0 0.0
    %6550 = vmatprep.subr.mxu0 0.0
    %6551 = vmatpush2.msra.mxu0 0.0
    %6552 = vmatprep.subr.mxu0 0.0
    %6553 = vmatpush2.msra.mxu0 0.0
    %6554 = vmatprep.subr.mxu0 0.0
    %6555 = vmatpush2.msra.mxu0 0.0
    %6556 = vmatprep.subr.mxu0 0.0
    %6557 = vmatpush2.msra.mxu0 0.0
    %6558 = vmatprep.mubr.f32.mxu0 0.0
    %6559 = vmatmul.mubr.f32.gmra.mxu0 %v6459
    %v6560 = vpop.f32.mrf.mxu0
    %v6561 = vadd.f32 0.0, %v6560
    %v6562 = vpop.f32.mrf.mxu0
    %6563 = vmatprep.mubr.f32.mxu0 0.0
    %6564 = vmatmul.mubr.f32.gmra.mxu0 %v6464
    %v6565 = vpop.f32.mrf.mxu0
    %v6566 = vadd.f32 0.0, %v6565
    %v6567 = vpop.f32.mrf.mxu0
    %6568 = vmatprep.mubr.f32.mxu0 0.0
    %6569 = vmatmul.mubr.f32.gmra.mxu0 %v6469
    %v6570 = vpop.f32.mrf.mxu0
    %v6571 = vadd.f32 0.0, %v6570
    %v6572 = vpop.f32.mrf.mxu0
    %6573 = vmatprep.mubr.f32.mxu0 0.0
    %6574 = vmatmul.mubr.f32.gmra.mxu0 %v6474
    %v6575 = vpop.f32.mrf.mxu0
    %v6576 = vadd.f32 0.0, %v6575
    %v6577 = vpop.f32.mrf.mxu0
    %6578 = vdwg.mxu0
    %v6579 = vadd.f32 %v6388, %v6561
    %v6580 = vadd.f32 %v6389, %v6566
    %v6581 = vadd.f32 %v6390, %v6571
    %v6582 = vadd.f32 %v6391, %v6576
    %6583 = vmatprep.subr.mxu0 0.0
    %6584 = vmatpush1.msra.mxu0 0.0
    %6585 = vmatprep.subr.mxu0 0.0
    %6586 = vmatpush1.msra.mxu0 0.0
    %6587 = vmatprep.subr.mxu0 0.0
    %6588 = vmatpush1.msra.mxu0 0.0
    %6589 = vmatprep.subr.mxu0 0.0
    %6590 = vmatpush1.msra.mxu0 0.0
    %6591 = vmatprep.subr.mxu0 0.0
    %6592 = vmatpush1.msra.mxu0 0.0
    %6593 = vmatprep.subr.mxu0 0.0
    %6594 = vmatpush1.msra.mxu0 0.0
    %6595 = vmatprep.subr.mxu0 0.0
    %6596 = vmatpush1.msra.mxu0 0.0
    %6597 = vmatprep.subr.mxu0 0.0
    %6598 = vmatpush1.msra.mxu0 0.0
    %6599 = vmatprep.subr.mxu0 0.0
    %6600 = vmatpush1.msra.mxu0 0.0
    %6601 = vmatprep.subr.mxu0 0.0
    %6602 = vmatpush1.msra.mxu0 0.0
    %6603 = vmatprep.subr.mxu0 0.0
    %6604 = vmatpush1.msra.mxu0 0.0
    %6605 = vmatprep.subr.mxu0 0.0
    %6606 = vmatpush1.msra.mxu0 0.0
    %6607 = vmatprep.subr.mxu0 0.0
    %6608 = vmatpush1.msra.mxu0 %v5254
    %6609 = vmatprep.subr.mxu0 0.0
    %6610 = vmatpush1.msra.mxu0 %v5253
    %6611 = vmatprep.subr.mxu0 0.0
    %6612 = vmatpush1.msra.mxu0 %v5252
    %6613 = vmatprep.subr.mxu0 0.0
    %6614 = vmatpush1.msra.mxu0 %v5251
    %6615 = vmatprep.subr.mxu0 0.0
    %6616 = vmatpush2.msra.mxu0 0.0
    %6617 = vmatprep.subr.mxu0 0.0
    %6618 = vmatpush2.msra.mxu0 0.0
    %6619 = vmatprep.subr.mxu0 0.0
    %6620 = vmatpush2.msra.mxu0 0.0
    %6621 = vmatprep.subr.mxu0 0.0
    %6622 = vmatpush2.msra.mxu0 0.0
    %6623 = vmatprep.subr.mxu0 0.0
    %6624 = vmatpush2.msra.mxu0 0.0
    %6625 = vmatprep.subr.mxu0 0.0
    %6626 = vmatpush2.msra.mxu0 0.0
    %6627 = vmatprep.subr.mxu0 0.0
    %6628 = vmatpush2.msra.mxu0 0.0
    %6629 = vmatprep.subr.mxu0 0.0
    %6630 = vmatpush2.msra.mxu0 0.0
    %6631 = vmatprep.subr.mxu0 0.0
    %6632 = vmatpush2.msra.mxu0 0.0
    %6633 = vmatprep.subr.mxu0 0.0
    %6634 = vmatpush2.msra.mxu0 0.0
    %6635 = vmatprep.subr.mxu0 0.0
    %6636 = vmatpush2.msra.mxu0 0.0
    %6637 = vmatprep.subr.mxu0 0.0
    %6638 = vmatpush2.msra.mxu0 0.0
    %6639 = vmatprep.subr.mxu0 0.0
    %6640 = vmatpush2.msra.mxu0 0.0
    %6641 = vmatprep.subr.mxu0 0.0
    %6642 = vmatpush2.msra.mxu0 0.0
    %6643 = vmatprep.subr.mxu0 0.0
    %6644 = vmatpush2.msra.mxu0 0.0
    %6645 = vmatprep.subr.mxu0 0.0
    %6646 = vmatpush2.msra.mxu0 0.0
    %6647 = vmatprep.mubr.f32.mxu0 0.0
    %6648 = vmatmul.mubr.f32.gmra.mxu0 %v4832
    %v6649 = vpop.f32.mrf.mxu0
    %v6650 = vadd.f32 0.0, %v6649
    %v6651 = vpop.f32.mrf.mxu0
    %6652 = vmatprep.mubr.f32.mxu0 0.0
    %6653 = vmatmul.mubr.f32.gmra.mxu0 %v4835
    %v6654 = vpop.f32.mrf.mxu0
    %v6655 = vadd.f32 0.0, %v6654
    %v6656 = vpop.f32.mrf.mxu0
    %6657 = vmatprep.mubr.f32.mxu0 0.0
    %6658 = vmatmul.mubr.f32.gmra.mxu0 %v4838
    %v6659 = vpop.f32.mrf.mxu0
    %v6660 = vadd.f32 0.0, %v6659
    %v6661 = vpop.f32.mrf.mxu0
    %6662 = vmatprep.mubr.f32.mxu0 0.0
    %6663 = vmatmul.mubr.f32.gmra.mxu0 %v4841
    %v6664 = vpop.f32.mrf.mxu0
    %v6665 = vadd.f32 0.0, %v6664
    %v6666 = vpop.f32.mrf.mxu0
    %6667 = vdwg.mxu0
    %s6668 = scalar_lea.vmem %s7, 896
    %v6669 = vld [vmem:[%s6668] sm:$0xff]
    %v6670 = vld [vmem:[%s6668 + $0x8] sm:$0xff]
    %v6671 = vld [vmem:[%s6668 + $0x10] sm:$0xff]
    %v6672 = vld [vmem:[%s6668 + $0x18] sm:$0xff]
    %v6673 = vld [vmem:[%s6668 + $0x20] sm:$0xff]
    %v6674 = vld [vmem:[%s6668 + $0x28] sm:$0xff]
    %v6675 = vld [vmem:[%s6668 + $0x30] sm:$0xff]
    %v6676 = vld [vmem:[%s6668 + $0x38] sm:$0xff]
    %v6677 = vld [vmem:[%s6668 + $0x40] sm:$0xff]
    %v6678 = vld [vmem:[%s6668 + $0x48] sm:$0xff]
    %v6679 = vld [vmem:[%s6668 + $0x50] sm:$0xff]
    %v6680 = vld [vmem:[%s6668 + $0x58] sm:$0xff]
    %v6681 = vld [vmem:[%s6668 + $0x60] sm:$0xff]
    %v6682 = vld [vmem:[%s6668 + $0x68] sm:$0xff]
    %v6683 = vld [vmem:[%s6668 + $0x70] sm:$0xff]
    %v6684 = vld [vmem:[%s6668 + $0x78] sm:$0xff]
    %6685 = vmatprep.subr.mxu0 0.0
    %6686 = vmatpush1.msra.mxu0 %v6684
    %6687 = vmatprep.subr.mxu0 0.0
    %6688 = vmatpush1.msra.mxu0 %v6683
    %6689 = vmatprep.subr.mxu0 0.0
    %6690 = vmatpush1.msra.mxu0 %v6682
    %6691 = vmatprep.subr.mxu0 0.0
    %6692 = vmatpush1.msra.mxu0 %v6681
    %6693 = vmatprep.subr.mxu0 0.0
    %6694 = vmatpush1.msra.mxu0 %v6680
    %6695 = vmatprep.subr.mxu0 0.0
    %6696 = vmatpush1.msra.mxu0 %v6679
    %6697 = vmatprep.subr.mxu0 0.0
    %6698 = vmatpush1.msra.mxu0 %v6678
    %6699 = vmatprep.subr.mxu0 0.0
    %6700 = vmatpush1.msra.mxu0 %v6677
    %6701 = vmatprep.subr.mxu0 0.0
    %6702 = vmatpush1.msra.mxu0 %v6676
    %6703 = vmatprep.subr.mxu0 0.0
    %6704 = vmatpush1.msra.mxu0 %v6675
    %6705 = vmatprep.subr.mxu0 0.0
    %6706 = vmatpush1.msra.mxu0 %v6674
    %6707 = vmatprep.subr.mxu0 0.0
    %6708 = vmatpush1.msra.mxu0 %v6673
    %6709 = vmatprep.subr.mxu0 0.0
    %6710 = vmatpush1.msra.mxu0 %v6672
    %6711 = vmatprep.subr.mxu0 0.0
    %6712 = vmatpush1.msra.mxu0 %v6671
    %6713 = vmatprep.subr.mxu0 0.0
    %6714 = vmatpush1.msra.mxu0 %v6670
    %6715 = vmatprep.subr.mxu0 0.0
    %6716 = vmatpush1.msra.mxu0 %v6669
    %6717 = vmatprep.subr.mxu0 0.0
    %6718 = vmatpush2.msra.mxu0 0.0
    %6719 = vmatprep.subr.mxu0 0.0
    %6720 = vmatpush2.msra.mxu0 0.0
    %6721 = vmatprep.subr.mxu0 0.0
    %6722 = vmatpush2.msra.mxu0 0.0
    %6723 = vmatprep.subr.mxu0 0.0
    %6724 = vmatpush2.msra.mxu0 0.0
    %6725 = vmatprep.subr.mxu0 0.0
    %6726 = vmatpush2.msra.mxu0 0.0
    %6727 = vmatprep.subr.mxu0 0.0
    %6728 = vmatpush2.msra.mxu0 0.0
    %6729 = vmatprep.subr.mxu0 0.0
    %6730 = vmatpush2.msra.mxu0 0.0
    %6731 = vmatprep.subr.mxu0 0.0
    %6732 = vmatpush2.msra.mxu0 0.0
    %6733 = vmatprep.subr.mxu0 0.0
    %6734 = vmatpush2.msra.mxu0 0.0
    %6735 = vmatprep.subr.mxu0 0.0
    %6736 = vmatpush2.msra.mxu0 0.0
    %6737 = vmatprep.subr.mxu0 0.0
    %6738 = vmatpush2.msra.mxu0 0.0
    %6739 = vmatprep.subr.mxu0 0.0
    %6740 = vmatpush2.msra.mxu0 0.0
    %6741 = vmatprep.subr.mxu0 0.0
    %6742 = vmatpush2.msra.mxu0 0.0
    %6743 = vmatprep.subr.mxu0 0.0
    %6744 = vmatpush2.msra.mxu0 0.0
    %6745 = vmatprep.subr.mxu0 0.0
    %6746 = vmatpush2.msra.mxu0 0.0
    %6747 = vmatprep.subr.mxu0 0.0
    %6748 = vmatpush2.msra.mxu0 0.0
    %6749 = vmatprep.mubr.f32.mxu0 0.0
    %6750 = vmatmul.mubr.f32.gmra.mxu0 %v6650
    %v6751 = vpop.f32.mrf.mxu0
    %v6752 = vadd.f32 0.0, %v6751
    %v6753 = vpop.f32.mrf.mxu0
    %6754 = vmatprep.mubr.f32.mxu0 0.0
    %6755 = vmatmul.mubr.f32.gmra.mxu0 %v6655
    %v6756 = vpop.f32.mrf.mxu0
    %v6757 = vadd.f32 0.0, %v6756
    %v6758 = vpop.f32.mrf.mxu0
    %6759 = vmatprep.mubr.f32.mxu0 0.0
    %6760 = vmatmul.mubr.f32.gmra.mxu0 %v6660
    %v6761 = vpop.f32.mrf.mxu0
    %v6762 = vadd.f32 0.0, %v6761
    %v6763 = vpop.f32.mrf.mxu0
    %6764 = vmatprep.mubr.f32.mxu0 0.0
    %6765 = vmatmul.mubr.f32.gmra.mxu0 %v6665
    %v6766 = vpop.f32.mrf.mxu0
    %v6767 = vadd.f32 0.0, %v6766
    %v6768 = vpop.f32.mrf.mxu0
    %6769 = vdwg.mxu0
    %v6770 = vadd.f32 %v6579, %v6752
    %v6771 = vadd.f32 %v6580, %v6757
    %v6772 = vadd.f32 %v6581, %v6762
    %v6773 = vadd.f32 %v6582, %v6767
    %6774 = vmatprep.subr.mxu0 0.0
    %6775 = vmatpush1.msra.mxu0 0.0
    %6776 = vmatprep.subr.mxu0 0.0
    %6777 = vmatpush1.msra.mxu0 0.0
    %6778 = vmatprep.subr.mxu0 0.0
    %6779 = vmatpush1.msra.mxu0 0.0
    %6780 = vmatprep.subr.mxu0 0.0
    %6781 = vmatpush1.msra.mxu0 0.0
    %6782 = vmatprep.subr.mxu0 0.0
    %6783 = vmatpush1.msra.mxu0 0.0
    %6784 = vmatprep.subr.mxu0 0.0
    %6785 = vmatpush1.msra.mxu0 0.0
    %6786 = vmatprep.subr.mxu0 0.0
    %6787 = vmatpush1.msra.mxu0 0.0
    %6788 = vmatprep.subr.mxu0 0.0
    %6789 = vmatpush1.msra.mxu0 0.0
    %6790 = vmatprep.subr.mxu0 0.0
    %6791 = vmatpush1.msra.mxu0 0.0
    %6792 = vmatprep.subr.mxu0 0.0
    %6793 = vmatpush1.msra.mxu0 0.0
    %6794 = vmatprep.subr.mxu0 0.0
    %6795 = vmatpush1.msra.mxu0 0.0
    %6796 = vmatprep.subr.mxu0 0.0
    %6797 = vmatpush1.msra.mxu0 0.0
    %6798 = vmatprep.subr.mxu0 0.0
    %6799 = vmatpush1.msra.mxu0 %v5254
    %6800 = vmatprep.subr.mxu0 0.0
    %6801 = vmatpush1.msra.mxu0 %v5253
    %6802 = vmatprep.subr.mxu0 0.0
    %6803 = vmatpush1.msra.mxu0 %v5252
    %6804 = vmatprep.subr.mxu0 0.0
    %6805 = vmatpush1.msra.mxu0 %v5251
    %6806 = vmatprep.subr.mxu0 0.0
    %6807 = vmatpush2.msra.mxu0 0.0
    %6808 = vmatprep.subr.mxu0 0.0
    %6809 = vmatpush2.msra.mxu0 0.0
    %6810 = vmatprep.subr.mxu0 0.0
    %6811 = vmatpush2.msra.mxu0 0.0
    %6812 = vmatprep.subr.mxu0 0.0
    %6813 = vmatpush2.msra.mxu0 0.0
    %6814 = vmatprep.subr.mxu0 0.0
    %6815 = vmatpush2.msra.mxu0 0.0
    %6816 = vmatprep.subr.mxu0 0.0
    %6817 = vmatpush2.msra.mxu0 0.0
    %6818 = vmatprep.subr.mxu0 0.0
    %6819 = vmatpush2.msra.mxu0 0.0
    %6820 = vmatprep.subr.mxu0 0.0
    %6821 = vmatpush2.msra.mxu0 0.0
    %6822 = vmatprep.subr.mxu0 0.0
    %6823 = vmatpush2.msra.mxu0 0.0
    %6824 = vmatprep.subr.mxu0 0.0
    %6825 = vmatpush2.msra.mxu0 0.0
    %6826 = vmatprep.subr.mxu0 0.0
    %6827 = vmatpush2.msra.mxu0 0.0
    %6828 = vmatprep.subr.mxu0 0.0
    %6829 = vmatpush2.msra.mxu0 0.0
    %6830 = vmatprep.subr.mxu0 0.0
    %6831 = vmatpush2.msra.mxu0 0.0
    %6832 = vmatprep.subr.mxu0 0.0
    %6833 = vmatpush2.msra.mxu0 0.0
    %6834 = vmatprep.subr.mxu0 0.0
    %6835 = vmatpush2.msra.mxu0 0.0
    %6836 = vmatprep.subr.mxu0 0.0
    %6837 = vmatpush2.msra.mxu0 0.0
    %6838 = vmatprep.mubr.f32.mxu0 0.0
    %6839 = vmatmul.mubr.f32.gmra.mxu0 %v5040
    %v6840 = vpop.f32.mrf.mxu0
    %v6841 = vadd.f32 0.0, %v6840
    %v6842 = vpop.f32.mrf.mxu0
    %6843 = vmatprep.mubr.f32.mxu0 0.0
    %6844 = vmatmul.mubr.f32.gmra.mxu0 %v5043
    %v6845 = vpop.f32.mrf.mxu0
    %v6846 = vadd.f32 0.0, %v6845
    %v6847 = vpop.f32.mrf.mxu0
    %6848 = vmatprep.mubr.f32.mxu0 0.0
    %6849 = vmatmul.mubr.f32.gmra.mxu0 %v5046
    %v6850 = vpop.f32.mrf.mxu0
    %v6851 = vadd.f32 0.0, %v6850
    %v6852 = vpop.f32.mrf.mxu0
    %6853 = vmatprep.mubr.f32.mxu0 0.0
    %6854 = vmatmul.mubr.f32.gmra.mxu0 %v5049
    %v6855 = vpop.f32.mrf.mxu0
    %v6856 = vadd.f32 0.0, %v6855
    %v6857 = vpop.f32.mrf.mxu0
    %6858 = vdwg.mxu0
    %s6859 = scalar_lea.vmem %s7, 1024
    %v6860 = vld [vmem:[%s6859] sm:$0xff]
    %v6861 = vld [vmem:[%s6859 + $0x8] sm:$0xff]
    %v6862 = vld [vmem:[%s6859 + $0x10] sm:$0xff]
    %v6863 = vld [vmem:[%s6859 + $0x18] sm:$0xff]
    %v6864 = vld [vmem:[%s6859 + $0x20] sm:$0xff]
    %v6865 = vld [vmem:[%s6859 + $0x28] sm:$0xff]
    %v6866 = vld [vmem:[%s6859 + $0x30] sm:$0xff]
    %v6867 = vld [vmem:[%s6859 + $0x38] sm:$0xff]
    %v6868 = vld [vmem:[%s6859 + $0x40] sm:$0xff]
    %v6869 = vld [vmem:[%s6859 + $0x48] sm:$0xff]
    %v6870 = vld [vmem:[%s6859 + $0x50] sm:$0xff]
    %v6871 = vld [vmem:[%s6859 + $0x58] sm:$0xff]
    %v6872 = vld [vmem:[%s6859 + $0x60] sm:$0xff]
    %v6873 = vld [vmem:[%s6859 + $0x68] sm:$0xff]
    %v6874 = vld [vmem:[%s6859 + $0x70] sm:$0xff]
    %v6875 = vld [vmem:[%s6859 + $0x78] sm:$0xff]
    %6876 = vmatprep.subr.mxu0 0.0
    %6877 = vmatpush1.msra.mxu0 %v6875
    %6878 = vmatprep.subr.mxu0 0.0
    %6879 = vmatpush1.msra.mxu0 %v6874
    %6880 = vmatprep.subr.mxu0 0.0
    %6881 = vmatpush1.msra.mxu0 %v6873
    %6882 = vmatprep.subr.mxu0 0.0
    %6883 = vmatpush1.msra.mxu0 %v6872
    %6884 = vmatprep.subr.mxu0 0.0
    %6885 = vmatpush1.msra.mxu0 %v6871
    %6886 = vmatprep.subr.mxu0 0.0
    %6887 = vmatpush1.msra.mxu0 %v6870
    %6888 = vmatprep.subr.mxu0 0.0
    %6889 = vmatpush1.msra.mxu0 %v6869
    %6890 = vmatprep.subr.mxu0 0.0
    %6891 = vmatpush1.msra.mxu0 %v6868
    %6892 = vmatprep.subr.mxu0 0.0
    %6893 = vmatpush1.msra.mxu0 %v6867
    %6894 = vmatprep.subr.mxu0 0.0
    %6895 = vmatpush1.msra.mxu0 %v6866
    %6896 = vmatprep.subr.mxu0 0.0
    %6897 = vmatpush1.msra.mxu0 %v6865
    %6898 = vmatprep.subr.mxu0 0.0
    %6899 = vmatpush1.msra.mxu0 %v6864
    %6900 = vmatprep.subr.mxu0 0.0
    %6901 = vmatpush1.msra.mxu0 %v6863
    %6902 = vmatprep.subr.mxu0 0.0
    %6903 = vmatpush1.msra.mxu0 %v6862
    %6904 = vmatprep.subr.mxu0 0.0
    %6905 = vmatpush1.msra.mxu0 %v6861
    %6906 = vmatprep.subr.mxu0 0.0
    %6907 = vmatpush1.msra.mxu0 %v6860
    %6908 = vmatprep.subr.mxu0 0.0
    %6909 = vmatpush2.msra.mxu0 0.0
    %6910 = vmatprep.subr.mxu0 0.0
    %6911 = vmatpush2.msra.mxu0 0.0
    %6912 = vmatprep.subr.mxu0 0.0
    %6913 = vmatpush2.msra.mxu0 0.0
    %6914 = vmatprep.subr.mxu0 0.0
    %6915 = vmatpush2.msra.mxu0 0.0
    %6916 = vmatprep.subr.mxu0 0.0
    %6917 = vmatpush2.msra.mxu0 0.0
    %6918 = vmatprep.subr.mxu0 0.0
    %6919 = vmatpush2.msra.mxu0 0.0
    %6920 = vmatprep.subr.mxu0 0.0
    %6921 = vmatpush2.msra.mxu0 0.0
    %6922 = vmatprep.subr.mxu0 0.0
    %6923 = vmatpush2.msra.mxu0 0.0
    %6924 = vmatprep.subr.mxu0 0.0
    %6925 = vmatpush2.msra.mxu0 0.0
    %6926 = vmatprep.subr.mxu0 0.0
    %6927 = vmatpush2.msra.mxu0 0.0
    %6928 = vmatprep.subr.mxu0 0.0
    %6929 = vmatpush2.msra.mxu0 0.0
    %6930 = vmatprep.subr.mxu0 0.0
    %6931 = vmatpush2.msra.mxu0 0.0
    %6932 = vmatprep.subr.mxu0 0.0
    %6933 = vmatpush2.msra.mxu0 0.0
    %6934 = vmatprep.subr.mxu0 0.0
    %6935 = vmatpush2.msra.mxu0 0.0
    %6936 = vmatprep.subr.mxu0 0.0
    %6937 = vmatpush2.msra.mxu0 0.0
    %6938 = vmatprep.subr.mxu0 0.0
    %6939 = vmatpush2.msra.mxu0 0.0
    %6940 = vmatprep.mubr.f32.mxu0 0.0
    %6941 = vmatmul.mubr.f32.gmra.mxu0 %v6841
    %v6942 = vpop.f32.mrf.mxu0
    %v6943 = vadd.f32 0.0, %v6942
    %v6944 = vpop.f32.mrf.mxu0
    %6945 = vmatprep.mubr.f32.mxu0 0.0
    %6946 = vmatmul.mubr.f32.gmra.mxu0 %v6846
    %v6947 = vpop.f32.mrf.mxu0
    %v6948 = vadd.f32 0.0, %v6947
    %v6949 = vpop.f32.mrf.mxu0
    %6950 = vmatprep.mubr.f32.mxu0 0.0
    %6951 = vmatmul.mubr.f32.gmra.mxu0 %v6851
    %v6952 = vpop.f32.mrf.mxu0
    %v6953 = vadd.f32 0.0, %v6952
    %v6954 = vpop.f32.mrf.mxu0
    %6955 = vmatprep.mubr.f32.mxu0 0.0
    %6956 = vmatmul.mubr.f32.gmra.mxu0 %v6856
    %v6957 = vpop.f32.mrf.mxu0
    %v6958 = vadd.f32 0.0, %v6957
    %v6959 = vpop.f32.mrf.mxu0
    %6960 = vdwg.mxu0
    %v6961 = vadd.f32 %v6770, %v6943
    %v6962 = vadd.f32 %v6771, %v6948
    %v6963 = vadd.f32 %v6772, %v6953
    %v6964 = vadd.f32 %v6773, %v6958
    %v6965 = vld [vmem:[%s2 + $0x3] sm:$0x1]
    %v6966 = vlaneseq
    %v6967 = vshrl.u32 %v6966, 7
    %v6968 = vsub.s32 0, %v6967
    %v6969 = vrot.slane %v6965, %v6968
    %v6970 = vadd.f32 %v6961, %v6969
    %v6971 = vadd.f32 %v6962, %v6969
    %v6972 = vadd.f32 %v6963, %v6969
    %v6973 = vadd.f32 %v6964, %v6969
    %v6974 = vmax.f32 %v6970, 0.0
    %v6975 = vmax.f32 %v6971, 0.0
    %v6976 = vmax.f32 %v6972, 0.0
    %v6977 = vmax.f32 %v6973, 0.0
    %v6978 = vld [vmem:[%s8] sm:$0xff]
    %v6979 = vld [vmem:[%s8 + $0x8] sm:$0xff]
    %v6980 = vld [vmem:[%s8 + $0x10] sm:$0xff]
    %v6981 = vld [vmem:[%s8 + $0x18] sm:$0xff]
    %v6982 = vld [vmem:[%s8 + $0x20] sm:$0xff]
    %v6983 = vld [vmem:[%s8 + $0x28] sm:$0xff]
    %v6984 = vld [vmem:[%s8 + $0x30] sm:$0xff]
    %v6985 = vld [vmem:[%s8 + $0x38] sm:$0xff]
    %v6986 = vld [vmem:[%s8 + $0x40] sm:$0xff]
    %v6987 = vld [vmem:[%s8 + $0x48] sm:$0xff]
    %v6988 = vld [vmem:[%s8 + $0x50] sm:$0xff]
    %v6989 = vld [vmem:[%s8 + $0x58] sm:$0xff]
    %v6990 = vld [vmem:[%s8 + $0x60] sm:$0xff]
    %v6991 = vld [vmem:[%s8 + $0x68] sm:$0xff]
    %v6992 = vld [vmem:[%s8 + $0x70] sm:$0xff]
    %v6993 = vld [vmem:[%s8 + $0x78] sm:$0xff]
    %v6994 = vld [vmem:[%s2 + $0x4] sm:$0x1]
    %v6995 = vlaneseq
    %v6996 = vshrl.u32 %v6995, 7
    %v6997 = vsub.s32 0, %v6996
    %v6998 = vrot.slane %v6994, %v6997
    %6999 = vmatprep.subr.mxu0 0.0
    %7000 = vmatpush1.msra.mxu0 %v6993
    %7001 = vmatprep.subr.mxu0 0.0
    %7002 = vmatpush1.msra.mxu0 %v6992
    %7003 = vmatprep.subr.mxu0 0.0
    %7004 = vmatpush1.msra.mxu0 %v6991
    %7005 = vmatprep.subr.mxu0 0.0
    %7006 = vmatpush1.msra.mxu0 %v6990
    %7007 = vmatprep.subr.mxu0 0.0
    %7008 = vmatpush1.msra.mxu0 %v6989
    %7009 = vmatprep.subr.mxu0 0.0
    %7010 = vmatpush1.msra.mxu0 %v6988
    %7011 = vmatprep.subr.mxu0 0.0
    %7012 = vmatpush1.msra.mxu0 %v6987
    %7013 = vmatprep.subr.mxu0 0.0
    %7014 = vmatpush1.msra.mxu0 %v6986
    %7015 = vmatprep.subr.mxu0 0.0
    %7016 = vmatpush1.msra.mxu0 %v6985
    %7017 = vmatprep.subr.mxu0 0.0
    %7018 = vmatpush1.msra.mxu0 %v6984
    %7019 = vmatprep.subr.mxu0 0.0
    %7020 = vmatpush1.msra.mxu0 %v6983
    %7021 = vmatprep.subr.mxu0 0.0
    %7022 = vmatpush1.msra.mxu0 %v6982
    %7023 = vmatprep.subr.mxu0 0.0
    %7024 = vmatpush1.msra.mxu0 %v6981
    %7025 = vmatprep.subr.mxu0 0.0
    %7026 = vmatpush1.msra.mxu0 %v6980
    %7027 = vmatprep.subr.mxu0 0.0
    %7028 = vmatpush1.msra.mxu0 %v6979
    %7029 = vmatprep.subr.mxu0 0.0
    %7030 = vmatpush1.msra.mxu0 %v6978
    %7031 = vmatprep.subr.mxu0 0.0
    %7032 = vmatpush2.msra.mxu0 0.0
    %7033 = vmatprep.subr.mxu0 0.0
    %7034 = vmatpush2.msra.mxu0 0.0
    %7035 = vmatprep.subr.mxu0 0.0
    %7036 = vmatpush2.msra.mxu0 0.0
    %7037 = vmatprep.subr.mxu0 0.0
    %7038 = vmatpush2.msra.mxu0 0.0
    %7039 = vmatprep.subr.mxu0 0.0
    %7040 = vmatpush2.msra.mxu0 0.0
    %7041 = vmatprep.subr.mxu0 0.0
    %7042 = vmatpush2.msra.mxu0 0.0
    %7043 = vmatprep.subr.mxu0 0.0
    %7044 = vmatpush2.msra.mxu0 0.0
    %7045 = vmatprep.subr.mxu0 0.0
    %7046 = vmatpush2.msra.mxu0 0.0
    %7047 = vmatprep.subr.mxu0 0.0
    %7048 = vmatpush2.msra.mxu0 0.0
    %7049 = vmatprep.subr.mxu0 0.0
    %7050 = vmatpush2.msra.mxu0 0.0
    %7051 = vmatprep.subr.mxu0 0.0
    %7052 = vmatpush2.msra.mxu0 0.0
    %7053 = vmatprep.subr.mxu0 0.0
    %7054 = vmatpush2.msra.mxu0 0.0
    %7055 = vmatprep.subr.mxu0 0.0
    %7056 = vmatpush2.msra.mxu0 0.0
    %7057 = vmatprep.subr.mxu0 0.0
    %7058 = vmatpush2.msra.mxu0 0.0
    %7059 = vmatprep.subr.mxu0 0.0
    %7060 = vmatpush2.msra.mxu0 0.0
    %7061 = vmatprep.subr.mxu0 0.0
    %7062 = vmatpush2.msra.mxu0 0.0
    %7063 = vmatprep.mubr.f32.mxu0 0.0
    %7064 = vmatmul.mubr.f32.gmra.mxu0 %v6974
    %v7065 = vpop.f32.mrf.mxu0
    %v7066 = vadd.f32 %v6998, %v7065
    %v7067 = vpop.f32.mrf.mxu0
    %7068 = vmatprep.mubr.f32.mxu0 0.0
    %7069 = vmatmul.mubr.f32.gmra.mxu0 %v6975
    %v7070 = vpop.f32.mrf.mxu0
    %v7071 = vadd.f32 %v6998, %v7070
    %v7072 = vpop.f32.mrf.mxu0
    %7073 = vmatprep.mubr.f32.mxu0 0.0
    %7074 = vmatmul.mubr.f32.gmra.mxu0 %v6976
    %v7075 = vpop.f32.mrf.mxu0
    %v7076 = vadd.f32 %v6998, %v7075
    %v7077 = vpop.f32.mrf.mxu0
    %7078 = vmatprep.mubr.f32.mxu0 0.0
    %7079 = vmatmul.mubr.f32.gmra.mxu0 %v6977
    %v7080 = vpop.f32.mrf.mxu0
    %v7081 = vadd.f32 %v6998, %v7080
    %v7082 = vpop.f32.mrf.mxu0
    %7083 = vdwg.mxu0
    %v7084 = vadd.f32 %v7066, %v5247
    %v7085 = vadd.f32 %v7071, %v5248
    %v7086 = vadd.f32 %v7076, %v5249
    %v7087 = vadd.f32 %v7081, %v5250
    %v7088 = vmax.f32 %v7084, 0.0
    %v7089 = vmax.f32 %v7085, 0.0
    %v7090 = vmax.f32 %v7086, 0.0
    %v7091 = vmax.f32 %v7087, 0.0
    %7092 = vmatprep.subr.mxu0 0.0
    %7093 = vmatpush1.msra.mxu0 0.0
    %7094 = vmatprep.subr.mxu0 0.0
    %7095 = vmatpush1.msra.mxu0 0.0
    %7096 = vmatprep.subr.mxu0 0.0
    %7097 = vmatpush1.msra.mxu0 0.0
    %7098 = vmatprep.subr.mxu0 0.0
    %7099 = vmatpush1.msra.mxu0 0.0
    %7100 = vmatprep.subr.mxu0 0.0
    %7101 = vmatpush1.msra.mxu0 0.0
    %7102 = vmatprep.subr.mxu0 0.0
    %7103 = vmatpush1.msra.mxu0 0.0
    %7104 = vmatprep.subr.mxu0 0.0
    %7105 = vmatpush1.msra.mxu0 0.0
    %7106 = vmatprep.subr.mxu0 0.0
    %7107 = vmatpush1.msra.mxu0 0.0
    %7108 = vmatprep.subr.mxu0 0.0
    %7109 = vmatpush1.msra.mxu0 0.0
    %7110 = vmatprep.subr.mxu0 0.0
    %7111 = vmatpush1.msra.mxu0 0.0
    %7112 = vmatprep.subr.mxu0 0.0
    %7113 = vmatpush1.msra.mxu0 0.0
    %7114 = vmatprep.subr.mxu0 0.0
    %7115 = vmatpush1.msra.mxu0 0.0
    %7116 = vmatprep.subr.mxu0 0.0
    %7117 = vmatpush1.msra.mxu0 %v7091
    %7118 = vmatprep.subr.mxu0 0.0
    %7119 = vmatpush1.msra.mxu0 %v7090
    %7120 = vmatprep.subr.mxu0 0.0
    %7121 = vmatpush1.msra.mxu0 %v7089
    %7122 = vmatprep.subr.mxu0 0.0
    %7123 = vmatpush1.msra.mxu0 %v7088
    %7124 = vmatprep.subr.mxu0 0.0
    %7125 = vmatpush2.msra.mxu0 0.0
    %7126 = vmatprep.subr.mxu0 0.0
    %7127 = vmatpush2.msra.mxu0 0.0
    %7128 = vmatprep.subr.mxu0 0.0
    %7129 = vmatpush2.msra.mxu0 0.0
    %7130 = vmatprep.subr.mxu0 0.0
    %7131 = vmatpush2.msra.mxu0 0.0
    %7132 = vmatprep.subr.mxu0 0.0
    %7133 = vmatpush2.msra.mxu0 0.0
    %7134 = vmatprep.subr.mxu0 0.0
    %7135 = vmatpush2.msra.mxu0 0.0
    %7136 = vmatprep.subr.mxu0 0.0
    %7137 = vmatpush2.msra.mxu0 0.0
    %7138 = vmatprep.subr.mxu0 0.0
    %7139 = vmatpush2.msra.mxu0 0.0
    %7140 = vmatprep.subr.mxu0 0.0
    %7141 = vmatpush2.msra.mxu0 0.0
    %7142 = vmatprep.subr.mxu0 0.0
    %7143 = vmatpush2.msra.mxu0 0.0
    %7144 = vmatprep.subr.mxu0 0.0
    %7145 = vmatpush2.msra.mxu0 0.0
    %7146 = vmatprep.subr.mxu0 0.0
    %7147 = vmatpush2.msra.mxu0 0.0
    %7148 = vmatprep.subr.mxu0 0.0
    %7149 = vmatpush2.msra.mxu0 0.0
    %7150 = vmatprep.subr.mxu0 0.0
    %7151 = vmatpush2.msra.mxu0 0.0
    %7152 = vmatprep.subr.mxu0 0.0
    %7153 = vmatpush2.msra.mxu0 0.0
    %7154 = vmatprep.subr.mxu0 0.0
    %7155 = vmatpush2.msra.mxu0 0.0
    %7156 = vmatprep.mubr.f32.mxu0 0.0
    %7157 = vmatmul.mubr.f32.gmra.mxu0 %v3385
    %v7158 = vpop.f32.mrf.mxu0
    %v7159 = vadd.f32 0.0, %v7158
    %v7160 = vpop.f32.mrf.mxu0
    %7161 = vmatprep.mubr.f32.mxu0 0.0
    %7162 = vmatmul.mubr.f32.gmra.mxu0 %v3388
    %v7163 = vpop.f32.mrf.mxu0
    %v7164 = vadd.f32 0.0, %v7163
    %v7165 = vpop.f32.mrf.mxu0
    %7166 = vmatprep.mubr.f32.mxu0 0.0
    %7167 = vmatmul.mubr.f32.gmra.mxu0 %v3391
    %v7168 = vpop.f32.mrf.mxu0
    %v7169 = vadd.f32 0.0, %v7168
    %v7170 = vpop.f32.mrf.mxu0
    %7171 = vmatprep.mubr.f32.mxu0 0.0
    %7172 = vmatmul.mubr.f32.gmra.mxu0 %v3394
    %v7173 = vpop.f32.mrf.mxu0
    %v7174 = vadd.f32 0.0, %v7173
    %v7175 = vpop.f32.mrf.mxu0
    %7176 = vdwg.mxu0
    %v7177 = vld [vmem:[%s9] sm:$0xff]
    %v7178 = vld [vmem:[%s9 + $0x8] sm:$0xff]
    %v7179 = vld [vmem:[%s9 + $0x10] sm:$0xff]
    %v7180 = vld [vmem:[%s9 + $0x18] sm:$0xff]
    %v7181 = vld [vmem:[%s9 + $0x20] sm:$0xff]
    %v7182 = vld [vmem:[%s9 + $0x28] sm:$0xff]
    %v7183 = vld [vmem:[%s9 + $0x30] sm:$0xff]
    %v7184 = vld [vmem:[%s9 + $0x38] sm:$0xff]
    %v7185 = vld [vmem:[%s9 + $0x40] sm:$0xff]
    %v7186 = vld [vmem:[%s9 + $0x48] sm:$0xff]
    %v7187 = vld [vmem:[%s9 + $0x50] sm:$0xff]
    %v7188 = vld [vmem:[%s9 + $0x58] sm:$0xff]
    %v7189 = vld [vmem:[%s9 + $0x60] sm:$0xff]
    %v7190 = vld [vmem:[%s9 + $0x68] sm:$0xff]
    %v7191 = vld [vmem:[%s9 + $0x70] sm:$0xff]
    %v7192 = vld [vmem:[%s9 + $0x78] sm:$0xff]
    %7193 = vmatprep.subr.mxu0 0.0
    %7194 = vmatpush1.msra.mxu0 0.0
    %7195 = vmatprep.subr.mxu0 0.0
    %7196 = vmatpush1.msra.mxu0 0.0
    %7197 = vmatprep.subr.mxu0 0.0
    %7198 = vmatpush1.msra.mxu0 0.0
    %7199 = vmatprep.subr.mxu0 0.0
    %7200 = vmatpush1.msra.mxu0 0.0
    %7201 = vmatprep.subr.mxu0 0.0
    %7202 = vmatpush1.msra.mxu0 0.0
    %7203 = vmatprep.subr.mxu0 0.0
    %7204 = vmatpush1.msra.mxu0 0.0
    %7205 = vmatprep.subr.mxu0 0.0
    %7206 = vmatpush1.msra.mxu0 0.0
    %7207 = vmatprep.subr.mxu0 0.0
    %7208 = vmatpush1.msra.mxu0 0.0
    %7209 = vmatprep.subr.mxu0 0.0
    %7210 = vmatpush1.msra.mxu0 0.0
    %7211 = vmatprep.subr.mxu0 0.0
    %7212 = vmatpush1.msra.mxu0 0.0
    %7213 = vmatprep.subr.mxu0 0.0
    %7214 = vmatpush1.msra.mxu0 0.0
    %7215 = vmatprep.subr.mxu0 0.0
    %7216 = vmatpush1.msra.mxu0 0.0
    %7217 = vmatprep.subr.mxu0 0.0
    %7218 = vmatpush1.msra.mxu0 %v7091
    %7219 = vmatprep.subr.mxu0 0.0
    %7220 = vmatpush1.msra.mxu0 %v7090
    %7221 = vmatprep.subr.mxu0 0.0
    %7222 = vmatpush1.msra.mxu0 %v7089
    %7223 = vmatprep.subr.mxu0 0.0
    %7224 = vmatpush1.msra.mxu0 %v7088
    %7225 = vmatprep.subr.mxu0 0.0
    %7226 = vmatpush2.msra.mxu0 0.0
    %7227 = vmatprep.subr.mxu0 0.0
    %7228 = vmatpush2.msra.mxu0 0.0
    %7229 = vmatprep.subr.mxu0 0.0
    %7230 = vmatpush2.msra.mxu0 0.0
    %7231 = vmatprep.subr.mxu0 0.0
    %7232 = vmatpush2.msra.mxu0 0.0
    %7233 = vmatprep.subr.mxu0 0.0
    %7234 = vmatpush2.msra.mxu0 0.0
    %7235 = vmatprep.subr.mxu0 0.0
    %7236 = vmatpush2.msra.mxu0 0.0
    %7237 = vmatprep.subr.mxu0 0.0
    %7238 = vmatpush2.msra.mxu0 0.0
    %7239 = vmatprep.subr.mxu0 0.0
    %7240 = vmatpush2.msra.mxu0 0.0
    %7241 = vmatprep.subr.mxu0 0.0
    %7242 = vmatpush2.msra.mxu0 0.0
    %7243 = vmatprep.subr.mxu0 0.0
    %7244 = vmatpush2.msra.mxu0 0.0
    %7245 = vmatprep.subr.mxu0 0.0
    %7246 = vmatpush2.msra.mxu0 0.0
    %7247 = vmatprep.subr.mxu0 0.0
    %7248 = vmatpush2.msra.mxu0 0.0
    %7249 = vmatprep.subr.mxu0 0.0
    %7250 = vmatpush2.msra.mxu0 0.0
    %7251 = vmatprep.subr.mxu0 0.0
    %7252 = vmatpush2.msra.mxu0 0.0
    %7253 = vmatprep.subr.mxu0 0.0
    %7254 = vmatpush2.msra.mxu0 0.0
    %7255 = vmatprep.subr.mxu0 0.0
    %7256 = vmatpush2.msra.mxu0 0.0
    %7257 = vmatprep.mubr.f32.mxu0 0.0
    %7258 = vmatmul.mubr.f32.gmra.mxu0 %v3503
    %v7259 = vpop.f32.mrf.mxu0
    %v7260 = vadd.f32 0.0, %v7259
    %v7261 = vpop.f32.mrf.mxu0
    %7262 = vmatprep.mubr.f32.mxu0 0.0
    %7263 = vmatmul.mubr.f32.gmra.mxu0 %v3506
    %v7264 = vpop.f32.mrf.mxu0
    %v7265 = vadd.f32 0.0, %v7264
    %v7266 = vpop.f32.mrf.mxu0
    %7267 = vmatprep.mubr.f32.mxu0 0.0
    %7268 = vmatmul.mubr.f32.gmra.mxu0 %v3509
    %v7269 = vpop.f32.mrf.mxu0
    %v7270 = vadd.f32 0.0, %v7269
    %v7271 = vpop.f32.mrf.mxu0
    %7272 = vmatprep.mubr.f32.mxu0 0.0
    %7273 = vmatmul.mubr.f32.gmra.mxu0 %v3512
    %v7274 = vpop.f32.mrf.mxu0
    %v7275 = vadd.f32 0.0, %v7274
    %v7276 = vpop.f32.mrf.mxu0
    %7277 = vdwg.mxu0
    %s7278 = scalar_lea.vmem %s9, 128
    %v7279 = vld [vmem:[%s7278] sm:$0xff]
    %v7280 = vld [vmem:[%s7278 + $0x8] sm:$0xff]
    %v7281 = vld [vmem:[%s7278 + $0x10] sm:$0xff]
    %v7282 = vld [vmem:[%s7278 + $0x18] sm:$0xff]
    %v7283 = vld [vmem:[%s7278 + $0x20] sm:$0xff]
    %v7284 = vld [vmem:[%s7278 + $0x28] sm:$0xff]
    %v7285 = vld [vmem:[%s7278 + $0x30] sm:$0xff]
    %v7286 = vld [vmem:[%s7278 + $0x38] sm:$0xff]
    %v7287 = vld [vmem:[%s7278 + $0x40] sm:$0xff]
    %v7288 = vld [vmem:[%s7278 + $0x48] sm:$0xff]
    %v7289 = vld [vmem:[%s7278 + $0x50] sm:$0xff]
    %v7290 = vld [vmem:[%s7278 + $0x58] sm:$0xff]
    %v7291 = vld [vmem:[%s7278 + $0x60] sm:$0xff]
    %v7292 = vld [vmem:[%s7278 + $0x68] sm:$0xff]
    %v7293 = vld [vmem:[%s7278 + $0x70] sm:$0xff]
    %v7294 = vld [vmem:[%s7278 + $0x78] sm:$0xff]
    %7295 = vmatprep.subr.mxu0 0.0
    %7296 = vmatpush1.msra.mxu0 %v7294
    %7297 = vmatprep.subr.mxu0 0.0
    %7298 = vmatpush1.msra.mxu0 %v7293
    %7299 = vmatprep.subr.mxu0 0.0
    %7300 = vmatpush1.msra.mxu0 %v7292
    %7301 = vmatprep.subr.mxu0 0.0
    %7302 = vmatpush1.msra.mxu0 %v7291
    %7303 = vmatprep.subr.mxu0 0.0
    %7304 = vmatpush1.msra.mxu0 %v7290
    %7305 = vmatprep.subr.mxu0 0.0
    %7306 = vmatpush1.msra.mxu0 %v7289
    %7307 = vmatprep.subr.mxu0 0.0
    %7308 = vmatpush1.msra.mxu0 %v7288
    %7309 = vmatprep.subr.mxu0 0.0
    %7310 = vmatpush1.msra.mxu0 %v7287
    %7311 = vmatprep.subr.mxu0 0.0
    %7312 = vmatpush1.msra.mxu0 %v7286
    %7313 = vmatprep.subr.mxu0 0.0
    %7314 = vmatpush1.msra.mxu0 %v7285
    %7315 = vmatprep.subr.mxu0 0.0
    %7316 = vmatpush1.msra.mxu0 %v7284
    %7317 = vmatprep.subr.mxu0 0.0
    %7318 = vmatpush1.msra.mxu0 %v7283
    %7319 = vmatprep.subr.mxu0 0.0
    %7320 = vmatpush1.msra.mxu0 %v7282
    %7321 = vmatprep.subr.mxu0 0.0
    %7322 = vmatpush1.msra.mxu0 %v7281
    %7323 = vmatprep.subr.mxu0 0.0
    %7324 = vmatpush1.msra.mxu0 %v7280
    %7325 = vmatprep.subr.mxu0 0.0
    %7326 = vmatpush1.msra.mxu0 %v7279
    %7327 = vmatprep.subr.mxu0 0.0
    %7328 = vmatpush2.msra.mxu0 0.0
    %7329 = vmatprep.subr.mxu0 0.0
    %7330 = vmatpush2.msra.mxu0 0.0
    %7331 = vmatprep.subr.mxu0 0.0
    %7332 = vmatpush2.msra.mxu0 0.0
    %7333 = vmatprep.subr.mxu0 0.0
    %7334 = vmatpush2.msra.mxu0 0.0
    %7335 = vmatprep.subr.mxu0 0.0
    %7336 = vmatpush2.msra.mxu0 0.0
    %7337 = vmatprep.subr.mxu0 0.0
    %7338 = vmatpush2.msra.mxu0 0.0
    %7339 = vmatprep.subr.mxu0 0.0
    %7340 = vmatpush2.msra.mxu0 0.0
    %7341 = vmatprep.subr.mxu0 0.0
    %7342 = vmatpush2.msra.mxu0 0.0
    %7343 = vmatprep.subr.mxu0 0.0
    %7344 = vmatpush2.msra.mxu0 0.0
    %7345 = vmatprep.subr.mxu0 0.0
    %7346 = vmatpush2.msra.mxu0 0.0
    %7347 = vmatprep.subr.mxu0 0.0
    %7348 = vmatpush2.msra.mxu0 0.0
    %7349 = vmatprep.subr.mxu0 0.0
    %7350 = vmatpush2.msra.mxu0 0.0
    %7351 = vmatprep.subr.mxu0 0.0
    %7352 = vmatpush2.msra.mxu0 0.0
    %7353 = vmatprep.subr.mxu0 0.0
    %7354 = vmatpush2.msra.mxu0 0.0
    %7355 = vmatprep.subr.mxu0 0.0
    %7356 = vmatpush2.msra.mxu0 0.0
    %7357 = vmatprep.subr.mxu0 0.0
    %7358 = vmatpush2.msra.mxu0 0.0
    %7359 = vmatprep.mubr.f32.mxu0 0.0
    %7360 = vmatmul.mubr.f32.gmra.mxu0 %v7260
    %v7361 = vpop.f32.mrf.mxu0
    %v7362 = vadd.f32 0.0, %v7361
    %v7363 = vpop.f32.mrf.mxu0
    %7364 = vmatprep.mubr.f32.mxu0 0.0
    %7365 = vmatmul.mubr.f32.gmra.mxu0 %v7265
    %v7366 = vpop.f32.mrf.mxu0
    %v7367 = vadd.f32 0.0, %v7366
    %v7368 = vpop.f32.mrf.mxu0
    %7369 = vmatprep.mubr.f32.mxu0 0.0
    %7370 = vmatmul.mubr.f32.gmra.mxu0 %v7270
    %v7371 = vpop.f32.mrf.mxu0
    %v7372 = vadd.f32 0.0, %v7371
    %v7373 = vpop.f32.mrf.mxu0
    %7374 = vmatprep.mubr.f32.mxu0 0.0
    %7375 = vmatmul.mubr.f32.gmra.mxu0 %v7275
    %v7376 = vpop.f32.mrf.mxu0
    %v7377 = vadd.f32 0.0, %v7376
    %v7378 = vpop.f32.mrf.mxu0
    %7379 = vdwg.mxu0
    %7380 = vmatprep.subr.mxu0 0.0
    %7381 = vmatpush1.msra.mxu0 %v7192
    %7382 = vmatprep.subr.mxu0 0.0
    %7383 = vmatpush1.msra.mxu0 %v7191
    %7384 = vmatprep.subr.mxu0 0.0
    %7385 = vmatpush1.msra.mxu0 %v7190
    %7386 = vmatprep.subr.mxu0 0.0
    %7387 = vmatpush1.msra.mxu0 %v7189
    %7388 = vmatprep.subr.mxu0 0.0
    %7389 = vmatpush1.msra.mxu0 %v7188
    %7390 = vmatprep.subr.mxu0 0.0
    %7391 = vmatpush1.msra.mxu0 %v7187
    %7392 = vmatprep.subr.mxu0 0.0
    %7393 = vmatpush1.msra.mxu0 %v7186
    %7394 = vmatprep.subr.mxu0 0.0
    %7395 = vmatpush1.msra.mxu0 %v7185
    %7396 = vmatprep.subr.mxu0 0.0
    %7397 = vmatpush1.msra.mxu0 %v7184
    %7398 = vmatprep.subr.mxu0 0.0
    %7399 = vmatpush1.msra.mxu0 %v7183
    %7400 = vmatprep.subr.mxu0 0.0
    %7401 = vmatpush1.msra.mxu0 %v7182
    %7402 = vmatprep.subr.mxu0 0.0
    %7403 = vmatpush1.msra.mxu0 %v7181
    %7404 = vmatprep.subr.mxu0 0.0
    %7405 = vmatpush1.msra.mxu0 %v7180
    %7406 = vmatprep.subr.mxu0 0.0
    %7407 = vmatpush1.msra.mxu0 %v7179
    %7408 = vmatprep.subr.mxu0 0.0
    %7409 = vmatpush1.msra.mxu0 %v7178
    %7410 = vmatprep.subr.mxu0 0.0
    %7411 = vmatpush1.msra.mxu0 %v7177
    %7412 = vmatprep.subr.mxu0 0.0
    %7413 = vmatpush2.msra.mxu0 0.0
    %7414 = vmatprep.subr.mxu0 0.0
    %7415 = vmatpush2.msra.mxu0 0.0
    %7416 = vmatprep.subr.mxu0 0.0
    %7417 = vmatpush2.msra.mxu0 0.0
    %7418 = vmatprep.subr.mxu0 0.0
    %7419 = vmatpush2.msra.mxu0 0.0
    %7420 = vmatprep.subr.mxu0 0.0
    %7421 = vmatpush2.msra.mxu0 0.0
    %7422 = vmatprep.subr.mxu0 0.0
    %7423 = vmatpush2.msra.mxu0 0.0
    %7424 = vmatprep.subr.mxu0 0.0
    %7425 = vmatpush2.msra.mxu0 0.0
    %7426 = vmatprep.subr.mxu0 0.0
    %7427 = vmatpush2.msra.mxu0 0.0
    %7428 = vmatprep.subr.mxu0 0.0
    %7429 = vmatpush2.msra.mxu0 0.0
    %7430 = vmatprep.subr.mxu0 0.0
    %7431 = vmatpush2.msra.mxu0 0.0
    %7432 = vmatprep.subr.mxu0 0.0
    %7433 = vmatpush2.msra.mxu0 0.0
    %7434 = vmatprep.subr.mxu0 0.0
    %7435 = vmatpush2.msra.mxu0 0.0
    %7436 = vmatprep.subr.mxu0 0.0
    %7437 = vmatpush2.msra.mxu0 0.0
    %7438 = vmatprep.subr.mxu0 0.0
    %7439 = vmatpush2.msra.mxu0 0.0
    %7440 = vmatprep.subr.mxu0 0.0
    %7441 = vmatpush2.msra.mxu0 0.0
    %7442 = vmatprep.subr.mxu0 0.0
    %7443 = vmatpush2.msra.mxu0 0.0
    %7444 = vmatprep.mubr.f32.mxu0 0.0
    %7445 = vmatmul.mubr.f32.gmra.mxu0 %v7159
    %v7446 = vpop.f32.mrf.mxu0
    %v7447 = vadd.f32 %v7362, %v7446
    %v7448 = vpop.f32.mrf.mxu0
    %7449 = vmatprep.mubr.f32.mxu0 0.0
    %7450 = vmatmul.mubr.f32.gmra.mxu0 %v7164
    %v7451 = vpop.f32.mrf.mxu0
    %v7452 = vadd.f32 %v7367, %v7451
    %v7453 = vpop.f32.mrf.mxu0
    %7454 = vmatprep.mubr.f32.mxu0 0.0
    %7455 = vmatmul.mubr.f32.gmra.mxu0 %v7169
    %v7456 = vpop.f32.mrf.mxu0
    %v7457 = vadd.f32 %v7372, %v7456
    %v7458 = vpop.f32.mrf.mxu0
    %7459 = vmatprep.mubr.f32.mxu0 0.0
    %7460 = vmatmul.mubr.f32.gmra.mxu0 %v7174
    %v7461 = vpop.f32.mrf.mxu0
    %v7462 = vadd.f32 %v7377, %v7461
    %v7463 = vpop.f32.mrf.mxu0
    %7464 = vdwg.mxu0
    %7465 = vmatprep.subr.mxu0 0.0
    %7466 = vmatpush1.msra.mxu0 0.0
    %7467 = vmatprep.subr.mxu0 0.0
    %7468 = vmatpush1.msra.mxu0 0.0
    %7469 = vmatprep.subr.mxu0 0.0
    %7470 = vmatpush1.msra.mxu0 0.0
    %7471 = vmatprep.subr.mxu0 0.0
    %7472 = vmatpush1.msra.mxu0 0.0
    %7473 = vmatprep.subr.mxu0 0.0
    %7474 = vmatpush1.msra.mxu0 0.0
    %7475 = vmatprep.subr.mxu0 0.0
    %7476 = vmatpush1.msra.mxu0 0.0
    %7477 = vmatprep.subr.mxu0 0.0
    %7478 = vmatpush1.msra.mxu0 0.0
    %7479 = vmatprep.subr.mxu0 0.0
    %7480 = vmatpush1.msra.mxu0 0.0
    %7481 = vmatprep.subr.mxu0 0.0
    %7482 = vmatpush1.msra.mxu0 0.0
    %7483 = vmatprep.subr.mxu0 0.0
    %7484 = vmatpush1.msra.mxu0 0.0
    %7485 = vmatprep.subr.mxu0 0.0
    %7486 = vmatpush1.msra.mxu0 0.0
    %7487 = vmatprep.subr.mxu0 0.0
    %7488 = vmatpush1.msra.mxu0 0.0
    %7489 = vmatprep.subr.mxu0 0.0
    %7490 = vmatpush1.msra.mxu0 %v7091
    %7491 = vmatprep.subr.mxu0 0.0
    %7492 = vmatpush1.msra.mxu0 %v7090
    %7493 = vmatprep.subr.mxu0 0.0
    %7494 = vmatpush1.msra.mxu0 %v7089
    %7495 = vmatprep.subr.mxu0 0.0
    %7496 = vmatpush1.msra.mxu0 %v7088
    %7497 = vmatprep.subr.mxu0 0.0
    %7498 = vmatpush2.msra.mxu0 0.0
    %7499 = vmatprep.subr.mxu0 0.0
    %7500 = vmatpush2.msra.mxu0 0.0
    %7501 = vmatprep.subr.mxu0 0.0
    %7502 = vmatpush2.msra.mxu0 0.0
    %7503 = vmatprep.subr.mxu0 0.0
    %7504 = vmatpush2.msra.mxu0 0.0
    %7505 = vmatprep.subr.mxu0 0.0
    %7506 = vmatpush2.msra.mxu0 0.0
    %7507 = vmatprep.subr.mxu0 0.0
    %7508 = vmatpush2.msra.mxu0 0.0
    %7509 = vmatprep.subr.mxu0 0.0
    %7510 = vmatpush2.msra.mxu0 0.0
    %7511 = vmatprep.subr.mxu0 0.0
    %7512 = vmatpush2.msra.mxu0 0.0
    %7513 = vmatprep.subr.mxu0 0.0
    %7514 = vmatpush2.msra.mxu0 0.0
    %7515 = vmatprep.subr.mxu0 0.0
    %7516 = vmatpush2.msra.mxu0 0.0
    %7517 = vmatprep.subr.mxu0 0.0
    %7518 = vmatpush2.msra.mxu0 0.0
    %7519 = vmatprep.subr.mxu0 0.0
    %7520 = vmatpush2.msra.mxu0 0.0
    %7521 = vmatprep.subr.mxu0 0.0
    %7522 = vmatpush2.msra.mxu0 0.0
    %7523 = vmatprep.subr.mxu0 0.0
    %7524 = vmatpush2.msra.mxu0 0.0
    %7525 = vmatprep.subr.mxu0 0.0
    %7526 = vmatpush2.msra.mxu0 0.0
    %7527 = vmatprep.subr.mxu0 0.0
    %7528 = vmatpush2.msra.mxu0 0.0
    %7529 = vmatprep.mubr.f32.mxu0 0.0
    %7530 = vmatmul.mubr.f32.gmra.mxu0 %v3792
    %v7531 = vpop.f32.mrf.mxu0
    %v7532 = vadd.f32 0.0, %v7531
    %v7533 = vpop.f32.mrf.mxu0
    %7534 = vmatprep.mubr.f32.mxu0 0.0
    %7535 = vmatmul.mubr.f32.gmra.mxu0 %v3795
    %v7536 = vpop.f32.mrf.mxu0
    %v7537 = vadd.f32 0.0, %v7536
    %v7538 = vpop.f32.mrf.mxu0
    %7539 = vmatprep.mubr.f32.mxu0 0.0
    %7540 = vmatmul.mubr.f32.gmra.mxu0 %v3798
    %v7541 = vpop.f32.mrf.mxu0
    %v7542 = vadd.f32 0.0, %v7541
    %v7543 = vpop.f32.mrf.mxu0
    %7544 = vmatprep.mubr.f32.mxu0 0.0
    %7545 = vmatmul.mubr.f32.gmra.mxu0 %v3801
    %v7546 = vpop.f32.mrf.mxu0
    %v7547 = vadd.f32 0.0, %v7546
    %v7548 = vpop.f32.mrf.mxu0
    %7549 = vdwg.mxu0
    %s7550 = scalar_lea.vmem %s9, 256
    %v7551 = vld [vmem:[%s7550] sm:$0xff]
    %v7552 = vld [vmem:[%s7550 + $0x8] sm:$0xff]
    %v7553 = vld [vmem:[%s7550 + $0x10] sm:$0xff]
    %v7554 = vld [vmem:[%s7550 + $0x18] sm:$0xff]
    %v7555 = vld [vmem:[%s7550 + $0x20] sm:$0xff]
    %v7556 = vld [vmem:[%s7550 + $0x28] sm:$0xff]
    %v7557 = vld [vmem:[%s7550 + $0x30] sm:$0xff]
    %v7558 = vld [vmem:[%s7550 + $0x38] sm:$0xff]
    %v7559 = vld [vmem:[%s7550 + $0x40] sm:$0xff]
    %v7560 = vld [vmem:[%s7550 + $0x48] sm:$0xff]
    %v7561 = vld [vmem:[%s7550 + $0x50] sm:$0xff]
    %v7562 = vld [vmem:[%s7550 + $0x58] sm:$0xff]
    %v7563 = vld [vmem:[%s7550 + $0x60] sm:$0xff]
    %v7564 = vld [vmem:[%s7550 + $0x68] sm:$0xff]
    %v7565 = vld [vmem:[%s7550 + $0x70] sm:$0xff]
    %v7566 = vld [vmem:[%s7550 + $0x78] sm:$0xff]
    %7567 = vmatprep.subr.mxu0 0.0
    %7568 = vmatpush1.msra.mxu0 %v7566
    %7569 = vmatprep.subr.mxu0 0.0
    %7570 = vmatpush1.msra.mxu0 %v7565
    %7571 = vmatprep.subr.mxu0 0.0
    %7572 = vmatpush1.msra.mxu0 %v7564
    %7573 = vmatprep.subr.mxu0 0.0
    %7574 = vmatpush1.msra.mxu0 %v7563
    %7575 = vmatprep.subr.mxu0 0.0
    %7576 = vmatpush1.msra.mxu0 %v7562
    %7577 = vmatprep.subr.mxu0 0.0
    %7578 = vmatpush1.msra.mxu0 %v7561
    %7579 = vmatprep.subr.mxu0 0.0
    %7580 = vmatpush1.msra.mxu0 %v7560
    %7581 = vmatprep.subr.mxu0 0.0
    %7582 = vmatpush1.msra.mxu0 %v7559
    %7583 = vmatprep.subr.mxu0 0.0
    %7584 = vmatpush1.msra.mxu0 %v7558
    %7585 = vmatprep.subr.mxu0 0.0
    %7586 = vmatpush1.msra.mxu0 %v7557
    %7587 = vmatprep.subr.mxu0 0.0
    %7588 = vmatpush1.msra.mxu0 %v7556
    %7589 = vmatprep.subr.mxu0 0.0
    %7590 = vmatpush1.msra.mxu0 %v7555
    %7591 = vmatprep.subr.mxu0 0.0
    %7592 = vmatpush1.msra.mxu0 %v7554
    %7593 = vmatprep.subr.mxu0 0.0
    %7594 = vmatpush1.msra.mxu0 %v7553
    %7595 = vmatprep.subr.mxu0 0.0
    %7596 = vmatpush1.msra.mxu0 %v7552
    %7597 = vmatprep.subr.mxu0 0.0
    %7598 = vmatpush1.msra.mxu0 %v7551
    %7599 = vmatprep.subr.mxu0 0.0
    %7600 = vmatpush2.msra.mxu0 0.0
    %7601 = vmatprep.subr.mxu0 0.0
    %7602 = vmatpush2.msra.mxu0 0.0
    %7603 = vmatprep.subr.mxu0 0.0
    %7604 = vmatpush2.msra.mxu0 0.0
    %7605 = vmatprep.subr.mxu0 0.0
    %7606 = vmatpush2.msra.mxu0 0.0
    %7607 = vmatprep.subr.mxu0 0.0
    %7608 = vmatpush2.msra.mxu0 0.0
    %7609 = vmatprep.subr.mxu0 0.0
    %7610 = vmatpush2.msra.mxu0 0.0
    %7611 = vmatprep.subr.mxu0 0.0
    %7612 = vmatpush2.msra.mxu0 0.0
    %7613 = vmatprep.subr.mxu0 0.0
    %7614 = vmatpush2.msra.mxu0 0.0
    %7615 = vmatprep.subr.mxu0 0.0
    %7616 = vmatpush2.msra.mxu0 0.0
    %7617 = vmatprep.subr.mxu0 0.0
    %7618 = vmatpush2.msra.mxu0 0.0
    %7619 = vmatprep.subr.mxu0 0.0
    %7620 = vmatpush2.msra.mxu0 0.0
    %7621 = vmatprep.subr.mxu0 0.0
    %7622 = vmatpush2.msra.mxu0 0.0
    %7623 = vmatprep.subr.mxu0 0.0
    %7624 = vmatpush2.msra.mxu0 0.0
    %7625 = vmatprep.subr.mxu0 0.0
    %7626 = vmatpush2.msra.mxu0 0.0
    %7627 = vmatprep.subr.mxu0 0.0
    %7628 = vmatpush2.msra.mxu0 0.0
    %7629 = vmatprep.subr.mxu0 0.0
    %7630 = vmatpush2.msra.mxu0 0.0
    %7631 = vmatprep.mubr.f32.mxu0 0.0
    %7632 = vmatmul.mubr.f32.gmra.mxu0 %v7532
    %v7633 = vpop.f32.mrf.mxu0
    %v7634 = vadd.f32 0.0, %v7633
    %v7635 = vpop.f32.mrf.mxu0
    %7636 = vmatprep.mubr.f32.mxu0 0.0
    %7637 = vmatmul.mubr.f32.gmra.mxu0 %v7537
    %v7638 = vpop.f32.mrf.mxu0
    %v7639 = vadd.f32 0.0, %v7638
    %v7640 = vpop.f32.mrf.mxu0
    %7641 = vmatprep.mubr.f32.mxu0 0.0
    %7642 = vmatmul.mubr.f32.gmra.mxu0 %v7542
    %v7643 = vpop.f32.mrf.mxu0
    %v7644 = vadd.f32 0.0, %v7643
    %v7645 = vpop.f32.mrf.mxu0
    %7646 = vmatprep.mubr.f32.mxu0 0.0
    %7647 = vmatmul.mubr.f32.gmra.mxu0 %v7547
    %v7648 = vpop.f32.mrf.mxu0
    %v7649 = vadd.f32 0.0, %v7648
    %v7650 = vpop.f32.mrf.mxu0
    %7651 = vdwg.mxu0
    %v7652 = vadd.f32 %v7447, %v7634
    %v7653 = vadd.f32 %v7452, %v7639
    %v7654 = vadd.f32 %v7457, %v7644
    %v7655 = vadd.f32 %v7462, %v7649
    %7656 = vmatprep.subr.mxu0 0.0
    %7657 = vmatpush1.msra.mxu0 0.0
    %7658 = vmatprep.subr.mxu0 0.0
    %7659 = vmatpush1.msra.mxu0 0.0
    %7660 = vmatprep.subr.mxu0 0.0
    %7661 = vmatpush1.msra.mxu0 0.0
    %7662 = vmatprep.subr.mxu0 0.0
    %7663 = vmatpush1.msra.mxu0 0.0
    %7664 = vmatprep.subr.mxu0 0.0
    %7665 = vmatpush1.msra.mxu0 0.0
    %7666 = vmatprep.subr.mxu0 0.0
    %7667 = vmatpush1.msra.mxu0 0.0
    %7668 = vmatprep.subr.mxu0 0.0
    %7669 = vmatpush1.msra.mxu0 0.0
    %7670 = vmatprep.subr.mxu0 0.0
    %7671 = vmatpush1.msra.mxu0 0.0
    %7672 = vmatprep.subr.mxu0 0.0
    %7673 = vmatpush1.msra.mxu0 0.0
    %7674 = vmatprep.subr.mxu0 0.0
    %7675 = vmatpush1.msra.mxu0 0.0
    %7676 = vmatprep.subr.mxu0 0.0
    %7677 = vmatpush1.msra.mxu0 0.0
    %7678 = vmatprep.subr.mxu0 0.0
    %7679 = vmatpush1.msra.mxu0 0.0
    %7680 = vmatprep.subr.mxu0 0.0
    %7681 = vmatpush1.msra.mxu0 %v7091
    %7682 = vmatprep.subr.mxu0 0.0
    %7683 = vmatpush1.msra.mxu0 %v7090
    %7684 = vmatprep.subr.mxu0 0.0
    %7685 = vmatpush1.msra.mxu0 %v7089
    %7686 = vmatprep.subr.mxu0 0.0
    %7687 = vmatpush1.msra.mxu0 %v7088
    %7688 = vmatprep.subr.mxu0 0.0
    %7689 = vmatpush2.msra.mxu0 0.0
    %7690 = vmatprep.subr.mxu0 0.0
    %7691 = vmatpush2.msra.mxu0 0.0
    %7692 = vmatprep.subr.mxu0 0.0
    %7693 = vmatpush2.msra.mxu0 0.0
    %7694 = vmatprep.subr.mxu0 0.0
    %7695 = vmatpush2.msra.mxu0 0.0
    %7696 = vmatprep.subr.mxu0 0.0
    %7697 = vmatpush2.msra.mxu0 0.0
    %7698 = vmatprep.subr.mxu0 0.0
    %7699 = vmatpush2.msra.mxu0 0.0
    %7700 = vmatprep.subr.mxu0 0.0
    %7701 = vmatpush2.msra.mxu0 0.0
    %7702 = vmatprep.subr.mxu0 0.0
    %7703 = vmatpush2.msra.mxu0 0.0
    %7704 = vmatprep.subr.mxu0 0.0
    %7705 = vmatpush2.msra.mxu0 0.0
    %7706 = vmatprep.subr.mxu0 0.0
    %7707 = vmatpush2.msra.mxu0 0.0
    %7708 = vmatprep.subr.mxu0 0.0
    %7709 = vmatpush2.msra.mxu0 0.0
    %7710 = vmatprep.subr.mxu0 0.0
    %7711 = vmatpush2.msra.mxu0 0.0
    %7712 = vmatprep.subr.mxu0 0.0
    %7713 = vmatpush2.msra.mxu0 0.0
    %7714 = vmatprep.subr.mxu0 0.0
    %7715 = vmatpush2.msra.mxu0 0.0
    %7716 = vmatprep.subr.mxu0 0.0
    %7717 = vmatpush2.msra.mxu0 0.0
    %7718 = vmatprep.subr.mxu0 0.0
    %7719 = vmatpush2.msra.mxu0 0.0
    %7720 = vmatprep.mubr.f32.mxu0 0.0
    %7721 = vmatmul.mubr.f32.gmra.mxu0 %v4000
    %v7722 = vpop.f32.mrf.mxu0
    %v7723 = vadd.f32 0.0, %v7722
    %v7724 = vpop.f32.mrf.mxu0
    %7725 = vmatprep.mubr.f32.mxu0 0.0
    %7726 = vmatmul.mubr.f32.gmra.mxu0 %v4003
    %v7727 = vpop.f32.mrf.mxu0
    %v7728 = vadd.f32 0.0, %v7727
    %v7729 = vpop.f32.mrf.mxu0
    %7730 = vmatprep.mubr.f32.mxu0 0.0
    %7731 = vmatmul.mubr.f32.gmra.mxu0 %v4006
    %v7732 = vpop.f32.mrf.mxu0
    %v7733 = vadd.f32 0.0, %v7732
    %v7734 = vpop.f32.mrf.mxu0
    %7735 = vmatprep.mubr.f32.mxu0 0.0
    %7736 = vmatmul.mubr.f32.gmra.mxu0 %v4009
    %v7737 = vpop.f32.mrf.mxu0
    %v7738 = vadd.f32 0.0, %v7737
    %v7739 = vpop.f32.mrf.mxu0
    %7740 = vdwg.mxu0
    %s7741 = scalar_lea.vmem %s9, 384
    %v7742 = vld [vmem:[%s7741] sm:$0xff]
    %v7743 = vld [vmem:[%s7741 + $0x8] sm:$0xff]
    %v7744 = vld [vmem:[%s7741 + $0x10] sm:$0xff]
    %v7745 = vld [vmem:[%s7741 + $0x18] sm:$0xff]
    %v7746 = vld [vmem:[%s7741 + $0x20] sm:$0xff]
    %v7747 = vld [vmem:[%s7741 + $0x28] sm:$0xff]
    %v7748 = vld [vmem:[%s7741 + $0x30] sm:$0xff]
    %v7749 = vld [vmem:[%s7741 + $0x38] sm:$0xff]
    %v7750 = vld [vmem:[%s7741 + $0x40] sm:$0xff]
    %v7751 = vld [vmem:[%s7741 + $0x48] sm:$0xff]
    %v7752 = vld [vmem:[%s7741 + $0x50] sm:$0xff]
    %v7753 = vld [vmem:[%s7741 + $0x58] sm:$0xff]
    %v7754 = vld [vmem:[%s7741 + $0x60] sm:$0xff]
    %v7755 = vld [vmem:[%s7741 + $0x68] sm:$0xff]
    %v7756 = vld [vmem:[%s7741 + $0x70] sm:$0xff]
    %v7757 = vld [vmem:[%s7741 + $0x78] sm:$0xff]
    %7758 = vmatprep.subr.mxu0 0.0
    %7759 = vmatpush1.msra.mxu0 %v7757
    %7760 = vmatprep.subr.mxu0 0.0
    %7761 = vmatpush1.msra.mxu0 %v7756
    %7762 = vmatprep.subr.mxu0 0.0
    %7763 = vmatpush1.msra.mxu0 %v7755
    %7764 = vmatprep.subr.mxu0 0.0
    %7765 = vmatpush1.msra.mxu0 %v7754
    %7766 = vmatprep.subr.mxu0 0.0
    %7767 = vmatpush1.msra.mxu0 %v7753
    %7768 = vmatprep.subr.mxu0 0.0
    %7769 = vmatpush1.msra.mxu0 %v7752
    %7770 = vmatprep.subr.mxu0 0.0
    %7771 = vmatpush1.msra.mxu0 %v7751
    %7772 = vmatprep.subr.mxu0 0.0
    %7773 = vmatpush1.msra.mxu0 %v7750
    %7774 = vmatprep.subr.mxu0 0.0
    %7775 = vmatpush1.msra.mxu0 %v7749
    %7776 = vmatprep.subr.mxu0 0.0
    %7777 = vmatpush1.msra.mxu0 %v7748
    %7778 = vmatprep.subr.mxu0 0.0
    %7779 = vmatpush1.msra.mxu0 %v7747
    %7780 = vmatprep.subr.mxu0 0.0
    %7781 = vmatpush1.msra.mxu0 %v7746
    %7782 = vmatprep.subr.mxu0 0.0
    %7783 = vmatpush1.msra.mxu0 %v7745
    %7784 = vmatprep.subr.mxu0 0.0
    %7785 = vmatpush1.msra.mxu0 %v7744
    %7786 = vmatprep.subr.mxu0 0.0
    %7787 = vmatpush1.msra.mxu0 %v7743
    %7788 = vmatprep.subr.mxu0 0.0
    %7789 = vmatpush1.msra.mxu0 %v7742
    %7790 = vmatprep.subr.mxu0 0.0
    %7791 = vmatpush2.msra.mxu0 0.0
    %7792 = vmatprep.subr.mxu0 0.0
    %7793 = vmatpush2.msra.mxu0 0.0
    %7794 = vmatprep.subr.mxu0 0.0
    %7795 = vmatpush2.msra.mxu0 0.0
    %7796 = vmatprep.subr.mxu0 0.0
    %7797 = vmatpush2.msra.mxu0 0.0
    %7798 = vmatprep.subr.mxu0 0.0
    %7799 = vmatpush2.msra.mxu0 0.0
    %7800 = vmatprep.subr.mxu0 0.0
    %7801 = vmatpush2.msra.mxu0 0.0
    %7802 = vmatprep.subr.mxu0 0.0
    %7803 = vmatpush2.msra.mxu0 0.0
    %7804 = vmatprep.subr.mxu0 0.0
    %7805 = vmatpush2.msra.mxu0 0.0
    %7806 = vmatprep.subr.mxu0 0.0
    %7807 = vmatpush2.msra.mxu0 0.0
    %7808 = vmatprep.subr.mxu0 0.0
    %7809 = vmatpush2.msra.mxu0 0.0
    %7810 = vmatprep.subr.mxu0 0.0
    %7811 = vmatpush2.msra.mxu0 0.0
    %7812 = vmatprep.subr.mxu0 0.0
    %7813 = vmatpush2.msra.mxu0 0.0
    %7814 = vmatprep.subr.mxu0 0.0
    %7815 = vmatpush2.msra.mxu0 0.0
    %7816 = vmatprep.subr.mxu0 0.0
    %7817 = vmatpush2.msra.mxu0 0.0
    %7818 = vmatprep.subr.mxu0 0.0
    %7819 = vmatpush2.msra.mxu0 0.0
    %7820 = vmatprep.subr.mxu0 0.0
    %7821 = vmatpush2.msra.mxu0 0.0
    %7822 = vmatprep.mubr.f32.mxu0 0.0
    %7823 = vmatmul.mubr.f32.gmra.mxu0 %v7723
    %v7824 = vpop.f32.mrf.mxu0
    %v7825 = vadd.f32 0.0, %v7824
    %v7826 = vpop.f32.mrf.mxu0
    %7827 = vmatprep.mubr.f32.mxu0 0.0
    %7828 = vmatmul.mubr.f32.gmra.mxu0 %v7728
    %v7829 = vpop.f32.mrf.mxu0
    %v7830 = vadd.f32 0.0, %v7829
    %v7831 = vpop.f32.mrf.mxu0
    %7832 = vmatprep.mubr.f32.mxu0 0.0
    %7833 = vmatmul.mubr.f32.gmra.mxu0 %v7733
    %v7834 = vpop.f32.mrf.mxu0
    %v7835 = vadd.f32 0.0, %v7834
    %v7836 = vpop.f32.mrf.mxu0
    %7837 = vmatprep.mubr.f32.mxu0 0.0
    %7838 = vmatmul.mubr.f32.gmra.mxu0 %v7738
    %v7839 = vpop.f32.mrf.mxu0
    %v7840 = vadd.f32 0.0, %v7839
    %v7841 = vpop.f32.mrf.mxu0
    %7842 = vdwg.mxu0
    %v7843 = vadd.f32 %v7652, %v7825
    %v7844 = vadd.f32 %v7653, %v7830
    %v7845 = vadd.f32 %v7654, %v7835
    %v7846 = vadd.f32 %v7655, %v7840
    %7847 = vmatprep.subr.mxu0 0.0
    %7848 = vmatpush1.msra.mxu0 0.0
    %7849 = vmatprep.subr.mxu0 0.0
    %7850 = vmatpush1.msra.mxu0 0.0
    %7851 = vmatprep.subr.mxu0 0.0
    %7852 = vmatpush1.msra.mxu0 0.0
    %7853 = vmatprep.subr.mxu0 0.0
    %7854 = vmatpush1.msra.mxu0 0.0
    %7855 = vmatprep.subr.mxu0 0.0
    %7856 = vmatpush1.msra.mxu0 0.0
    %7857 = vmatprep.subr.mxu0 0.0
    %7858 = vmatpush1.msra.mxu0 0.0
    %7859 = vmatprep.subr.mxu0 0.0
    %7860 = vmatpush1.msra.mxu0 0.0
    %7861 = vmatprep.subr.mxu0 0.0
    %7862 = vmatpush1.msra.mxu0 0.0
    %7863 = vmatprep.subr.mxu0 0.0
    %7864 = vmatpush1.msra.mxu0 0.0
    %7865 = vmatprep.subr.mxu0 0.0
    %7866 = vmatpush1.msra.mxu0 0.0
    %7867 = vmatprep.subr.mxu0 0.0
    %7868 = vmatpush1.msra.mxu0 0.0
    %7869 = vmatprep.subr.mxu0 0.0
    %7870 = vmatpush1.msra.mxu0 0.0
    %7871 = vmatprep.subr.mxu0 0.0
    %7872 = vmatpush1.msra.mxu0 %v7091
    %7873 = vmatprep.subr.mxu0 0.0
    %7874 = vmatpush1.msra.mxu0 %v7090
    %7875 = vmatprep.subr.mxu0 0.0
    %7876 = vmatpush1.msra.mxu0 %v7089
    %7877 = vmatprep.subr.mxu0 0.0
    %7878 = vmatpush1.msra.mxu0 %v7088
    %7879 = vmatprep.subr.mxu0 0.0
    %7880 = vmatpush2.msra.mxu0 0.0
    %7881 = vmatprep.subr.mxu0 0.0
    %7882 = vmatpush2.msra.mxu0 0.0
    %7883 = vmatprep.subr.mxu0 0.0
    %7884 = vmatpush2.msra.mxu0 0.0
    %7885 = vmatprep.subr.mxu0 0.0
    %7886 = vmatpush2.msra.mxu0 0.0
    %7887 = vmatprep.subr.mxu0 0.0
    %7888 = vmatpush2.msra.mxu0 0.0
    %7889 = vmatprep.subr.mxu0 0.0
    %7890 = vmatpush2.msra.mxu0 0.0
    %7891 = vmatprep.subr.mxu0 0.0
    %7892 = vmatpush2.msra.mxu0 0.0
    %7893 = vmatprep.subr.mxu0 0.0
    %7894 = vmatpush2.msra.mxu0 0.0
    %7895 = vmatprep.subr.mxu0 0.0
    %7896 = vmatpush2.msra.mxu0 0.0
    %7897 = vmatprep.subr.mxu0 0.0
    %7898 = vmatpush2.msra.mxu0 0.0
    %7899 = vmatprep.subr.mxu0 0.0
    %7900 = vmatpush2.msra.mxu0 0.0
    %7901 = vmatprep.subr.mxu0 0.0
    %7902 = vmatpush2.msra.mxu0 0.0
    %7903 = vmatprep.subr.mxu0 0.0
    %7904 = vmatpush2.msra.mxu0 0.0
    %7905 = vmatprep.subr.mxu0 0.0
    %7906 = vmatpush2.msra.mxu0 0.0
    %7907 = vmatprep.subr.mxu0 0.0
    %7908 = vmatpush2.msra.mxu0 0.0
    %7909 = vmatprep.subr.mxu0 0.0
    %7910 = vmatpush2.msra.mxu0 0.0
    %7911 = vmatprep.mubr.f32.mxu0 0.0
    %7912 = vmatmul.mubr.f32.gmra.mxu0 %v4208
    %v7913 = vpop.f32.mrf.mxu0
    %v7914 = vadd.f32 0.0, %v7913
    %v7915 = vpop.f32.mrf.mxu0
    %7916 = vmatprep.mubr.f32.mxu0 0.0
    %7917 = vmatmul.mubr.f32.gmra.mxu0 %v4211
    %v7918 = vpop.f32.mrf.mxu0
    %v7919 = vadd.f32 0.0, %v7918
    %v7920 = vpop.f32.mrf.mxu0
    %7921 = vmatprep.mubr.f32.mxu0 0.0
    %7922 = vmatmul.mubr.f32.gmra.mxu0 %v4214
    %v7923 = vpop.f32.mrf.mxu0
    %v7924 = vadd.f32 0.0, %v7923
    %v7925 = vpop.f32.mrf.mxu0
    %7926 = vmatprep.mubr.f32.mxu0 0.0
    %7927 = vmatmul.mubr.f32.gmra.mxu0 %v4217
    %v7928 = vpop.f32.mrf.mxu0
    %v7929 = vadd.f32 0.0, %v7928
    %v7930 = vpop.f32.mrf.mxu0
    %7931 = vdwg.mxu0
    %s7932 = scalar_lea.vmem %s9, 512
    %v7933 = vld [vmem:[%s7932] sm:$0xff]
    %v7934 = vld [vmem:[%s7932 + $0x8] sm:$0xff]
    %v7935 = vld [vmem:[%s7932 + $0x10] sm:$0xff]
    %v7936 = vld [vmem:[%s7932 + $0x18] sm:$0xff]
    %v7937 = vld [vmem:[%s7932 + $0x20] sm:$0xff]
    %v7938 = vld [vmem:[%s7932 + $0x28] sm:$0xff]
    %v7939 = vld [vmem:[%s7932 + $0x30] sm:$0xff]
    %v7940 = vld [vmem:[%s7932 + $0x38] sm:$0xff]
    %v7941 = vld [vmem:[%s7932 + $0x40] sm:$0xff]
    %v7942 = vld [vmem:[%s7932 + $0x48] sm:$0xff]
    %v7943 = vld [vmem:[%s7932 + $0x50] sm:$0xff]
    %v7944 = vld [vmem:[%s7932 + $0x58] sm:$0xff]
    %v7945 = vld [vmem:[%s7932 + $0x60] sm:$0xff]
    %v7946 = vld [vmem:[%s7932 + $0x68] sm:$0xff]
    %v7947 = vld [vmem:[%s7932 + $0x70] sm:$0xff]
    %v7948 = vld [vmem:[%s7932 + $0x78] sm:$0xff]
    %7949 = vmatprep.subr.mxu0 0.0
    %7950 = vmatpush1.msra.mxu0 %v7948
    %7951 = vmatprep.subr.mxu0 0.0
    %7952 = vmatpush1.msra.mxu0 %v7947
    %7953 = vmatprep.subr.mxu0 0.0
    %7954 = vmatpush1.msra.mxu0 %v7946
    %7955 = vmatprep.subr.mxu0 0.0
    %7956 = vmatpush1.msra.mxu0 %v7945
    %7957 = vmatprep.subr.mxu0 0.0
    %7958 = vmatpush1.msra.mxu0 %v7944
    %7959 = vmatprep.subr.mxu0 0.0
    %7960 = vmatpush1.msra.mxu0 %v7943
    %7961 = vmatprep.subr.mxu0 0.0
    %7962 = vmatpush1.msra.mxu0 %v7942
    %7963 = vmatprep.subr.mxu0 0.0
    %7964 = vmatpush1.msra.mxu0 %v7941
    %7965 = vmatprep.subr.mxu0 0.0
    %7966 = vmatpush1.msra.mxu0 %v7940
    %7967 = vmatprep.subr.mxu0 0.0
    %7968 = vmatpush1.msra.mxu0 %v7939
    %7969 = vmatprep.subr.mxu0 0.0
    %7970 = vmatpush1.msra.mxu0 %v7938
    %7971 = vmatprep.subr.mxu0 0.0
    %7972 = vmatpush1.msra.mxu0 %v7937
    %7973 = vmatprep.subr.mxu0 0.0
    %7974 = vmatpush1.msra.mxu0 %v7936
    %7975 = vmatprep.subr.mxu0 0.0
    %7976 = vmatpush1.msra.mxu0 %v7935
    %7977 = vmatprep.subr.mxu0 0.0
    %7978 = vmatpush1.msra.mxu0 %v7934
    %7979 = vmatprep.subr.mxu0 0.0
    %7980 = vmatpush1.msra.mxu0 %v7933
    %7981 = vmatprep.subr.mxu0 0.0
    %7982 = vmatpush2.msra.mxu0 0.0
    %7983 = vmatprep.subr.mxu0 0.0
    %7984 = vmatpush2.msra.mxu0 0.0
    %7985 = vmatprep.subr.mxu0 0.0
    %7986 = vmatpush2.msra.mxu0 0.0
    %7987 = vmatprep.subr.mxu0 0.0
    %7988 = vmatpush2.msra.mxu0 0.0
    %7989 = vmatprep.subr.mxu0 0.0
    %7990 = vmatpush2.msra.mxu0 0.0
    %7991 = vmatprep.subr.mxu0 0.0
    %7992 = vmatpush2.msra.mxu0 0.0
    %7993 = vmatprep.subr.mxu0 0.0
    %7994 = vmatpush2.msra.mxu0 0.0
    %7995 = vmatprep.subr.mxu0 0.0
    %7996 = vmatpush2.msra.mxu0 0.0
    %7997 = vmatprep.subr.mxu0 0.0
    %7998 = vmatpush2.msra.mxu0 0.0
    %7999 = vmatprep.subr.mxu0 0.0
    %8000 = vmatpush2.msra.mxu0 0.0
    %8001 = vmatprep.subr.mxu0 0.0
    %8002 = vmatpush2.msra.mxu0 0.0
    %8003 = vmatprep.subr.mxu0 0.0
    %8004 = vmatpush2.msra.mxu0 0.0
    %8005 = vmatprep.subr.mxu0 0.0
    %8006 = vmatpush2.msra.mxu0 0.0
    %8007 = vmatprep.subr.mxu0 0.0
    %8008 = vmatpush2.msra.mxu0 0.0
    %8009 = vmatprep.subr.mxu0 0.0
    %8010 = vmatpush2.msra.mxu0 0.0
    %8011 = vmatprep.subr.mxu0 0.0
    %8012 = vmatpush2.msra.mxu0 0.0
    %8013 = vmatprep.mubr.f32.mxu0 0.0
    %8014 = vmatmul.mubr.f32.gmra.mxu0 %v7914
    %v8015 = vpop.f32.mrf.mxu0
    %v8016 = vadd.f32 0.0, %v8015
    %v8017 = vpop.f32.mrf.mxu0
    %8018 = vmatprep.mubr.f32.mxu0 0.0
    %8019 = vmatmul.mubr.f32.gmra.mxu0 %v7919
    %v8020 = vpop.f32.mrf.mxu0
    %v8021 = vadd.f32 0.0, %v8020
    %v8022 = vpop.f32.mrf.mxu0
    %8023 = vmatprep.mubr.f32.mxu0 0.0
    %8024 = vmatmul.mubr.f32.gmra.mxu0 %v7924
    %v8025 = vpop.f32.mrf.mxu0
    %v8026 = vadd.f32 0.0, %v8025
    %v8027 = vpop.f32.mrf.mxu0
    %8028 = vmatprep.mubr.f32.mxu0 0.0
    %8029 = vmatmul.mubr.f32.gmra.mxu0 %v7929
    %v8030 = vpop.f32.mrf.mxu0
    %v8031 = vadd.f32 0.0, %v8030
    %v8032 = vpop.f32.mrf.mxu0
    %8033 = vdwg.mxu0
    %v8034 = vadd.f32 %v7843, %v8016
    %v8035 = vadd.f32 %v7844, %v8021
    %v8036 = vadd.f32 %v7845, %v8026
    %v8037 = vadd.f32 %v7846, %v8031
    %8038 = vmatprep.subr.mxu0 0.0
    %8039 = vmatpush1.msra.mxu0 0.0
    %8040 = vmatprep.subr.mxu0 0.0
    %8041 = vmatpush1.msra.mxu0 0.0
    %8042 = vmatprep.subr.mxu0 0.0
    %8043 = vmatpush1.msra.mxu0 0.0
    %8044 = vmatprep.subr.mxu0 0.0
    %8045 = vmatpush1.msra.mxu0 0.0
    %8046 = vmatprep.subr.mxu0 0.0
    %8047 = vmatpush1.msra.mxu0 0.0
    %8048 = vmatprep.subr.mxu0 0.0
    %8049 = vmatpush1.msra.mxu0 0.0
    %8050 = vmatprep.subr.mxu0 0.0
    %8051 = vmatpush1.msra.mxu0 0.0
    %8052 = vmatprep.subr.mxu0 0.0
    %8053 = vmatpush1.msra.mxu0 0.0
    %8054 = vmatprep.subr.mxu0 0.0
    %8055 = vmatpush1.msra.mxu0 0.0
    %8056 = vmatprep.subr.mxu0 0.0
    %8057 = vmatpush1.msra.mxu0 0.0
    %8058 = vmatprep.subr.mxu0 0.0
    %8059 = vmatpush1.msra.mxu0 0.0
    %8060 = vmatprep.subr.mxu0 0.0
    %8061 = vmatpush1.msra.mxu0 0.0
    %8062 = vmatprep.subr.mxu0 0.0
    %8063 = vmatpush1.msra.mxu0 %v7091
    %8064 = vmatprep.subr.mxu0 0.0
    %8065 = vmatpush1.msra.mxu0 %v7090
    %8066 = vmatprep.subr.mxu0 0.0
    %8067 = vmatpush1.msra.mxu0 %v7089
    %8068 = vmatprep.subr.mxu0 0.0
    %8069 = vmatpush1.msra.mxu0 %v7088
    %8070 = vmatprep.subr.mxu0 0.0
    %8071 = vmatpush2.msra.mxu0 0.0
    %8072 = vmatprep.subr.mxu0 0.0
    %8073 = vmatpush2.msra.mxu0 0.0
    %8074 = vmatprep.subr.mxu0 0.0
    %8075 = vmatpush2.msra.mxu0 0.0
    %8076 = vmatprep.subr.mxu0 0.0
    %8077 = vmatpush2.msra.mxu0 0.0
    %8078 = vmatprep.subr.mxu0 0.0
    %8079 = vmatpush2.msra.mxu0 0.0
    %8080 = vmatprep.subr.mxu0 0.0
    %8081 = vmatpush2.msra.mxu0 0.0
    %8082 = vmatprep.subr.mxu0 0.0
    %8083 = vmatpush2.msra.mxu0 0.0
    %8084 = vmatprep.subr.mxu0 0.0
    %8085 = vmatpush2.msra.mxu0 0.0
    %8086 = vmatprep.subr.mxu0 0.0
    %8087 = vmatpush2.msra.mxu0 0.0
    %8088 = vmatprep.subr.mxu0 0.0
    %8089 = vmatpush2.msra.mxu0 0.0
    %8090 = vmatprep.subr.mxu0 0.0
    %8091 = vmatpush2.msra.mxu0 0.0
    %8092 = vmatprep.subr.mxu0 0.0
    %8093 = vmatpush2.msra.mxu0 0.0
    %8094 = vmatprep.subr.mxu0 0.0
    %8095 = vmatpush2.msra.mxu0 0.0
    %8096 = vmatprep.subr.mxu0 0.0
    %8097 = vmatpush2.msra.mxu0 0.0
    %8098 = vmatprep.subr.mxu0 0.0
    %8099 = vmatpush2.msra.mxu0 0.0
    %8100 = vmatprep.subr.mxu0 0.0
    %8101 = vmatpush2.msra.mxu0 0.0
    %8102 = vmatprep.mubr.f32.mxu0 0.0
    %8103 = vmatmul.mubr.f32.gmra.mxu0 %v4416
    %v8104 = vpop.f32.mrf.mxu0
    %v8105 = vadd.f32 0.0, %v8104
    %v8106 = vpop.f32.mrf.mxu0
    %8107 = vmatprep.mubr.f32.mxu0 0.0
    %8108 = vmatmul.mubr.f32.gmra.mxu0 %v4419
    %v8109 = vpop.f32.mrf.mxu0
    %v8110 = vadd.f32 0.0, %v8109
    %v8111 = vpop.f32.mrf.mxu0
    %8112 = vmatprep.mubr.f32.mxu0 0.0
    %8113 = vmatmul.mubr.f32.gmra.mxu0 %v4422
    %v8114 = vpop.f32.mrf.mxu0
    %v8115 = vadd.f32 0.0, %v8114
    %v8116 = vpop.f32.mrf.mxu0
    %8117 = vmatprep.mubr.f32.mxu0 0.0
    %8118 = vmatmul.mubr.f32.gmra.mxu0 %v4425
    %v8119 = vpop.f32.mrf.mxu0
    %v8120 = vadd.f32 0.0, %v8119
    %v8121 = vpop.f32.mrf.mxu0
    %8122 = vdwg.mxu0
    %s8123 = scalar_lea.vmem %s9, 640
    %v8124 = vld [vmem:[%s8123] sm:$0xff]
    %v8125 = vld [vmem:[%s8123 + $0x8] sm:$0xff]
    %v8126 = vld [vmem:[%s8123 + $0x10] sm:$0xff]
    %v8127 = vld [vmem:[%s8123 + $0x18] sm:$0xff]
    %v8128 = vld [vmem:[%s8123 + $0x20] sm:$0xff]
    %v8129 = vld [vmem:[%s8123 + $0x28] sm:$0xff]
    %v8130 = vld [vmem:[%s8123 + $0x30] sm:$0xff]
    %v8131 = vld [vmem:[%s8123 + $0x38] sm:$0xff]
    %v8132 = vld [vmem:[%s8123 + $0x40] sm:$0xff]
    %v8133 = vld [vmem:[%s8123 + $0x48] sm:$0xff]
    %v8134 = vld [vmem:[%s8123 + $0x50] sm:$0xff]
    %v8135 = vld [vmem:[%s8123 + $0x58] sm:$0xff]
    %v8136 = vld [vmem:[%s8123 + $0x60] sm:$0xff]
    %v8137 = vld [vmem:[%s8123 + $0x68] sm:$0xff]
    %v8138 = vld [vmem:[%s8123 + $0x70] sm:$0xff]
    %v8139 = vld [vmem:[%s8123 + $0x78] sm:$0xff]
    %8140 = vmatprep.subr.mxu0 0.0
    %8141 = vmatpush1.msra.mxu0 %v8139
    %8142 = vmatprep.subr.mxu0 0.0
    %8143 = vmatpush1.msra.mxu0 %v8138
    %8144 = vmatprep.subr.mxu0 0.0
    %8145 = vmatpush1.msra.mxu0 %v8137
    %8146 = vmatprep.subr.mxu0 0.0
    %8147 = vmatpush1.msra.mxu0 %v8136
    %8148 = vmatprep.subr.mxu0 0.0
    %8149 = vmatpush1.msra.mxu0 %v8135
    %8150 = vmatprep.subr.mxu0 0.0
    %8151 = vmatpush1.msra.mxu0 %v8134
    %8152 = vmatprep.subr.mxu0 0.0
    %8153 = vmatpush1.msra.mxu0 %v8133
    %8154 = vmatprep.subr.mxu0 0.0
    %8155 = vmatpush1.msra.mxu0 %v8132
    %8156 = vmatprep.subr.mxu0 0.0
    %8157 = vmatpush1.msra.mxu0 %v8131
    %8158 = vmatprep.subr.mxu0 0.0
    %8159 = vmatpush1.msra.mxu0 %v8130
    %8160 = vmatprep.subr.mxu0 0.0
    %8161 = vmatpush1.msra.mxu0 %v8129
    %8162 = vmatprep.subr.mxu0 0.0
    %8163 = vmatpush1.msra.mxu0 %v8128
    %8164 = vmatprep.subr.mxu0 0.0
    %8165 = vmatpush1.msra.mxu0 %v8127
    %8166 = vmatprep.subr.mxu0 0.0
    %8167 = vmatpush1.msra.mxu0 %v8126
    %8168 = vmatprep.subr.mxu0 0.0
    %8169 = vmatpush1.msra.mxu0 %v8125
    %8170 = vmatprep.subr.mxu0 0.0
    %8171 = vmatpush1.msra.mxu0 %v8124
    %8172 = vmatprep.subr.mxu0 0.0
    %8173 = vmatpush2.msra.mxu0 0.0
    %8174 = vmatprep.subr.mxu0 0.0
    %8175 = vmatpush2.msra.mxu0 0.0
    %8176 = vmatprep.subr.mxu0 0.0
    %8177 = vmatpush2.msra.mxu0 0.0
    %8178 = vmatprep.subr.mxu0 0.0
    %8179 = vmatpush2.msra.mxu0 0.0
    %8180 = vmatprep.subr.mxu0 0.0
    %8181 = vmatpush2.msra.mxu0 0.0
    %8182 = vmatprep.subr.mxu0 0.0
    %8183 = vmatpush2.msra.mxu0 0.0
    %8184 = vmatprep.subr.mxu0 0.0
    %8185 = vmatpush2.msra.mxu0 0.0
    %8186 = vmatprep.subr.mxu0 0.0
    %8187 = vmatpush2.msra.mxu0 0.0
    %8188 = vmatprep.subr.mxu0 0.0
    %8189 = vmatpush2.msra.mxu0 0.0
    %8190 = vmatprep.subr.mxu0 0.0
    %8191 = vmatpush2.msra.mxu0 0.0
    %8192 = vmatprep.subr.mxu0 0.0
    %8193 = vmatpush2.msra.mxu0 0.0
    %8194 = vmatprep.subr.mxu0 0.0
    %8195 = vmatpush2.msra.mxu0 0.0
    %8196 = vmatprep.subr.mxu0 0.0
    %8197 = vmatpush2.msra.mxu0 0.0
    %8198 = vmatprep.subr.mxu0 0.0
    %8199 = vmatpush2.msra.mxu0 0.0
    %8200 = vmatprep.subr.mxu0 0.0
    %8201 = vmatpush2.msra.mxu0 0.0
    %8202 = vmatprep.subr.mxu0 0.0
    %8203 = vmatpush2.msra.mxu0 0.0
    %8204 = vmatprep.mubr.f32.mxu0 0.0
    %8205 = vmatmul.mubr.f32.gmra.mxu0 %v8105
    %v8206 = vpop.f32.mrf.mxu0
    %v8207 = vadd.f32 0.0, %v8206
    %v8208 = vpop.f32.mrf.mxu0
    %8209 = vmatprep.mubr.f32.mxu0 0.0
    %8210 = vmatmul.mubr.f32.gmra.mxu0 %v8110
    %v8211 = vpop.f32.mrf.mxu0
    %v8212 = vadd.f32 0.0, %v8211
    %v8213 = vpop.f32.mrf.mxu0
    %8214 = vmatprep.mubr.f32.mxu0 0.0
    %8215 = vmatmul.mubr.f32.gmra.mxu0 %v8115
    %v8216 = vpop.f32.mrf.mxu0
    %v8217 = vadd.f32 0.0, %v8216
    %v8218 = vpop.f32.mrf.mxu0
    %8219 = vmatprep.mubr.f32.mxu0 0.0
    %8220 = vmatmul.mubr.f32.gmra.mxu0 %v8120
    %v8221 = vpop.f32.mrf.mxu0
    %v8222 = vadd.f32 0.0, %v8221
    %v8223 = vpop.f32.mrf.mxu0
    %8224 = vdwg.mxu0
    %v8225 = vadd.f32 %v8034, %v8207
    %v8226 = vadd.f32 %v8035, %v8212
    %v8227 = vadd.f32 %v8036, %v8217
    %v8228 = vadd.f32 %v8037, %v8222
    %8229 = vmatprep.subr.mxu0 0.0
    %8230 = vmatpush1.msra.mxu0 0.0
    %8231 = vmatprep.subr.mxu0 0.0
    %8232 = vmatpush1.msra.mxu0 0.0
    %8233 = vmatprep.subr.mxu0 0.0
    %8234 = vmatpush1.msra.mxu0 0.0
    %8235 = vmatprep.subr.mxu0 0.0
    %8236 = vmatpush1.msra.mxu0 0.0
    %8237 = vmatprep.subr.mxu0 0.0
    %8238 = vmatpush1.msra.mxu0 0.0
    %8239 = vmatprep.subr.mxu0 0.0
    %8240 = vmatpush1.msra.mxu0 0.0
    %8241 = vmatprep.subr.mxu0 0.0
    %8242 = vmatpush1.msra.mxu0 0.0
    %8243 = vmatprep.subr.mxu0 0.0
    %8244 = vmatpush1.msra.mxu0 0.0
    %8245 = vmatprep.subr.mxu0 0.0
    %8246 = vmatpush1.msra.mxu0 0.0
    %8247 = vmatprep.subr.mxu0 0.0
    %8248 = vmatpush1.msra.mxu0 0.0
    %8249 = vmatprep.subr.mxu0 0.0
    %8250 = vmatpush1.msra.mxu0 0.0
    %8251 = vmatprep.subr.mxu0 0.0
    %8252 = vmatpush1.msra.mxu0 0.0
    %8253 = vmatprep.subr.mxu0 0.0
    %8254 = vmatpush1.msra.mxu0 %v7091
    %8255 = vmatprep.subr.mxu0 0.0
    %8256 = vmatpush1.msra.mxu0 %v7090
    %8257 = vmatprep.subr.mxu0 0.0
    %8258 = vmatpush1.msra.mxu0 %v7089
    %8259 = vmatprep.subr.mxu0 0.0
    %8260 = vmatpush1.msra.mxu0 %v7088
    %8261 = vmatprep.subr.mxu0 0.0
    %8262 = vmatpush2.msra.mxu0 0.0
    %8263 = vmatprep.subr.mxu0 0.0
    %8264 = vmatpush2.msra.mxu0 0.0
    %8265 = vmatprep.subr.mxu0 0.0
    %8266 = vmatpush2.msra.mxu0 0.0
    %8267 = vmatprep.subr.mxu0 0.0
    %8268 = vmatpush2.msra.mxu0 0.0
    %8269 = vmatprep.subr.mxu0 0.0
    %8270 = vmatpush2.msra.mxu0 0.0
    %8271 = vmatprep.subr.mxu0 0.0
    %8272 = vmatpush2.msra.mxu0 0.0
    %8273 = vmatprep.subr.mxu0 0.0
    %8274 = vmatpush2.msra.mxu0 0.0
    %8275 = vmatprep.subr.mxu0 0.0
    %8276 = vmatpush2.msra.mxu0 0.0
    %8277 = vmatprep.subr.mxu0 0.0
    %8278 = vmatpush2.msra.mxu0 0.0
    %8279 = vmatprep.subr.mxu0 0.0
    %8280 = vmatpush2.msra.mxu0 0.0
    %8281 = vmatprep.subr.mxu0 0.0
    %8282 = vmatpush2.msra.mxu0 0.0
    %8283 = vmatprep.subr.mxu0 0.0
    %8284 = vmatpush2.msra.mxu0 0.0
    %8285 = vmatprep.subr.mxu0 0.0
    %8286 = vmatpush2.msra.mxu0 0.0
    %8287 = vmatprep.subr.mxu0 0.0
    %8288 = vmatpush2.msra.mxu0 0.0
    %8289 = vmatprep.subr.mxu0 0.0
    %8290 = vmatpush2.msra.mxu0 0.0
    %8291 = vmatprep.subr.mxu0 0.0
    %8292 = vmatpush2.msra.mxu0 0.0
    %8293 = vmatprep.mubr.f32.mxu0 0.0
    %8294 = vmatmul.mubr.f32.gmra.mxu0 %v4624
    %v8295 = vpop.f32.mrf.mxu0
    %v8296 = vadd.f32 0.0, %v8295
    %v8297 = vpop.f32.mrf.mxu0
    %8298 = vmatprep.mubr.f32.mxu0 0.0
    %8299 = vmatmul.mubr.f32.gmra.mxu0 %v4627
    %v8300 = vpop.f32.mrf.mxu0
    %v8301 = vadd.f32 0.0, %v8300
    %v8302 = vpop.f32.mrf.mxu0
    %8303 = vmatprep.mubr.f32.mxu0 0.0
    %8304 = vmatmul.mubr.f32.gmra.mxu0 %v4630
    %v8305 = vpop.f32.mrf.mxu0
    %v8306 = vadd.f32 0.0, %v8305
    %v8307 = vpop.f32.mrf.mxu0
    %8308 = vmatprep.mubr.f32.mxu0 0.0
    %8309 = vmatmul.mubr.f32.gmra.mxu0 %v4633
    %v8310 = vpop.f32.mrf.mxu0
    %v8311 = vadd.f32 0.0, %v8310
    %v8312 = vpop.f32.mrf.mxu0
    %8313 = vdwg.mxu0
    %s8314 = scalar_lea.vmem %s9, 768
    %v8315 = vld [vmem:[%s8314] sm:$0xff]
    %v8316 = vld [vmem:[%s8314 + $0x8] sm:$0xff]
    %v8317 = vld [vmem:[%s8314 + $0x10] sm:$0xff]
    %v8318 = vld [vmem:[%s8314 + $0x18] sm:$0xff]
    %v8319 = vld [vmem:[%s8314 + $0x20] sm:$0xff]
    %v8320 = vld [vmem:[%s8314 + $0x28] sm:$0xff]
    %v8321 = vld [vmem:[%s8314 + $0x30] sm:$0xff]
    %v8322 = vld [vmem:[%s8314 + $0x38] sm:$0xff]
    %v8323 = vld [vmem:[%s8314 + $0x40] sm:$0xff]
    %v8324 = vld [vmem:[%s8314 + $0x48] sm:$0xff]
    %v8325 = vld [vmem:[%s8314 + $0x50] sm:$0xff]
    %v8326 = vld [vmem:[%s8314 + $0x58] sm:$0xff]
    %v8327 = vld [vmem:[%s8314 + $0x60] sm:$0xff]
    %v8328 = vld [vmem:[%s8314 + $0x68] sm:$0xff]
    %v8329 = vld [vmem:[%s8314 + $0x70] sm:$0xff]
    %v8330 = vld [vmem:[%s8314 + $0x78] sm:$0xff]
    %8331 = vmatprep.subr.mxu0 0.0
    %8332 = vmatpush1.msra.mxu0 %v8330
    %8333 = vmatprep.subr.mxu0 0.0
    %8334 = vmatpush1.msra.mxu0 %v8329
    %8335 = vmatprep.subr.mxu0 0.0
    %8336 = vmatpush1.msra.mxu0 %v8328
    %8337 = vmatprep.subr.mxu0 0.0
    %8338 = vmatpush1.msra.mxu0 %v8327
    %8339 = vmatprep.subr.mxu0 0.0
    %8340 = vmatpush1.msra.mxu0 %v8326
    %8341 = vmatprep.subr.mxu0 0.0
    %8342 = vmatpush1.msra.mxu0 %v8325
    %8343 = vmatprep.subr.mxu0 0.0
    %8344 = vmatpush1.msra.mxu0 %v8324
    %8345 = vmatprep.subr.mxu0 0.0
    %8346 = vmatpush1.msra.mxu0 %v8323
    %8347 = vmatprep.subr.mxu0 0.0
    %8348 = vmatpush1.msra.mxu0 %v8322
    %8349 = vmatprep.subr.mxu0 0.0
    %8350 = vmatpush1.msra.mxu0 %v8321
    %8351 = vmatprep.subr.mxu0 0.0
    %8352 = vmatpush1.msra.mxu0 %v8320
    %8353 = vmatprep.subr.mxu0 0.0
    %8354 = vmatpush1.msra.mxu0 %v8319
    %8355 = vmatprep.subr.mxu0 0.0
    %8356 = vmatpush1.msra.mxu0 %v8318
    %8357 = vmatprep.subr.mxu0 0.0
    %8358 = vmatpush1.msra.mxu0 %v8317
    %8359 = vmatprep.subr.mxu0 0.0
    %8360 = vmatpush1.msra.mxu0 %v8316
    %8361 = vmatprep.subr.mxu0 0.0
    %8362 = vmatpush1.msra.mxu0 %v8315
    %8363 = vmatprep.subr.mxu0 0.0
    %8364 = vmatpush2.msra.mxu0 0.0
    %8365 = vmatprep.subr.mxu0 0.0
    %8366 = vmatpush2.msra.mxu0 0.0
    %8367 = vmatprep.subr.mxu0 0.0
    %8368 = vmatpush2.msra.mxu0 0.0
    %8369 = vmatprep.subr.mxu0 0.0
    %8370 = vmatpush2.msra.mxu0 0.0
    %8371 = vmatprep.subr.mxu0 0.0
    %8372 = vmatpush2.msra.mxu0 0.0
    %8373 = vmatprep.subr.mxu0 0.0
    %8374 = vmatpush2.msra.mxu0 0.0
    %8375 = vmatprep.subr.mxu0 0.0
    %8376 = vmatpush2.msra.mxu0 0.0
    %8377 = vmatprep.subr.mxu0 0.0
    %8378 = vmatpush2.msra.mxu0 0.0
    %8379 = vmatprep.subr.mxu0 0.0
    %8380 = vmatpush2.msra.mxu0 0.0
    %8381 = vmatprep.subr.mxu0 0.0
    %8382 = vmatpush2.msra.mxu0 0.0
    %8383 = vmatprep.subr.mxu0 0.0
    %8384 = vmatpush2.msra.mxu0 0.0
    %8385 = vmatprep.subr.mxu0 0.0
    %8386 = vmatpush2.msra.mxu0 0.0
    %8387 = vmatprep.subr.mxu0 0.0
    %8388 = vmatpush2.msra.mxu0 0.0
    %8389 = vmatprep.subr.mxu0 0.0
    %8390 = vmatpush2.msra.mxu0 0.0
    %8391 = vmatprep.subr.mxu0 0.0
    %8392 = vmatpush2.msra.mxu0 0.0
    %8393 = vmatprep.subr.mxu0 0.0
    %8394 = vmatpush2.msra.mxu0 0.0
    %8395 = vmatprep.mubr.f32.mxu0 0.0
    %8396 = vmatmul.mubr.f32.gmra.mxu0 %v8296
    %v8397 = vpop.f32.mrf.mxu0
    %v8398 = vadd.f32 0.0, %v8397
    %v8399 = vpop.f32.mrf.mxu0
    %8400 = vmatprep.mubr.f32.mxu0 0.0
    %8401 = vmatmul.mubr.f32.gmra.mxu0 %v8301
    %v8402 = vpop.f32.mrf.mxu0
    %v8403 = vadd.f32 0.0, %v8402
    %v8404 = vpop.f32.mrf.mxu0
    %8405 = vmatprep.mubr.f32.mxu0 0.0
    %8406 = vmatmul.mubr.f32.gmra.mxu0 %v8306
    %v8407 = vpop.f32.mrf.mxu0
    %v8408 = vadd.f32 0.0, %v8407
    %v8409 = vpop.f32.mrf.mxu0
    %8410 = vmatprep.mubr.f32.mxu0 0.0
    %8411 = vmatmul.mubr.f32.gmra.mxu0 %v8311
    %v8412 = vpop.f32.mrf.mxu0
    %v8413 = vadd.f32 0.0, %v8412
    %v8414 = vpop.f32.mrf.mxu0
    %8415 = vdwg.mxu0
    %v8416 = vadd.f32 %v8225, %v8398
    %v8417 = vadd.f32 %v8226, %v8403
    %v8418 = vadd.f32 %v8227, %v8408
    %v8419 = vadd.f32 %v8228, %v8413
    %8420 = vmatprep.subr.mxu0 0.0
    %8421 = vmatpush1.msra.mxu0 0.0
    %8422 = vmatprep.subr.mxu0 0.0
    %8423 = vmatpush1.msra.mxu0 0.0
    %8424 = vmatprep.subr.mxu0 0.0
    %8425 = vmatpush1.msra.mxu0 0.0
    %8426 = vmatprep.subr.mxu0 0.0
    %8427 = vmatpush1.msra.mxu0 0.0
    %8428 = vmatprep.subr.mxu0 0.0
    %8429 = vmatpush1.msra.mxu0 0.0
    %8430 = vmatprep.subr.mxu0 0.0
    %8431 = vmatpush1.msra.mxu0 0.0
    %8432 = vmatprep.subr.mxu0 0.0
    %8433 = vmatpush1.msra.mxu0 0.0
    %8434 = vmatprep.subr.mxu0 0.0
    %8435 = vmatpush1.msra.mxu0 0.0
    %8436 = vmatprep.subr.mxu0 0.0
    %8437 = vmatpush1.msra.mxu0 0.0
    %8438 = vmatprep.subr.mxu0 0.0
    %8439 = vmatpush1.msra.mxu0 0.0
    %8440 = vmatprep.subr.mxu0 0.0
    %8441 = vmatpush1.msra.mxu0 0.0
    %8442 = vmatprep.subr.mxu0 0.0
    %8443 = vmatpush1.msra.mxu0 0.0
    %8444 = vmatprep.subr.mxu0 0.0
    %8445 = vmatpush1.msra.mxu0 %v7091
    %8446 = vmatprep.subr.mxu0 0.0
    %8447 = vmatpush1.msra.mxu0 %v7090
    %8448 = vmatprep.subr.mxu0 0.0
    %8449 = vmatpush1.msra.mxu0 %v7089
    %8450 = vmatprep.subr.mxu0 0.0
    %8451 = vmatpush1.msra.mxu0 %v7088
    %8452 = vmatprep.subr.mxu0 0.0
    %8453 = vmatpush2.msra.mxu0 0.0
    %8454 = vmatprep.subr.mxu0 0.0
    %8455 = vmatpush2.msra.mxu0 0.0
    %8456 = vmatprep.subr.mxu0 0.0
    %8457 = vmatpush2.msra.mxu0 0.0
    %8458 = vmatprep.subr.mxu0 0.0
    %8459 = vmatpush2.msra.mxu0 0.0
    %8460 = vmatprep.subr.mxu0 0.0
    %8461 = vmatpush2.msra.mxu0 0.0
    %8462 = vmatprep.subr.mxu0 0.0
    %8463 = vmatpush2.msra.mxu0 0.0
    %8464 = vmatprep.subr.mxu0 0.0
    %8465 = vmatpush2.msra.mxu0 0.0
    %8466 = vmatprep.subr.mxu0 0.0
    %8467 = vmatpush2.msra.mxu0 0.0
    %8468 = vmatprep.subr.mxu0 0.0
    %8469 = vmatpush2.msra.mxu0 0.0
    %8470 = vmatprep.subr.mxu0 0.0
    %8471 = vmatpush2.msra.mxu0 0.0
    %8472 = vmatprep.subr.mxu0 0.0
    %8473 = vmatpush2.msra.mxu0 0.0
    %8474 = vmatprep.subr.mxu0 0.0
    %8475 = vmatpush2.msra.mxu0 0.0
    %8476 = vmatprep.subr.mxu0 0.0
    %8477 = vmatpush2.msra.mxu0 0.0
    %8478 = vmatprep.subr.mxu0 0.0
    %8479 = vmatpush2.msra.mxu0 0.0
    %8480 = vmatprep.subr.mxu0 0.0
    %8481 = vmatpush2.msra.mxu0 0.0
    %8482 = vmatprep.subr.mxu0 0.0
    %8483 = vmatpush2.msra.mxu0 0.0
    %8484 = vmatprep.mubr.f32.mxu0 0.0
    %8485 = vmatmul.mubr.f32.gmra.mxu0 %v4832
    %v8486 = vpop.f32.mrf.mxu0
    %v8487 = vadd.f32 0.0, %v8486
    %v8488 = vpop.f32.mrf.mxu0
    %8489 = vmatprep.mubr.f32.mxu0 0.0
    %8490 = vmatmul.mubr.f32.gmra.mxu0 %v4835
    %v8491 = vpop.f32.mrf.mxu0
    %v8492 = vadd.f32 0.0, %v8491
    %v8493 = vpop.f32.mrf.mxu0
    %8494 = vmatprep.mubr.f32.mxu0 0.0
    %8495 = vmatmul.mubr.f32.gmra.mxu0 %v4838
    %v8496 = vpop.f32.mrf.mxu0
    %v8497 = vadd.f32 0.0, %v8496
    %v8498 = vpop.f32.mrf.mxu0
    %8499 = vmatprep.mubr.f32.mxu0 0.0
    %8500 = vmatmul.mubr.f32.gmra.mxu0 %v4841
    %v8501 = vpop.f32.mrf.mxu0
    %v8502 = vadd.f32 0.0, %v8501
    %v8503 = vpop.f32.mrf.mxu0
    %8504 = vdwg.mxu0
    %s8505 = scalar_lea.vmem %s9, 896
    %v8506 = vld [vmem:[%s8505] sm:$0xff]
    %v8507 = vld [vmem:[%s8505 + $0x8] sm:$0xff]
    %v8508 = vld [vmem:[%s8505 + $0x10] sm:$0xff]
    %v8509 = vld [vmem:[%s8505 + $0x18] sm:$0xff]
    %v8510 = vld [vmem:[%s8505 + $0x20] sm:$0xff]
    %v8511 = vld [vmem:[%s8505 + $0x28] sm:$0xff]
    %v8512 = vld [vmem:[%s8505 + $0x30] sm:$0xff]
    %v8513 = vld [vmem:[%s8505 + $0x38] sm:$0xff]
    %v8514 = vld [vmem:[%s8505 + $0x40] sm:$0xff]
    %v8515 = vld [vmem:[%s8505 + $0x48] sm:$0xff]
    %v8516 = vld [vmem:[%s8505 + $0x50] sm:$0xff]
    %v8517 = vld [vmem:[%s8505 + $0x58] sm:$0xff]
    %v8518 = vld [vmem:[%s8505 + $0x60] sm:$0xff]
    %v8519 = vld [vmem:[%s8505 + $0x68] sm:$0xff]
    %v8520 = vld [vmem:[%s8505 + $0x70] sm:$0xff]
    %v8521 = vld [vmem:[%s8505 + $0x78] sm:$0xff]
    %8522 = vmatprep.subr.mxu0 0.0
    %8523 = vmatpush1.msra.mxu0 %v8521
    %8524 = vmatprep.subr.mxu0 0.0
    %8525 = vmatpush1.msra.mxu0 %v8520
    %8526 = vmatprep.subr.mxu0 0.0
    %8527 = vmatpush1.msra.mxu0 %v8519
    %8528 = vmatprep.subr.mxu0 0.0
    %8529 = vmatpush1.msra.mxu0 %v8518
    %8530 = vmatprep.subr.mxu0 0.0
    %8531 = vmatpush1.msra.mxu0 %v8517
    %8532 = vmatprep.subr.mxu0 0.0
    %8533 = vmatpush1.msra.mxu0 %v8516
    %8534 = vmatprep.subr.mxu0 0.0
    %8535 = vmatpush1.msra.mxu0 %v8515
    %8536 = vmatprep.subr.mxu0 0.0
    %8537 = vmatpush1.msra.mxu0 %v8514
    %8538 = vmatprep.subr.mxu0 0.0
    %8539 = vmatpush1.msra.mxu0 %v8513
    %8540 = vmatprep.subr.mxu0 0.0
    %8541 = vmatpush1.msra.mxu0 %v8512
    %8542 = vmatprep.subr.mxu0 0.0
    %8543 = vmatpush1.msra.mxu0 %v8511
    %8544 = vmatprep.subr.mxu0 0.0
    %8545 = vmatpush1.msra.mxu0 %v8510
    %8546 = vmatprep.subr.mxu0 0.0
    %8547 = vmatpush1.msra.mxu0 %v8509
    %8548 = vmatprep.subr.mxu0 0.0
    %8549 = vmatpush1.msra.mxu0 %v8508
    %8550 = vmatprep.subr.mxu0 0.0
    %8551 = vmatpush1.msra.mxu0 %v8507
    %8552 = vmatprep.subr.mxu0 0.0
    %8553 = vmatpush1.msra.mxu0 %v8506
    %8554 = vmatprep.subr.mxu0 0.0
    %8555 = vmatpush2.msra.mxu0 0.0
    %8556 = vmatprep.subr.mxu0 0.0
    %8557 = vmatpush2.msra.mxu0 0.0
    %8558 = vmatprep.subr.mxu0 0.0
    %8559 = vmatpush2.msra.mxu0 0.0
    %8560 = vmatprep.subr.mxu0 0.0
    %8561 = vmatpush2.msra.mxu0 0.0
    %8562 = vmatprep.subr.mxu0 0.0
    %8563 = vmatpush2.msra.mxu0 0.0
    %8564 = vmatprep.subr.mxu0 0.0
    %8565 = vmatpush2.msra.mxu0 0.0
    %8566 = vmatprep.subr.mxu0 0.0
    %8567 = vmatpush2.msra.mxu0 0.0
    %8568 = vmatprep.subr.mxu0 0.0
    %8569 = vmatpush2.msra.mxu0 0.0
    %8570 = vmatprep.subr.mxu0 0.0
    %8571 = vmatpush2.msra.mxu0 0.0
    %8572 = vmatprep.subr.mxu0 0.0
    %8573 = vmatpush2.msra.mxu0 0.0
    %8574 = vmatprep.subr.mxu0 0.0
    %8575 = vmatpush2.msra.mxu0 0.0
    %8576 = vmatprep.subr.mxu0 0.0
    %8577 = vmatpush2.msra.mxu0 0.0
    %8578 = vmatprep.subr.mxu0 0.0
    %8579 = vmatpush2.msra.mxu0 0.0
    %8580 = vmatprep.subr.mxu0 0.0
    %8581 = vmatpush2.msra.mxu0 0.0
    %8582 = vmatprep.subr.mxu0 0.0
    %8583 = vmatpush2.msra.mxu0 0.0
    %8584 = vmatprep.subr.mxu0 0.0
    %8585 = vmatpush2.msra.mxu0 0.0
    %8586 = vmatprep.mubr.f32.mxu0 0.0
    %8587 = vmatmul.mubr.f32.gmra.mxu0 %v8487
    %v8588 = vpop.f32.mrf.mxu0
    %v8589 = vadd.f32 0.0, %v8588
    %v8590 = vpop.f32.mrf.mxu0
    %8591 = vmatprep.mubr.f32.mxu0 0.0
    %8592 = vmatmul.mubr.f32.gmra.mxu0 %v8492
    %v8593 = vpop.f32.mrf.mxu0
    %v8594 = vadd.f32 0.0, %v8593
    %v8595 = vpop.f32.mrf.mxu0
    %8596 = vmatprep.mubr.f32.mxu0 0.0
    %8597 = vmatmul.mubr.f32.gmra.mxu0 %v8497
    %v8598 = vpop.f32.mrf.mxu0
    %v8599 = vadd.f32 0.0, %v8598
    %v8600 = vpop.f32.mrf.mxu0
    %8601 = vmatprep.mubr.f32.mxu0 0.0
    %8602 = vmatmul.mubr.f32.gmra.mxu0 %v8502
    %v8603 = vpop.f32.mrf.mxu0
    %v8604 = vadd.f32 0.0, %v8603
    %v8605 = vpop.f32.mrf.mxu0
    %8606 = vdwg.mxu0
    %v8607 = vadd.f32 %v8416, %v8589
    %v8608 = vadd.f32 %v8417, %v8594
    %v8609 = vadd.f32 %v8418, %v8599
    %v8610 = vadd.f32 %v8419, %v8604
    %8611 = vmatprep.subr.mxu0 0.0
    %8612 = vmatpush1.msra.mxu0 0.0
    %8613 = vmatprep.subr.mxu0 0.0
    %8614 = vmatpush1.msra.mxu0 0.0
    %8615 = vmatprep.subr.mxu0 0.0
    %8616 = vmatpush1.msra.mxu0 0.0
    %8617 = vmatprep.subr.mxu0 0.0
    %8618 = vmatpush1.msra.mxu0 0.0
    %8619 = vmatprep.subr.mxu0 0.0
    %8620 = vmatpush1.msra.mxu0 0.0
    %8621 = vmatprep.subr.mxu0 0.0
    %8622 = vmatpush1.msra.mxu0 0.0
    %8623 = vmatprep.subr.mxu0 0.0
    %8624 = vmatpush1.msra.mxu0 0.0
    %8625 = vmatprep.subr.mxu0 0.0
    %8626 = vmatpush1.msra.mxu0 0.0
    %8627 = vmatprep.subr.mxu0 0.0
    %8628 = vmatpush1.msra.mxu0 0.0
    %8629 = vmatprep.subr.mxu0 0.0
    %8630 = vmatpush1.msra.mxu0 0.0
    %8631 = vmatprep.subr.mxu0 0.0
    %8632 = vmatpush1.msra.mxu0 0.0
    %8633 = vmatprep.subr.mxu0 0.0
    %8634 = vmatpush1.msra.mxu0 0.0
    %8635 = vmatprep.subr.mxu0 0.0
    %8636 = vmatpush1.msra.mxu0 %v7091
    %8637 = vmatprep.subr.mxu0 0.0
    %8638 = vmatpush1.msra.mxu0 %v7090
    %8639 = vmatprep.subr.mxu0 0.0
    %8640 = vmatpush1.msra.mxu0 %v7089
    %8641 = vmatprep.subr.mxu0 0.0
    %8642 = vmatpush1.msra.mxu0 %v7088
    %8643 = vmatprep.subr.mxu0 0.0
    %8644 = vmatpush2.msra.mxu0 0.0
    %8645 = vmatprep.subr.mxu0 0.0
    %8646 = vmatpush2.msra.mxu0 0.0
    %8647 = vmatprep.subr.mxu0 0.0
    %8648 = vmatpush2.msra.mxu0 0.0
    %8649 = vmatprep.subr.mxu0 0.0
    %8650 = vmatpush2.msra.mxu0 0.0
    %8651 = vmatprep.subr.mxu0 0.0
    %8652 = vmatpush2.msra.mxu0 0.0
    %8653 = vmatprep.subr.mxu0 0.0
    %8654 = vmatpush2.msra.mxu0 0.0
    %8655 = vmatprep.subr.mxu0 0.0
    %8656 = vmatpush2.msra.mxu0 0.0
    %8657 = vmatprep.subr.mxu0 0.0
    %8658 = vmatpush2.msra.mxu0 0.0
    %8659 = vmatprep.subr.mxu0 0.0
    %8660 = vmatpush2.msra.mxu0 0.0
    %8661 = vmatprep.subr.mxu0 0.0
    %8662 = vmatpush2.msra.mxu0 0.0
    %8663 = vmatprep.subr.mxu0 0.0
    %8664 = vmatpush2.msra.mxu0 0.0
    %8665 = vmatprep.subr.mxu0 0.0
    %8666 = vmatpush2.msra.mxu0 0.0
    %8667 = vmatprep.subr.mxu0 0.0
    %8668 = vmatpush2.msra.mxu0 0.0
    %8669 = vmatprep.subr.mxu0 0.0
    %8670 = vmatpush2.msra.mxu0 0.0
    %8671 = vmatprep.subr.mxu0 0.0
    %8672 = vmatpush2.msra.mxu0 0.0
    %8673 = vmatprep.subr.mxu0 0.0
    %8674 = vmatpush2.msra.mxu0 0.0
    %8675 = vmatprep.mubr.f32.mxu0 0.0
    %8676 = vmatmul.mubr.f32.gmra.mxu0 %v5040
    %v8677 = vpop.f32.mrf.mxu0
    %v8678 = vadd.f32 0.0, %v8677
    %v8679 = vpop.f32.mrf.mxu0
    %8680 = vmatprep.mubr.f32.mxu0 0.0
    %8681 = vmatmul.mubr.f32.gmra.mxu0 %v5043
    %v8682 = vpop.f32.mrf.mxu0
    %v8683 = vadd.f32 0.0, %v8682
    %v8684 = vpop.f32.mrf.mxu0
    %8685 = vmatprep.mubr.f32.mxu0 0.0
    %8686 = vmatmul.mubr.f32.gmra.mxu0 %v5046
    %v8687 = vpop.f32.mrf.mxu0
    %v8688 = vadd.f32 0.0, %v8687
    %v8689 = vpop.f32.mrf.mxu0
    %8690 = vmatprep.mubr.f32.mxu0 0.0
    %8691 = vmatmul.mubr.f32.gmra.mxu0 %v5049
    %v8692 = vpop.f32.mrf.mxu0
    %v8693 = vadd.f32 0.0, %v8692
    %v8694 = vpop.f32.mrf.mxu0
    %8695 = vdwg.mxu0
    %s8696 = scalar_lea.vmem %s9, 1024
    %v8697 = vld [vmem:[%s8696] sm:$0xff]
    %v8698 = vld [vmem:[%s8696 + $0x8] sm:$0xff]
    %v8699 = vld [vmem:[%s8696 + $0x10] sm:$0xff]
    %v8700 = vld [vmem:[%s8696 + $0x18] sm:$0xff]
    %v8701 = vld [vmem:[%s8696 + $0x20] sm:$0xff]
    %v8702 = vld [vmem:[%s8696 + $0x28] sm:$0xff]
    %v8703 = vld [vmem:[%s8696 + $0x30] sm:$0xff]
    %v8704 = vld [vmem:[%s8696 + $0x38] sm:$0xff]
    %v8705 = vld [vmem:[%s8696 + $0x40] sm:$0xff]
    %v8706 = vld [vmem:[%s8696 + $0x48] sm:$0xff]
    %v8707 = vld [vmem:[%s8696 + $0x50] sm:$0xff]
    %v8708 = vld [vmem:[%s8696 + $0x58] sm:$0xff]
    %v8709 = vld [vmem:[%s8696 + $0x60] sm:$0xff]
    %v8710 = vld [vmem:[%s8696 + $0x68] sm:$0xff]
    %v8711 = vld [vmem:[%s8696 + $0x70] sm:$0xff]
    %v8712 = vld [vmem:[%s8696 + $0x78] sm:$0xff]
    %8713 = vmatprep.subr.mxu0 0.0
    %8714 = vmatpush1.msra.mxu0 %v8712
    %8715 = vmatprep.subr.mxu0 0.0
    %8716 = vmatpush1.msra.mxu0 %v8711
    %8717 = vmatprep.subr.mxu0 0.0
    %8718 = vmatpush1.msra.mxu0 %v8710
    %8719 = vmatprep.subr.mxu0 0.0
    %8720 = vmatpush1.msra.mxu0 %v8709
    %8721 = vmatprep.subr.mxu0 0.0
    %8722 = vmatpush1.msra.mxu0 %v8708
    %8723 = vmatprep.subr.mxu0 0.0
    %8724 = vmatpush1.msra.mxu0 %v8707
    %8725 = vmatprep.subr.mxu0 0.0
    %8726 = vmatpush1.msra.mxu0 %v8706
    %8727 = vmatprep.subr.mxu0 0.0
    %8728 = vmatpush1.msra.mxu0 %v8705
    %8729 = vmatprep.subr.mxu0 0.0
    %8730 = vmatpush1.msra.mxu0 %v8704
    %8731 = vmatprep.subr.mxu0 0.0
    %8732 = vmatpush1.msra.mxu0 %v8703
    %8733 = vmatprep.subr.mxu0 0.0
    %8734 = vmatpush1.msra.mxu0 %v8702
    %8735 = vmatprep.subr.mxu0 0.0
    %8736 = vmatpush1.msra.mxu0 %v8701
    %8737 = vmatprep.subr.mxu0 0.0
    %8738 = vmatpush1.msra.mxu0 %v8700
    %8739 = vmatprep.subr.mxu0 0.0
    %8740 = vmatpush1.msra.mxu0 %v8699
    %8741 = vmatprep.subr.mxu0 0.0
    %8742 = vmatpush1.msra.mxu0 %v8698
    %8743 = vmatprep.subr.mxu0 0.0
    %8744 = vmatpush1.msra.mxu0 %v8697
    %8745 = vmatprep.subr.mxu0 0.0
    %8746 = vmatpush2.msra.mxu0 0.0
    %8747 = vmatprep.subr.mxu0 0.0
    %8748 = vmatpush2.msra.mxu0 0.0
    %8749 = vmatprep.subr.mxu0 0.0
    %8750 = vmatpush2.msra.mxu0 0.0
    %8751 = vmatprep.subr.mxu0 0.0
    %8752 = vmatpush2.msra.mxu0 0.0
    %8753 = vmatprep.subr.mxu0 0.0
    %8754 = vmatpush2.msra.mxu0 0.0
    %8755 = vmatprep.subr.mxu0 0.0
    %8756 = vmatpush2.msra.mxu0 0.0
    %8757 = vmatprep.subr.mxu0 0.0
    %8758 = vmatpush2.msra.mxu0 0.0
    %8759 = vmatprep.subr.mxu0 0.0
    %8760 = vmatpush2.msra.mxu0 0.0
    %8761 = vmatprep.subr.mxu0 0.0
    %8762 = vmatpush2.msra.mxu0 0.0
    %8763 = vmatprep.subr.mxu0 0.0
    %8764 = vmatpush2.msra.mxu0 0.0
    %8765 = vmatprep.subr.mxu0 0.0
    %8766 = vmatpush2.msra.mxu0 0.0
    %8767 = vmatprep.subr.mxu0 0.0
    %8768 = vmatpush2.msra.mxu0 0.0
    %8769 = vmatprep.subr.mxu0 0.0
    %8770 = vmatpush2.msra.mxu0 0.0
    %8771 = vmatprep.subr.mxu0 0.0
    %8772 = vmatpush2.msra.mxu0 0.0
    %8773 = vmatprep.subr.mxu0 0.0
    %8774 = vmatpush2.msra.mxu0 0.0
    %8775 = vmatprep.subr.mxu0 0.0
    %8776 = vmatpush2.msra.mxu0 0.0
    %8777 = vmatprep.mubr.f32.mxu0 0.0
    %8778 = vmatmul.mubr.f32.gmra.mxu0 %v8678
    %v8779 = vpop.f32.mrf.mxu0
    %v8780 = vadd.f32 0.0, %v8779
    %v8781 = vpop.f32.mrf.mxu0
    %8782 = vmatprep.mubr.f32.mxu0 0.0
    %8783 = vmatmul.mubr.f32.gmra.mxu0 %v8683
    %v8784 = vpop.f32.mrf.mxu0
    %v8785 = vadd.f32 0.0, %v8784
    %v8786 = vpop.f32.mrf.mxu0
    %8787 = vmatprep.mubr.f32.mxu0 0.0
    %8788 = vmatmul.mubr.f32.gmra.mxu0 %v8688
    %v8789 = vpop.f32.mrf.mxu0
    %v8790 = vadd.f32 0.0, %v8789
    %v8791 = vpop.f32.mrf.mxu0
    %8792 = vmatprep.mubr.f32.mxu0 0.0
    %8793 = vmatmul.mubr.f32.gmra.mxu0 %v8693
    %v8794 = vpop.f32.mrf.mxu0
    %v8795 = vadd.f32 0.0, %v8794
    %v8796 = vpop.f32.mrf.mxu0
    %8797 = vdwg.mxu0
    %v8798 = vadd.f32 %v8607, %v8780
    %v8799 = vadd.f32 %v8608, %v8785
    %v8800 = vadd.f32 %v8609, %v8790
    %v8801 = vadd.f32 %v8610, %v8795
    %v8802 = vld [vmem:[%s2 + $0x5] sm:$0x1]
    %v8803 = vlaneseq
    %v8804 = vshrl.u32 %v8803, 7
    %v8805 = vsub.s32 0, %v8804
    %v8806 = vrot.slane %v8802, %v8805
    %v8807 = vadd.f32 %v8798, %v8806
    %v8808 = vadd.f32 %v8799, %v8806
    %v8809 = vadd.f32 %v8800, %v8806
    %v8810 = vadd.f32 %v8801, %v8806
    %v8811 = vmax.f32 %v8807, 0.0
    %v8812 = vmax.f32 %v8808, 0.0
    %v8813 = vmax.f32 %v8809, 0.0
    %v8814 = vmax.f32 %v8810, 0.0
    %v8815 = vld [vmem:[%s10] sm:$0xff]
    %v8816 = vld [vmem:[%s10 + $0x8] sm:$0xff]
    %v8817 = vld [vmem:[%s10 + $0x10] sm:$0xff]
    %v8818 = vld [vmem:[%s10 + $0x18] sm:$0xff]
    %v8819 = vld [vmem:[%s10 + $0x20] sm:$0xff]
    %v8820 = vld [vmem:[%s10 + $0x28] sm:$0xff]
    %v8821 = vld [vmem:[%s10 + $0x30] sm:$0xff]
    %v8822 = vld [vmem:[%s10 + $0x38] sm:$0xff]
    %v8823 = vld [vmem:[%s10 + $0x40] sm:$0xff]
    %v8824 = vld [vmem:[%s10 + $0x48] sm:$0xff]
    %v8825 = vld [vmem:[%s10 + $0x50] sm:$0xff]
    %v8826 = vld [vmem:[%s10 + $0x58] sm:$0xff]
    %v8827 = vld [vmem:[%s10 + $0x60] sm:$0xff]
    %v8828 = vld [vmem:[%s10 + $0x68] sm:$0xff]
    %v8829 = vld [vmem:[%s10 + $0x70] sm:$0xff]
    %v8830 = vld [vmem:[%s10 + $0x78] sm:$0xff]
    %v8831 = vld [vmem:[%s2 + $0x6] sm:$0x1]
    %v8832 = vlaneseq
    %v8833 = vshrl.u32 %v8832, 7
    %v8834 = vsub.s32 0, %v8833
    %v8835 = vrot.slane %v8831, %v8834
    %8836 = vmatprep.subr.mxu0 0.0
    %8837 = vmatpush1.msra.mxu0 %v8830
    %8838 = vmatprep.subr.mxu0 0.0
    %8839 = vmatpush1.msra.mxu0 %v8829
    %8840 = vmatprep.subr.mxu0 0.0
    %8841 = vmatpush1.msra.mxu0 %v8828
    %8842 = vmatprep.subr.mxu0 0.0
    %8843 = vmatpush1.msra.mxu0 %v8827
    %8844 = vmatprep.subr.mxu0 0.0
    %8845 = vmatpush1.msra.mxu0 %v8826
    %8846 = vmatprep.subr.mxu0 0.0
    %8847 = vmatpush1.msra.mxu0 %v8825
    %8848 = vmatprep.subr.mxu0 0.0
    %8849 = vmatpush1.msra.mxu0 %v8824
    %8850 = vmatprep.subr.mxu0 0.0
    %8851 = vmatpush1.msra.mxu0 %v8823
    %8852 = vmatprep.subr.mxu0 0.0
    %8853 = vmatpush1.msra.mxu0 %v8822
    %8854 = vmatprep.subr.mxu0 0.0
    %8855 = vmatpush1.msra.mxu0 %v8821
    %8856 = vmatprep.subr.mxu0 0.0
    %8857 = vmatpush1.msra.mxu0 %v8820
    %8858 = vmatprep.subr.mxu0 0.0
    %8859 = vmatpush1.msra.mxu0 %v8819
    %8860 = vmatprep.subr.mxu0 0.0
    %8861 = vmatpush1.msra.mxu0 %v8818
    %8862 = vmatprep.subr.mxu0 0.0
    %8863 = vmatpush1.msra.mxu0 %v8817
    %8864 = vmatprep.subr.mxu0 0.0
    %8865 = vmatpush1.msra.mxu0 %v8816
    %8866 = vmatprep.subr.mxu0 0.0
    %8867 = vmatpush1.msra.mxu0 %v8815
    %8868 = vmatprep.subr.mxu0 0.0
    %8869 = vmatpush2.msra.mxu0 0.0
    %8870 = vmatprep.subr.mxu0 0.0
    %8871 = vmatpush2.msra.mxu0 0.0
    %8872 = vmatprep.subr.mxu0 0.0
    %8873 = vmatpush2.msra.mxu0 0.0
    %8874 = vmatprep.subr.mxu0 0.0
    %8875 = vmatpush2.msra.mxu0 0.0
    %8876 = vmatprep.subr.mxu0 0.0
    %8877 = vmatpush2.msra.mxu0 0.0
    %8878 = vmatprep.subr.mxu0 0.0
    %8879 = vmatpush2.msra.mxu0 0.0
    %8880 = vmatprep.subr.mxu0 0.0
    %8881 = vmatpush2.msra.mxu0 0.0
    %8882 = vmatprep.subr.mxu0 0.0
    %8883 = vmatpush2.msra.mxu0 0.0
    %8884 = vmatprep.subr.mxu0 0.0
    %8885 = vmatpush2.msra.mxu0 0.0
    %8886 = vmatprep.subr.mxu0 0.0
    %8887 = vmatpush2.msra.mxu0 0.0
    %8888 = vmatprep.subr.mxu0 0.0
    %8889 = vmatpush2.msra.mxu0 0.0
    %8890 = vmatprep.subr.mxu0 0.0
    %8891 = vmatpush2.msra.mxu0 0.0
    %8892 = vmatprep.subr.mxu0 0.0
    %8893 = vmatpush2.msra.mxu0 0.0
    %8894 = vmatprep.subr.mxu0 0.0
    %8895 = vmatpush2.msra.mxu0 0.0
    %8896 = vmatprep.subr.mxu0 0.0
    %8897 = vmatpush2.msra.mxu0 0.0
    %8898 = vmatprep.subr.mxu0 0.0
    %8899 = vmatpush2.msra.mxu0 0.0
    %8900 = vmatprep.mubr.f32.mxu0 0.0
    %8901 = vmatmul.mubr.f32.gmra.mxu0 %v8811
    %v8902 = vpop.f32.mrf.mxu0
    %v8903 = vadd.f32 %v8835, %v8902
    %v8904 = vpop.f32.mrf.mxu0
    %8905 = vmatprep.mubr.f32.mxu0 0.0
    %8906 = vmatmul.mubr.f32.gmra.mxu0 %v8812
    %v8907 = vpop.f32.mrf.mxu0
    %v8908 = vadd.f32 %v8835, %v8907
    %v8909 = vpop.f32.mrf.mxu0
    %8910 = vmatprep.mubr.f32.mxu0 0.0
    %8911 = vmatmul.mubr.f32.gmra.mxu0 %v8813
    %v8912 = vpop.f32.mrf.mxu0
    %v8913 = vadd.f32 %v8835, %v8912
    %v8914 = vpop.f32.mrf.mxu0
    %8915 = vmatprep.mubr.f32.mxu0 0.0
    %8916 = vmatmul.mubr.f32.gmra.mxu0 %v8814
    %v8917 = vpop.f32.mrf.mxu0
    %v8918 = vadd.f32 %v8835, %v8917
    %v8919 = vpop.f32.mrf.mxu0
    %8920 = vdwg.mxu0
    %v8921 = vadd.f32 %v8903, %v7084
    %v8922 = vadd.f32 %v8908, %v7085
    %v8923 = vadd.f32 %v8913, %v7086
    %v8924 = vadd.f32 %v8918, %v7087
    %v8925 = vmax.f32 %v8921, 0.0
    %v8926 = vmax.f32 %v8922, 0.0
    %v8927 = vmax.f32 %v8923, 0.0
    %v8928 = vmax.f32 %v8924, 0.0
    %v8929 = vld [vmem:[%s11] sm:$0xff]
    %v8930 = vld [vmem:[%s11 + $0x8] sm:$0xff]
    %v8931 = vld [vmem:[%s11 + $0x10] sm:$0xff]
    %v8932 = vld [vmem:[%s11 + $0x18] sm:$0xff]
    %v8933 = vld [vmem:[%s11 + $0x20] sm:$0xff]
    %v8934 = vld [vmem:[%s11 + $0x28] sm:$0xff]
    %v8935 = vld [vmem:[%s11 + $0x30] sm:$0xff]
    %v8936 = vld [vmem:[%s11 + $0x38] sm:$0xff]
    %v8937 = vld [vmem:[%s11 + $0x40] sm:$0xff]
    %v8938 = vld [vmem:[%s11 + $0x48] sm:$0xff]
    %v8939 = vld [vmem:[%s11 + $0x50] sm:$0xff]
    %v8940 = vld [vmem:[%s11 + $0x58] sm:$0xff]
    %v8941 = vld [vmem:[%s11 + $0x60] sm:$0xff]
    %v8942 = vld [vmem:[%s11 + $0x68] sm:$0xff]
    %v8943 = vld [vmem:[%s11 + $0x70] sm:$0xff]
    %v8944 = vld [vmem:[%s11 + $0x78] sm:$0xff]
    %v8945 = vld [vmem:[%s2 + $0x7] sm:$0x1]
    %v8946 = vlaneseq
    %v8947 = vshrl.u32 %v8946, 7
    %v8948 = vsub.s32 0, %v8947
    %v8949 = vrot.slane %v8945, %v8948
    %8950 = vmatprep.subr.mxu0 0.0
    %8951 = vmatpush1.msra.mxu0 %v8944
    %8952 = vmatprep.subr.mxu0 0.0
    %8953 = vmatpush1.msra.mxu0 %v8943
    %8954 = vmatprep.subr.mxu0 0.0
    %8955 = vmatpush1.msra.mxu0 %v8942
    %8956 = vmatprep.subr.mxu0 0.0
    %8957 = vmatpush1.msra.mxu0 %v8941
    %8958 = vmatprep.subr.mxu0 0.0
    %8959 = vmatpush1.msra.mxu0 %v8940
    %8960 = vmatprep.subr.mxu0 0.0
    %8961 = vmatpush1.msra.mxu0 %v8939
    %8962 = vmatprep.subr.mxu0 0.0
    %8963 = vmatpush1.msra.mxu0 %v8938
    %8964 = vmatprep.subr.mxu0 0.0
    %8965 = vmatpush1.msra.mxu0 %v8937
    %8966 = vmatprep.subr.mxu0 0.0
    %8967 = vmatpush1.msra.mxu0 %v8936
    %8968 = vmatprep.subr.mxu0 0.0
    %8969 = vmatpush1.msra.mxu0 %v8935
    %8970 = vmatprep.subr.mxu0 0.0
    %8971 = vmatpush1.msra.mxu0 %v8934
    %8972 = vmatprep.subr.mxu0 0.0
    %8973 = vmatpush1.msra.mxu0 %v8933
    %8974 = vmatprep.subr.mxu0 0.0
    %8975 = vmatpush1.msra.mxu0 %v8932
    %8976 = vmatprep.subr.mxu0 0.0
    %8977 = vmatpush1.msra.mxu0 %v8931
    %8978 = vmatprep.subr.mxu0 0.0
    %8979 = vmatpush1.msra.mxu0 %v8930
    %8980 = vmatprep.subr.mxu0 0.0
    %8981 = vmatpush1.msra.mxu0 %v8929
    %8982 = vmatprep.subr.mxu0 0.0
    %8983 = vmatpush2.msra.mxu0 0.0
    %8984 = vmatprep.subr.mxu0 0.0
    %8985 = vmatpush2.msra.mxu0 0.0
    %8986 = vmatprep.subr.mxu0 0.0
    %8987 = vmatpush2.msra.mxu0 0.0
    %8988 = vmatprep.subr.mxu0 0.0
    %8989 = vmatpush2.msra.mxu0 0.0
    %8990 = vmatprep.subr.mxu0 0.0
    %8991 = vmatpush2.msra.mxu0 0.0
    %8992 = vmatprep.subr.mxu0 0.0
    %8993 = vmatpush2.msra.mxu0 0.0
    %8994 = vmatprep.subr.mxu0 0.0
    %8995 = vmatpush2.msra.mxu0 0.0
    %8996 = vmatprep.subr.mxu0 0.0
    %8997 = vmatpush2.msra.mxu0 0.0
    %8998 = vmatprep.subr.mxu0 0.0
    %8999 = vmatpush2.msra.mxu0 0.0
    %9000 = vmatprep.subr.mxu0 0.0
    %9001 = vmatpush2.msra.mxu0 0.0
    %9002 = vmatprep.subr.mxu0 0.0
    %9003 = vmatpush2.msra.mxu0 0.0
    %9004 = vmatprep.subr.mxu0 0.0
    %9005 = vmatpush2.msra.mxu0 0.0
    %9006 = vmatprep.subr.mxu0 0.0
    %9007 = vmatpush2.msra.mxu0 0.0
    %9008 = vmatprep.subr.mxu0 0.0
    %9009 = vmatpush2.msra.mxu0 0.0
    %9010 = vmatprep.subr.mxu0 0.0
    %9011 = vmatpush2.msra.mxu0 0.0
    %9012 = vmatprep.subr.mxu0 0.0
    %9013 = vmatpush2.msra.mxu0 0.0
    %9014 = vmatprep.mubr.f32.mxu0 0.0
    %9015 = vmatmul.mubr.f32.gmra.mxu0 %v8925
    %v9016 = vpop.f32.mrf.mxu0
    %v9017 = vadd.f32 %v8949, %v9016
    %v9018 = vpop.f32.mrf.mxu0
    %9019 = vmatprep.mubr.f32.mxu0 0.0
    %9020 = vmatmul.mubr.f32.gmra.mxu0 %v8926
    %v9021 = vpop.f32.mrf.mxu0
    %v9022 = vadd.f32 %v8949, %v9021
    %v9023 = vpop.f32.mrf.mxu0
    %9024 = vmatprep.mubr.f32.mxu0 0.0
    %9025 = vmatmul.mubr.f32.gmra.mxu0 %v8927
    %v9026 = vpop.f32.mrf.mxu0
    %v9027 = vadd.f32 %v8949, %v9026
    %v9028 = vpop.f32.mrf.mxu0
    %9029 = vmatprep.mubr.f32.mxu0 0.0
    %9030 = vmatmul.mubr.f32.gmra.mxu0 %v8928
    %v9031 = vpop.f32.mrf.mxu0
    %v9032 = vadd.f32 %v8949, %v9031
    %v9033 = vpop.f32.mrf.mxu0
    %9034 = vdwg.mxu0
    %9035 = vst [vmem:[#allocation2] sm:$0xff] %v9017
    %9036 = vst [vmem:[#allocation2 + $0x8] sm:$0xff] %v9022
    %9037 = vst [vmem:[#allocation2 + $0x10] sm:$0xff] %v9027
    %9038 = vst [vmem:[#allocation2 + $0x18] sm:$0xff] %v9032
    // Predicated region
    $region50: #{encoder_forward.1} parent=1 // pred_check
      _
    $region51: #{encoder_forward.1} parent=1 // pred_check_branch
      %9040 = sbr.rel (0) target = $region53
    $region52: #{encoder_forward.1} parent=1 // pred_region
      %s9042 = ssub.s32 512, 512
      %9043 = vsyncadd [#allocation3], %s9042
      %s9044 = sshll.u32 [#allocation2], 4
      %s9045 = int_to_ptr.vmem [resolvable:$true] %s9044
      %9050 = dma.vmem_to_hbm [thread:$0]  %s9045, 512, %s12, [#allocation3], 128, 128, 8
    $region53: #{encoder_forward.1} parent=1 // pred_fallthru
      _
    // Predicated region
    $region54: #{encoder_forward.1} parent=1 // pred_check
      _
    $region55: #{encoder_forward.1} parent=1 // pred_check_branch
      %9052 = sbr.rel (0) target = $region57
    $region56: #{encoder_forward.1} parent=1 // pred_region
      %9053 = dma.done [#allocation3], 512
    $region57: #{encoder_forward.1} parent=1 // pred_fallthru
      _
    %9054 = vsyncpa [#allocation3], 1

</llo_original>
